<compile_context>
chip_gen: v7x
topology: tpu7x:2x2x1
jax: 0.10.0
libtpu: 0.0.40
codegen_flags: <defaults>
</compile_context>

<pallas_src>
import functools
import math

import jax
import jax.numpy as jnp
from jax import lax
from jax.experimental import pallas as pl
from jax.experimental.pallas import tpu as pltpu


_FOLD = 8  # scalars folded per output row == MXU contraction depth (f32 sublane tile)


def _round_up(v, m):
    return ((v + m - 1) // m) * m


def _sine_embed_kernel(x_ref, c_ref, o_ref, *, fold):
    # x_ref: (fold, tn)   f32 -- x[fold*j + h] lives at [h, j] (lane-dense columns)
    # c_ref: (fold+1, L)  f32 -- rows 0..fold-1: block-diagonal 1/dim_t scale matrix,
    #                            row fold: phase (0 on sin lanes, pi/2 on cos lanes)
    # o_ref: (tn, L)          -- folded, lane-dense interleaved sin/cos embedding
    scale = c_ref[0:fold, :]            # (fold, L)  static slice -> ref view load
    phase = c_ref[fold:fold + 1, :]     # (1, L)

    # One small MXU matmul fuses: transpose of the (fold, tn) slab, broadcast of
    # each scalar across its F-lane group, and the 1/dim_t scaling:
    #   t[j, h*F + f] = x[fold*j + h] / dim_t[f]
    # HIGHEST precision keeps f32 accuracy (default MXU precision would truncate
    # x and 1/dim_t to bf16 and break the 2e-5 tolerance).
    t = lax.dot_general(
        x_ref[...], scale,
        dimension_numbers=(((0,), (0,)), ((), ())),   # contract the sublane dim of both
        precision=lax.Precision.HIGHEST,
        preferred_element_type=jnp.float32)           # (tn, L)

    # cos(t) == sin(t + pi/2): a single transcendental per output element.
    o_ref[...] = jnp.sin(t + phase).astype(o_ref.dtype)


def scalar_embedding_sine(x, num_pos_feats=64, temperature=10000.0, *,
                          block_rows=2048, out_dtype=jnp.float32):
    """Pallas TPU implementation of ScalarEmbeddingSine.forward for 1-D input x."""
    N = x.shape[0]
    F = int(num_pos_feats)
    fold = _FOLD
    L = fold * F
    x = x.astype(jnp.float32)

    # ---- deterministic constants (this module has no learnable parameters) ----
    k = jnp.arange(F, dtype=jnp.float32)
    dim_t = jnp.asarray(temperature, jnp.float32) ** (2.0 * jnp.floor(k / 2.0) / F)
    inv_dim_t = 1.0 / dim_t                                            # (F,)
    phase = jnp.where((jnp.arange(F) % 2) == 1,
                      jnp.float32(math.pi / 2.0), jnp.float32(0.0))    # (F,)
    # scale[h, h*F:(h+1)*F] = inv_dim_t, zeros elsewhere (select + scale in one matrix).
    scale = (jnp.eye(fold, dtype=jnp.float32)[:, :, None]
             * inv_dim_t[None, None, :]).reshape(fold, L)
    const = jnp.concatenate(
        [scale, jnp.tile(phase, fold)[None, :]], axis=0)               # (fold+1, L)

    # ---- tiling ----
    R = -(-N // fold)                      # folded rows needed (ceil(N / fold))
    # tn: multiple of 128 (lane dim of the x block / sublane dim of the out block),
    # capped near R/4 so the parallel grid keeps >=4 steps when R is large enough.
    tn = _round_up(min(int(block_rows), max(-(-R // 4), 128)), 128)
    # Tiny inputs: pad the folded rows up to one full block (avoids a block larger
    # than the array; the extra rows + trailing slice are negligible at this size).
    R_out = R if R >= tn else tn
    total = R_out * fold                   # scalars actually fed to the kernel
    x_pad = x if total == N else jnp.pad(x, (0, total - N))
    x2 = x_pad.reshape(R_out, fold).T      # (fold, R_out); x2[h, j] = x[fold*j + h]

    num_blocks = pl.cdiv(R_out, tn)        # ragged last block is masked by Pallas

    out2 = pl.pallas_call(
        functools.partial(_sine_embed_kernel, fold=fold),
        out_shape=jax.ShapeDtypeStruct((R_out, L), out_dtype),
        grid=(num_blocks,),
        in_specs=[
            pl.BlockSpec((fold, tn), lambda i: (0, i)),      # x columns for this tile
            pl.BlockSpec((fold + 1, L), lambda i: (0, 0)),   # resident constants
        ],
        out_specs=pl.BlockSpec((tn, L), lambda i: (i, 0)),
        compiler_params=pltpu.CompilerParams(dimension_semantics=("parallel",)),
    )(x2, const)

    # (R_out, fold*F) -> (R_out*fold, F) is a row-major view; slice only when we
    # actually padded (N % fold != 0 or tiny N) — the common large-N even case
    # returns with no extra full-output copy.
    out = out2.reshape(total, F)
    return out if total == N else out[:N]


def _reference(x, num_pos_feats=64, temperature=10000.0):
    # Pure-JAX mirror of the PyTorch forward, used only for the correctness check.
    F = num_pos_feats
    k = jnp.arange(F, dtype=jnp.float32)
    dim_t = jnp.asarray(temperature, jnp.float32) ** (2.0 * jnp.floor(k / 2.0) / F)
    pos = x.astype(jnp.float32)[:, None] / dim_t                       # (N, F)
    s = jnp.sin(pos[:, 0::2])
    c = jnp.cos(pos[:, 1::2])
    return jnp.stack((s, c), axis=2).reshape(x.shape[0], F)


if __name__ == "__main__":
    key = jax.random.PRNGKey(0)
    NUM_POS_FEATS = 64      # module default
    TEMPERATURE = 10000.0

    ok = True
    # 2048: fold-aligned, multi-step grid, no trailing slice.
    # 1200: fold-aligned but ragged last block (Pallas edge masking), no slice.
    # 500 / 16: padded single-block path with trailing slice.
    for N in (2048, 1200, 500, 16):
        kx, key = jax.random.split(key)
        x = jax.random.uniform(kx, (N,), dtype=jnp.float32) * 10.0

        out = jax.block_until_ready(
            scalar_embedding_sine(x, NUM_POS_FEATS, TEMPERATURE))
        ref = _reference(x, NUM_POS_FEATS, TEMPERATURE)

        ok &= out.shape == (N, NUM_POS_FEATS)
        ok &= out.dtype == jnp.float32
        ok &= bool(jnp.allclose(out, ref, atol=5e-5, rtol=5e-5))

    assert ok
    print("KERNEL_OK")
</pallas_src>

<mosaic_0001>
module attributes {stable_mosaic.version = 11 : i64} {
  func.func @_sine_embed_kernel(%arg0: i32, %arg1: memref<8x128xf32, #tpu.memory_space<vmem>>, %arg2: memref<9x512xf32, #tpu.memory_space<vmem>>, %arg3: memref<128x512xf32, #tpu.memory_space<vmem>>) attributes {dimension_semantics = [#tpu.dimension_semantics<parallel>], iteration_bounds = array<i64: 2>, scalar_prefetch = 0 : i64, scratch_operands = 0 : i64, tpu.core_type = #tpu.core_type<tc>, window_params = [{transform_indices = @transform_0, window_bounds = array<i64: 8, 128>}, {pipeline_mode = #tpu.pipeline_mode<synchronous>, transform_indices = @transform_1, window_bounds = array<i64: 9, 512>}, {transform_indices = @transform_2, window_bounds = array<i64: 128, 512>}]} {
    %c0 = arith.constant 0 : index
    %c0_0 = arith.constant 0 : index
    %0 = vector.load %arg2[%c0, %c0_0] : memref<9x512xf32, #tpu.memory_space<vmem>>, vector<8x512xf32>
    %c8 = arith.constant 8 : index
    %c0_1 = arith.constant 0 : index
    %1 = vector.load %arg2[%c8, %c0_1] : memref<9x512xf32, #tpu.memory_space<vmem>>, vector<1x512xf32>
    %c0_2 = arith.constant 0 : index
    %c0_3 = arith.constant 0 : index
    %2 = vector.load %arg1[%c0_2, %c0_3] : memref<8x128xf32, #tpu.memory_space<vmem>>, vector<8x128xf32>
    %cst = arith.constant dense<0.000000e+00> : vector<128x512xf32>
    %3 = tpu.matmul %2, %0, %cst {dimension_numbers = #tpu.dot_dimension_numbers<[0], [0], [1], [1], [0, 1, 1, 1], [], []>, precision = #tpu.contract_precision<fp32>} : vector<8x128xf32>, vector<8x512xf32>, vector<128x512xf32> -> vector<128x512xf32>
    %4 = vector.broadcast %1 : vector<1x512xf32> to vector<128x512xf32>
    %5 = arith.addf %3, %4 : vector<128x512xf32>
    %6 = math.sin %5 : vector<128x512xf32>
    %c0_4 = arith.constant 0 : index
    %c0_5 = arith.constant 0 : index
    %7 = vector.load %arg3[%c0_4, %c0_5] : memref<128x512xf32, #tpu.memory_space<vmem>>, vector<128x512xf32>
    tpu.vector_store %arg3[%c0_4, %c0_5], %6 {strides = array<i32>} : memref<128x512xf32, #tpu.memory_space<vmem>>, vector<128x512xf32>,
    return
  }
  func.func @transform_0(%arg0: i32) -> (i32, i32) {
    %c0_i32 = arith.constant 0 : i32
    %c0_i32_0 = arith.constant 0 : i32
    return %c0_i32, %arg0 : i32, i32
  }
  func.func @transform_1(%arg0: i32) -> (i32, i32) {
    %c0_i32 = arith.constant 0 : i32
    %c0_i32_0 = arith.constant 0 : i32
    %c0_i32_1 = arith.constant 0 : i32
    return %c0_i32, %c0_i32_0 : i32, i32
  }
  func.func @transform_2(%arg0: i32) -> (i32, i32) {
    %c0_i32 = arith.constant 0 : i32
    %c0_i32_0 = arith.constant 0 : i32
    return %arg0, %c0_i32 : i32, i32
  }
}

</mosaic_0001>

<llo_original>
// kernel: tpu_custom_call.1
$region0: #{tpu_custom_call.1}
  #allocation0 [shape = 'u32[]', space=smem, size = 0x4, offset = 0x4, fixed_abs, tag = 'smem constant byte address 0x4 - core index']
  #allocation1 [shape = 'u32[144,128]{1,0:T(1,128)}', space=vmem, size = 0x12000, scoped, tag = 'internal scratch']
  %s0 = inlined_call_operand.hbm [shape: f32[8,256], index: 0, kind: input, shape index: {}]
  %s1 = inlined_call_operand.hbm [shape: f32[9,512], index: 1, kind: input, shape index: {}]
  %s2 = inlined_call_operand.hbm [shape: f32[256,512], index: 2, kind: output, shape index: {}]
  %s3 = sld [smem:[#allocation0]]
  $region49: #{tpu_custom_call.1} parent=0
    _
  %s5 = ssub.s32 1, %s3
  %s6 = scalar_select 0, %s5, %s3
  $region1: #{tpu_custom_call.1} parent=0
    #allocation2 [shape = 'u8[8192]{0}', space=vmem, size = 0x2000, scoped, tag = 'input window, operand 0']
    #allocation3 [shape = 's32[2]{0}', space=sflag, size = 0x8, scoped, tag = 'scoped memory for tpu_custom_call.1']
    #allocation4 [shape = 's32[2]{0}', space=sflag, size = 0x8, scoped, tag = 'scoped memory for tpu_custom_call.1']
    #allocation5 [shape = 'u8[32768]{0}', space=vmem, size = 0x8000, scoped, tag = 'input window, operand 1, single buffered']
    #allocation6 [shape = 's32[1]{0}', space=sflag, size = 0x4, scoped, tag = 'scoped memory for tpu_custom_call.1']
    #allocation7 [shape = 'u8[524288]{0}', space=vmem, size = 0x80000, scoped, tag = 'output window, operand 0']
    %7 = vsyncpa [#allocation3], 0
    %s8 = scalar_lea.sflag [#allocation3], 1
    %9 = vsyncpa %s8, 0
    %10 = vsyncpa [#allocation6], 0
    %11 = vsyncpa [#allocation4], 0
    %s12 = scalar_lea.sflag [#allocation4], 1
    %13 = vsyncpa %s12, 0
    loop: start=0, step=1, limit=4
    $region2: #{tpu_custom_call.1} parent=1 // loop_pre_header
      _
    $region3: #{tpu_custom_call.1} parent=1 // loop_header
      %s15 = sphi 0, %s19
      %p16 = scmp.ge.s32.totalorder %s15, 4
      %s25 = sphi 0, %s27
      %s28 = sphi 0, %s25
      %s29 = sphi 0, %s28
      %s45 = sphi 0, %s29
      %s49 = sphi 0, %s49
      %s51 = sphi 0, %s49
      %s52 = sphi 0, %s51
      %s66 = sphi 0, %s52
      %s72 = sphi 0, %s74
      %s75 = sphi 0, %s72
      %s76 = sphi 0, %s75
      %s92 = sphi 0, %s76
    $region4: #{tpu_custom_call.1} parent=1 // loop_header_branch
      %18 = sbr.rel (%p16) target = $region8
    $region5: #{tpu_custom_call.1} parent=1 // loop_body
      %s20 = ssub.s32 %s15, 1
      %s21 = ssub.s32 %s15, 2
      %s22 = sadd.s32 %s15, 1
      %s23 = ssub.s32 %s15, %s22
      %p24 = scmp.eq.s32.totalorder %s23, 0
      %s26 = sadd.s32 %s25, 1
      %s27 = scalar_select %p24, %s25, %s26
      %p30 = pneg %p24
      %p31 = scmp.eq.s32.totalorder %s15, 1
      %p32 = por %p30, %p31
      %p33 = scmp.ne.s32.totalorder %s25, %s28
      %p34 = scmp.eq.s32.totalorder %s15, 0
      %p35 = por %p33, %p34
      %p36 = scmp.ne.s32.totalorder %s25, %s28
      %p37 = scmp.eq.s32.totalorder %s20, 1
      %p38 = por %p36, %p37
      %p39 = scmp.ne.s32.totalorder %s28, %s29
      %p40 = scmp.eq.s32.totalorder %s20, 0
      %p41 = por %p39, %p40
      %p42 = scmp.ne.s32.totalorder %s28, %s29
      %p43 = scmp.eq.s32.totalorder %s21, 1
      %p44 = por %p42, %p43
      %p46 = scmp.ne.s32.totalorder %s29, %s45
      %p47 = scmp.eq.s32.totalorder %s21, 0
      %p48 = por %p46, %p47
      %s50 = sadd.s32 %s49, 1
      %p53 = scmp.eq.s32.totalorder %s15, 1
      %p54 = scmp.ne.s32.totalorder %s49, %s51
      %p55 = scmp.eq.s32.totalorder %s15, 0
      %p56 = por %p54, %p55
      %p57 = scmp.ne.s32.totalorder %s49, %s51
      %p58 = scmp.eq.s32.totalorder %s20, 1
      %p59 = por %p57, %p58
      %p60 = scmp.ne.s32.totalorder %s51, %s52
      %p61 = scmp.eq.s32.totalorder %s20, 0
      %p62 = por %p60, %p61
      %p63 = scmp.ne.s32.totalorder %s51, %s52
      %p64 = scmp.eq.s32.totalorder %s21, 1
      %p65 = por %p63, %p64
      %p67 = scmp.ne.s32.totalorder %s52, %s66
      %p68 = scmp.eq.s32.totalorder %s21, 0
      %p69 = por %p67, %p68
      %s70 = ssub.s32 %s15, %s22
      %p71 = scmp.eq.s32.totalorder %s70, 0
      %s73 = sadd.s32 %s72, 1
      %s74 = scalar_select %p71, %s72, %s73
      %p77 = pneg %p71
      %p78 = scmp.eq.s32.totalorder %s15, 1
      %p79 = por %p77, %p78
      %p80 = scmp.ne.s32.totalorder %s72, %s75
      %p81 = scmp.eq.s32.totalorder %s15, 0
      %p82 = por %p80, %p81
      %p83 = scmp.ne.s32.totalorder %s72, %s75
      %p84 = scmp.eq.s32.totalorder %s20, 1
      %p85 = por %p83, %p84
      %p86 = scmp.ne.s32.totalorder %s75, %s76
      %p87 = scmp.eq.s32.totalorder %s20, 0
      %p88 = por %p86, %p87
      %p89 = scmp.ne.s32.totalorder %s75, %s76
      %p90 = scmp.eq.s32.totalorder %s21, 1
      %p91 = por %p89, %p90
      %p93 = scmp.ne.s32.totalorder %s76, %s92
      %p94 = scmp.eq.s32.totalorder %s21, 0
      %p95 = por %p93, %p94
      %p96 = scmp.le.s32.totalorder 1, %s15
      %p97 = scmp.lt.s32.totalorder %s15, 3
      %p98 = pnand %p96, %p97
      %p99 = pneg %p98
      // Predicated region
      $region9: #{tpu_custom_call.1} parent=5 // pred_check
        _
      $region10: #{tpu_custom_call.1} parent=5 // pred_check_branch
        %101 = sbr.rel (%p98) target = $region12
      $region11: #{tpu_custom_call.1} parent=5 // pred_region
        %s102 = ssub.s32 %s15, 1
        // Predicated region
        $region13: #{tpu_custom_call.1} parent=11 // pred_check
          %p103 = pneg %p62
        $region14: #{tpu_custom_call.1} parent=11 // pred_check_branch
          %105 = sbr.rel (%p103) target = $region16
        $region15: #{tpu_custom_call.1} parent=11 // pred_region
          %s107 = ssub.s32 1024, 1024
          %108 = vsyncadd [#allocation6], %s107
          %s109 = sshll.u32 [#allocation5], 4
          %s110 = int_to_ptr.vmem [resolvable:$true] %s109
          %115 = dma.hbm_to_vmem [thread:$0]  %s1, 1024, %s110, [#allocation6], 512, 512, 32
        $region16: #{tpu_custom_call.1} parent=11 // pred_fallthru
          _
      $region12: #{tpu_custom_call.1} parent=5 // pred_fallthru
        _
      %p116 = scmp.lt.s32.totalorder %s15, 2
      // Predicated region
      $region17: #{tpu_custom_call.1} parent=5 // pred_check
        %p117 = pneg %p116
      $region18: #{tpu_custom_call.1} parent=5 // pred_check_branch
        %119 = sbr.rel (%p117) target = $region20
      $region19: #{tpu_custom_call.1} parent=5 // pred_region
        // Predicated region
        $region21: #{tpu_custom_call.1} parent=19 // pred_check
          %p120 = pneg %p35
        $region22: #{tpu_custom_call.1} parent=19 // pred_check_branch
          %122 = sbr.rel (%p120) target = $region24
        $region23: #{tpu_custom_call.1} parent=19 // pred_region
          %s123 = sand.u32 %s25, 1
          %s124 = scalar_lea.sflag [#allocation3], %s123
          %s125 = sand.u32 %s25, 1
          %s126 = smul.addr %s125, 8
          %s127 = scalar_lea.vmem [#allocation2], %s126
          %s129 = ssub.s32 128, 128
          %130 = vsyncadd %s124, %s129
          %s131 = smul.addr %s15, 128
          %s132 = scalar_lea.hbm %s0, %s131
          %s134 = sshll.u32 %s127, 4
          %s135 = int_to_ptr.vmem [resolvable:$true] %s134
          %137 = dma.hbm_to_vmem [thread:$0]  %s132, 128, %s135, %s124
        $region24: #{tpu_custom_call.1} parent=19 // pred_fallthru
          _
      $region20: #{tpu_custom_call.1} parent=5 // pred_fallthru
        _
      %p138 = scmp.le.s32.totalorder 1, %s15
      %p139 = scmp.lt.s32.totalorder %s15, 3
      %p140 = pnand %p138, %p139
      %p141 = pneg %p140
      // Predicated region
      $region25: #{tpu_custom_call.1} parent=5 // pred_check
        _
      $region26: #{tpu_custom_call.1} parent=5 // pred_check_branch
        %143 = sbr.rel (%p140) target = $region28
      $region27: #{tpu_custom_call.1} parent=5 // pred_region
        %s144 = ssub.s32 %s15, 1
        %s145 = sand.u32 %s28, 1
        %s146 = scalar_lea.sflag [#allocation3], %s145
        %s147 = sand.u32 %s28, 1
        %s148 = smul.addr %s147, 8
        %s149 = scalar_lea.vmem [#allocation2], %s148
        // Predicated region
        $region29: #{tpu_custom_call.1} parent=27 // pred_check
          %p150 = pneg %p41
        $region30: #{tpu_custom_call.1} parent=27 // pred_check_branch
          %152 = sbr.rel (%p150) target = $region32
        $region31: #{tpu_custom_call.1} parent=27 // pred_region
          %153 = dma.done %s146, 128
        $region32: #{tpu_custom_call.1} parent=27 // pred_fallthru
          _
        // Predicated region
        $region33: #{tpu_custom_call.1} parent=27 // pred_check
          %p154 = pneg %p62
        $region34: #{tpu_custom_call.1} parent=27 // pred_check_branch
          %156 = sbr.rel (%p154) target = $region36
        $region35: #{tpu_custom_call.1} parent=27 // pred_region
          %157 = dma.done [#allocation6], 1024
        $region36: #{tpu_custom_call.1} parent=27 // pred_fallthru
          _
        %s158 = sand.u32 %s28, 1
        %s159 = scalar_lea.sflag [#allocation3], %s158
        %s160 = sand.u32 %s28, 1
        %s161 = smul.addr %s160, 8
        %s162 = scalar_lea.vmem [#allocation2], %s161
        %p163 = pneg %p41
        %p164 = pneg %p38
        %p165 = pneg %p62
        %p166 = pneg %p59
        %p167 = pneg %p88
        %p168 = pneg %p85
        %s169 = sand.u32 %s75, 1
        %s170 = scalar_lea.sflag [#allocation4], %s169
        %s171 = sand.u32 %s75, 1
        %s172 = smul.addr %s171, 512
        %s173 = scalar_lea.vmem [#allocation7], %s172
        %s174 = smul.u32 16, %s20
        %v175 = vld [vmem:[#allocation5] sm:$0xff]
        %v176 = vld [vmem:[#allocation5 + $0x8] sm:$0xff]
        %v177 = vld [vmem:[#allocation5 + $0x10] sm:$0xff]
        %v178 = vld [vmem:[#allocation5 + $0x18] sm:$0xff]
        %s179 = scalar_lea.vmem [#allocation5], 32
        %v180 = vld [vmem:[%s179] ss:$8 sm:$0xf]
        %v181 = vld [vmem:[%s149] sm:$0xff]
        %v183 = vlaneseq
        %v184 = vshrl.u32 %v183, 7
        %v185 = vsub.s32 0, %v184
        %v186 = vrot.slane %v180, %v185
        %v187 = vlaneseq
        %v188 = vshrl.u32 %v187, 7
        %v189 = vsub.s32 1, %v188
        %v190 = vrot.slane %v180, %v189
        %v191 = vlaneseq
        %v192 = vshrl.u32 %v191, 7
        %v193 = vsub.s32 2, %v192
        %v194 = vrot.slane %v180, %v193
        %v195 = vlaneseq
        %v196 = vshrl.u32 %v195, 7
        %v197 = vsub.s32 3, %v196
        %v198 = vrot.slane %v180, %v197
        %203 = vxpose.xlu0.b32.start [1/16] %v181, 128
        %204 = vxpose.xlu0.b32.cont [2/16] 0.0, 128
        %205 = vxpose.xlu0.b32.cont [3/16] 0.0, 128
        %206 = vxpose.xlu0.b32.cont [4/16] 0.0, 128
        %207 = vxpose.xlu0.b32.cont [5/16] 0.0, 128
        %208 = vxpose.xlu0.b32.cont [6/16] 0.0, 128
        %209 = vxpose.xlu0.b32.cont [7/16] 0.0, 128
        %210 = vxpose.xlu0.b32.cont [8/16] 0.0, 128
        %211 = vxpose.xlu0.b32.cont [9/16] 0.0, 128
        %212 = vxpose.xlu0.b32.cont [10/16] 0.0, 128
        %213 = vxpose.xlu0.b32.cont [11/16] 0.0, 128
        %214 = vxpose.xlu0.b32.cont [12/16] 0.0, 128
        %215 = vxpose.xlu0.b32.cont [13/16] 0.0, 128
        %216 = vxpose.xlu0.b32.cont [14/16] 0.0, 128
        %217 = vxpose.xlu0.b32.cont [15/16] 0.0, 128
        %218 = vxpose.xlu0.b32.end [16/16] 0.0, 128
        %v219 = vpop.trf.xlu0
        %v220 = vpop.trf.xlu0
        %v221 = vpop.trf.xlu0
        %v222 = vpop.trf.xlu0
        %v223 = vpop.trf.xlu0
        %v224 = vpop.trf.xlu0
        %v225 = vpop.trf.xlu0
        %v226 = vpop.trf.xlu0
        %v227 = vpop.trf.xlu0
        %v228 = vpop.trf.xlu0
        %v229 = vpop.trf.xlu0
        %v230 = vpop.trf.xlu0
        %v231 = vpop.trf.xlu0
        %v232 = vpop.trf.xlu0
        %v233 = vpop.trf.xlu0
        %v234 = vpop.trf.xlu0
        %vm235 = vcmask 64512
        %v237 = vsel %vm235, %v219, 0
        %v240 = vsel %vm235, %v220, 0
        %v243 = vsel %vm235, %v221, 0
        %v246 = vsel %vm235, %v222, 0
        %v249 = vsel %vm235, %v223, 0
        %v252 = vsel %vm235, %v224, 0
        %v255 = vsel %vm235, %v225, 0
        %v258 = vsel %vm235, %v226, 0
        %v261 = vsel %vm235, %v227, 0
        %v264 = vsel %vm235, %v228, 0
        %v267 = vsel %vm235, %v229, 0
        %v270 = vsel %vm235, %v230, 0
        %v273 = vsel %vm235, %v231, 0
        %v276 = vsel %vm235, %v232, 0
        %v279 = vsel %vm235, %v233, 0
        %v282 = vsel %vm235, %v234, 0
        %v284 = vand.u32 %v176, 4294901760
        %285 = vmatprep.subr.mxu0 %v284
        %v286 = vand.u32 %v175, 4294901760
        %287 = vmatpush1.msra.mxu0 %v286
        %288 = vmatprep.subr.mxu0 0.0
        %289 = vmatpush1.msra.mxu0 0.0
        %290 = vmatprep.subr.mxu0 0.0
        %291 = vmatpush1.msra.mxu0 0.0
        %292 = vmatprep.subr.mxu0 0.0
        %293 = vmatpush1.msra.mxu0 0.0
        %294 = vmatprep.subr.mxu0 0.0
        %295 = vmatpush1.msra.mxu0 0.0
        %296 = vmatprep.subr.mxu0 0.0
        %297 = vmatpush1.msra.mxu0 0.0
        %298 = vmatprep.subr.mxu0 0.0
        %299 = vmatpush1.msra.mxu0 0.0
        %300 = vmatprep.subr.mxu0 0.0
        %301 = vmatpush1.msra.mxu0 0.0
        %302 = vmatprep.subr.mxu0 0.0
        %303 = vmatpush1.msra.mxu0 0.0
        %304 = vmatprep.subr.mxu0 0.0
        %305 = vmatpush1.msra.mxu0 0.0
        %306 = vmatprep.subr.mxu0 0.0
        %307 = vmatpush1.msra.mxu0 0.0
        %308 = vmatprep.subr.mxu0 0.0
        %309 = vmatpush1.msra.mxu0 0.0
        %310 = vmatprep.subr.mxu0 0.0
        %311 = vmatpush1.msra.mxu0 0.0
        %312 = vmatprep.subr.mxu0 0.0
        %313 = vmatpush1.msra.mxu0 0.0
        %314 = vmatprep.subr.mxu0 0.0
        %315 = vmatpush1.msra.mxu0 0.0
        %316 = vmatprep.subr.mxu0 0.0
        %317 = vmatpush1.msra.mxu0 0.0
        %318 = vmatprep.subr.mxu0 0.0
        %319 = vmatpush1.msra.mxu0 0.0
        %320 = vmatprep.subr.mxu0 0.0
        %321 = vmatpush1.msra.mxu0 0.0
        %322 = vmatprep.subr.mxu0 0.0
        %323 = vmatpush1.msra.mxu0 0.0
        %324 = vmatprep.subr.mxu0 0.0
        %325 = vmatpush1.msra.mxu0 0.0
        %326 = vmatprep.subr.mxu0 0.0
        %327 = vmatpush1.msra.mxu0 0.0
        %328 = vmatprep.subr.mxu0 0.0
        %329 = vmatpush1.msra.mxu0 0.0
        %330 = vmatprep.subr.mxu0 0.0
        %331 = vmatpush1.msra.mxu0 0.0
        %332 = vmatprep.subr.mxu0 0.0
        %333 = vmatpush1.msra.mxu0 0.0
        %334 = vmatprep.subr.mxu0 0.0
        %335 = vmatpush1.msra.mxu0 0.0
        %336 = vmatprep.subr.mxu0 0.0
        %337 = vmatpush1.msra.mxu0 0.0
        %338 = vmatprep.subr.mxu0 0.0
        %339 = vmatpush1.msra.mxu0 0.0
        %340 = vmatprep.subr.mxu0 0.0
        %341 = vmatpush1.msra.mxu0 0.0
        %342 = vmatprep.subr.mxu0 0.0
        %343 = vmatpush1.msra.mxu0 0.0
        %344 = vmatprep.subr.mxu0 0.0
        %345 = vmatpush1.msra.mxu0 0.0
        %346 = vmatprep.subr.mxu0 0.0
        %347 = vmatpush1.msra.mxu0 0.0
        %348 = vmatprep.subr.mxu0 0.0
        %349 = vmatpush1.msra.mxu0 0.0
        %350 = vmatprep.mubr.f32.mxu0 0.0
        %v351 = vand.u32 %v237, 4294901760
        %v352 = vsub.f32 %v237, %v351
        %v353 = vand.u32 %v352, 4294901760
        %v354 = vsub.f32 %v352, %v353
        %v355 = vand.u32 %v354, 4294901760
        %356 = vmatmul.mubr.f32.gmra.mrb[0].mxu0 %v355
        %v357 = vpop.f32.mrb[0].mxu0
        %v358 = vadd.f32 %v186, %v357
        %v359 = vpop.f32.mrb[0].mxu0
        %v360 = vadd.f32 %v190, %v359
        %361 = vmatprep.mubr.f32.mxu0 0.0
        %v362 = vand.u32 %v240, 4294901760
        %v363 = vsub.f32 %v240, %v362
        %v364 = vand.u32 %v363, 4294901760
        %v365 = vsub.f32 %v363, %v364
        %v366 = vand.u32 %v365, 4294901760
        %367 = vmatmul.mubr.f32.gmra.mrb[0].mxu0 %v366
        %v368 = vpop.f32.mrb[0].mxu0
        %v369 = vadd.f32 %v186, %v368
        %v370 = vpop.f32.mrb[0].mxu0
        %v371 = vadd.f32 %v190, %v370
        %372 = vmatprep.mubr.f32.mxu0 0.0
        %v373 = vand.u32 %v243, 4294901760
        %v374 = vsub.f32 %v243, %v373
        %v375 = vand.u32 %v374, 4294901760
        %v376 = vsub.f32 %v374, %v375
        %v377 = vand.u32 %v376, 4294901760
        %378 = vmatmul.mubr.f32.gmra.mrb[0].mxu0 %v377
        %v379 = vpop.f32.mrb[0].mxu0
        %v380 = vadd.f32 %v186, %v379
        %v381 = vpop.f32.mrb[0].mxu0
        %v382 = vadd.f32 %v190, %v381
        %383 = vmatprep.mubr.f32.mxu0 0.0
        %v384 = vand.u32 %v246, 4294901760
        %v385 = vsub.f32 %v246, %v384
        %v386 = vand.u32 %v385, 4294901760
        %v387 = vsub.f32 %v385, %v386
        %v388 = vand.u32 %v387, 4294901760
        %389 = vmatmul.mubr.f32.gmra.mrb[0].mxu0 %v388
        %v390 = vpop.f32.mrb[0].mxu0
        %v391 = vadd.f32 %v186, %v390
        %v392 = vpop.f32.mrb[0].mxu0
        %v393 = vadd.f32 %v190, %v392
        %394 = vmatprep.mubr.f32.mxu0 0.0
        %v395 = vand.u32 %v249, 4294901760
        %v396 = vsub.f32 %v249, %v395
        %v397 = vand.u32 %v396, 4294901760
        %v398 = vsub.f32 %v396, %v397
        %v399 = vand.u32 %v398, 4294901760
        %400 = vmatmul.mubr.f32.gmra.mrb[0].mxu0 %v399
        %v401 = vpop.f32.mrb[0].mxu0
        %v402 = vadd.f32 %v186, %v401
        %v403 = vpop.f32.mrb[0].mxu0
        %v404 = vadd.f32 %v190, %v403
        %405 = vmatprep.mubr.f32.mxu0 0.0
        %v406 = vand.u32 %v252, 4294901760
        %v407 = vsub.f32 %v252, %v406
        %v408 = vand.u32 %v407, 4294901760
        %v409 = vsub.f32 %v407, %v408
        %v410 = vand.u32 %v409, 4294901760
        %411 = vmatmul.mubr.f32.gmra.mrb[0].mxu0 %v410
        %v412 = vpop.f32.mrb[0].mxu0
        %v413 = vadd.f32 %v186, %v412
        %v414 = vpop.f32.mrb[0].mxu0
        %v415 = vadd.f32 %v190, %v414
        %416 = vmatprep.mubr.f32.mxu0 0.0
        %v417 = vand.u32 %v255, 4294901760
        %v418 = vsub.f32 %v255, %v417
        %v419 = vand.u32 %v418, 4294901760
        %v420 = vsub.f32 %v418, %v419
        %v421 = vand.u32 %v420, 4294901760
        %422 = vmatmul.mubr.f32.gmra.mrb[0].mxu0 %v421
        %v423 = vpop.f32.mrb[0].mxu0
        %v424 = vadd.f32 %v186, %v423
        %v425 = vpop.f32.mrb[0].mxu0
        %v426 = vadd.f32 %v190, %v425
        %427 = vmatprep.mubr.f32.mxu0 0.0
        %v428 = vand.u32 %v258, 4294901760
        %v429 = vsub.f32 %v258, %v428
        %v430 = vand.u32 %v429, 4294901760
        %v431 = vsub.f32 %v429, %v430
        %v432 = vand.u32 %v431, 4294901760
        %433 = vmatmul.mubr.f32.gmra.mrb[0].mxu0 %v432
        %v434 = vpop.f32.mrb[0].mxu0
        %v435 = vadd.f32 %v186, %v434
        %v436 = vpop.f32.mrb[0].mxu0
        %v437 = vadd.f32 %v190, %v436
        %438 = vmatprep.mubr.f32.mxu0 0.0
        %v439 = vand.u32 %v261, 4294901760
        %v440 = vsub.f32 %v261, %v439
        %v441 = vand.u32 %v440, 4294901760
        %v442 = vsub.f32 %v440, %v441
        %v443 = vand.u32 %v442, 4294901760
        %444 = vmatmul.mubr.f32.gmra.mrb[0].mxu0 %v443
        %v445 = vpop.f32.mrb[0].mxu0
        %v446 = vadd.f32 %v186, %v445
        %v447 = vpop.f32.mrb[0].mxu0
        %v448 = vadd.f32 %v190, %v447
        %449 = vmatprep.mubr.f32.mxu0 0.0
        %v450 = vand.u32 %v264, 4294901760
        %v451 = vsub.f32 %v264, %v450
        %v452 = vand.u32 %v451, 4294901760
        %v453 = vsub.f32 %v451, %v452
        %v454 = vand.u32 %v453, 4294901760
        %455 = vmatmul.mubr.f32.gmra.mrb[0].mxu0 %v454
        %v456 = vpop.f32.mrb[0].mxu0
        %v457 = vadd.f32 %v186, %v456
        %v458 = vpop.f32.mrb[0].mxu0
        %v459 = vadd.f32 %v190, %v458
        %460 = vmatprep.mubr.f32.mxu0 0.0
        %v461 = vand.u32 %v267, 4294901760
        %v462 = vsub.f32 %v267, %v461
        %v463 = vand.u32 %v462, 4294901760
        %v464 = vsub.f32 %v462, %v463
        %v465 = vand.u32 %v464, 4294901760
        %466 = vmatmul.mubr.f32.gmra.mrb[0].mxu0 %v465
        %v467 = vpop.f32.mrb[0].mxu0
        %v468 = vadd.f32 %v186, %v467
        %v469 = vpop.f32.mrb[0].mxu0
        %v470 = vadd.f32 %v190, %v469
        %471 = vmatprep.mubr.f32.mxu0 0.0
        %v472 = vand.u32 %v270, 4294901760
        %v473 = vsub.f32 %v270, %v472
        %v474 = vand.u32 %v473, 4294901760
        %v475 = vsub.f32 %v473, %v474
        %v476 = vand.u32 %v475, 4294901760
        %477 = vmatmul.mubr.f32.gmra.mrb[0].mxu0 %v476
        %v478 = vpop.f32.mrb[0].mxu0
        %v479 = vadd.f32 %v186, %v478
        %v480 = vpop.f32.mrb[0].mxu0
        %v481 = vadd.f32 %v190, %v480
        %482 = vmatprep.mubr.f32.mxu0 0.0
        %v483 = vand.u32 %v273, 4294901760
        %v484 = vsub.f32 %v273, %v483
        %v485 = vand.u32 %v484, 4294901760
        %v486 = vsub.f32 %v484, %v485
        %v487 = vand.u32 %v486, 4294901760
        %488 = vmatmul.mubr.f32.gmra.mrb[0].mxu0 %v487
        %v489 = vpop.f32.mrb[0].mxu0
        %v490 = vadd.f32 %v186, %v489
        %v491 = vpop.f32.mrb[0].mxu0
        %v492 = vadd.f32 %v190, %v491
        %493 = vmatprep.mubr.f32.mxu0 0.0
        %v494 = vand.u32 %v276, 4294901760
        %v495 = vsub.f32 %v276, %v494
        %v496 = vand.u32 %v495, 4294901760
        %v497 = vsub.f32 %v495, %v496
        %v498 = vand.u32 %v497, 4294901760
        %499 = vmatmul.mubr.f32.gmra.mrb[0].mxu0 %v498
        %v500 = vpop.f32.mrb[0].mxu0
        %v501 = vadd.f32 %v186, %v500
        %v502 = vpop.f32.mrb[0].mxu0
        %v503 = vadd.f32 %v190, %v502
        %504 = vmatprep.mubr.f32.mxu0 0.0
        %v505 = vand.u32 %v279, 4294901760
        %v506 = vsub.f32 %v279, %v505
        %v507 = vand.u32 %v506, 4294901760
        %v508 = vsub.f32 %v506, %v507
        %v509 = vand.u32 %v508, 4294901760
        %510 = vmatmul.mubr.f32.gmra.mrb[0].mxu0 %v509
        %v511 = vpop.f32.mrb[0].mxu0
        %v512 = vadd.f32 %v186, %v511
        %v513 = vpop.f32.mrb[0].mxu0
        %v514 = vadd.f32 %v190, %v513
        %515 = vmatprep.mubr.f32.mxu0 0.0
        %v516 = vand.u32 %v282, 4294901760
        %v517 = vsub.f32 %v282, %v516
        %v518 = vand.u32 %v517, 4294901760
        %v519 = vsub.f32 %v517, %v518
        %v520 = vand.u32 %v519, 4294901760
        %521 = vmatmul.mubr.f32.gmra.mrb[0].mxu0 %v520
        %v522 = vpop.f32.mrb[0].mxu0
        %v523 = vadd.f32 %v186, %v522
        %v524 = vpop.f32.mrb[0].mxu0
        %v525 = vadd.f32 %v190, %v524
        %526 = vdwg.mxu0
        %v527 = vand.u32 %v176, 4294901760
        %v528 = vsub.f32 %v176, %v527
        %v529 = vand.u32 %v528, 4294901760
        %v530 = vsub.f32 %v528, %v529
        %v531 = vand.u32 %v530, 4294901760
        %532 = vmatprep.subr.mxu0 %v531
        %v533 = vand.u32 %v175, 4294901760
        %v534 = vsub.f32 %v175, %v533
        %v535 = vand.u32 %v534, 4294901760
        %v536 = vsub.f32 %v534, %v535
        %v537 = vand.u32 %v536, 4294901760
        %538 = vmatpush1.msra.mxu0 %v537
        %539 = vmatprep.subr.mxu0 0.0
        %540 = vmatpush1.msra.mxu0 0.0
        %541 = vmatprep.subr.mxu0 0.0
        %542 = vmatpush1.msra.mxu0 0.0
        %543 = vmatprep.subr.mxu0 0.0
        %544 = vmatpush1.msra.mxu0 0.0
        %545 = vmatprep.subr.mxu0 0.0
        %546 = vmatpush1.msra.mxu0 0.0
        %547 = vmatprep.subr.mxu0 0.0
        %548 = vmatpush1.msra.mxu0 0.0
        %549 = vmatprep.subr.mxu0 0.0
        %550 = vmatpush1.msra.mxu0 0.0
        %551 = vmatprep.subr.mxu0 0.0
        %552 = vmatpush1.msra.mxu0 0.0
        %553 = vmatprep.subr.mxu0 0.0
        %554 = vmatpush1.msra.mxu0 0.0
        %555 = vmatprep.subr.mxu0 0.0
        %556 = vmatpush1.msra.mxu0 0.0
        %557 = vmatprep.subr.mxu0 0.0
        %558 = vmatpush1.msra.mxu0 0.0
        %559 = vmatprep.subr.mxu0 0.0
        %560 = vmatpush1.msra.mxu0 0.0
        %561 = vmatprep.subr.mxu0 0.0
        %562 = vmatpush1.msra.mxu0 0.0
        %563 = vmatprep.subr.mxu0 0.0
        %564 = vmatpush1.msra.mxu0 0.0
        %565 = vmatprep.subr.mxu0 0.0
        %566 = vmatpush1.msra.mxu0 0.0
        %567 = vmatprep.subr.mxu0 0.0
        %568 = vmatpush1.msra.mxu0 0.0
        %569 = vmatprep.subr.mxu0 0.0
        %570 = vmatpush1.msra.mxu0 0.0
        %571 = vmatprep.subr.mxu0 0.0
        %572 = vmatpush1.msra.mxu0 0.0
        %573 = vmatprep.subr.mxu0 0.0
        %574 = vmatpush1.msra.mxu0 0.0
        %575 = vmatprep.subr.mxu0 0.0
        %576 = vmatpush1.msra.mxu0 0.0
        %577 = vmatprep.subr.mxu0 0.0
        %578 = vmatpush1.msra.mxu0 0.0
        %579 = vmatprep.subr.mxu0 0.0
        %580 = vmatpush1.msra.mxu0 0.0
        %581 = vmatprep.subr.mxu0 0.0
        %582 = vmatpush1.msra.mxu0 0.0
        %583 = vmatprep.subr.mxu0 0.0
        %584 = vmatpush1.msra.mxu0 0.0
        %585 = vmatprep.subr.mxu0 0.0
        %586 = vmatpush1.msra.mxu0 0.0
        %587 = vmatprep.subr.mxu0 0.0
        %588 = vmatpush1.msra.mxu0 0.0
        %589 = vmatprep.subr.mxu0 0.0
        %590 = vmatpush1.msra.mxu0 0.0
        %591 = vmatprep.subr.mxu0 0.0
        %592 = vmatpush1.msra.mxu0 0.0
        %593 = vmatprep.subr.mxu0 0.0
        %594 = vmatpush1.msra.mxu0 0.0
        %595 = vmatprep.subr.mxu0 0.0
        %596 = vmatpush1.msra.mxu0 0.0
        %597 = vmatprep.subr.mxu0 0.0
        %598 = vmatpush1.msra.mxu0 0.0
        %599 = vmatprep.subr.mxu0 0.0
        %600 = vmatpush1.msra.mxu0 0.0
        %601 = vmatprep.mubr.f32.mxu0 0.0
        %v602 = vand.u32 %v237, 4294901760
        %603 = vmatmul.mubr.f32.gmra.mrb[0].mxu0 %v602
        %v604 = vpop.f32.mrb[0].mxu0
        %v605 = vadd.f32 %v358, %v604
        %v606 = vpop.f32.mrb[0].mxu0
        %v607 = vadd.f32 %v360, %v606
        %608 = vmatprep.mubr.f32.mxu0 0.0
        %v609 = vand.u32 %v240, 4294901760
        %610 = vmatmul.mubr.f32.gmra.mrb[0].mxu0 %v609
        %v611 = vpop.f32.mrb[0].mxu0
        %v612 = vadd.f32 %v369, %v611
        %v613 = vpop.f32.mrb[0].mxu0
        %v614 = vadd.f32 %v371, %v613
        %615 = vmatprep.mubr.f32.mxu0 0.0
        %v616 = vand.u32 %v243, 4294901760
        %617 = vmatmul.mubr.f32.gmra.mrb[0].mxu0 %v616
        %v618 = vpop.f32.mrb[0].mxu0
        %v619 = vadd.f32 %v380, %v618
        %v620 = vpop.f32.mrb[0].mxu0
        %v621 = vadd.f32 %v382, %v620
        %622 = vmatprep.mubr.f32.mxu0 0.0
        %v623 = vand.u32 %v246, 4294901760
        %624 = vmatmul.mubr.f32.gmra.mrb[0].mxu0 %v623
        %v625 = vpop.f32.mrb[0].mxu0
        %v626 = vadd.f32 %v391, %v625
        %v627 = vpop.f32.mrb[0].mxu0
        %v628 = vadd.f32 %v393, %v627
        %629 = vmatprep.mubr.f32.mxu0 0.0
        %v630 = vand.u32 %v249, 4294901760
        %631 = vmatmul.mubr.f32.gmra.mrb[0].mxu0 %v630
        %v632 = vpop.f32.mrb[0].mxu0
        %v633 = vadd.f32 %v402, %v632
        %v634 = vpop.f32.mrb[0].mxu0
        %v635 = vadd.f32 %v404, %v634
        %636 = vmatprep.mubr.f32.mxu0 0.0
        %v637 = vand.u32 %v252, 4294901760
        %638 = vmatmul.mubr.f32.gmra.mrb[0].mxu0 %v637
        %v639 = vpop.f32.mrb[0].mxu0
        %v640 = vadd.f32 %v413, %v639
        %v641 = vpop.f32.mrb[0].mxu0
        %v642 = vadd.f32 %v415, %v641
        %643 = vmatprep.mubr.f32.mxu0 0.0
        %v644 = vand.u32 %v255, 4294901760
        %645 = vmatmul.mubr.f32.gmra.mrb[0].mxu0 %v644
        %v646 = vpop.f32.mrb[0].mxu0
        %v647 = vadd.f32 %v424, %v646
        %v648 = vpop.f32.mrb[0].mxu0
        %v649 = vadd.f32 %v426, %v648
        %650 = vmatprep.mubr.f32.mxu0 0.0
        %v651 = vand.u32 %v258, 4294901760
        %652 = vmatmul.mubr.f32.gmra.mrb[0].mxu0 %v651
        %v653 = vpop.f32.mrb[0].mxu0
        %v654 = vadd.f32 %v435, %v653
        %v655 = vpop.f32.mrb[0].mxu0
        %v656 = vadd.f32 %v437, %v655
        %657 = vmatprep.mubr.f32.mxu0 0.0
        %v658 = vand.u32 %v261, 4294901760
        %659 = vmatmul.mubr.f32.gmra.mrb[0].mxu0 %v658
        %v660 = vpop.f32.mrb[0].mxu0
        %v661 = vadd.f32 %v446, %v660
        %v662 = vpop.f32.mrb[0].mxu0
        %v663 = vadd.f32 %v448, %v662
        %664 = vmatprep.mubr.f32.mxu0 0.0
        %v665 = vand.u32 %v264, 4294901760
        %666 = vmatmul.mubr.f32.gmra.mrb[0].mxu0 %v665
        %v667 = vpop.f32.mrb[0].mxu0
        %v668 = vadd.f32 %v457, %v667
        %v669 = vpop.f32.mrb[0].mxu0
        %v670 = vadd.f32 %v459, %v669
        %671 = vmatprep.mubr.f32.mxu0 0.0
        %v672 = vand.u32 %v267, 4294901760
        %673 = vmatmul.mubr.f32.gmra.mrb[0].mxu0 %v672
        %v674 = vpop.f32.mrb[0].mxu0
        %v675 = vadd.f32 %v468, %v674
        %v676 = vpop.f32.mrb[0].mxu0
        %v677 = vadd.f32 %v470, %v676
        %678 = vmatprep.mubr.f32.mxu0 0.0
        %v679 = vand.u32 %v270, 4294901760
        %680 = vmatmul.mubr.f32.gmra.mrb[0].mxu0 %v679
        %v681 = vpop.f32.mrb[0].mxu0
        %v682 = vadd.f32 %v479, %v681
        %v683 = vpop.f32.mrb[0].mxu0
        %v684 = vadd.f32 %v481, %v683
        %685 = vmatprep.mubr.f32.mxu0 0.0
        %v686 = vand.u32 %v273, 4294901760
        %687 = vmatmul.mubr.f32.gmra.mrb[0].mxu0 %v686
        %v688 = vpop.f32.mrb[0].mxu0
        %v689 = vadd.f32 %v490, %v688
        %v690 = vpop.f32.mrb[0].mxu0
        %v691 = vadd.f32 %v492, %v690
        %692 = vmatprep.mubr.f32.mxu0 0.0
        %v693 = vand.u32 %v276, 4294901760
        %694 = vmatmul.mubr.f32.gmra.mrb[0].mxu0 %v693
        %v695 = vpop.f32.mrb[0].mxu0
        %v696 = vadd.f32 %v501, %v695
        %v697 = vpop.f32.mrb[0].mxu0
        %v698 = vadd.f32 %v503, %v697
        %699 = vmatprep.mubr.f32.mxu0 0.0
        %v700 = vand.u32 %v279, 4294901760
        %701 = vmatmul.mubr.f32.gmra.mrb[0].mxu0 %v700
        %v702 = vpop.f32.mrb[0].mxu0
        %v703 = vadd.f32 %v512, %v702
        %v704 = vpop.f32.mrb[0].mxu0
        %v705 = vadd.f32 %v514, %v704
        %706 = vmatprep.mubr.f32.mxu0 0.0
        %v707 = vand.u32 %v282, 4294901760
        %708 = vmatmul.mubr.f32.gmra.mrb[0].mxu0 %v707
        %v709 = vpop.f32.mrb[0].mxu0
        %v710 = vadd.f32 %v523, %v709
        %v711 = vpop.f32.mrb[0].mxu0
        %v712 = vadd.f32 %v525, %v711
        %713 = vdwg.mxu0
        %v714 = vand.u32 %v176, 4294901760
        %v715 = vsub.f32 %v176, %v714
        %716 = vmatprep.subr.mxu0 %v715
        %v717 = vand.u32 %v175, 4294901760
        %v718 = vsub.f32 %v175, %v717
        %719 = vmatpush1.msra.mxu0 %v718
        %720 = vmatprep.subr.mxu0 0.0
        %721 = vmatpush1.msra.mxu0 0.0
        %722 = vmatprep.subr.mxu0 0.0
        %723 = vmatpush1.msra.mxu0 0.0
        %724 = vmatprep.subr.mxu0 0.0
        %725 = vmatpush1.msra.mxu0 0.0
        %726 = vmatprep.subr.mxu0 0.0
        %727 = vmatpush1.msra.mxu0 0.0
        %728 = vmatprep.subr.mxu0 0.0
        %729 = vmatpush1.msra.mxu0 0.0
        %730 = vmatprep.subr.mxu0 0.0
        %731 = vmatpush1.msra.mxu0 0.0
        %732 = vmatprep.subr.mxu0 0.0
        %733 = vmatpush1.msra.mxu0 0.0
        %734 = vmatprep.subr.mxu0 0.0
        %735 = vmatpush1.msra.mxu0 0.0
        %736 = vmatprep.subr.mxu0 0.0
        %737 = vmatpush1.msra.mxu0 0.0
        %738 = vmatprep.subr.mxu0 0.0
        %739 = vmatpush1.msra.mxu0 0.0
        %740 = vmatprep.subr.mxu0 0.0
        %741 = vmatpush1.msra.mxu0 0.0
        %742 = vmatprep.subr.mxu0 0.0
        %743 = vmatpush1.msra.mxu0 0.0
        %744 = vmatprep.subr.mxu0 0.0
        %745 = vmatpush1.msra.mxu0 0.0
        %746 = vmatprep.subr.mxu0 0.0
        %747 = vmatpush1.msra.mxu0 0.0
        %748 = vmatprep.subr.mxu0 0.0
        %749 = vmatpush1.msra.mxu0 0.0
        %750 = vmatprep.subr.mxu0 0.0
        %751 = vmatpush1.msra.mxu0 0.0
        %752 = vmatprep.subr.mxu0 0.0
        %753 = vmatpush1.msra.mxu0 0.0
        %754 = vmatprep.subr.mxu0 0.0
        %755 = vmatpush1.msra.mxu0 0.0
        %756 = vmatprep.subr.mxu0 0.0
        %757 = vmatpush1.msra.mxu0 0.0
        %758 = vmatprep.subr.mxu0 0.0
        %759 = vmatpush1.msra.mxu0 0.0
        %760 = vmatprep.subr.mxu0 0.0
        %761 = vmatpush1.msra.mxu0 0.0
        %762 = vmatprep.subr.mxu0 0.0
        %763 = vmatpush1.msra.mxu0 0.0
        %764 = vmatprep.subr.mxu0 0.0
        %765 = vmatpush1.msra.mxu0 0.0
        %766 = vmatprep.subr.mxu0 0.0
        %767 = vmatpush1.msra.mxu0 0.0
        %768 = vmatprep.subr.mxu0 0.0
        %769 = vmatpush1.msra.mxu0 0.0
        %770 = vmatprep.subr.mxu0 0.0
        %771 = vmatpush1.msra.mxu0 0.0
        %772 = vmatprep.subr.mxu0 0.0
        %773 = vmatpush1.msra.mxu0 0.0
        %774 = vmatprep.subr.mxu0 0.0
        %775 = vmatpush1.msra.mxu0 0.0
        %776 = vmatprep.subr.mxu0 0.0
        %777 = vmatpush1.msra.mxu0 0.0
        %778 = vmatprep.subr.mxu0 0.0
        %779 = vmatpush1.msra.mxu0 0.0
        %780 = vmatprep.subr.mxu0 0.0
        %781 = vmatpush1.msra.mxu0 0.0
        %782 = vmatprep.mubr.f32.mxu0 0.0
        %v783 = vand.u32 %v237, 4294901760
        %v784 = vsub.f32 %v237, %v783
        %785 = vmatmul.mubr.f32.gmra.mrb[0].mxu0 %v784
        %v786 = vpop.f32.mrb[0].mxu0
        %v787 = vadd.f32 %v605, %v786
        %v788 = vpop.f32.mrb[0].mxu0
        %v789 = vadd.f32 %v607, %v788
        %790 = vmatprep.mubr.f32.mxu0 0.0
        %v791 = vand.u32 %v240, 4294901760
        %v792 = vsub.f32 %v240, %v791
        %793 = vmatmul.mubr.f32.gmra.mrb[0].mxu0 %v792
        %v794 = vpop.f32.mrb[0].mxu0
        %v795 = vadd.f32 %v612, %v794
        %v796 = vpop.f32.mrb[0].mxu0
        %v797 = vadd.f32 %v614, %v796
        %798 = vmatprep.mubr.f32.mxu0 0.0
        %v799 = vand.u32 %v243, 4294901760
        %v800 = vsub.f32 %v243, %v799
        %801 = vmatmul.mubr.f32.gmra.mrb[0].mxu0 %v800
        %v802 = vpop.f32.mrb[0].mxu0
        %v803 = vadd.f32 %v619, %v802
        %v804 = vpop.f32.mrb[0].mxu0
        %v805 = vadd.f32 %v621, %v804
        %806 = vmatprep.mubr.f32.mxu0 0.0
        %v807 = vand.u32 %v246, 4294901760
        %v808 = vsub.f32 %v246, %v807
        %809 = vmatmul.mubr.f32.gmra.mrb[0].mxu0 %v808
        %v810 = vpop.f32.mrb[0].mxu0
        %v811 = vadd.f32 %v626, %v810
        %v812 = vpop.f32.mrb[0].mxu0
        %v813 = vadd.f32 %v628, %v812
        %814 = vmatprep.mubr.f32.mxu0 0.0
        %v815 = vand.u32 %v249, 4294901760
        %v816 = vsub.f32 %v249, %v815
        %817 = vmatmul.mubr.f32.gmra.mrb[0].mxu0 %v816
        %v818 = vpop.f32.mrb[0].mxu0
        %v819 = vadd.f32 %v633, %v818
        %v820 = vpop.f32.mrb[0].mxu0
        %v821 = vadd.f32 %v635, %v820
        %822 = vmatprep.mubr.f32.mxu0 0.0
        %v823 = vand.u32 %v252, 4294901760
        %v824 = vsub.f32 %v252, %v823
        %825 = vmatmul.mubr.f32.gmra.mrb[0].mxu0 %v824
        %v826 = vpop.f32.mrb[0].mxu0
        %v827 = vadd.f32 %v640, %v826
        %v828 = vpop.f32.mrb[0].mxu0
        %v829 = vadd.f32 %v642, %v828
        %830 = vmatprep.mubr.f32.mxu0 0.0
        %v831 = vand.u32 %v255, 4294901760
        %v832 = vsub.f32 %v255, %v831
        %833 = vmatmul.mubr.f32.gmra.mrb[0].mxu0 %v832
        %v834 = vpop.f32.mrb[0].mxu0
        %v835 = vadd.f32 %v647, %v834
        %v836 = vpop.f32.mrb[0].mxu0
        %v837 = vadd.f32 %v649, %v836
        %838 = vmatprep.mubr.f32.mxu0 0.0
        %v839 = vand.u32 %v258, 4294901760
        %v840 = vsub.f32 %v258, %v839
        %841 = vmatmul.mubr.f32.gmra.mrb[0].mxu0 %v840
        %v842 = vpop.f32.mrb[0].mxu0
        %v843 = vadd.f32 %v654, %v842
        %v844 = vpop.f32.mrb[0].mxu0
        %v845 = vadd.f32 %v656, %v844
        %846 = vmatprep.mubr.f32.mxu0 0.0
        %v847 = vand.u32 %v261, 4294901760
        %v848 = vsub.f32 %v261, %v847
        %849 = vmatmul.mubr.f32.gmra.mrb[0].mxu0 %v848
        %v850 = vpop.f32.mrb[0].mxu0
        %v851 = vadd.f32 %v661, %v850
        %v852 = vpop.f32.mrb[0].mxu0
        %v853 = vadd.f32 %v663, %v852
        %854 = vmatprep.mubr.f32.mxu0 0.0
        %v855 = vand.u32 %v264, 4294901760
        %v856 = vsub.f32 %v264, %v855
        %857 = vmatmul.mubr.f32.gmra.mrb[0].mxu0 %v856
        %v858 = vpop.f32.mrb[0].mxu0
        %v859 = vadd.f32 %v668, %v858
        %v860 = vpop.f32.mrb[0].mxu0
        %v861 = vadd.f32 %v670, %v860
        %862 = vmatprep.mubr.f32.mxu0 0.0
        %v863 = vand.u32 %v267, 4294901760
        %v864 = vsub.f32 %v267, %v863
        %865 = vmatmul.mubr.f32.gmra.mrb[0].mxu0 %v864
        %v866 = vpop.f32.mrb[0].mxu0
        %v867 = vadd.f32 %v675, %v866
        %v868 = vpop.f32.mrb[0].mxu0
        %v869 = vadd.f32 %v677, %v868
        %870 = vmatprep.mubr.f32.mxu0 0.0
        %v871 = vand.u32 %v270, 4294901760
        %v872 = vsub.f32 %v270, %v871
        %873 = vmatmul.mubr.f32.gmra.mrb[0].mxu0 %v872
        %v874 = vpop.f32.mrb[0].mxu0
        %v875 = vadd.f32 %v682, %v874
        %v876 = vpop.f32.mrb[0].mxu0
        %v877 = vadd.f32 %v684, %v876
        %878 = vmatprep.mubr.f32.mxu0 0.0
        %v879 = vand.u32 %v273, 4294901760
        %v880 = vsub.f32 %v273, %v879
        %881 = vmatmul.mubr.f32.gmra.mrb[0].mxu0 %v880
        %v882 = vpop.f32.mrb[0].mxu0
        %v883 = vadd.f32 %v689, %v882
        %v884 = vpop.f32.mrb[0].mxu0
        %v885 = vadd.f32 %v691, %v884
        %886 = vmatprep.mubr.f32.mxu0 0.0
        %v887 = vand.u32 %v276, 4294901760
        %v888 = vsub.f32 %v276, %v887
        %889 = vmatmul.mubr.f32.gmra.mrb[0].mxu0 %v888
        %v890 = vpop.f32.mrb[0].mxu0
        %v891 = vadd.f32 %v696, %v890
        %v892 = vpop.f32.mrb[0].mxu0
        %v893 = vadd.f32 %v698, %v892
        %894 = vmatprep.mubr.f32.mxu0 0.0
        %v895 = vand.u32 %v279, 4294901760
        %v896 = vsub.f32 %v279, %v895
        %897 = vmatmul.mubr.f32.gmra.mrb[0].mxu0 %v896
        %v898 = vpop.f32.mrb[0].mxu0
        %v899 = vadd.f32 %v703, %v898
        %v900 = vpop.f32.mrb[0].mxu0
        %v901 = vadd.f32 %v705, %v900
        %902 = vmatprep.mubr.f32.mxu0 0.0
        %v903 = vand.u32 %v282, 4294901760
        %v904 = vsub.f32 %v282, %v903
        %905 = vmatmul.mubr.f32.gmra.mrb[0].mxu0 %v904
        %v906 = vpop.f32.mrb[0].mxu0
        %v907 = vadd.f32 %v710, %v906
        %v908 = vpop.f32.mrb[0].mxu0
        %v909 = vadd.f32 %v712, %v908
        %910 = vdwg.mxu0
        %v911 = vand.u32 %v176, 4294901760
        %912 = vmatprep.subr.mxu0 %v911
        %v913 = vand.u32 %v175, 4294901760
        %914 = vmatpush1.msra.mxu0 %v913
        %915 = vmatprep.subr.mxu0 0.0
        %916 = vmatpush1.msra.mxu0 0.0
        %917 = vmatprep.subr.mxu0 0.0
        %918 = vmatpush1.msra.mxu0 0.0
        %919 = vmatprep.subr.mxu0 0.0
        %920 = vmatpush1.msra.mxu0 0.0
        %921 = vmatprep.subr.mxu0 0.0
        %922 = vmatpush1.msra.mxu0 0.0
        %923 = vmatprep.subr.mxu0 0.0
        %924 = vmatpush1.msra.mxu0 0.0
        %925 = vmatprep.subr.mxu0 0.0
        %926 = vmatpush1.msra.mxu0 0.0
        %927 = vmatprep.subr.mxu0 0.0
        %928 = vmatpush1.msra.mxu0 0.0
        %929 = vmatprep.subr.mxu0 0.0
        %930 = vmatpush1.msra.mxu0 0.0
        %931 = vmatprep.subr.mxu0 0.0
        %932 = vmatpush1.msra.mxu0 0.0
        %933 = vmatprep.subr.mxu0 0.0
        %934 = vmatpush1.msra.mxu0 0.0
        %935 = vmatprep.subr.mxu0 0.0
        %936 = vmatpush1.msra.mxu0 0.0
        %937 = vmatprep.subr.mxu0 0.0
        %938 = vmatpush1.msra.mxu0 0.0
        %939 = vmatprep.subr.mxu0 0.0
        %940 = vmatpush1.msra.mxu0 0.0
        %941 = vmatprep.subr.mxu0 0.0
        %942 = vmatpush1.msra.mxu0 0.0
        %943 = vmatprep.subr.mxu0 0.0
        %944 = vmatpush1.msra.mxu0 0.0
        %945 = vmatprep.subr.mxu0 0.0
        %946 = vmatpush1.msra.mxu0 0.0
        %947 = vmatprep.subr.mxu0 0.0
        %948 = vmatpush1.msra.mxu0 0.0
        %949 = vmatprep.subr.mxu0 0.0
        %950 = vmatpush1.msra.mxu0 0.0
        %951 = vmatprep.subr.mxu0 0.0
        %952 = vmatpush1.msra.mxu0 0.0
        %953 = vmatprep.subr.mxu0 0.0
        %954 = vmatpush1.msra.mxu0 0.0
        %955 = vmatprep.subr.mxu0 0.0
        %956 = vmatpush1.msra.mxu0 0.0
        %957 = vmatprep.subr.mxu0 0.0
        %958 = vmatpush1.msra.mxu0 0.0
        %959 = vmatprep.subr.mxu0 0.0
        %960 = vmatpush1.msra.mxu0 0.0
        %961 = vmatprep.subr.mxu0 0.0
        %962 = vmatpush1.msra.mxu0 0.0
        %963 = vmatprep.subr.mxu0 0.0
        %964 = vmatpush1.msra.mxu0 0.0
        %965 = vmatprep.subr.mxu0 0.0
        %966 = vmatpush1.msra.mxu0 0.0
        %967 = vmatprep.subr.mxu0 0.0
        %968 = vmatpush1.msra.mxu0 0.0
        %969 = vmatprep.subr.mxu0 0.0
        %970 = vmatpush1.msra.mxu0 0.0
        %971 = vmatprep.subr.mxu0 0.0
        %972 = vmatpush1.msra.mxu0 0.0
        %973 = vmatprep.subr.mxu0 0.0
        %974 = vmatpush1.msra.mxu0 0.0
        %975 = vmatprep.subr.mxu0 0.0
        %976 = vmatpush1.msra.mxu0 0.0
        %977 = vmatprep.mubr.f32.mxu0 0.0
        %v978 = vand.u32 %v237, 4294901760
        %v979 = vsub.f32 %v237, %v978
        %v980 = vand.u32 %v979, 4294901760
        %981 = vmatmul.mubr.f32.gmra.mrb[0].mxu0 %v980
        %v982 = vpop.f32.mrb[0].mxu0
        %v983 = vadd.f32 %v787, %v982
        %v984 = vpop.f32.mrb[0].mxu0
        %v985 = vadd.f32 %v789, %v984
        %986 = vmatprep.mubr.f32.mxu0 0.0
        %v987 = vand.u32 %v240, 4294901760
        %v988 = vsub.f32 %v240, %v987
        %v989 = vand.u32 %v988, 4294901760
        %990 = vmatmul.mubr.f32.gmra.mrb[0].mxu0 %v989
        %v991 = vpop.f32.mrb[0].mxu0
        %v992 = vadd.f32 %v795, %v991
        %v993 = vpop.f32.mrb[0].mxu0
        %v994 = vadd.f32 %v797, %v993
        %995 = vmatprep.mubr.f32.mxu0 0.0
        %v996 = vand.u32 %v243, 4294901760
        %v997 = vsub.f32 %v243, %v996
        %v998 = vand.u32 %v997, 4294901760
        %999 = vmatmul.mubr.f32.gmra.mrb[0].mxu0 %v998
        %v1000 = vpop.f32.mrb[0].mxu0
        %v1001 = vadd.f32 %v803, %v1000
        %v1002 = vpop.f32.mrb[0].mxu0
        %v1003 = vadd.f32 %v805, %v1002
        %1004 = vmatprep.mubr.f32.mxu0 0.0
        %v1005 = vand.u32 %v246, 4294901760
        %v1006 = vsub.f32 %v246, %v1005
        %v1007 = vand.u32 %v1006, 4294901760
        %1008 = vmatmul.mubr.f32.gmra.mrb[0].mxu0 %v1007
        %v1009 = vpop.f32.mrb[0].mxu0
        %v1010 = vadd.f32 %v811, %v1009
        %v1011 = vpop.f32.mrb[0].mxu0
        %v1012 = vadd.f32 %v813, %v1011
        %1013 = vmatprep.mubr.f32.mxu0 0.0
        %v1014 = vand.u32 %v249, 4294901760
        %v1015 = vsub.f32 %v249, %v1014
        %v1016 = vand.u32 %v1015, 4294901760
        %1017 = vmatmul.mubr.f32.gmra.mrb[0].mxu0 %v1016
        %v1018 = vpop.f32.mrb[0].mxu0
        %v1019 = vadd.f32 %v819, %v1018
        %v1020 = vpop.f32.mrb[0].mxu0
        %v1021 = vadd.f32 %v821, %v1020
        %1022 = vmatprep.mubr.f32.mxu0 0.0
        %v1023 = vand.u32 %v252, 4294901760
        %v1024 = vsub.f32 %v252, %v1023
        %v1025 = vand.u32 %v1024, 4294901760
        %1026 = vmatmul.mubr.f32.gmra.mrb[0].mxu0 %v1025
        %v1027 = vpop.f32.mrb[0].mxu0
        %v1028 = vadd.f32 %v827, %v1027
        %v1029 = vpop.f32.mrb[0].mxu0
        %v1030 = vadd.f32 %v829, %v1029
        %1031 = vmatprep.mubr.f32.mxu0 0.0
        %v1032 = vand.u32 %v255, 4294901760
        %v1033 = vsub.f32 %v255, %v1032
        %v1034 = vand.u32 %v1033, 4294901760
        %1035 = vmatmul.mubr.f32.gmra.mrb[0].mxu0 %v1034
        %v1036 = vpop.f32.mrb[0].mxu0
        %v1037 = vadd.f32 %v835, %v1036
        %v1038 = vpop.f32.mrb[0].mxu0
        %v1039 = vadd.f32 %v837, %v1038
        %1040 = vmatprep.mubr.f32.mxu0 0.0
        %v1041 = vand.u32 %v258, 4294901760
        %v1042 = vsub.f32 %v258, %v1041
        %v1043 = vand.u32 %v1042, 4294901760
        %1044 = vmatmul.mubr.f32.gmra.mrb[0].mxu0 %v1043
        %v1045 = vpop.f32.mrb[0].mxu0
        %v1046 = vadd.f32 %v843, %v1045
        %v1047 = vpop.f32.mrb[0].mxu0
        %v1048 = vadd.f32 %v845, %v1047
        %1049 = vmatprep.mubr.f32.mxu0 0.0
        %v1050 = vand.u32 %v261, 4294901760
        %v1051 = vsub.f32 %v261, %v1050
        %v1052 = vand.u32 %v1051, 4294901760
        %1053 = vmatmul.mubr.f32.gmra.mrb[0].mxu0 %v1052
        %v1054 = vpop.f32.mrb[0].mxu0
        %v1055 = vadd.f32 %v851, %v1054
        %v1056 = vpop.f32.mrb[0].mxu0
        %v1057 = vadd.f32 %v853, %v1056
        %1058 = vmatprep.mubr.f32.mxu0 0.0
        %v1059 = vand.u32 %v264, 4294901760
        %v1060 = vsub.f32 %v264, %v1059
        %v1061 = vand.u32 %v1060, 4294901760
        %1062 = vmatmul.mubr.f32.gmra.mrb[0].mxu0 %v1061
        %v1063 = vpop.f32.mrb[0].mxu0
        %v1064 = vadd.f32 %v859, %v1063
        %v1065 = vpop.f32.mrb[0].mxu0
        %v1066 = vadd.f32 %v861, %v1065
        %1067 = vmatprep.mubr.f32.mxu0 0.0
        %v1068 = vand.u32 %v267, 4294901760
        %v1069 = vsub.f32 %v267, %v1068
        %v1070 = vand.u32 %v1069, 4294901760
        %1071 = vmatmul.mubr.f32.gmra.mrb[0].mxu0 %v1070
        %v1072 = vpop.f32.mrb[0].mxu0
        %v1073 = vadd.f32 %v867, %v1072
        %v1074 = vpop.f32.mrb[0].mxu0
        %v1075 = vadd.f32 %v869, %v1074
        %1076 = vmatprep.mubr.f32.mxu0 0.0
        %v1077 = vand.u32 %v270, 4294901760
        %v1078 = vsub.f32 %v270, %v1077
        %v1079 = vand.u32 %v1078, 4294901760
        %1080 = vmatmul.mubr.f32.gmra.mrb[0].mxu0 %v1079
        %v1081 = vpop.f32.mrb[0].mxu0
        %v1082 = vadd.f32 %v875, %v1081
        %v1083 = vpop.f32.mrb[0].mxu0
        %v1084 = vadd.f32 %v877, %v1083
        %1085 = vmatprep.mubr.f32.mxu0 0.0
        %v1086 = vand.u32 %v273, 4294901760
        %v1087 = vsub.f32 %v273, %v1086
        %v1088 = vand.u32 %v1087, 4294901760
        %1089 = vmatmul.mubr.f32.gmra.mrb[0].mxu0 %v1088
        %v1090 = vpop.f32.mrb[0].mxu0
        %v1091 = vadd.f32 %v883, %v1090
        %v1092 = vpop.f32.mrb[0].mxu0
        %v1093 = vadd.f32 %v885, %v1092
        %1094 = vmatprep.mubr.f32.mxu0 0.0
        %v1095 = vand.u32 %v276, 4294901760
        %v1096 = vsub.f32 %v276, %v1095
        %v1097 = vand.u32 %v1096, 4294901760
        %1098 = vmatmul.mubr.f32.gmra.mrb[0].mxu0 %v1097
        %v1099 = vpop.f32.mrb[0].mxu0
        %v1100 = vadd.f32 %v891, %v1099
        %v1101 = vpop.f32.mrb[0].mxu0
        %v1102 = vadd.f32 %v893, %v1101
        %1103 = vmatprep.mubr.f32.mxu0 0.0
        %v1104 = vand.u32 %v279, 4294901760
        %v1105 = vsub.f32 %v279, %v1104
        %v1106 = vand.u32 %v1105, 4294901760
        %1107 = vmatmul.mubr.f32.gmra.mrb[0].mxu0 %v1106
        %v1108 = vpop.f32.mrb[0].mxu0
        %v1109 = vadd.f32 %v899, %v1108
        %v1110 = vpop.f32.mrb[0].mxu0
        %v1111 = vadd.f32 %v901, %v1110
        %1112 = vmatprep.mubr.f32.mxu0 0.0
        %v1113 = vand.u32 %v282, 4294901760
        %v1114 = vsub.f32 %v282, %v1113
        %v1115 = vand.u32 %v1114, 4294901760
        %1116 = vmatmul.mubr.f32.gmra.mrb[0].mxu0 %v1115
        %v1117 = vpop.f32.mrb[0].mxu0
        %v1118 = vadd.f32 %v907, %v1117
        %v1119 = vpop.f32.mrb[0].mxu0
        %v1120 = vadd.f32 %v909, %v1119
        %1121 = vdwg.mxu0
        %v1122 = vand.u32 %v176, 4294901760
        %v1123 = vsub.f32 %v176, %v1122
        %v1124 = vand.u32 %v1123, 4294901760
        %1125 = vmatprep.subr.mxu0 %v1124
        %v1126 = vand.u32 %v175, 4294901760
        %v1127 = vsub.f32 %v175, %v1126
        %v1128 = vand.u32 %v1127, 4294901760
        %1129 = vmatpush1.msra.mxu0 %v1128
        %1130 = vmatprep.subr.mxu0 0.0
        %1131 = vmatpush1.msra.mxu0 0.0
        %1132 = vmatprep.subr.mxu0 0.0
        %1133 = vmatpush1.msra.mxu0 0.0
        %1134 = vmatprep.subr.mxu0 0.0
        %1135 = vmatpush1.msra.mxu0 0.0
        %1136 = vmatprep.subr.mxu0 0.0
        %1137 = vmatpush1.msra.mxu0 0.0
        %1138 = vmatprep.subr.mxu0 0.0
        %1139 = vmatpush1.msra.mxu0 0.0
        %1140 = vmatprep.subr.mxu0 0.0
        %1141 = vmatpush1.msra.mxu0 0.0
        %1142 = vmatprep.subr.mxu0 0.0
        %1143 = vmatpush1.msra.mxu0 0.0
        %1144 = vmatprep.subr.mxu0 0.0
        %1145 = vmatpush1.msra.mxu0 0.0
        %1146 = vmatprep.subr.mxu0 0.0
        %1147 = vmatpush1.msra.mxu0 0.0
        %1148 = vmatprep.subr.mxu0 0.0
        %1149 = vmatpush1.msra.mxu0 0.0
        %1150 = vmatprep.subr.mxu0 0.0
        %1151 = vmatpush1.msra.mxu0 0.0
        %1152 = vmatprep.subr.mxu0 0.0
        %1153 = vmatpush1.msra.mxu0 0.0
        %1154 = vmatprep.subr.mxu0 0.0
        %1155 = vmatpush1.msra.mxu0 0.0
        %1156 = vmatprep.subr.mxu0 0.0
        %1157 = vmatpush1.msra.mxu0 0.0
        %1158 = vmatprep.subr.mxu0 0.0
        %1159 = vmatpush1.msra.mxu0 0.0
        %1160 = vmatprep.subr.mxu0 0.0
        %1161 = vmatpush1.msra.mxu0 0.0
        %1162 = vmatprep.subr.mxu0 0.0
        %1163 = vmatpush1.msra.mxu0 0.0
        %1164 = vmatprep.subr.mxu0 0.0
        %1165 = vmatpush1.msra.mxu0 0.0
        %1166 = vmatprep.subr.mxu0 0.0
        %1167 = vmatpush1.msra.mxu0 0.0
        %1168 = vmatprep.subr.mxu0 0.0
        %1169 = vmatpush1.msra.mxu0 0.0
        %1170 = vmatprep.subr.mxu0 0.0
        %1171 = vmatpush1.msra.mxu0 0.0
        %1172 = vmatprep.subr.mxu0 0.0
        %1173 = vmatpush1.msra.mxu0 0.0
        %1174 = vmatprep.subr.mxu0 0.0
        %1175 = vmatpush1.msra.mxu0 0.0
        %1176 = vmatprep.subr.mxu0 0.0
        %1177 = vmatpush1.msra.mxu0 0.0
        %1178 = vmatprep.subr.mxu0 0.0
        %1179 = vmatpush1.msra.mxu0 0.0
        %1180 = vmatprep.subr.mxu0 0.0
        %1181 = vmatpush1.msra.mxu0 0.0
        %1182 = vmatprep.subr.mxu0 0.0
        %1183 = vmatpush1.msra.mxu0 0.0
        %1184 = vmatprep.subr.mxu0 0.0
        %1185 = vmatpush1.msra.mxu0 0.0
        %1186 = vmatprep.subr.mxu0 0.0
        %1187 = vmatpush1.msra.mxu0 0.0
        %1188 = vmatprep.subr.mxu0 0.0
        %1189 = vmatpush1.msra.mxu0 0.0
        %1190 = vmatprep.subr.mxu0 0.0
        %1191 = vmatpush1.msra.mxu0 0.0
        %1192 = vmatprep.mubr.f32.mxu0 0.0
        %v1193 = vand.u32 %v237, 4294901760
        %1194 = vmatmul.mubr.f32.gmra.mrb[0].mxu0 %v1193
        %v1195 = vpop.f32.mrb[0].mxu0
        %v1196 = vadd.f32 %v983, %v1195
        %v1197 = vpop.f32.mrb[0].mxu0
        %v1198 = vadd.f32 %v985, %v1197
        %1199 = vmatprep.mubr.f32.mxu0 0.0
        %v1200 = vand.u32 %v240, 4294901760
        %1201 = vmatmul.mubr.f32.gmra.mrb[0].mxu0 %v1200
        %v1202 = vpop.f32.mrb[0].mxu0
        %v1203 = vadd.f32 %v992, %v1202
        %v1204 = vpop.f32.mrb[0].mxu0
        %v1205 = vadd.f32 %v994, %v1204
        %1206 = vmatprep.mubr.f32.mxu0 0.0
        %v1207 = vand.u32 %v243, 4294901760
        %1208 = vmatmul.mubr.f32.gmra.mrb[0].mxu0 %v1207
        %v1209 = vpop.f32.mrb[0].mxu0
        %v1210 = vadd.f32 %v1001, %v1209
        %v1211 = vpop.f32.mrb[0].mxu0
        %v1212 = vadd.f32 %v1003, %v1211
        %1213 = vmatprep.mubr.f32.mxu0 0.0
        %v1214 = vand.u32 %v246, 4294901760
        %1215 = vmatmul.mubr.f32.gmra.mrb[0].mxu0 %v1214
        %v1216 = vpop.f32.mrb[0].mxu0
        %v1217 = vadd.f32 %v1010, %v1216
        %v1218 = vpop.f32.mrb[0].mxu0
        %v1219 = vadd.f32 %v1012, %v1218
        %1220 = vmatprep.mubr.f32.mxu0 0.0
        %v1221 = vand.u32 %v249, 4294901760
        %1222 = vmatmul.mubr.f32.gmra.mrb[0].mxu0 %v1221
        %v1223 = vpop.f32.mrb[0].mxu0
        %v1224 = vadd.f32 %v1019, %v1223
        %v1225 = vpop.f32.mrb[0].mxu0
        %v1226 = vadd.f32 %v1021, %v1225
        %1227 = vmatprep.mubr.f32.mxu0 0.0
        %v1228 = vand.u32 %v252, 4294901760
        %1229 = vmatmul.mubr.f32.gmra.mrb[0].mxu0 %v1228
        %v1230 = vpop.f32.mrb[0].mxu0
        %v1231 = vadd.f32 %v1028, %v1230
        %v1232 = vpop.f32.mrb[0].mxu0
        %v1233 = vadd.f32 %v1030, %v1232
        %1234 = vmatprep.mubr.f32.mxu0 0.0
        %v1235 = vand.u32 %v255, 4294901760
        %1236 = vmatmul.mubr.f32.gmra.mrb[0].mxu0 %v1235
        %v1237 = vpop.f32.mrb[0].mxu0
        %v1238 = vadd.f32 %v1037, %v1237
        %v1239 = vpop.f32.mrb[0].mxu0
        %v1240 = vadd.f32 %v1039, %v1239
        %1241 = vmatprep.mubr.f32.mxu0 0.0
        %v1242 = vand.u32 %v258, 4294901760
        %1243 = vmatmul.mubr.f32.gmra.mrb[0].mxu0 %v1242
        %v1244 = vpop.f32.mrb[0].mxu0
        %v1245 = vadd.f32 %v1046, %v1244
        %v1246 = vpop.f32.mrb[0].mxu0
        %v1247 = vadd.f32 %v1048, %v1246
        %1248 = vmatprep.mubr.f32.mxu0 0.0
        %v1249 = vand.u32 %v261, 4294901760
        %1250 = vmatmul.mubr.f32.gmra.mrb[0].mxu0 %v1249
        %v1251 = vpop.f32.mrb[0].mxu0
        %v1252 = vadd.f32 %v1055, %v1251
        %v1253 = vpop.f32.mrb[0].mxu0
        %v1254 = vadd.f32 %v1057, %v1253
        %1255 = vmatprep.mubr.f32.mxu0 0.0
        %v1256 = vand.u32 %v264, 4294901760
        %1257 = vmatmul.mubr.f32.gmra.mrb[0].mxu0 %v1256
        %v1258 = vpop.f32.mrb[0].mxu0
        %v1259 = vadd.f32 %v1064, %v1258
        %v1260 = vpop.f32.mrb[0].mxu0
        %v1261 = vadd.f32 %v1066, %v1260
        %1262 = vmatprep.mubr.f32.mxu0 0.0
        %v1263 = vand.u32 %v267, 4294901760
        %1264 = vmatmul.mubr.f32.gmra.mrb[0].mxu0 %v1263
        %v1265 = vpop.f32.mrb[0].mxu0
        %v1266 = vadd.f32 %v1073, %v1265
        %v1267 = vpop.f32.mrb[0].mxu0
        %v1268 = vadd.f32 %v1075, %v1267
        %1269 = vmatprep.mubr.f32.mxu0 0.0
        %v1270 = vand.u32 %v270, 4294901760
        %1271 = vmatmul.mubr.f32.gmra.mrb[0].mxu0 %v1270
        %v1272 = vpop.f32.mrb[0].mxu0
        %v1273 = vadd.f32 %v1082, %v1272
        %v1274 = vpop.f32.mrb[0].mxu0
        %v1275 = vadd.f32 %v1084, %v1274
        %1276 = vmatprep.mubr.f32.mxu0 0.0
        %v1277 = vand.u32 %v273, 4294901760
        %1278 = vmatmul.mubr.f32.gmra.mrb[0].mxu0 %v1277
        %v1279 = vpop.f32.mrb[0].mxu0
        %v1280 = vadd.f32 %v1091, %v1279
        %v1281 = vpop.f32.mrb[0].mxu0
        %v1282 = vadd.f32 %v1093, %v1281
        %1283 = vmatprep.mubr.f32.mxu0 0.0
        %v1284 = vand.u32 %v276, 4294901760
        %1285 = vmatmul.mubr.f32.gmra.mrb[0].mxu0 %v1284
        %v1286 = vpop.f32.mrb[0].mxu0
        %v1287 = vadd.f32 %v1100, %v1286
        %v1288 = vpop.f32.mrb[0].mxu0
        %v1289 = vadd.f32 %v1102, %v1288
        %1290 = vmatprep.mubr.f32.mxu0 0.0
        %v1291 = vand.u32 %v279, 4294901760
        %1292 = vmatmul.mubr.f32.gmra.mrb[0].mxu0 %v1291
        %v1293 = vpop.f32.mrb[0].mxu0
        %v1294 = vadd.f32 %v1109, %v1293
        %v1295 = vpop.f32.mrb[0].mxu0
        %v1296 = vadd.f32 %v1111, %v1295
        %1297 = vmatprep.mubr.f32.mxu0 0.0
        %v1298 = vand.u32 %v282, 4294901760
        %1299 = vmatmul.mubr.f32.gmra.mrb[0].mxu0 %v1298
        %v1300 = vpop.f32.mrb[0].mxu0
        %v1301 = vadd.f32 %v1118, %v1300
        %v1302 = vpop.f32.mrb[0].mxu0
        %v1303 = vadd.f32 %v1120, %v1302
        %1304 = vdwg.mxu0
        %v1305 = vand.u32 %v176, 4294901760
        %1306 = vmatprep.subr.mxu0 %v1305
        %v1307 = vand.u32 %v175, 4294901760
        %1308 = vmatpush1.msra.mxu0 %v1307
        %1309 = vmatprep.subr.mxu0 0.0
        %1310 = vmatpush1.msra.mxu0 0.0
        %1311 = vmatprep.subr.mxu0 0.0
        %1312 = vmatpush1.msra.mxu0 0.0
        %1313 = vmatprep.subr.mxu0 0.0
        %1314 = vmatpush1.msra.mxu0 0.0
        %1315 = vmatprep.subr.mxu0 0.0
        %1316 = vmatpush1.msra.mxu0 0.0
        %1317 = vmatprep.subr.mxu0 0.0
        %1318 = vmatpush1.msra.mxu0 0.0
        %1319 = vmatprep.subr.mxu0 0.0
        %1320 = vmatpush1.msra.mxu0 0.0
        %1321 = vmatprep.subr.mxu0 0.0
        %1322 = vmatpush1.msra.mxu0 0.0
        %1323 = vmatprep.subr.mxu0 0.0
        %1324 = vmatpush1.msra.mxu0 0.0
        %1325 = vmatprep.subr.mxu0 0.0
        %1326 = vmatpush1.msra.mxu0 0.0
        %1327 = vmatprep.subr.mxu0 0.0
        %1328 = vmatpush1.msra.mxu0 0.0
        %1329 = vmatprep.subr.mxu0 0.0
        %1330 = vmatpush1.msra.mxu0 0.0
        %1331 = vmatprep.subr.mxu0 0.0
        %1332 = vmatpush1.msra.mxu0 0.0
        %1333 = vmatprep.subr.mxu0 0.0
        %1334 = vmatpush1.msra.mxu0 0.0
        %1335 = vmatprep.subr.mxu0 0.0
        %1336 = vmatpush1.msra.mxu0 0.0
        %1337 = vmatprep.subr.mxu0 0.0
        %1338 = vmatpush1.msra.mxu0 0.0
        %1339 = vmatprep.subr.mxu0 0.0
        %1340 = vmatpush1.msra.mxu0 0.0
        %1341 = vmatprep.subr.mxu0 0.0
        %1342 = vmatpush1.msra.mxu0 0.0
        %1343 = vmatprep.subr.mxu0 0.0
        %1344 = vmatpush1.msra.mxu0 0.0
        %1345 = vmatprep.subr.mxu0 0.0
        %1346 = vmatpush1.msra.mxu0 0.0
        %1347 = vmatprep.subr.mxu0 0.0
        %1348 = vmatpush1.msra.mxu0 0.0
        %1349 = vmatprep.subr.mxu0 0.0
        %1350 = vmatpush1.msra.mxu0 0.0
        %1351 = vmatprep.subr.mxu0 0.0
        %1352 = vmatpush1.msra.mxu0 0.0
        %1353 = vmatprep.subr.mxu0 0.0
        %1354 = vmatpush1.msra.mxu0 0.0
        %1355 = vmatprep.subr.mxu0 0.0
        %1356 = vmatpush1.msra.mxu0 0.0
        %1357 = vmatprep.subr.mxu0 0.0
        %1358 = vmatpush1.msra.mxu0 0.0
        %1359 = vmatprep.subr.mxu0 0.0
        %1360 = vmatpush1.msra.mxu0 0.0
        %1361 = vmatprep.subr.mxu0 0.0
        %1362 = vmatpush1.msra.mxu0 0.0
        %1363 = vmatprep.subr.mxu0 0.0
        %1364 = vmatpush1.msra.mxu0 0.0
        %1365 = vmatprep.subr.mxu0 0.0
        %1366 = vmatpush1.msra.mxu0 0.0
        %1367 = vmatprep.subr.mxu0 0.0
        %1368 = vmatpush1.msra.mxu0 0.0
        %1369 = vmatprep.subr.mxu0 0.0
        %1370 = vmatpush1.msra.mxu0 0.0
        %1371 = vmatprep.mubr.f32.mxu0 0.0
        %v1372 = vand.u32 %v237, 4294901760
        %1373 = vmatmul.mubr.f32.gmra.mrb[0].mxu0 %v1372
        %v1374 = vpop.f32.mrb[0].mxu0
        %v1375 = vadd.f32 %v1196, %v1374
        %v1376 = vpop.f32.mrb[0].mxu0
        %v1377 = vadd.f32 %v1198, %v1376
        %1378 = vmatprep.mubr.f32.mxu0 0.0
        %v1379 = vand.u32 %v240, 4294901760
        %1380 = vmatmul.mubr.f32.gmra.mrb[0].mxu0 %v1379
        %v1381 = vpop.f32.mrb[0].mxu0
        %v1382 = vadd.f32 %v1203, %v1381
        %v1383 = vpop.f32.mrb[0].mxu0
        %v1384 = vadd.f32 %v1205, %v1383
        %1385 = vmatprep.mubr.f32.mxu0 0.0
        %v1386 = vand.u32 %v243, 4294901760
        %1387 = vmatmul.mubr.f32.gmra.mrb[0].mxu0 %v1386
        %v1388 = vpop.f32.mrb[0].mxu0
        %v1389 = vadd.f32 %v1210, %v1388
        %v1390 = vpop.f32.mrb[0].mxu0
        %v1391 = vadd.f32 %v1212, %v1390
        %1392 = vmatprep.mubr.f32.mxu0 0.0
        %v1393 = vand.u32 %v246, 4294901760
        %1394 = vmatmul.mubr.f32.gmra.mrb[0].mxu0 %v1393
        %v1395 = vpop.f32.mrb[0].mxu0
        %v1396 = vadd.f32 %v1217, %v1395
        %v1397 = vpop.f32.mrb[0].mxu0
        %v1398 = vadd.f32 %v1219, %v1397
        %1399 = vmatprep.mubr.f32.mxu0 0.0
        %v1400 = vand.u32 %v249, 4294901760
        %1401 = vmatmul.mubr.f32.gmra.mrb[0].mxu0 %v1400
        %v1402 = vpop.f32.mrb[0].mxu0
        %v1403 = vadd.f32 %v1224, %v1402
        %v1404 = vpop.f32.mrb[0].mxu0
        %v1405 = vadd.f32 %v1226, %v1404
        %1406 = vmatprep.mubr.f32.mxu0 0.0
        %v1407 = vand.u32 %v252, 4294901760
        %1408 = vmatmul.mubr.f32.gmra.mrb[0].mxu0 %v1407
        %v1409 = vpop.f32.mrb[0].mxu0
        %v1410 = vadd.f32 %v1231, %v1409
        %v1411 = vpop.f32.mrb[0].mxu0
        %v1412 = vadd.f32 %v1233, %v1411
        %1413 = vmatprep.mubr.f32.mxu0 0.0
        %v1414 = vand.u32 %v255, 4294901760
        %1415 = vmatmul.mubr.f32.gmra.mrb[0].mxu0 %v1414
        %v1416 = vpop.f32.mrb[0].mxu0
        %v1417 = vadd.f32 %v1238, %v1416
        %v1418 = vpop.f32.mrb[0].mxu0
        %v1419 = vadd.f32 %v1240, %v1418
        %1420 = vmatprep.mubr.f32.mxu0 0.0
        %v1421 = vand.u32 %v258, 4294901760
        %1422 = vmatmul.mubr.f32.gmra.mrb[0].mxu0 %v1421
        %v1423 = vpop.f32.mrb[0].mxu0
        %v1424 = vadd.f32 %v1245, %v1423
        %v1425 = vpop.f32.mrb[0].mxu0
        %v1426 = vadd.f32 %v1247, %v1425
        %1427 = vmatprep.mubr.f32.mxu0 0.0
        %v1428 = vand.u32 %v261, 4294901760
        %1429 = vmatmul.mubr.f32.gmra.mrb[0].mxu0 %v1428
        %v1430 = vpop.f32.mrb[0].mxu0
        %v1431 = vadd.f32 %v1252, %v1430
        %v1432 = vpop.f32.mrb[0].mxu0
        %v1433 = vadd.f32 %v1254, %v1432
        %1434 = vmatprep.mubr.f32.mxu0 0.0
        %v1435 = vand.u32 %v264, 4294901760
        %1436 = vmatmul.mubr.f32.gmra.mrb[0].mxu0 %v1435
        %v1437 = vpop.f32.mrb[0].mxu0
        %v1438 = vadd.f32 %v1259, %v1437
        %v1439 = vpop.f32.mrb[0].mxu0
        %v1440 = vadd.f32 %v1261, %v1439
        %1441 = vmatprep.mubr.f32.mxu0 0.0
        %v1442 = vand.u32 %v267, 4294901760
        %1443 = vmatmul.mubr.f32.gmra.mrb[0].mxu0 %v1442
        %v1444 = vpop.f32.mrb[0].mxu0
        %v1445 = vadd.f32 %v1266, %v1444
        %v1446 = vpop.f32.mrb[0].mxu0
        %v1447 = vadd.f32 %v1268, %v1446
        %1448 = vmatprep.mubr.f32.mxu0 0.0
        %v1449 = vand.u32 %v270, 4294901760
        %1450 = vmatmul.mubr.f32.gmra.mrb[0].mxu0 %v1449
        %v1451 = vpop.f32.mrb[0].mxu0
        %v1452 = vadd.f32 %v1273, %v1451
        %v1453 = vpop.f32.mrb[0].mxu0
        %v1454 = vadd.f32 %v1275, %v1453
        %1455 = vmatprep.mubr.f32.mxu0 0.0
        %v1456 = vand.u32 %v273, 4294901760
        %1457 = vmatmul.mubr.f32.gmra.mrb[0].mxu0 %v1456
        %v1458 = vpop.f32.mrb[0].mxu0
        %v1459 = vadd.f32 %v1280, %v1458
        %v1460 = vpop.f32.mrb[0].mxu0
        %v1461 = vadd.f32 %v1282, %v1460
        %1462 = vmatprep.mubr.f32.mxu0 0.0
        %v1463 = vand.u32 %v276, 4294901760
        %1464 = vmatmul.mubr.f32.gmra.mrb[0].mxu0 %v1463
        %v1465 = vpop.f32.mrb[0].mxu0
        %v1466 = vadd.f32 %v1287, %v1465
        %v1467 = vpop.f32.mrb[0].mxu0
        %v1468 = vadd.f32 %v1289, %v1467
        %1469 = vmatprep.mubr.f32.mxu0 0.0
        %v1470 = vand.u32 %v279, 4294901760
        %1471 = vmatmul.mubr.f32.gmra.mrb[0].mxu0 %v1470
        %v1472 = vpop.f32.mrb[0].mxu0
        %v1473 = vadd.f32 %v1294, %v1472
        %v1474 = vpop.f32.mrb[0].mxu0
        %v1475 = vadd.f32 %v1296, %v1474
        %1476 = vmatprep.mubr.f32.mxu0 0.0
        %v1477 = vand.u32 %v282, 4294901760
        %1478 = vmatmul.mubr.f32.gmra.mrb[0].mxu0 %v1477
        %v1479 = vpop.f32.mrb[0].mxu0
        %v1480 = vadd.f32 %v1301, %v1479
        %v1481 = vpop.f32.mrb[0].mxu0
        %v1482 = vadd.f32 %v1303, %v1481
        %1483 = vdwg.mxu0
        %v1484 = vand.u32 %v178, 4294901760
        %1485 = vmatprep.subr.mxu0 %v1484
        %v1486 = vand.u32 %v177, 4294901760
        %1487 = vmatpush1.msra.mxu0 %v1486
        %1488 = vmatprep.subr.mxu0 0.0
        %1489 = vmatpush1.msra.mxu0 0.0
        %1490 = vmatprep.subr.mxu0 0.0
        %1491 = vmatpush1.msra.mxu0 0.0
        %1492 = vmatprep.subr.mxu0 0.0
        %1493 = vmatpush1.msra.mxu0 0.0
        %1494 = vmatprep.subr.mxu0 0.0
        %1495 = vmatpush1.msra.mxu0 0.0
        %1496 = vmatprep.subr.mxu0 0.0
        %1497 = vmatpush1.msra.mxu0 0.0
        %1498 = vmatprep.subr.mxu0 0.0
        %1499 = vmatpush1.msra.mxu0 0.0
        %1500 = vmatprep.subr.mxu0 0.0
        %1501 = vmatpush1.msra.mxu0 0.0
        %1502 = vmatprep.subr.mxu0 0.0
        %1503 = vmatpush1.msra.mxu0 0.0
        %1504 = vmatprep.subr.mxu0 0.0
        %1505 = vmatpush1.msra.mxu0 0.0
        %1506 = vmatprep.subr.mxu0 0.0
        %1507 = vmatpush1.msra.mxu0 0.0
        %1508 = vmatprep.subr.mxu0 0.0
        %1509 = vmatpush1.msra.mxu0 0.0
        %1510 = vmatprep.subr.mxu0 0.0
        %1511 = vmatpush1.msra.mxu0 0.0
        %1512 = vmatprep.subr.mxu0 0.0
        %1513 = vmatpush1.msra.mxu0 0.0
        %1514 = vmatprep.subr.mxu0 0.0
        %1515 = vmatpush1.msra.mxu0 0.0
        %1516 = vmatprep.subr.mxu0 0.0
        %1517 = vmatpush1.msra.mxu0 0.0
        %1518 = vmatprep.subr.mxu0 0.0
        %1519 = vmatpush1.msra.mxu0 0.0
        %1520 = vmatprep.subr.mxu0 0.0
        %1521 = vmatpush1.msra.mxu0 0.0
        %1522 = vmatprep.subr.mxu0 0.0
        %1523 = vmatpush1.msra.mxu0 0.0
        %1524 = vmatprep.subr.mxu0 0.0
        %1525 = vmatpush1.msra.mxu0 0.0
        %1526 = vmatprep.subr.mxu0 0.0
        %1527 = vmatpush1.msra.mxu0 0.0
        %1528 = vmatprep.subr.mxu0 0.0
        %1529 = vmatpush1.msra.mxu0 0.0
        %1530 = vmatprep.subr.mxu0 0.0
        %1531 = vmatpush1.msra.mxu0 0.0
        %1532 = vmatprep.subr.mxu0 0.0
        %1533 = vmatpush1.msra.mxu0 0.0
        %1534 = vmatprep.subr.mxu0 0.0
        %1535 = vmatpush1.msra.mxu0 0.0
        %1536 = vmatprep.subr.mxu0 0.0
        %1537 = vmatpush1.msra.mxu0 0.0
        %1538 = vmatprep.subr.mxu0 0.0
        %1539 = vmatpush1.msra.mxu0 0.0
        %1540 = vmatprep.subr.mxu0 0.0
        %1541 = vmatpush1.msra.mxu0 0.0
        %1542 = vmatprep.subr.mxu0 0.0
        %1543 = vmatpush1.msra.mxu0 0.0
        %1544 = vmatprep.subr.mxu0 0.0
        %1545 = vmatpush1.msra.mxu0 0.0
        %1546 = vmatprep.subr.mxu0 0.0
        %1547 = vmatpush1.msra.mxu0 0.0
        %1548 = vmatprep.subr.mxu0 0.0
        %1549 = vmatpush1.msra.mxu0 0.0
        %1550 = vmatprep.mubr.f32.mxu0 0.0
        %v1551 = vand.u32 %v237, 4294901760
        %v1552 = vsub.f32 %v237, %v1551
        %v1553 = vand.u32 %v1552, 4294901760
        %v1554 = vsub.f32 %v1552, %v1553
        %v1555 = vand.u32 %v1554, 4294901760
        %1556 = vmatmul.mubr.f32.gmra.mrb[0].mxu0 %v1555
        %v1557 = vpop.f32.mrb[0].mxu0
        %v1558 = vadd.f32 %v194, %v1557
        %v1559 = vpop.f32.mrb[0].mxu0
        %v1560 = vadd.f32 %v198, %v1559
        %1561 = vmatprep.mubr.f32.mxu0 0.0
        %v1562 = vand.u32 %v240, 4294901760
        %v1563 = vsub.f32 %v240, %v1562
        %v1564 = vand.u32 %v1563, 4294901760
        %v1565 = vsub.f32 %v1563, %v1564
        %v1566 = vand.u32 %v1565, 4294901760
        %1567 = vmatmul.mubr.f32.gmra.mrb[0].mxu0 %v1566
        %v1568 = vpop.f32.mrb[0].mxu0
        %v1569 = vadd.f32 %v194, %v1568
        %v1570 = vpop.f32.mrb[0].mxu0
        %v1571 = vadd.f32 %v198, %v1570
        %1572 = vmatprep.mubr.f32.mxu0 0.0
        %v1573 = vand.u32 %v243, 4294901760
        %v1574 = vsub.f32 %v243, %v1573
        %v1575 = vand.u32 %v1574, 4294901760
        %v1576 = vsub.f32 %v1574, %v1575
        %v1577 = vand.u32 %v1576, 4294901760
        %1578 = vmatmul.mubr.f32.gmra.mrb[0].mxu0 %v1577
        %v1579 = vpop.f32.mrb[0].mxu0
        %v1580 = vadd.f32 %v194, %v1579
        %v1581 = vpop.f32.mrb[0].mxu0
        %v1582 = vadd.f32 %v198, %v1581
        %1583 = vmatprep.mubr.f32.mxu0 0.0
        %v1584 = vand.u32 %v246, 4294901760
        %v1585 = vsub.f32 %v246, %v1584
        %v1586 = vand.u32 %v1585, 4294901760
        %v1587 = vsub.f32 %v1585, %v1586
        %v1588 = vand.u32 %v1587, 4294901760
        %1589 = vmatmul.mubr.f32.gmra.mrb[0].mxu0 %v1588
        %v1590 = vpop.f32.mrb[0].mxu0
        %v1591 = vadd.f32 %v194, %v1590
        %v1592 = vpop.f32.mrb[0].mxu0
        %v1593 = vadd.f32 %v198, %v1592
        %1594 = vmatprep.mubr.f32.mxu0 0.0
        %v1595 = vand.u32 %v249, 4294901760
        %v1596 = vsub.f32 %v249, %v1595
        %v1597 = vand.u32 %v1596, 4294901760
        %v1598 = vsub.f32 %v1596, %v1597
        %v1599 = vand.u32 %v1598, 4294901760
        %1600 = vmatmul.mubr.f32.gmra.mrb[0].mxu0 %v1599
        %v1601 = vpop.f32.mrb[0].mxu0
        %v1602 = vadd.f32 %v194, %v1601
        %v1603 = vpop.f32.mrb[0].mxu0
        %v1604 = vadd.f32 %v198, %v1603
        %1605 = vmatprep.mubr.f32.mxu0 0.0
        %v1606 = vand.u32 %v252, 4294901760
        %v1607 = vsub.f32 %v252, %v1606
        %v1608 = vand.u32 %v1607, 4294901760
        %v1609 = vsub.f32 %v1607, %v1608
        %v1610 = vand.u32 %v1609, 4294901760
        %1611 = vmatmul.mubr.f32.gmra.mrb[0].mxu0 %v1610
        %v1612 = vpop.f32.mrb[0].mxu0
        %v1613 = vadd.f32 %v194, %v1612
        %v1614 = vpop.f32.mrb[0].mxu0
        %v1615 = vadd.f32 %v198, %v1614
        %1616 = vmatprep.mubr.f32.mxu0 0.0
        %v1617 = vand.u32 %v255, 4294901760
        %v1618 = vsub.f32 %v255, %v1617
        %v1619 = vand.u32 %v1618, 4294901760
        %v1620 = vsub.f32 %v1618, %v1619
        %v1621 = vand.u32 %v1620, 4294901760
        %1622 = vmatmul.mubr.f32.gmra.mrb[0].mxu0 %v1621
        %v1623 = vpop.f32.mrb[0].mxu0
        %v1624 = vadd.f32 %v194, %v1623
        %v1625 = vpop.f32.mrb[0].mxu0
        %v1626 = vadd.f32 %v198, %v1625
        %1627 = vmatprep.mubr.f32.mxu0 0.0
        %v1628 = vand.u32 %v258, 4294901760
        %v1629 = vsub.f32 %v258, %v1628
        %v1630 = vand.u32 %v1629, 4294901760
        %v1631 = vsub.f32 %v1629, %v1630
        %v1632 = vand.u32 %v1631, 4294901760
        %1633 = vmatmul.mubr.f32.gmra.mrb[0].mxu0 %v1632
        %v1634 = vpop.f32.mrb[0].mxu0
        %v1635 = vadd.f32 %v194, %v1634
        %v1636 = vpop.f32.mrb[0].mxu0
        %v1637 = vadd.f32 %v198, %v1636
        %1638 = vmatprep.mubr.f32.mxu0 0.0
        %v1639 = vand.u32 %v261, 4294901760
        %v1640 = vsub.f32 %v261, %v1639
        %v1641 = vand.u32 %v1640, 4294901760
        %v1642 = vsub.f32 %v1640, %v1641
        %v1643 = vand.u32 %v1642, 4294901760
        %1644 = vmatmul.mubr.f32.gmra.mrb[0].mxu0 %v1643
        %v1645 = vpop.f32.mrb[0].mxu0
        %v1646 = vadd.f32 %v194, %v1645
        %v1647 = vpop.f32.mrb[0].mxu0
        %v1648 = vadd.f32 %v198, %v1647
        %1649 = vmatprep.mubr.f32.mxu0 0.0
        %v1650 = vand.u32 %v264, 4294901760
        %v1651 = vsub.f32 %v264, %v1650
        %v1652 = vand.u32 %v1651, 4294901760
        %v1653 = vsub.f32 %v1651, %v1652
        %v1654 = vand.u32 %v1653, 4294901760
        %1655 = vmatmul.mubr.f32.gmra.mrb[0].mxu0 %v1654
        %v1656 = vpop.f32.mrb[0].mxu0
        %v1657 = vadd.f32 %v194, %v1656
        %v1658 = vpop.f32.mrb[0].mxu0
        %v1659 = vadd.f32 %v198, %v1658
        %1660 = vmatprep.mubr.f32.mxu0 0.0
        %v1661 = vand.u32 %v267, 4294901760
        %v1662 = vsub.f32 %v267, %v1661
        %v1663 = vand.u32 %v1662, 4294901760
        %v1664 = vsub.f32 %v1662, %v1663
        %v1665 = vand.u32 %v1664, 4294901760
        %1666 = vmatmul.mubr.f32.gmra.mrb[0].mxu0 %v1665
        %v1667 = vpop.f32.mrb[0].mxu0
        %v1668 = vadd.f32 %v194, %v1667
        %v1669 = vpop.f32.mrb[0].mxu0
        %v1670 = vadd.f32 %v198, %v1669
        %1671 = vmatprep.mubr.f32.mxu0 0.0
        %v1672 = vand.u32 %v270, 4294901760
        %v1673 = vsub.f32 %v270, %v1672
        %v1674 = vand.u32 %v1673, 4294901760
        %v1675 = vsub.f32 %v1673, %v1674
        %v1676 = vand.u32 %v1675, 4294901760
        %1677 = vmatmul.mubr.f32.gmra.mrb[0].mxu0 %v1676
        %v1678 = vpop.f32.mrb[0].mxu0
        %v1679 = vadd.f32 %v194, %v1678
        %v1680 = vpop.f32.mrb[0].mxu0
        %v1681 = vadd.f32 %v198, %v1680
        %1682 = vmatprep.mubr.f32.mxu0 0.0
        %v1683 = vand.u32 %v273, 4294901760
        %v1684 = vsub.f32 %v273, %v1683
        %v1685 = vand.u32 %v1684, 4294901760
        %v1686 = vsub.f32 %v1684, %v1685
        %v1687 = vand.u32 %v1686, 4294901760
        %1688 = vmatmul.mubr.f32.gmra.mrb[0].mxu0 %v1687
        %v1689 = vpop.f32.mrb[0].mxu0
        %v1690 = vadd.f32 %v194, %v1689
        %v1691 = vpop.f32.mrb[0].mxu0
        %v1692 = vadd.f32 %v198, %v1691
        %1693 = vmatprep.mubr.f32.mxu0 0.0
        %v1694 = vand.u32 %v276, 4294901760
        %v1695 = vsub.f32 %v276, %v1694
        %v1696 = vand.u32 %v1695, 4294901760
        %v1697 = vsub.f32 %v1695, %v1696
        %v1698 = vand.u32 %v1697, 4294901760
        %1699 = vmatmul.mubr.f32.gmra.mrb[0].mxu0 %v1698
        %v1700 = vpop.f32.mrb[0].mxu0
        %v1701 = vadd.f32 %v194, %v1700
        %v1702 = vpop.f32.mrb[0].mxu0
        %v1703 = vadd.f32 %v198, %v1702
        %1704 = vmatprep.mubr.f32.mxu0 0.0
        %v1705 = vand.u32 %v279, 4294901760
        %v1706 = vsub.f32 %v279, %v1705
        %v1707 = vand.u32 %v1706, 4294901760
        %v1708 = vsub.f32 %v1706, %v1707
        %v1709 = vand.u32 %v1708, 4294901760
        %1710 = vmatmul.mubr.f32.gmra.mrb[0].mxu0 %v1709
        %v1711 = vpop.f32.mrb[0].mxu0
        %v1712 = vadd.f32 %v194, %v1711
        %v1713 = vpop.f32.mrb[0].mxu0
        %v1714 = vadd.f32 %v198, %v1713
        %1715 = vmatprep.mubr.f32.mxu0 0.0
        %v1716 = vand.u32 %v282, 4294901760
        %v1717 = vsub.f32 %v282, %v1716
        %v1718 = vand.u32 %v1717, 4294901760
        %v1719 = vsub.f32 %v1717, %v1718
        %v1720 = vand.u32 %v1719, 4294901760
        %1721 = vmatmul.mubr.f32.gmra.mrb[0].mxu0 %v1720
        %v1722 = vpop.f32.mrb[0].mxu0
        %v1723 = vadd.f32 %v194, %v1722
        %v1724 = vpop.f32.mrb[0].mxu0
        %v1725 = vadd.f32 %v198, %v1724
        %1726 = vdwg.mxu0
        %v1727 = vand.u32 %v178, 4294901760
        %v1728 = vsub.f32 %v178, %v1727
        %v1729 = vand.u32 %v1728, 4294901760
        %v1730 = vsub.f32 %v1728, %v1729
        %v1731 = vand.u32 %v1730, 4294901760
        %1732 = vmatprep.subr.mxu0 %v1731
        %v1733 = vand.u32 %v177, 4294901760
        %v1734 = vsub.f32 %v177, %v1733
        %v1735 = vand.u32 %v1734, 4294901760
        %v1736 = vsub.f32 %v1734, %v1735
        %v1737 = vand.u32 %v1736, 4294901760
        %1738 = vmatpush1.msra.mxu0 %v1737
        %1739 = vmatprep.subr.mxu0 0.0
        %1740 = vmatpush1.msra.mxu0 0.0
        %1741 = vmatprep.subr.mxu0 0.0
        %1742 = vmatpush1.msra.mxu0 0.0
        %1743 = vmatprep.subr.mxu0 0.0
        %1744 = vmatpush1.msra.mxu0 0.0
        %1745 = vmatprep.subr.mxu0 0.0
        %1746 = vmatpush1.msra.mxu0 0.0
        %1747 = vmatprep.subr.mxu0 0.0
        %1748 = vmatpush1.msra.mxu0 0.0
        %1749 = vmatprep.subr.mxu0 0.0
        %1750 = vmatpush1.msra.mxu0 0.0
        %1751 = vmatprep.subr.mxu0 0.0
        %1752 = vmatpush1.msra.mxu0 0.0
        %1753 = vmatprep.subr.mxu0 0.0
        %1754 = vmatpush1.msra.mxu0 0.0
        %1755 = vmatprep.subr.mxu0 0.0
        %1756 = vmatpush1.msra.mxu0 0.0
        %1757 = vmatprep.subr.mxu0 0.0
        %1758 = vmatpush1.msra.mxu0 0.0
        %1759 = vmatprep.subr.mxu0 0.0
        %1760 = vmatpush1.msra.mxu0 0.0
        %1761 = vmatprep.subr.mxu0 0.0
        %1762 = vmatpush1.msra.mxu0 0.0
        %1763 = vmatprep.subr.mxu0 0.0
        %1764 = vmatpush1.msra.mxu0 0.0
        %1765 = vmatprep.subr.mxu0 0.0
        %1766 = vmatpush1.msra.mxu0 0.0
        %1767 = vmatprep.subr.mxu0 0.0
        %1768 = vmatpush1.msra.mxu0 0.0
        %1769 = vmatprep.subr.mxu0 0.0
        %1770 = vmatpush1.msra.mxu0 0.0
        %1771 = vmatprep.subr.mxu0 0.0
        %1772 = vmatpush1.msra.mxu0 0.0
        %1773 = vmatprep.subr.mxu0 0.0
        %1774 = vmatpush1.msra.mxu0 0.0
        %1775 = vmatprep.subr.mxu0 0.0
        %1776 = vmatpush1.msra.mxu0 0.0
        %1777 = vmatprep.subr.mxu0 0.0
        %1778 = vmatpush1.msra.mxu0 0.0
        %1779 = vmatprep.subr.mxu0 0.0
        %1780 = vmatpush1.msra.mxu0 0.0
        %1781 = vmatprep.subr.mxu0 0.0
        %1782 = vmatpush1.msra.mxu0 0.0
        %1783 = vmatprep.subr.mxu0 0.0
        %1784 = vmatpush1.msra.mxu0 0.0
        %1785 = vmatprep.subr.mxu0 0.0
        %1786 = vmatpush1.msra.mxu0 0.0
        %1787 = vmatprep.subr.mxu0 0.0
        %1788 = vmatpush1.msra.mxu0 0.0
        %1789 = vmatprep.subr.mxu0 0.0
        %1790 = vmatpush1.msra.mxu0 0.0
        %1791 = vmatprep.subr.mxu0 0.0
        %1792 = vmatpush1.msra.mxu0 0.0
        %1793 = vmatprep.subr.mxu0 0.0
        %1794 = vmatpush1.msra.mxu0 0.0
        %1795 = vmatprep.subr.mxu0 0.0
        %1796 = vmatpush1.msra.mxu0 0.0
        %1797 = vmatprep.subr.mxu0 0.0
        %1798 = vmatpush1.msra.mxu0 0.0
        %1799 = vmatprep.subr.mxu0 0.0
        %1800 = vmatpush1.msra.mxu0 0.0
        %1801 = vmatprep.mubr.f32.mxu0 0.0
        %v1802 = vand.u32 %v237, 4294901760
        %1803 = vmatmul.mubr.f32.gmra.mrb[0].mxu0 %v1802
        %v1804 = vpop.f32.mrb[0].mxu0
        %v1805 = vadd.f32 %v1558, %v1804
        %v1806 = vpop.f32.mrb[0].mxu0
        %v1807 = vadd.f32 %v1560, %v1806
        %1808 = vmatprep.mubr.f32.mxu0 0.0
        %v1809 = vand.u32 %v240, 4294901760
        %1810 = vmatmul.mubr.f32.gmra.mrb[0].mxu0 %v1809
        %v1811 = vpop.f32.mrb[0].mxu0
        %v1812 = vadd.f32 %v1569, %v1811
        %v1813 = vpop.f32.mrb[0].mxu0
        %v1814 = vadd.f32 %v1571, %v1813
        %1815 = vmatprep.mubr.f32.mxu0 0.0
        %v1816 = vand.u32 %v243, 4294901760
        %1817 = vmatmul.mubr.f32.gmra.mrb[0].mxu0 %v1816
        %v1818 = vpop.f32.mrb[0].mxu0
        %v1819 = vadd.f32 %v1580, %v1818
        %v1820 = vpop.f32.mrb[0].mxu0
        %v1821 = vadd.f32 %v1582, %v1820
        %1822 = vmatprep.mubr.f32.mxu0 0.0
        %v1823 = vand.u32 %v246, 4294901760
        %1824 = vmatmul.mubr.f32.gmra.mrb[0].mxu0 %v1823
        %v1825 = vpop.f32.mrb[0].mxu0
        %v1826 = vadd.f32 %v1591, %v1825
        %v1827 = vpop.f32.mrb[0].mxu0
        %v1828 = vadd.f32 %v1593, %v1827
        %1829 = vmatprep.mubr.f32.mxu0 0.0
        %v1830 = vand.u32 %v249, 4294901760
        %1831 = vmatmul.mubr.f32.gmra.mrb[0].mxu0 %v1830
        %v1832 = vpop.f32.mrb[0].mxu0
        %v1833 = vadd.f32 %v1602, %v1832
        %v1834 = vpop.f32.mrb[0].mxu0
        %v1835 = vadd.f32 %v1604, %v1834
        %1836 = vmatprep.mubr.f32.mxu0 0.0
        %v1837 = vand.u32 %v252, 4294901760
        %1838 = vmatmul.mubr.f32.gmra.mrb[0].mxu0 %v1837
        %v1839 = vpop.f32.mrb[0].mxu0
        %v1840 = vadd.f32 %v1613, %v1839
        %v1841 = vpop.f32.mrb[0].mxu0
        %v1842 = vadd.f32 %v1615, %v1841
        %1843 = vmatprep.mubr.f32.mxu0 0.0
        %v1844 = vand.u32 %v255, 4294901760
        %1845 = vmatmul.mubr.f32.gmra.mrb[0].mxu0 %v1844
        %v1846 = vpop.f32.mrb[0].mxu0
        %v1847 = vadd.f32 %v1624, %v1846
        %v1848 = vpop.f32.mrb[0].mxu0
        %v1849 = vadd.f32 %v1626, %v1848
        %1850 = vmatprep.mubr.f32.mxu0 0.0
        %v1851 = vand.u32 %v258, 4294901760
        %1852 = vmatmul.mubr.f32.gmra.mrb[0].mxu0 %v1851
        %v1853 = vpop.f32.mrb[0].mxu0
        %v1854 = vadd.f32 %v1635, %v1853
        %v1855 = vpop.f32.mrb[0].mxu0
        %v1856 = vadd.f32 %v1637, %v1855
        %1857 = vmatprep.mubr.f32.mxu0 0.0
        %v1858 = vand.u32 %v261, 4294901760
        %1859 = vmatmul.mubr.f32.gmra.mrb[0].mxu0 %v1858
        %v1860 = vpop.f32.mrb[0].mxu0
        %v1861 = vadd.f32 %v1646, %v1860
        %v1862 = vpop.f32.mrb[0].mxu0
        %v1863 = vadd.f32 %v1648, %v1862
        %1864 = vmatprep.mubr.f32.mxu0 0.0
        %v1865 = vand.u32 %v264, 4294901760
        %1866 = vmatmul.mubr.f32.gmra.mrb[0].mxu0 %v1865
        %v1867 = vpop.f32.mrb[0].mxu0
        %v1868 = vadd.f32 %v1657, %v1867
        %v1869 = vpop.f32.mrb[0].mxu0
        %v1870 = vadd.f32 %v1659, %v1869
        %1871 = vmatprep.mubr.f32.mxu0 0.0
        %v1872 = vand.u32 %v267, 4294901760
        %1873 = vmatmul.mubr.f32.gmra.mrb[0].mxu0 %v1872
        %v1874 = vpop.f32.mrb[0].mxu0
        %v1875 = vadd.f32 %v1668, %v1874
        %v1876 = vpop.f32.mrb[0].mxu0
        %v1877 = vadd.f32 %v1670, %v1876
        %1878 = vmatprep.mubr.f32.mxu0 0.0
        %v1879 = vand.u32 %v270, 4294901760
        %1880 = vmatmul.mubr.f32.gmra.mrb[0].mxu0 %v1879
        %v1881 = vpop.f32.mrb[0].mxu0
        %v1882 = vadd.f32 %v1679, %v1881
        %v1883 = vpop.f32.mrb[0].mxu0
        %v1884 = vadd.f32 %v1681, %v1883
        %1885 = vmatprep.mubr.f32.mxu0 0.0
        %v1886 = vand.u32 %v273, 4294901760
        %1887 = vmatmul.mubr.f32.gmra.mrb[0].mxu0 %v1886
        %v1888 = vpop.f32.mrb[0].mxu0
        %v1889 = vadd.f32 %v1690, %v1888
        %v1890 = vpop.f32.mrb[0].mxu0
        %v1891 = vadd.f32 %v1692, %v1890
        %1892 = vmatprep.mubr.f32.mxu0 0.0
        %v1893 = vand.u32 %v276, 4294901760
        %1894 = vmatmul.mubr.f32.gmra.mrb[0].mxu0 %v1893
        %v1895 = vpop.f32.mrb[0].mxu0
        %v1896 = vadd.f32 %v1701, %v1895
        %v1897 = vpop.f32.mrb[0].mxu0
        %v1898 = vadd.f32 %v1703, %v1897
        %1899 = vmatprep.mubr.f32.mxu0 0.0
        %v1900 = vand.u32 %v279, 4294901760
        %1901 = vmatmul.mubr.f32.gmra.mrb[0].mxu0 %v1900
        %v1902 = vpop.f32.mrb[0].mxu0
        %v1903 = vadd.f32 %v1712, %v1902
        %v1904 = vpop.f32.mrb[0].mxu0
        %v1905 = vadd.f32 %v1714, %v1904
        %1906 = vmatprep.mubr.f32.mxu0 0.0
        %v1907 = vand.u32 %v282, 4294901760
        %1908 = vmatmul.mubr.f32.gmra.mrb[0].mxu0 %v1907
        %v1909 = vpop.f32.mrb[0].mxu0
        %v1910 = vadd.f32 %v1723, %v1909
        %v1911 = vpop.f32.mrb[0].mxu0
        %v1912 = vadd.f32 %v1725, %v1911
        %1913 = vdwg.mxu0
        %v1914 = vand.u32 %v178, 4294901760
        %v1915 = vsub.f32 %v178, %v1914
        %1916 = vmatprep.subr.mxu0 %v1915
        %v1917 = vand.u32 %v177, 4294901760
        %v1918 = vsub.f32 %v177, %v1917
        %1919 = vmatpush1.msra.mxu0 %v1918
        %1920 = vmatprep.subr.mxu0 0.0
        %1921 = vmatpush1.msra.mxu0 0.0
        %1922 = vmatprep.subr.mxu0 0.0
        %1923 = vmatpush1.msra.mxu0 0.0
        %1924 = vmatprep.subr.mxu0 0.0
        %1925 = vmatpush1.msra.mxu0 0.0
        %1926 = vmatprep.subr.mxu0 0.0
        %1927 = vmatpush1.msra.mxu0 0.0
        %1928 = vmatprep.subr.mxu0 0.0
        %1929 = vmatpush1.msra.mxu0 0.0
        %1930 = vmatprep.subr.mxu0 0.0
        %1931 = vmatpush1.msra.mxu0 0.0
        %1932 = vmatprep.subr.mxu0 0.0
        %1933 = vmatpush1.msra.mxu0 0.0
        %1934 = vmatprep.subr.mxu0 0.0
        %1935 = vmatpush1.msra.mxu0 0.0
        %1936 = vmatprep.subr.mxu0 0.0
        %1937 = vmatpush1.msra.mxu0 0.0
        %1938 = vmatprep.subr.mxu0 0.0
        %1939 = vmatpush1.msra.mxu0 0.0
        %1940 = vmatprep.subr.mxu0 0.0
        %1941 = vmatpush1.msra.mxu0 0.0
        %1942 = vmatprep.subr.mxu0 0.0
        %1943 = vmatpush1.msra.mxu0 0.0
        %1944 = vmatprep.subr.mxu0 0.0
        %1945 = vmatpush1.msra.mxu0 0.0
        %1946 = vmatprep.subr.mxu0 0.0
        %1947 = vmatpush1.msra.mxu0 0.0
        %1948 = vmatprep.subr.mxu0 0.0
        %1949 = vmatpush1.msra.mxu0 0.0
        %1950 = vmatprep.subr.mxu0 0.0
        %1951 = vmatpush1.msra.mxu0 0.0
        %1952 = vmatprep.subr.mxu0 0.0
        %1953 = vmatpush1.msra.mxu0 0.0
        %1954 = vmatprep.subr.mxu0 0.0
        %1955 = vmatpush1.msra.mxu0 0.0
        %1956 = vmatprep.subr.mxu0 0.0
        %1957 = vmatpush1.msra.mxu0 0.0
        %1958 = vmatprep.subr.mxu0 0.0
        %1959 = vmatpush1.msra.mxu0 0.0
        %1960 = vmatprep.subr.mxu0 0.0
        %1961 = vmatpush1.msra.mxu0 0.0
        %1962 = vmatprep.subr.mxu0 0.0
        %1963 = vmatpush1.msra.mxu0 0.0
        %1964 = vmatprep.subr.mxu0 0.0
        %1965 = vmatpush1.msra.mxu0 0.0
        %1966 = vmatprep.subr.mxu0 0.0
        %1967 = vmatpush1.msra.mxu0 0.0
        %1968 = vmatprep.subr.mxu0 0.0
        %1969 = vmatpush1.msra.mxu0 0.0
        %1970 = vmatprep.subr.mxu0 0.0
        %1971 = vmatpush1.msra.mxu0 0.0
        %1972 = vmatprep.subr.mxu0 0.0
        %1973 = vmatpush1.msra.mxu0 0.0
        %1974 = vmatprep.subr.mxu0 0.0
        %1975 = vmatpush1.msra.mxu0 0.0
        %1976 = vmatprep.subr.mxu0 0.0
        %1977 = vmatpush1.msra.mxu0 0.0
        %1978 = vmatprep.subr.mxu0 0.0
        %1979 = vmatpush1.msra.mxu0 0.0
        %1980 = vmatprep.subr.mxu0 0.0
        %1981 = vmatpush1.msra.mxu0 0.0
        %1982 = vmatprep.mubr.f32.mxu0 0.0
        %v1983 = vand.u32 %v237, 4294901760
        %v1984 = vsub.f32 %v237, %v1983
        %1985 = vmatmul.mubr.f32.gmra.mrb[0].mxu0 %v1984
        %v1986 = vpop.f32.mrb[0].mxu0
        %v1987 = vadd.f32 %v1805, %v1986
        %v1988 = vpop.f32.mrb[0].mxu0
        %v1989 = vadd.f32 %v1807, %v1988
        %1990 = vmatprep.mubr.f32.mxu0 0.0
        %v1991 = vand.u32 %v240, 4294901760
        %v1992 = vsub.f32 %v240, %v1991
        %1993 = vmatmul.mubr.f32.gmra.mrb[0].mxu0 %v1992
        %v1994 = vpop.f32.mrb[0].mxu0
        %v1995 = vadd.f32 %v1812, %v1994
        %v1996 = vpop.f32.mrb[0].mxu0
        %v1997 = vadd.f32 %v1814, %v1996
        %1998 = vmatprep.mubr.f32.mxu0 0.0
        %v1999 = vand.u32 %v243, 4294901760
        %v2000 = vsub.f32 %v243, %v1999
        %2001 = vmatmul.mubr.f32.gmra.mrb[0].mxu0 %v2000
        %v2002 = vpop.f32.mrb[0].mxu0
        %v2003 = vadd.f32 %v1819, %v2002
        %v2004 = vpop.f32.mrb[0].mxu0
        %v2005 = vadd.f32 %v1821, %v2004
        %2006 = vmatprep.mubr.f32.mxu0 0.0
        %v2007 = vand.u32 %v246, 4294901760
        %v2008 = vsub.f32 %v246, %v2007
        %2009 = vmatmul.mubr.f32.gmra.mrb[0].mxu0 %v2008
        %v2010 = vpop.f32.mrb[0].mxu0
        %v2011 = vadd.f32 %v1826, %v2010
        %v2012 = vpop.f32.mrb[0].mxu0
        %v2013 = vadd.f32 %v1828, %v2012
        %2014 = vmatprep.mubr.f32.mxu0 0.0
        %v2015 = vand.u32 %v249, 4294901760
        %v2016 = vsub.f32 %v249, %v2015
        %2017 = vmatmul.mubr.f32.gmra.mrb[0].mxu0 %v2016
        %v2018 = vpop.f32.mrb[0].mxu0
        %v2019 = vadd.f32 %v1833, %v2018
        %v2020 = vpop.f32.mrb[0].mxu0
        %v2021 = vadd.f32 %v1835, %v2020
        %2022 = vmatprep.mubr.f32.mxu0 0.0
        %v2023 = vand.u32 %v252, 4294901760
        %v2024 = vsub.f32 %v252, %v2023
        %2025 = vmatmul.mubr.f32.gmra.mrb[0].mxu0 %v2024
        %v2026 = vpop.f32.mrb[0].mxu0
        %v2027 = vadd.f32 %v1840, %v2026
        %v2028 = vpop.f32.mrb[0].mxu0
        %v2029 = vadd.f32 %v1842, %v2028
        %2030 = vmatprep.mubr.f32.mxu0 0.0
        %v2031 = vand.u32 %v255, 4294901760
        %v2032 = vsub.f32 %v255, %v2031
        %2033 = vmatmul.mubr.f32.gmra.mrb[0].mxu0 %v2032
        %v2034 = vpop.f32.mrb[0].mxu0
        %v2035 = vadd.f32 %v1847, %v2034
        %v2036 = vpop.f32.mrb[0].mxu0
        %v2037 = vadd.f32 %v1849, %v2036
        %2038 = vmatprep.mubr.f32.mxu0 0.0
        %v2039 = vand.u32 %v258, 4294901760
        %v2040 = vsub.f32 %v258, %v2039
        %2041 = vmatmul.mubr.f32.gmra.mrb[0].mxu0 %v2040
        %v2042 = vpop.f32.mrb[0].mxu0
        %v2043 = vadd.f32 %v1854, %v2042
        %v2044 = vpop.f32.mrb[0].mxu0
        %v2045 = vadd.f32 %v1856, %v2044
        %2046 = vmatprep.mubr.f32.mxu0 0.0
        %v2047 = vand.u32 %v261, 4294901760
        %v2048 = vsub.f32 %v261, %v2047
        %2049 = vmatmul.mubr.f32.gmra.mrb[0].mxu0 %v2048
        %v2050 = vpop.f32.mrb[0].mxu0
        %v2051 = vadd.f32 %v1861, %v2050
        %v2052 = vpop.f32.mrb[0].mxu0
        %v2053 = vadd.f32 %v1863, %v2052
        %2054 = vmatprep.mubr.f32.mxu0 0.0
        %v2055 = vand.u32 %v264, 4294901760
        %v2056 = vsub.f32 %v264, %v2055
        %2057 = vmatmul.mubr.f32.gmra.mrb[0].mxu0 %v2056
        %v2058 = vpop.f32.mrb[0].mxu0
        %v2059 = vadd.f32 %v1868, %v2058
        %v2060 = vpop.f32.mrb[0].mxu0
        %v2061 = vadd.f32 %v1870, %v2060
        %2062 = vmatprep.mubr.f32.mxu0 0.0
        %v2063 = vand.u32 %v267, 4294901760
        %v2064 = vsub.f32 %v267, %v2063
        %2065 = vmatmul.mubr.f32.gmra.mrb[0].mxu0 %v2064
        %v2066 = vpop.f32.mrb[0].mxu0
        %v2067 = vadd.f32 %v1875, %v2066
        %v2068 = vpop.f32.mrb[0].mxu0
        %v2069 = vadd.f32 %v1877, %v2068
        %2070 = vmatprep.mubr.f32.mxu0 0.0
        %v2071 = vand.u32 %v270, 4294901760
        %v2072 = vsub.f32 %v270, %v2071
        %2073 = vmatmul.mubr.f32.gmra.mrb[0].mxu0 %v2072
        %v2074 = vpop.f32.mrb[0].mxu0
        %v2075 = vadd.f32 %v1882, %v2074
        %v2076 = vpop.f32.mrb[0].mxu0
        %v2077 = vadd.f32 %v1884, %v2076
        %2078 = vmatprep.mubr.f32.mxu0 0.0
        %v2079 = vand.u32 %v273, 4294901760
        %v2080 = vsub.f32 %v273, %v2079
        %2081 = vmatmul.mubr.f32.gmra.mrb[0].mxu0 %v2080
        %v2082 = vpop.f32.mrb[0].mxu0
        %v2083 = vadd.f32 %v1889, %v2082
        %v2084 = vpop.f32.mrb[0].mxu0
        %v2085 = vadd.f32 %v1891, %v2084
        %2086 = vmatprep.mubr.f32.mxu0 0.0
        %v2087 = vand.u32 %v276, 4294901760
        %v2088 = vsub.f32 %v276, %v2087
        %2089 = vmatmul.mubr.f32.gmra.mrb[0].mxu0 %v2088
        %v2090 = vpop.f32.mrb[0].mxu0
        %v2091 = vadd.f32 %v1896, %v2090
        %v2092 = vpop.f32.mrb[0].mxu0
        %v2093 = vadd.f32 %v1898, %v2092
        %2094 = vmatprep.mubr.f32.mxu0 0.0
        %v2095 = vand.u32 %v279, 4294901760
        %v2096 = vsub.f32 %v279, %v2095
        %2097 = vmatmul.mubr.f32.gmra.mrb[0].mxu0 %v2096
        %v2098 = vpop.f32.mrb[0].mxu0
        %v2099 = vadd.f32 %v1903, %v2098
        %v2100 = vpop.f32.mrb[0].mxu0
        %v2101 = vadd.f32 %v1905, %v2100
        %2102 = vmatprep.mubr.f32.mxu0 0.0
        %v2103 = vand.u32 %v282, 4294901760
        %v2104 = vsub.f32 %v282, %v2103
        %2105 = vmatmul.mubr.f32.gmra.mrb[0].mxu0 %v2104
        %v2106 = vpop.f32.mrb[0].mxu0
        %v2107 = vadd.f32 %v1910, %v2106
        %v2108 = vpop.f32.mrb[0].mxu0
        %v2109 = vadd.f32 %v1912, %v2108
        %2110 = vdwg.mxu0
        %v2111 = vand.u32 %v178, 4294901760
        %2112 = vmatprep.subr.mxu0 %v2111
        %v2113 = vand.u32 %v177, 4294901760
        %2114 = vmatpush1.msra.mxu0 %v2113
        %2115 = vmatprep.subr.mxu0 0.0
        %2116 = vmatpush1.msra.mxu0 0.0
        %2117 = vmatprep.subr.mxu0 0.0
        %2118 = vmatpush1.msra.mxu0 0.0
        %2119 = vmatprep.subr.mxu0 0.0
        %2120 = vmatpush1.msra.mxu0 0.0
        %2121 = vmatprep.subr.mxu0 0.0
        %2122 = vmatpush1.msra.mxu0 0.0
        %2123 = vmatprep.subr.mxu0 0.0
        %2124 = vmatpush1.msra.mxu0 0.0
        %2125 = vmatprep.subr.mxu0 0.0
        %2126 = vmatpush1.msra.mxu0 0.0
        %2127 = vmatprep.subr.mxu0 0.0
        %2128 = vmatpush1.msra.mxu0 0.0
        %2129 = vmatprep.subr.mxu0 0.0
        %2130 = vmatpush1.msra.mxu0 0.0
        %2131 = vmatprep.subr.mxu0 0.0
        %2132 = vmatpush1.msra.mxu0 0.0
        %2133 = vmatprep.subr.mxu0 0.0
        %2134 = vmatpush1.msra.mxu0 0.0
        %2135 = vmatprep.subr.mxu0 0.0
        %2136 = vmatpush1.msra.mxu0 0.0
        %2137 = vmatprep.subr.mxu0 0.0
        %2138 = vmatpush1.msra.mxu0 0.0
        %2139 = vmatprep.subr.mxu0 0.0
        %2140 = vmatpush1.msra.mxu0 0.0
        %2141 = vmatprep.subr.mxu0 0.0
        %2142 = vmatpush1.msra.mxu0 0.0
        %2143 = vmatprep.subr.mxu0 0.0
        %2144 = vmatpush1.msra.mxu0 0.0
        %2145 = vmatprep.subr.mxu0 0.0
        %2146 = vmatpush1.msra.mxu0 0.0
        %2147 = vmatprep.subr.mxu0 0.0
        %2148 = vmatpush1.msra.mxu0 0.0
        %2149 = vmatprep.subr.mxu0 0.0
        %2150 = vmatpush1.msra.mxu0 0.0
        %2151 = vmatprep.subr.mxu0 0.0
        %2152 = vmatpush1.msra.mxu0 0.0
        %2153 = vmatprep.subr.mxu0 0.0
        %2154 = vmatpush1.msra.mxu0 0.0
        %2155 = vmatprep.subr.mxu0 0.0
        %2156 = vmatpush1.msra.mxu0 0.0
        %2157 = vmatprep.subr.mxu0 0.0
        %2158 = vmatpush1.msra.mxu0 0.0
        %2159 = vmatprep.subr.mxu0 0.0
        %2160 = vmatpush1.msra.mxu0 0.0
        %2161 = vmatprep.subr.mxu0 0.0
        %2162 = vmatpush1.msra.mxu0 0.0
        %2163 = vmatprep.subr.mxu0 0.0
        %2164 = vmatpush1.msra.mxu0 0.0
        %2165 = vmatprep.subr.mxu0 0.0
        %2166 = vmatpush1.msra.mxu0 0.0
        %2167 = vmatprep.subr.mxu0 0.0
        %2168 = vmatpush1.msra.mxu0 0.0
        %2169 = vmatprep.subr.mxu0 0.0
        %2170 = vmatpush1.msra.mxu0 0.0
        %2171 = vmatprep.subr.mxu0 0.0
        %2172 = vmatpush1.msra.mxu0 0.0
        %2173 = vmatprep.subr.mxu0 0.0
        %2174 = vmatpush1.msra.mxu0 0.0
        %2175 = vmatprep.subr.mxu0 0.0
        %2176 = vmatpush1.msra.mxu0 0.0
        %2177 = vmatprep.mubr.f32.mxu0 0.0
        %v2178 = vand.u32 %v237, 4294901760
        %v2179 = vsub.f32 %v237, %v2178
        %v2180 = vand.u32 %v2179, 4294901760
        %2181 = vmatmul.mubr.f32.gmra.mrb[0].mxu0 %v2180
        %v2182 = vpop.f32.mrb[0].mxu0
        %v2183 = vadd.f32 %v1987, %v2182
        %v2184 = vpop.f32.mrb[0].mxu0
        %v2185 = vadd.f32 %v1989, %v2184
        %2186 = vmatprep.mubr.f32.mxu0 0.0
        %v2187 = vand.u32 %v240, 4294901760
        %v2188 = vsub.f32 %v240, %v2187
        %v2189 = vand.u32 %v2188, 4294901760
        %2190 = vmatmul.mubr.f32.gmra.mrb[0].mxu0 %v2189
        %v2191 = vpop.f32.mrb[0].mxu0
        %v2192 = vadd.f32 %v1995, %v2191
        %v2193 = vpop.f32.mrb[0].mxu0
        %v2194 = vadd.f32 %v1997, %v2193
        %2195 = vmatprep.mubr.f32.mxu0 0.0
        %v2196 = vand.u32 %v243, 4294901760
        %v2197 = vsub.f32 %v243, %v2196
        %v2198 = vand.u32 %v2197, 4294901760
        %2199 = vmatmul.mubr.f32.gmra.mrb[0].mxu0 %v2198
        %v2200 = vpop.f32.mrb[0].mxu0
        %v2201 = vadd.f32 %v2003, %v2200
        %v2202 = vpop.f32.mrb[0].mxu0
        %v2203 = vadd.f32 %v2005, %v2202
        %2204 = vmatprep.mubr.f32.mxu0 0.0
        %v2205 = vand.u32 %v246, 4294901760
        %v2206 = vsub.f32 %v246, %v2205
        %v2207 = vand.u32 %v2206, 4294901760
        %2208 = vmatmul.mubr.f32.gmra.mrb[0].mxu0 %v2207
        %v2209 = vpop.f32.mrb[0].mxu0
        %v2210 = vadd.f32 %v2011, %v2209
        %v2211 = vpop.f32.mrb[0].mxu0
        %v2212 = vadd.f32 %v2013, %v2211
        %2213 = vmatprep.mubr.f32.mxu0 0.0
        %v2214 = vand.u32 %v249, 4294901760
        %v2215 = vsub.f32 %v249, %v2214
        %v2216 = vand.u32 %v2215, 4294901760
        %2217 = vmatmul.mubr.f32.gmra.mrb[0].mxu0 %v2216
        %v2218 = vpop.f32.mrb[0].mxu0
        %v2219 = vadd.f32 %v2019, %v2218
        %v2220 = vpop.f32.mrb[0].mxu0
        %v2221 = vadd.f32 %v2021, %v2220
        %2222 = vmatprep.mubr.f32.mxu0 0.0
        %v2223 = vand.u32 %v252, 4294901760
        %v2224 = vsub.f32 %v252, %v2223
        %v2225 = vand.u32 %v2224, 4294901760
        %2226 = vmatmul.mubr.f32.gmra.mrb[0].mxu0 %v2225
        %v2227 = vpop.f32.mrb[0].mxu0
        %v2228 = vadd.f32 %v2027, %v2227
        %v2229 = vpop.f32.mrb[0].mxu0
        %v2230 = vadd.f32 %v2029, %v2229
        %2231 = vmatprep.mubr.f32.mxu0 0.0
        %v2232 = vand.u32 %v255, 4294901760
        %v2233 = vsub.f32 %v255, %v2232
        %v2234 = vand.u32 %v2233, 4294901760
        %2235 = vmatmul.mubr.f32.gmra.mrb[0].mxu0 %v2234
        %v2236 = vpop.f32.mrb[0].mxu0
        %v2237 = vadd.f32 %v2035, %v2236
        %v2238 = vpop.f32.mrb[0].mxu0
        %v2239 = vadd.f32 %v2037, %v2238
        %2240 = vmatprep.mubr.f32.mxu0 0.0
        %v2241 = vand.u32 %v258, 4294901760
        %v2242 = vsub.f32 %v258, %v2241
        %v2243 = vand.u32 %v2242, 4294901760
        %2244 = vmatmul.mubr.f32.gmra.mrb[0].mxu0 %v2243
        %v2245 = vpop.f32.mrb[0].mxu0
        %v2246 = vadd.f32 %v2043, %v2245
        %v2247 = vpop.f32.mrb[0].mxu0
        %v2248 = vadd.f32 %v2045, %v2247
        %2249 = vmatprep.mubr.f32.mxu0 0.0
        %v2250 = vand.u32 %v261, 4294901760
        %v2251 = vsub.f32 %v261, %v2250
        %v2252 = vand.u32 %v2251, 4294901760
        %2253 = vmatmul.mubr.f32.gmra.mrb[0].mxu0 %v2252
        %v2254 = vpop.f32.mrb[0].mxu0
        %v2255 = vadd.f32 %v2051, %v2254
        %v2256 = vpop.f32.mrb[0].mxu0
        %v2257 = vadd.f32 %v2053, %v2256
        %2258 = vmatprep.mubr.f32.mxu0 0.0
        %v2259 = vand.u32 %v264, 4294901760
        %v2260 = vsub.f32 %v264, %v2259
        %v2261 = vand.u32 %v2260, 4294901760
        %2262 = vmatmul.mubr.f32.gmra.mrb[0].mxu0 %v2261
        %v2263 = vpop.f32.mrb[0].mxu0
        %v2264 = vadd.f32 %v2059, %v2263
        %v2265 = vpop.f32.mrb[0].mxu0
        %v2266 = vadd.f32 %v2061, %v2265
        %2267 = vmatprep.mubr.f32.mxu0 0.0
        %v2268 = vand.u32 %v267, 4294901760
        %v2269 = vsub.f32 %v267, %v2268
        %v2270 = vand.u32 %v2269, 4294901760
        %2271 = vmatmul.mubr.f32.gmra.mrb[0].mxu0 %v2270
        %v2272 = vpop.f32.mrb[0].mxu0
        %v2273 = vadd.f32 %v2067, %v2272
        %v2274 = vpop.f32.mrb[0].mxu0
        %v2275 = vadd.f32 %v2069, %v2274
        %2276 = vmatprep.mubr.f32.mxu0 0.0
        %v2277 = vand.u32 %v270, 4294901760
        %v2278 = vsub.f32 %v270, %v2277
        %v2279 = vand.u32 %v2278, 4294901760
        %2280 = vmatmul.mubr.f32.gmra.mrb[0].mxu0 %v2279
        %v2281 = vpop.f32.mrb[0].mxu0
        %v2282 = vadd.f32 %v2075, %v2281
        %v2283 = vpop.f32.mrb[0].mxu0
        %v2284 = vadd.f32 %v2077, %v2283
        %2285 = vmatprep.mubr.f32.mxu0 0.0
        %v2286 = vand.u32 %v273, 4294901760
        %v2287 = vsub.f32 %v273, %v2286
        %v2288 = vand.u32 %v2287, 4294901760
        %2289 = vmatmul.mubr.f32.gmra.mrb[0].mxu0 %v2288
        %v2290 = vpop.f32.mrb[0].mxu0
        %v2291 = vadd.f32 %v2083, %v2290
        %v2292 = vpop.f32.mrb[0].mxu0
        %v2293 = vadd.f32 %v2085, %v2292
        %2294 = vmatprep.mubr.f32.mxu0 0.0
        %v2295 = vand.u32 %v276, 4294901760
        %v2296 = vsub.f32 %v276, %v2295
        %v2297 = vand.u32 %v2296, 4294901760
        %2298 = vmatmul.mubr.f32.gmra.mrb[0].mxu0 %v2297
        %v2299 = vpop.f32.mrb[0].mxu0
        %v2300 = vadd.f32 %v2091, %v2299
        %v2301 = vpop.f32.mrb[0].mxu0
        %v2302 = vadd.f32 %v2093, %v2301
        %2303 = vmatprep.mubr.f32.mxu0 0.0
        %v2304 = vand.u32 %v279, 4294901760
        %v2305 = vsub.f32 %v279, %v2304
        %v2306 = vand.u32 %v2305, 4294901760
        %2307 = vmatmul.mubr.f32.gmra.mrb[0].mxu0 %v2306
        %v2308 = vpop.f32.mrb[0].mxu0
        %v2309 = vadd.f32 %v2099, %v2308
        %v2310 = vpop.f32.mrb[0].mxu0
        %v2311 = vadd.f32 %v2101, %v2310
        %2312 = vmatprep.mubr.f32.mxu0 0.0
        %v2313 = vand.u32 %v282, 4294901760
        %v2314 = vsub.f32 %v282, %v2313
        %v2315 = vand.u32 %v2314, 4294901760
        %2316 = vmatmul.mubr.f32.gmra.mrb[0].mxu0 %v2315
        %v2317 = vpop.f32.mrb[0].mxu0
        %v2318 = vadd.f32 %v2107, %v2317
        %v2319 = vpop.f32.mrb[0].mxu0
        %v2320 = vadd.f32 %v2109, %v2319
        %2321 = vdwg.mxu0
        %v2322 = vand.u32 %v178, 4294901760
        %v2323 = vsub.f32 %v178, %v2322
        %v2324 = vand.u32 %v2323, 4294901760
        %2325 = vmatprep.subr.mxu0 %v2324
        %v2326 = vand.u32 %v177, 4294901760
        %v2327 = vsub.f32 %v177, %v2326
        %v2328 = vand.u32 %v2327, 4294901760
        %2329 = vmatpush1.msra.mxu0 %v2328
        %2330 = vmatprep.subr.mxu0 0.0
        %2331 = vmatpush1.msra.mxu0 0.0
        %2332 = vmatprep.subr.mxu0 0.0
        %2333 = vmatpush1.msra.mxu0 0.0
        %2334 = vmatprep.subr.mxu0 0.0
        %2335 = vmatpush1.msra.mxu0 0.0
        %2336 = vmatprep.subr.mxu0 0.0
        %2337 = vmatpush1.msra.mxu0 0.0
        %2338 = vmatprep.subr.mxu0 0.0
        %2339 = vmatpush1.msra.mxu0 0.0
        %2340 = vmatprep.subr.mxu0 0.0
        %2341 = vmatpush1.msra.mxu0 0.0
        %2342 = vmatprep.subr.mxu0 0.0
        %2343 = vmatpush1.msra.mxu0 0.0
        %2344 = vmatprep.subr.mxu0 0.0
        %2345 = vmatpush1.msra.mxu0 0.0
        %2346 = vmatprep.subr.mxu0 0.0
        %2347 = vmatpush1.msra.mxu0 0.0
        %2348 = vmatprep.subr.mxu0 0.0
        %2349 = vmatpush1.msra.mxu0 0.0
        %2350 = vmatprep.subr.mxu0 0.0
        %2351 = vmatpush1.msra.mxu0 0.0
        %2352 = vmatprep.subr.mxu0 0.0
        %2353 = vmatpush1.msra.mxu0 0.0
        %2354 = vmatprep.subr.mxu0 0.0
        %2355 = vmatpush1.msra.mxu0 0.0
        %2356 = vmatprep.subr.mxu0 0.0
        %2357 = vmatpush1.msra.mxu0 0.0
        %2358 = vmatprep.subr.mxu0 0.0
        %2359 = vmatpush1.msra.mxu0 0.0
        %2360 = vmatprep.subr.mxu0 0.0
        %2361 = vmatpush1.msra.mxu0 0.0
        %2362 = vmatprep.subr.mxu0 0.0
        %2363 = vmatpush1.msra.mxu0 0.0
        %2364 = vmatprep.subr.mxu0 0.0
        %2365 = vmatpush1.msra.mxu0 0.0
        %2366 = vmatprep.subr.mxu0 0.0
        %2367 = vmatpush1.msra.mxu0 0.0
        %2368 = vmatprep.subr.mxu0 0.0
        %2369 = vmatpush1.msra.mxu0 0.0
        %2370 = vmatprep.subr.mxu0 0.0
        %2371 = vmatpush1.msra.mxu0 0.0
        %2372 = vmatprep.subr.mxu0 0.0
        %2373 = vmatpush1.msra.mxu0 0.0
        %2374 = vmatprep.subr.mxu0 0.0
        %2375 = vmatpush1.msra.mxu0 0.0
        %2376 = vmatprep.subr.mxu0 0.0
        %2377 = vmatpush1.msra.mxu0 0.0
        %2378 = vmatprep.subr.mxu0 0.0
        %2379 = vmatpush1.msra.mxu0 0.0
        %2380 = vmatprep.subr.mxu0 0.0
        %2381 = vmatpush1.msra.mxu0 0.0
        %2382 = vmatprep.subr.mxu0 0.0
        %2383 = vmatpush1.msra.mxu0 0.0
        %2384 = vmatprep.subr.mxu0 0.0
        %2385 = vmatpush1.msra.mxu0 0.0
        %2386 = vmatprep.subr.mxu0 0.0
        %2387 = vmatpush1.msra.mxu0 0.0
        %2388 = vmatprep.subr.mxu0 0.0
        %2389 = vmatpush1.msra.mxu0 0.0
        %2390 = vmatprep.subr.mxu0 0.0
        %2391 = vmatpush1.msra.mxu0 0.0
        %2392 = vmatprep.mubr.f32.mxu0 0.0
        %v2393 = vand.u32 %v237, 4294901760
        %2394 = vmatmul.mubr.f32.gmra.mrb[0].mxu0 %v2393
        %v2395 = vpop.f32.mrb[0].mxu0
        %v2396 = vadd.f32 %v2183, %v2395
        %v2397 = vpop.f32.mrb[0].mxu0
        %v2398 = vadd.f32 %v2185, %v2397
        %2399 = vmatprep.mubr.f32.mxu0 0.0
        %v2400 = vand.u32 %v240, 4294901760
        %2401 = vmatmul.mubr.f32.gmra.mrb[0].mxu0 %v2400
        %v2402 = vpop.f32.mrb[0].mxu0
        %v2403 = vadd.f32 %v2192, %v2402
        %v2404 = vpop.f32.mrb[0].mxu0
        %v2405 = vadd.f32 %v2194, %v2404
        %2406 = vmatprep.mubr.f32.mxu0 0.0
        %v2407 = vand.u32 %v243, 4294901760
        %2408 = vmatmul.mubr.f32.gmra.mrb[0].mxu0 %v2407
        %v2409 = vpop.f32.mrb[0].mxu0
        %v2410 = vadd.f32 %v2201, %v2409
        %v2411 = vpop.f32.mrb[0].mxu0
        %v2412 = vadd.f32 %v2203, %v2411
        %2413 = vmatprep.mubr.f32.mxu0 0.0
        %v2414 = vand.u32 %v246, 4294901760
        %2415 = vmatmul.mubr.f32.gmra.mrb[0].mxu0 %v2414
        %v2416 = vpop.f32.mrb[0].mxu0
        %v2417 = vadd.f32 %v2210, %v2416
        %v2418 = vpop.f32.mrb[0].mxu0
        %v2419 = vadd.f32 %v2212, %v2418
        %2420 = vmatprep.mubr.f32.mxu0 0.0
        %v2421 = vand.u32 %v249, 4294901760
        %2422 = vmatmul.mubr.f32.gmra.mrb[0].mxu0 %v2421
        %v2423 = vpop.f32.mrb[0].mxu0
        %v2424 = vadd.f32 %v2219, %v2423
        %v2425 = vpop.f32.mrb[0].mxu0
        %v2426 = vadd.f32 %v2221, %v2425
        %2427 = vmatprep.mubr.f32.mxu0 0.0
        %v2428 = vand.u32 %v252, 4294901760
        %2429 = vmatmul.mubr.f32.gmra.mrb[0].mxu0 %v2428
        %v2430 = vpop.f32.mrb[0].mxu0
        %v2431 = vadd.f32 %v2228, %v2430
        %v2432 = vpop.f32.mrb[0].mxu0
        %v2433 = vadd.f32 %v2230, %v2432
        %2434 = vmatprep.mubr.f32.mxu0 0.0
        %v2435 = vand.u32 %v255, 4294901760
        %2436 = vmatmul.mubr.f32.gmra.mrb[0].mxu0 %v2435
        %v2437 = vpop.f32.mrb[0].mxu0
        %v2438 = vadd.f32 %v2237, %v2437
        %v2439 = vpop.f32.mrb[0].mxu0
        %v2440 = vadd.f32 %v2239, %v2439
        %2441 = vmatprep.mubr.f32.mxu0 0.0
        %v2442 = vand.u32 %v258, 4294901760
        %2443 = vmatmul.mubr.f32.gmra.mrb[0].mxu0 %v2442
        %v2444 = vpop.f32.mrb[0].mxu0
        %v2445 = vadd.f32 %v2246, %v2444
        %v2446 = vpop.f32.mrb[0].mxu0
        %v2447 = vadd.f32 %v2248, %v2446
        %2448 = vmatprep.mubr.f32.mxu0 0.0
        %v2449 = vand.u32 %v261, 4294901760
        %2450 = vmatmul.mubr.f32.gmra.mrb[0].mxu0 %v2449
        %v2451 = vpop.f32.mrb[0].mxu0
        %v2452 = vadd.f32 %v2255, %v2451
        %v2453 = vpop.f32.mrb[0].mxu0
        %v2454 = vadd.f32 %v2257, %v2453
        %2455 = vmatprep.mubr.f32.mxu0 0.0
        %v2456 = vand.u32 %v264, 4294901760
        %2457 = vmatmul.mubr.f32.gmra.mrb[0].mxu0 %v2456
        %v2458 = vpop.f32.mrb[0].mxu0
        %v2459 = vadd.f32 %v2264, %v2458
        %v2460 = vpop.f32.mrb[0].mxu0
        %v2461 = vadd.f32 %v2266, %v2460
        %2462 = vmatprep.mubr.f32.mxu0 0.0
        %v2463 = vand.u32 %v267, 4294901760
        %2464 = vmatmul.mubr.f32.gmra.mrb[0].mxu0 %v2463
        %v2465 = vpop.f32.mrb[0].mxu0
        %v2466 = vadd.f32 %v2273, %v2465
        %v2467 = vpop.f32.mrb[0].mxu0
        %v2468 = vadd.f32 %v2275, %v2467
        %2469 = vmatprep.mubr.f32.mxu0 0.0
        %v2470 = vand.u32 %v270, 4294901760
        %2471 = vmatmul.mubr.f32.gmra.mrb[0].mxu0 %v2470
        %v2472 = vpop.f32.mrb[0].mxu0
        %v2473 = vadd.f32 %v2282, %v2472
        %v2474 = vpop.f32.mrb[0].mxu0
        %v2475 = vadd.f32 %v2284, %v2474
        %2476 = vmatprep.mubr.f32.mxu0 0.0
        %v2477 = vand.u32 %v273, 4294901760
        %2478 = vmatmul.mubr.f32.gmra.mrb[0].mxu0 %v2477
        %v2479 = vpop.f32.mrb[0].mxu0
        %v2480 = vadd.f32 %v2291, %v2479
        %v2481 = vpop.f32.mrb[0].mxu0
        %v2482 = vadd.f32 %v2293, %v2481
        %2483 = vmatprep.mubr.f32.mxu0 0.0
        %v2484 = vand.u32 %v276, 4294901760
        %2485 = vmatmul.mubr.f32.gmra.mrb[0].mxu0 %v2484
        %v2486 = vpop.f32.mrb[0].mxu0
        %v2487 = vadd.f32 %v2300, %v2486
        %v2488 = vpop.f32.mrb[0].mxu0
        %v2489 = vadd.f32 %v2302, %v2488
        %2490 = vmatprep.mubr.f32.mxu0 0.0
        %v2491 = vand.u32 %v279, 4294901760
        %2492 = vmatmul.mubr.f32.gmra.mrb[0].mxu0 %v2491
        %v2493 = vpop.f32.mrb[0].mxu0
        %v2494 = vadd.f32 %v2309, %v2493
        %v2495 = vpop.f32.mrb[0].mxu0
        %v2496 = vadd.f32 %v2311, %v2495
        %2497 = vmatprep.mubr.f32.mxu0 0.0
        %v2498 = vand.u32 %v282, 4294901760
        %2499 = vmatmul.mubr.f32.gmra.mrb[0].mxu0 %v2498
        %v2500 = vpop.f32.mrb[0].mxu0
        %v2501 = vadd.f32 %v2318, %v2500
        %v2502 = vpop.f32.mrb[0].mxu0
        %v2503 = vadd.f32 %v2320, %v2502
        %2504 = vdwg.mxu0
        %v2505 = vand.u32 %v178, 4294901760
        %2506 = vmatprep.subr.mxu0 %v2505
        %v2507 = vand.u32 %v177, 4294901760
        %2508 = vmatpush1.msra.mxu0 %v2507
        %2509 = vmatprep.subr.mxu0 0.0
        %2510 = vmatpush1.msra.mxu0 0.0
        %2511 = vmatprep.subr.mxu0 0.0
        %2512 = vmatpush1.msra.mxu0 0.0
        %2513 = vmatprep.subr.mxu0 0.0
        %2514 = vmatpush1.msra.mxu0 0.0
        %2515 = vmatprep.subr.mxu0 0.0
        %2516 = vmatpush1.msra.mxu0 0.0
        %2517 = vmatprep.subr.mxu0 0.0
        %2518 = vmatpush1.msra.mxu0 0.0
        %2519 = vmatprep.subr.mxu0 0.0
        %2520 = vmatpush1.msra.mxu0 0.0
        %2521 = vmatprep.subr.mxu0 0.0
        %2522 = vmatpush1.msra.mxu0 0.0
        %2523 = vmatprep.subr.mxu0 0.0
        %2524 = vmatpush1.msra.mxu0 0.0
        %2525 = vmatprep.subr.mxu0 0.0
        %2526 = vmatpush1.msra.mxu0 0.0
        %2527 = vmatprep.subr.mxu0 0.0
        %2528 = vmatpush1.msra.mxu0 0.0
        %2529 = vmatprep.subr.mxu0 0.0
        %2530 = vmatpush1.msra.mxu0 0.0
        %2531 = vmatprep.subr.mxu0 0.0
        %2532 = vmatpush1.msra.mxu0 0.0
        %2533 = vmatprep.subr.mxu0 0.0
        %2534 = vmatpush1.msra.mxu0 0.0
        %2535 = vmatprep.subr.mxu0 0.0
        %2536 = vmatpush1.msra.mxu0 0.0
        %2537 = vmatprep.subr.mxu0 0.0
        %2538 = vmatpush1.msra.mxu0 0.0
        %2539 = vmatprep.subr.mxu0 0.0
        %2540 = vmatpush1.msra.mxu0 0.0
        %2541 = vmatprep.subr.mxu0 0.0
        %2542 = vmatpush1.msra.mxu0 0.0
        %2543 = vmatprep.subr.mxu0 0.0
        %2544 = vmatpush1.msra.mxu0 0.0
        %2545 = vmatprep.subr.mxu0 0.0
        %2546 = vmatpush1.msra.mxu0 0.0
        %2547 = vmatprep.subr.mxu0 0.0
        %2548 = vmatpush1.msra.mxu0 0.0
        %2549 = vmatprep.subr.mxu0 0.0
        %2550 = vmatpush1.msra.mxu0 0.0
        %2551 = vmatprep.subr.mxu0 0.0
        %2552 = vmatpush1.msra.mxu0 0.0
        %2553 = vmatprep.subr.mxu0 0.0
        %2554 = vmatpush1.msra.mxu0 0.0
        %2555 = vmatprep.subr.mxu0 0.0
        %2556 = vmatpush1.msra.mxu0 0.0
        %2557 = vmatprep.subr.mxu0 0.0
        %2558 = vmatpush1.msra.mxu0 0.0
        %2559 = vmatprep.subr.mxu0 0.0
        %2560 = vmatpush1.msra.mxu0 0.0
        %2561 = vmatprep.subr.mxu0 0.0
        %2562 = vmatpush1.msra.mxu0 0.0
        %2563 = vmatprep.subr.mxu0 0.0
        %2564 = vmatpush1.msra.mxu0 0.0
        %2565 = vmatprep.subr.mxu0 0.0
        %2566 = vmatpush1.msra.mxu0 0.0
        %2567 = vmatprep.subr.mxu0 0.0
        %2568 = vmatpush1.msra.mxu0 0.0
        %2569 = vmatprep.subr.mxu0 0.0
        %2570 = vmatpush1.msra.mxu0 0.0
        %2571 = vmatprep.mubr.f32.mxu0 0.0
        %v2572 = vand.u32 %v237, 4294901760
        %2573 = vmatmul.mubr.f32.gmra.mrb[0].mxu0 %v2572
        %v2574 = vpop.f32.mrb[0].mxu0
        %v2575 = vadd.f32 %v2396, %v2574
        %v2576 = vpop.f32.mrb[0].mxu0
        %v2577 = vadd.f32 %v2398, %v2576
        %2578 = vmatprep.mubr.f32.mxu0 0.0
        %v2579 = vand.u32 %v240, 4294901760
        %2580 = vmatmul.mubr.f32.gmra.mrb[0].mxu0 %v2579
        %v2581 = vpop.f32.mrb[0].mxu0
        %v2582 = vadd.f32 %v2403, %v2581
        %v2583 = vpop.f32.mrb[0].mxu0
        %v2584 = vadd.f32 %v2405, %v2583
        %2585 = vmatprep.mubr.f32.mxu0 0.0
        %v2586 = vand.u32 %v243, 4294901760
        %2587 = vmatmul.mubr.f32.gmra.mrb[0].mxu0 %v2586
        %v2588 = vpop.f32.mrb[0].mxu0
        %v2589 = vadd.f32 %v2410, %v2588
        %v2590 = vpop.f32.mrb[0].mxu0
        %v2591 = vadd.f32 %v2412, %v2590
        %2592 = vmatprep.mubr.f32.mxu0 0.0
        %v2593 = vand.u32 %v246, 4294901760
        %2594 = vmatmul.mubr.f32.gmra.mrb[0].mxu0 %v2593
        %v2595 = vpop.f32.mrb[0].mxu0
        %v2596 = vadd.f32 %v2417, %v2595
        %v2597 = vpop.f32.mrb[0].mxu0
        %v2598 = vadd.f32 %v2419, %v2597
        %2599 = vmatprep.mubr.f32.mxu0 0.0
        %v2600 = vand.u32 %v249, 4294901760
        %2601 = vmatmul.mubr.f32.gmra.mrb[0].mxu0 %v2600
        %v2602 = vpop.f32.mrb[0].mxu0
        %v2603 = vadd.f32 %v2424, %v2602
        %v2604 = vpop.f32.mrb[0].mxu0
        %v2605 = vadd.f32 %v2426, %v2604
        %2606 = vmatprep.mubr.f32.mxu0 0.0
        %v2607 = vand.u32 %v252, 4294901760
        %2608 = vmatmul.mubr.f32.gmra.mrb[0].mxu0 %v2607
        %v2609 = vpop.f32.mrb[0].mxu0
        %v2610 = vadd.f32 %v2431, %v2609
        %v2611 = vpop.f32.mrb[0].mxu0
        %v2612 = vadd.f32 %v2433, %v2611
        %2613 = vmatprep.mubr.f32.mxu0 0.0
        %v2614 = vand.u32 %v255, 4294901760
        %2615 = vmatmul.mubr.f32.gmra.mrb[0].mxu0 %v2614
        %v2616 = vpop.f32.mrb[0].mxu0
        %v2617 = vadd.f32 %v2438, %v2616
        %v2618 = vpop.f32.mrb[0].mxu0
        %v2619 = vadd.f32 %v2440, %v2618
        %2620 = vmatprep.mubr.f32.mxu0 0.0
        %v2621 = vand.u32 %v258, 4294901760
        %2622 = vmatmul.mubr.f32.gmra.mrb[0].mxu0 %v2621
        %v2623 = vpop.f32.mrb[0].mxu0
        %v2624 = vadd.f32 %v2445, %v2623
        %v2625 = vpop.f32.mrb[0].mxu0
        %v2626 = vadd.f32 %v2447, %v2625
        %2627 = vmatprep.mubr.f32.mxu0 0.0
        %v2628 = vand.u32 %v261, 4294901760
        %2629 = vmatmul.mubr.f32.gmra.mrb[0].mxu0 %v2628
        %v2630 = vpop.f32.mrb[0].mxu0
        %v2631 = vadd.f32 %v2452, %v2630
        %v2632 = vpop.f32.mrb[0].mxu0
        %v2633 = vadd.f32 %v2454, %v2632
        %2634 = vmatprep.mubr.f32.mxu0 0.0
        %v2635 = vand.u32 %v264, 4294901760
        %2636 = vmatmul.mubr.f32.gmra.mrb[0].mxu0 %v2635
        %v2637 = vpop.f32.mrb[0].mxu0
        %v2638 = vadd.f32 %v2459, %v2637
        %v2639 = vpop.f32.mrb[0].mxu0
        %v2640 = vadd.f32 %v2461, %v2639
        %2641 = vmatprep.mubr.f32.mxu0 0.0
        %v2642 = vand.u32 %v267, 4294901760
        %2643 = vmatmul.mubr.f32.gmra.mrb[0].mxu0 %v2642
        %v2644 = vpop.f32.mrb[0].mxu0
        %v2645 = vadd.f32 %v2466, %v2644
        %v2646 = vpop.f32.mrb[0].mxu0
        %v2647 = vadd.f32 %v2468, %v2646
        %2648 = vmatprep.mubr.f32.mxu0 0.0
        %v2649 = vand.u32 %v270, 4294901760
        %2650 = vmatmul.mubr.f32.gmra.mrb[0].mxu0 %v2649
        %v2651 = vpop.f32.mrb[0].mxu0
        %v2652 = vadd.f32 %v2473, %v2651
        %v2653 = vpop.f32.mrb[0].mxu0
        %v2654 = vadd.f32 %v2475, %v2653
        %2655 = vmatprep.mubr.f32.mxu0 0.0
        %v2656 = vand.u32 %v273, 4294901760
        %2657 = vmatmul.mubr.f32.gmra.mrb[0].mxu0 %v2656
        %v2658 = vpop.f32.mrb[0].mxu0
        %v2659 = vadd.f32 %v2480, %v2658
        %v2660 = vpop.f32.mrb[0].mxu0
        %v2661 = vadd.f32 %v2482, %v2660
        %2662 = vmatprep.mubr.f32.mxu0 0.0
        %v2663 = vand.u32 %v276, 4294901760
        %2664 = vmatmul.mubr.f32.gmra.mrb[0].mxu0 %v2663
        %v2665 = vpop.f32.mrb[0].mxu0
        %v2666 = vadd.f32 %v2487, %v2665
        %v2667 = vpop.f32.mrb[0].mxu0
        %v2668 = vadd.f32 %v2489, %v2667
        %2669 = vmatprep.mubr.f32.mxu0 0.0
        %v2670 = vand.u32 %v279, 4294901760
        %2671 = vmatmul.mubr.f32.gmra.mrb[0].mxu0 %v2670
        %v2672 = vpop.f32.mrb[0].mxu0
        %v2673 = vadd.f32 %v2494, %v2672
        %v2674 = vpop.f32.mrb[0].mxu0
        %v2675 = vadd.f32 %v2496, %v2674
        %2676 = vmatprep.mubr.f32.mxu0 0.0
        %v2677 = vand.u32 %v282, 4294901760
        %2678 = vmatmul.mubr.f32.gmra.mrb[0].mxu0 %v2677
        %v2679 = vpop.f32.mrb[0].mxu0
        %v2680 = vadd.f32 %v2501, %v2679
        %v2681 = vpop.f32.mrb[0].mxu0
        %v2682 = vadd.f32 %v2503, %v2681
        %2683 = vdwg.mxu0
        %v2684 = vand.u32 2147483647, %v1375
        %vm2685 = vcmp.le.f32.partialorder %v2684, 0.7853982
        %vm2686 = vcmp.lt.s32.totalorder %v1375, 0
        %v2687 = vand.u32 %v1375, 2139095040
        %v2688 = vshrl.u32 %v2687, 23
        %v2689 = vsub.s32 %v2688, 127
        %v2690 = vand.u32 2147483647, %v1375
        %v2691 = vand.u32 %v2690, 8388607
        %v2692 = vor.u32 %v2691, 8388608
        %v2693 = vsub.s32 0, %v2692
        %v2694 = vadd.s32 %v2689, 1
        %vm2695 = vcmp.gt.s32.totalorder %v2694, 0
        %v2696 = vsel %vm2695, %v2694, 0
        %v2697 = vshrl.u32 %v2696, 5
        %v2698 = vand.u32 %v2696, 31
        %v2699 = vsub.s32 32, %v2698
        %v2700 = vshrl.u32 683565275, %v2699
        %v2701 = vshll.u32 683565275, %v2698
        %v2702 = vshrl.u32 2475754826, %v2699
        %v2703 = vor.u32 %v2701, %v2702
        %v2704 = vshll.u32 2475754826, %v2698
        %v2705 = vshrl.u32 2131351028, %v2699
        %v2706 = vor.u32 %v2704, %v2705
        %v2707 = vshll.u32 2131351028, %v2698
        %v2708 = vshrl.u32 2102212464, %v2699
        %v2709 = vor.u32 %v2707, %v2708
        %v2710 = vshll.u32 2102212464, %v2698
        %v2711 = vshrl.u32 920167782, %v2699
        %v2712 = vor.u32 %v2710, %v2711
        %v2713 = vshll.u32 920167782, %v2698
        %v2714 = vshrl.u32 1326507024, %v2699
        %v2715 = vor.u32 %v2713, %v2714
        %vm2716 = vcmp.lt.s32.totalorder %v2697, 1
        %vm2717 = vcmp.lt.s32.totalorder %v2697, 2
        %vm2718 = vcmp.lt.s32.totalorder %v2697, 3
        %vm2719 = vcmp.lt.s32.totalorder %v2697, 4
        %v2720 = vsel %vm2716, %v2700, %v2703
        %v2721 = vsel %vm2719, %v2709, 2102212464
        %v2722 = vsel %vm2718, %v2706, %v2721
        %v2723 = vsel %vm2717, %v2720, %v2722
        %v2724 = vsel %vm2716, %v2703, %v2706
        %v2725 = vsel %vm2719, %v2712, 920167782
        %v2726 = vsel %vm2718, %v2709, %v2725
        %v2727 = vsel %vm2717, %v2724, %v2726
        %v2728 = vsel %vm2716, %v2706, %v2709
        %v2729 = vsel %vm2719, %v2715, 1326507024
        %v2730 = vsel %vm2718, %v2712, %v2729
        %v2731 = vsel %vm2717, %v2728, %v2730
        %v2732 = vshll.u32 %v2692, 8
        %v2733 = vmul.u32.u64.compose %v2732, %v2731
        %v2734 = vextract.low.u32 %v2733
        %v2735 = vextract.high.u32 %v2733
        %v2736 = vmul.u32.u64.compose %v2732, %v2727
        %v2737 = vextract.low.u32 %v2736
        %v2738 = vextract.high.u32 %v2736
        %v2739 = vmul.u32 %v2732, %v2723
        %v2740 = vadd.s32 %v2735, %v2737
        %vm2741 = vc.u32 %v2735, %v2737
        %v2742 = vadd.s32 %v2738, 1
        %v2743 = vsel %vm2741, %v2742, %v2738
        %v2744 = vadd.s32 %v2739, %v2743
        %v2745 = vadd.s32 %v2744, 536870912
        %v2746 = vshrl.u32 %v2745, 30
        %v2747 = vshll.u32 %v2746, 30
        %v2748 = vsub.s32 %v2744, %v2747
        %vm2749 = vcmp.lt.s32.totalorder %v2748, 0
        %v2750 = vsub.s32 0, %v2748
        %v2751 = vsel %vm2749, %v2750, %v2748
        %v2752 = vclz %v2751
        %v2753 = vsub.s32 %v2752, 2
        %vm2754 = vcmp.gt.s32.totalorder 0, %v2753
        %v2755 = vsel %vm2754, 0, %v2753
        %v2756 = vsub.s32 32, %v2755
        %v2757 = vshll.u32 %v2748, %v2755
        %v2758 = vshrl.u32 %v2740, %v2756
        %v2759 = vor.u32 %v2757, %v2758
        %v2760 = vsub.s32 4294967266, %v2755
        %v2761 = vadd.s32 %v2760, 127
        %v2762 = vshll.u32 %v2761, 23
        %v2763 = vor.u32 4788187, %v2762
        %v2764 = vand.u32 2147483647, %v2763
        %v2766 = vcvt.s32.f32 %v2759
        %v2767 = vmul.f32 %v2766, %v2764
        %v2768 = vxor.u32 %v2767, 2147483648
        %v2769 = vsel %vm2686, %v2768, %v2767
        %v2770 = vsub.s32 4, %v2746
        %v2771 = vsel %vm2686, %v2770, %v2746
        %v2772 = vsel %vm2685, %v1375, %v2769
        %v2773 = vsel %vm2685, 0, %v2771
        %v2774 = vcosq.f32.pop %v2772
        %v2775 = vsinq.f32.pop %v2772
        %vm2776 = vweird.f32 %v1375
        %v2777 = vadd.s32 %v2773, 3
        %v2778 = vand.u32 %v2777, 3
        %vm2779 = vcmp.lt.s32.totalorder %v2778, 2
        %vm2780 = vcmp.eq.s32.totalorder %v2778, 0
        %v2781 = vxor.u32 %v2775, 2147483648
        %v2782 = vsel %vm2780, %v2774, %v2781
        %vm2783 = vcmp.eq.s32.totalorder %v2778, 2
        %v2784 = vxor.u32 %v2774, 2147483648
        %v2785 = vsel %vm2783, %v2784, %v2775
        %v2786 = vsel %vm2779, %v2782, %v2785
        %v2787 = vsel %vm2776, nan, %v2786
        %v2788 = vand.u32 2147483647, %v1377
        %vm2789 = vcmp.le.f32.partialorder %v2788, 0.7853982
        %vm2790 = vcmp.lt.s32.totalorder %v1377, 0
        %v2791 = vand.u32 %v1377, 2139095040
        %v2792 = vshrl.u32 %v2791, 23
        %v2793 = vsub.s32 %v2792, 127
        %v2794 = vand.u32 2147483647, %v1377
        %v2795 = vand.u32 %v2794, 8388607
        %v2796 = vor.u32 %v2795, 8388608
        %v2797 = vsub.s32 0, %v2796
        %v2798 = vadd.s32 %v2793, 1
        %vm2799 = vcmp.gt.s32.totalorder %v2798, 0
        %v2800 = vsel %vm2799, %v2798, 0
        %v2801 = vshrl.u32 %v2800, 5
        %v2802 = vand.u32 %v2800, 31
        %v2803 = vsub.s32 32, %v2802
        %v2804 = vshrl.u32 683565275, %v2803
        %v2805 = vshll.u32 683565275, %v2802
        %v2806 = vshrl.u32 2475754826, %v2803
        %v2807 = vor.u32 %v2805, %v2806
        %v2808 = vshll.u32 2475754826, %v2802
        %v2809 = vshrl.u32 2131351028, %v2803
        %v2810 = vor.u32 %v2808, %v2809
        %v2811 = vshll.u32 2131351028, %v2802
        %v2812 = vshrl.u32 2102212464, %v2803
        %v2813 = vor.u32 %v2811, %v2812
        %v2814 = vshll.u32 2102212464, %v2802
        %v2815 = vshrl.u32 920167782, %v2803
        %v2816 = vor.u32 %v2814, %v2815
        %v2817 = vshll.u32 920167782, %v2802
        %v2818 = vshrl.u32 1326507024, %v2803
        %v2819 = vor.u32 %v2817, %v2818
        %vm2820 = vcmp.lt.s32.totalorder %v2801, 1
        %vm2821 = vcmp.lt.s32.totalorder %v2801, 2
        %vm2822 = vcmp.lt.s32.totalorder %v2801, 3
        %vm2823 = vcmp.lt.s32.totalorder %v2801, 4
        %v2824 = vsel %vm2820, %v2804, %v2807
        %v2825 = vsel %vm2823, %v2813, 2102212464
        %v2826 = vsel %vm2822, %v2810, %v2825
        %v2827 = vsel %vm2821, %v2824, %v2826
        %v2828 = vsel %vm2820, %v2807, %v2810
        %v2829 = vsel %vm2823, %v2816, 920167782
        %v2830 = vsel %vm2822, %v2813, %v2829
        %v2831 = vsel %vm2821, %v2828, %v2830
        %v2832 = vsel %vm2820, %v2810, %v2813
        %v2833 = vsel %vm2823, %v2819, 1326507024
        %v2834 = vsel %vm2822, %v2816, %v2833
        %v2835 = vsel %vm2821, %v2832, %v2834
        %v2836 = vshll.u32 %v2796, 8
        %v2837 = vmul.u32.u64.compose %v2836, %v2835
        %v2838 = vextract.low.u32 %v2837
        %v2839 = vextract.high.u32 %v2837
        %v2840 = vmul.u32.u64.compose %v2836, %v2831
        %v2841 = vextract.low.u32 %v2840
        %v2842 = vextract.high.u32 %v2840
        %v2843 = vmul.u32 %v2836, %v2827
        %v2844 = vadd.s32 %v2839, %v2841
        %vm2845 = vc.u32 %v2839, %v2841
        %v2846 = vadd.s32 %v2842, 1
        %v2847 = vsel %vm2845, %v2846, %v2842
        %v2848 = vadd.s32 %v2843, %v2847
        %v2849 = vadd.s32 %v2848, 536870912
        %v2850 = vshrl.u32 %v2849, 30
        %v2851 = vshll.u32 %v2850, 30
        %v2852 = vsub.s32 %v2848, %v2851
        %vm2853 = vcmp.lt.s32.totalorder %v2852, 0
        %v2854 = vsub.s32 0, %v2852
        %v2855 = vsel %vm2853, %v2854, %v2852
        %v2856 = vclz %v2855
        %v2857 = vsub.s32 %v2856, 2
        %vm2858 = vcmp.gt.s32.totalorder 0, %v2857
        %v2859 = vsel %vm2858, 0, %v2857
        %v2860 = vsub.s32 32, %v2859
        %v2861 = vshll.u32 %v2852, %v2859
        %v2862 = vshrl.u32 %v2844, %v2860
        %v2863 = vor.u32 %v2861, %v2862
        %v2864 = vsub.s32 4294967266, %v2859
        %v2865 = vadd.s32 %v2864, 127
        %v2866 = vshll.u32 %v2865, 23
        %v2867 = vor.u32 4788187, %v2866
        %v2868 = vand.u32 2147483647, %v2867
        %v2870 = vcvt.s32.f32 %v2863
        %v2871 = vmul.f32 %v2870, %v2868
        %v2872 = vxor.u32 %v2871, 2147483648
        %v2873 = vsel %vm2790, %v2872, %v2871
        %v2874 = vsub.s32 4, %v2850
        %v2875 = vsel %vm2790, %v2874, %v2850
        %v2876 = vsel %vm2789, %v1377, %v2873
        %v2877 = vsel %vm2789, 0, %v2875
        %v2878 = vcosq.f32.pop %v2876
        %v2879 = vsinq.f32.pop %v2876
        %vm2880 = vweird.f32 %v1377
        %v2881 = vadd.s32 %v2877, 3
        %v2882 = vand.u32 %v2881, 3
        %vm2883 = vcmp.lt.s32.totalorder %v2882, 2
        %vm2884 = vcmp.eq.s32.totalorder %v2882, 0
        %v2885 = vxor.u32 %v2879, 2147483648
        %v2886 = vsel %vm2884, %v2878, %v2885
        %vm2887 = vcmp.eq.s32.totalorder %v2882, 2
        %v2888 = vxor.u32 %v2878, 2147483648
        %v2889 = vsel %vm2887, %v2888, %v2879
        %v2890 = vsel %vm2883, %v2886, %v2889
        %v2891 = vsel %vm2880, nan, %v2890
        %v2892 = vand.u32 2147483647, %v2575
        %vm2893 = vcmp.le.f32.partialorder %v2892, 0.7853982
        %vm2894 = vcmp.lt.s32.totalorder %v2575, 0
        %v2895 = vand.u32 %v2575, 2139095040
        %v2896 = vshrl.u32 %v2895, 23
        %v2897 = vsub.s32 %v2896, 127
        %v2898 = vand.u32 2147483647, %v2575
        %v2899 = vand.u32 %v2898, 8388607
        %v2900 = vor.u32 %v2899, 8388608
        %v2901 = vsub.s32 0, %v2900
        %v2902 = vadd.s32 %v2897, 1
        %vm2903 = vcmp.gt.s32.totalorder %v2902, 0
        %v2904 = vsel %vm2903, %v2902, 0
        %v2905 = vshrl.u32 %v2904, 5
        %v2906 = vand.u32 %v2904, 31
        %v2907 = vsub.s32 32, %v2906
        %v2908 = vshrl.u32 683565275, %v2907
        %v2909 = vshll.u32 683565275, %v2906
        %v2910 = vshrl.u32 2475754826, %v2907
        %v2911 = vor.u32 %v2909, %v2910
        %v2912 = vshll.u32 2475754826, %v2906
        %v2913 = vshrl.u32 2131351028, %v2907
        %v2914 = vor.u32 %v2912, %v2913
        %v2915 = vshll.u32 2131351028, %v2906
        %v2916 = vshrl.u32 2102212464, %v2907
        %v2917 = vor.u32 %v2915, %v2916
        %v2918 = vshll.u32 2102212464, %v2906
        %v2919 = vshrl.u32 920167782, %v2907
        %v2920 = vor.u32 %v2918, %v2919
        %v2921 = vshll.u32 920167782, %v2906
        %v2922 = vshrl.u32 1326507024, %v2907
        %v2923 = vor.u32 %v2921, %v2922
        %vm2924 = vcmp.lt.s32.totalorder %v2905, 1
        %vm2925 = vcmp.lt.s32.totalorder %v2905, 2
        %vm2926 = vcmp.lt.s32.totalorder %v2905, 3
        %vm2927 = vcmp.lt.s32.totalorder %v2905, 4
        %v2928 = vsel %vm2924, %v2908, %v2911
        %v2929 = vsel %vm2927, %v2917, 2102212464
        %v2930 = vsel %vm2926, %v2914, %v2929
        %v2931 = vsel %vm2925, %v2928, %v2930
        %v2932 = vsel %vm2924, %v2911, %v2914
        %v2933 = vsel %vm2927, %v2920, 920167782
        %v2934 = vsel %vm2926, %v2917, %v2933
        %v2935 = vsel %vm2925, %v2932, %v2934
        %v2936 = vsel %vm2924, %v2914, %v2917
        %v2937 = vsel %vm2927, %v2923, 1326507024
        %v2938 = vsel %vm2926, %v2920, %v2937
        %v2939 = vsel %vm2925, %v2936, %v2938
        %v2940 = vshll.u32 %v2900, 8
        %v2941 = vmul.u32.u64.compose %v2940, %v2939
        %v2942 = vextract.low.u32 %v2941
        %v2943 = vextract.high.u32 %v2941
        %v2944 = vmul.u32.u64.compose %v2940, %v2935
        %v2945 = vextract.low.u32 %v2944
        %v2946 = vextract.high.u32 %v2944
        %v2947 = vmul.u32 %v2940, %v2931
        %v2948 = vadd.s32 %v2943, %v2945
        %vm2949 = vc.u32 %v2943, %v2945
        %v2950 = vadd.s32 %v2946, 1
        %v2951 = vsel %vm2949, %v2950, %v2946
        %v2952 = vadd.s32 %v2947, %v2951
        %v2953 = vadd.s32 %v2952, 536870912
        %v2954 = vshrl.u32 %v2953, 30
        %v2955 = vshll.u32 %v2954, 30
        %v2956 = vsub.s32 %v2952, %v2955
        %vm2957 = vcmp.lt.s32.totalorder %v2956, 0
        %v2958 = vsub.s32 0, %v2956
        %v2959 = vsel %vm2957, %v2958, %v2956
        %v2960 = vclz %v2959
        %v2961 = vsub.s32 %v2960, 2
        %vm2962 = vcmp.gt.s32.totalorder 0, %v2961
        %v2963 = vsel %vm2962, 0, %v2961
        %v2964 = vsub.s32 32, %v2963
        %v2965 = vshll.u32 %v2956, %v2963
        %v2966 = vshrl.u32 %v2948, %v2964
        %v2967 = vor.u32 %v2965, %v2966
        %v2968 = vsub.s32 4294967266, %v2963
        %v2969 = vadd.s32 %v2968, 127
        %v2970 = vshll.u32 %v2969, 23
        %v2971 = vor.u32 4788187, %v2970
        %v2972 = vand.u32 2147483647, %v2971
        %v2974 = vcvt.s32.f32 %v2967
        %v2975 = vmul.f32 %v2974, %v2972
        %v2976 = vxor.u32 %v2975, 2147483648
        %v2977 = vsel %vm2894, %v2976, %v2975
        %v2978 = vsub.s32 4, %v2954
        %v2979 = vsel %vm2894, %v2978, %v2954
        %v2980 = vsel %vm2893, %v2575, %v2977
        %v2981 = vsel %vm2893, 0, %v2979
        %v2982 = vcosq.f32.pop %v2980
        %v2983 = vsinq.f32.pop %v2980
        %vm2984 = vweird.f32 %v2575
        %v2985 = vadd.s32 %v2981, 3
        %v2986 = vand.u32 %v2985, 3
        %vm2987 = vcmp.lt.s32.totalorder %v2986, 2
        %vm2988 = vcmp.eq.s32.totalorder %v2986, 0
        %v2989 = vxor.u32 %v2983, 2147483648
        %v2990 = vsel %vm2988, %v2982, %v2989
        %vm2991 = vcmp.eq.s32.totalorder %v2986, 2
        %v2992 = vxor.u32 %v2982, 2147483648
        %v2993 = vsel %vm2991, %v2992, %v2983
        %v2994 = vsel %vm2987, %v2990, %v2993
        %v2995 = vsel %vm2984, nan, %v2994
        %v2996 = vand.u32 2147483647, %v2577
        %vm2997 = vcmp.le.f32.partialorder %v2996, 0.7853982
        %vm2998 = vcmp.lt.s32.totalorder %v2577, 0
        %v2999 = vand.u32 %v2577, 2139095040
        %v3000 = vshrl.u32 %v2999, 23
        %v3001 = vsub.s32 %v3000, 127
        %v3002 = vand.u32 2147483647, %v2577
        %v3003 = vand.u32 %v3002, 8388607
        %v3004 = vor.u32 %v3003, 8388608
        %v3005 = vsub.s32 0, %v3004
        %v3006 = vadd.s32 %v3001, 1
        %vm3007 = vcmp.gt.s32.totalorder %v3006, 0
        %v3008 = vsel %vm3007, %v3006, 0
        %v3009 = vshrl.u32 %v3008, 5
        %v3010 = vand.u32 %v3008, 31
        %v3011 = vsub.s32 32, %v3010
        %v3012 = vshrl.u32 683565275, %v3011
        %v3013 = vshll.u32 683565275, %v3010
        %v3014 = vshrl.u32 2475754826, %v3011
        %v3015 = vor.u32 %v3013, %v3014
        %v3016 = vshll.u32 2475754826, %v3010
        %v3017 = vshrl.u32 2131351028, %v3011
        %v3018 = vor.u32 %v3016, %v3017
        %v3019 = vshll.u32 2131351028, %v3010
        %v3020 = vshrl.u32 2102212464, %v3011
        %v3021 = vor.u32 %v3019, %v3020
        %v3022 = vshll.u32 2102212464, %v3010
        %v3023 = vshrl.u32 920167782, %v3011
        %v3024 = vor.u32 %v3022, %v3023
        %v3025 = vshll.u32 920167782, %v3010
        %v3026 = vshrl.u32 1326507024, %v3011
        %v3027 = vor.u32 %v3025, %v3026
        %vm3028 = vcmp.lt.s32.totalorder %v3009, 1
        %vm3029 = vcmp.lt.s32.totalorder %v3009, 2
        %vm3030 = vcmp.lt.s32.totalorder %v3009, 3
        %vm3031 = vcmp.lt.s32.totalorder %v3009, 4
        %v3032 = vsel %vm3028, %v3012, %v3015
        %v3033 = vsel %vm3031, %v3021, 2102212464
        %v3034 = vsel %vm3030, %v3018, %v3033
        %v3035 = vsel %vm3029, %v3032, %v3034
        %v3036 = vsel %vm3028, %v3015, %v3018
        %v3037 = vsel %vm3031, %v3024, 920167782
        %v3038 = vsel %vm3030, %v3021, %v3037
        %v3039 = vsel %vm3029, %v3036, %v3038
        %v3040 = vsel %vm3028, %v3018, %v3021
        %v3041 = vsel %vm3031, %v3027, 1326507024
        %v3042 = vsel %vm3030, %v3024, %v3041
        %v3043 = vsel %vm3029, %v3040, %v3042
        %v3044 = vshll.u32 %v3004, 8
        %v3045 = vmul.u32.u64.compose %v3044, %v3043
        %v3046 = vextract.low.u32 %v3045
        %v3047 = vextract.high.u32 %v3045
        %v3048 = vmul.u32.u64.compose %v3044, %v3039
        %v3049 = vextract.low.u32 %v3048
        %v3050 = vextract.high.u32 %v3048
        %v3051 = vmul.u32 %v3044, %v3035
        %v3052 = vadd.s32 %v3047, %v3049
        %vm3053 = vc.u32 %v3047, %v3049
        %v3054 = vadd.s32 %v3050, 1
        %v3055 = vsel %vm3053, %v3054, %v3050
        %v3056 = vadd.s32 %v3051, %v3055
        %v3057 = vadd.s32 %v3056, 536870912
        %v3058 = vshrl.u32 %v3057, 30
        %v3059 = vshll.u32 %v3058, 30
        %v3060 = vsub.s32 %v3056, %v3059
        %vm3061 = vcmp.lt.s32.totalorder %v3060, 0
        %v3062 = vsub.s32 0, %v3060
        %v3063 = vsel %vm3061, %v3062, %v3060
        %v3064 = vclz %v3063
        %v3065 = vsub.s32 %v3064, 2
        %vm3066 = vcmp.gt.s32.totalorder 0, %v3065
        %v3067 = vsel %vm3066, 0, %v3065
        %v3068 = vsub.s32 32, %v3067
        %v3069 = vshll.u32 %v3060, %v3067
        %v3070 = vshrl.u32 %v3052, %v3068
        %v3071 = vor.u32 %v3069, %v3070
        %v3072 = vsub.s32 4294967266, %v3067
        %v3073 = vadd.s32 %v3072, 127
        %v3074 = vshll.u32 %v3073, 23
        %v3075 = vor.u32 4788187, %v3074
        %v3076 = vand.u32 2147483647, %v3075
        %v3078 = vcvt.s32.f32 %v3071
        %v3079 = vmul.f32 %v3078, %v3076
        %v3080 = vxor.u32 %v3079, 2147483648
        %v3081 = vsel %vm2998, %v3080, %v3079
        %v3082 = vsub.s32 4, %v3058
        %v3083 = vsel %vm2998, %v3082, %v3058
        %v3084 = vsel %vm2997, %v2577, %v3081
        %v3085 = vsel %vm2997, 0, %v3083
        %v3086 = vcosq.f32.pop %v3084
        %v3087 = vsinq.f32.pop %v3084
        %vm3088 = vweird.f32 %v2577
        %v3089 = vadd.s32 %v3085, 3
        %v3090 = vand.u32 %v3089, 3
        %vm3091 = vcmp.lt.s32.totalorder %v3090, 2
        %vm3092 = vcmp.eq.s32.totalorder %v3090, 0
        %v3093 = vxor.u32 %v3087, 2147483648
        %v3094 = vsel %vm3092, %v3086, %v3093
        %vm3095 = vcmp.eq.s32.totalorder %v3090, 2
        %v3096 = vxor.u32 %v3086, 2147483648
        %v3097 = vsel %vm3095, %v3096, %v3087
        %v3098 = vsel %vm3091, %v3094, %v3097
        %v3099 = vsel %vm3088, nan, %v3098
        %v3100 = vand.u32 2147483647, %v1382
        %vm3101 = vcmp.le.f32.partialorder %v3100, 0.7853982
        %vm3102 = vcmp.lt.s32.totalorder %v1382, 0
        %v3103 = vand.u32 %v1382, 2139095040
        %v3104 = vshrl.u32 %v3103, 23
        %v3105 = vsub.s32 %v3104, 127
        %v3106 = vand.u32 2147483647, %v1382
        %v3107 = vand.u32 %v3106, 8388607
        %v3108 = vor.u32 %v3107, 8388608
        %v3109 = vsub.s32 0, %v3108
        %v3110 = vadd.s32 %v3105, 1
        %vm3111 = vcmp.gt.s32.totalorder %v3110, 0
        %v3112 = vsel %vm3111, %v3110, 0
        %v3113 = vshrl.u32 %v3112, 5
        %v3114 = vand.u32 %v3112, 31
        %v3115 = vsub.s32 32, %v3114
        %v3116 = vshrl.u32 683565275, %v3115
        %v3117 = vshll.u32 683565275, %v3114
        %v3118 = vshrl.u32 2475754826, %v3115
        %v3119 = vor.u32 %v3117, %v3118
        %v3120 = vshll.u32 2475754826, %v3114
        %v3121 = vshrl.u32 2131351028, %v3115
        %v3122 = vor.u32 %v3120, %v3121
        %v3123 = vshll.u32 2131351028, %v3114
        %v3124 = vshrl.u32 2102212464, %v3115
        %v3125 = vor.u32 %v3123, %v3124
        %v3126 = vshll.u32 2102212464, %v3114
        %v3127 = vshrl.u32 920167782, %v3115
        %v3128 = vor.u32 %v3126, %v3127
        %v3129 = vshll.u32 920167782, %v3114
        %v3130 = vshrl.u32 1326507024, %v3115
        %v3131 = vor.u32 %v3129, %v3130
        %vm3132 = vcmp.lt.s32.totalorder %v3113, 1
        %vm3133 = vcmp.lt.s32.totalorder %v3113, 2
        %vm3134 = vcmp.lt.s32.totalorder %v3113, 3
        %vm3135 = vcmp.lt.s32.totalorder %v3113, 4
        %v3136 = vsel %vm3132, %v3116, %v3119
        %v3137 = vsel %vm3135, %v3125, 2102212464
        %v3138 = vsel %vm3134, %v3122, %v3137
        %v3139 = vsel %vm3133, %v3136, %v3138
        %v3140 = vsel %vm3132, %v3119, %v3122
        %v3141 = vsel %vm3135, %v3128, 920167782
        %v3142 = vsel %vm3134, %v3125, %v3141
        %v3143 = vsel %vm3133, %v3140, %v3142
        %v3144 = vsel %vm3132, %v3122, %v3125
        %v3145 = vsel %vm3135, %v3131, 1326507024
        %v3146 = vsel %vm3134, %v3128, %v3145
        %v3147 = vsel %vm3133, %v3144, %v3146
        %v3148 = vshll.u32 %v3108, 8
        %v3149 = vmul.u32.u64.compose %v3148, %v3147
        %v3150 = vextract.low.u32 %v3149
        %v3151 = vextract.high.u32 %v3149
        %v3152 = vmul.u32.u64.compose %v3148, %v3143
        %v3153 = vextract.low.u32 %v3152
        %v3154 = vextract.high.u32 %v3152
        %v3155 = vmul.u32 %v3148, %v3139
        %v3156 = vadd.s32 %v3151, %v3153
        %vm3157 = vc.u32 %v3151, %v3153
        %v3158 = vadd.s32 %v3154, 1
        %v3159 = vsel %vm3157, %v3158, %v3154
        %v3160 = vadd.s32 %v3155, %v3159
        %v3161 = vadd.s32 %v3160, 536870912
        %v3162 = vshrl.u32 %v3161, 30
        %v3163 = vshll.u32 %v3162, 30
        %v3164 = vsub.s32 %v3160, %v3163
        %vm3165 = vcmp.lt.s32.totalorder %v3164, 0
        %v3166 = vsub.s32 0, %v3164
        %v3167 = vsel %vm3165, %v3166, %v3164
        %v3168 = vclz %v3167
        %v3169 = vsub.s32 %v3168, 2
        %vm3170 = vcmp.gt.s32.totalorder 0, %v3169
        %v3171 = vsel %vm3170, 0, %v3169
        %v3172 = vsub.s32 32, %v3171
        %v3173 = vshll.u32 %v3164, %v3171
        %v3174 = vshrl.u32 %v3156, %v3172
        %v3175 = vor.u32 %v3173, %v3174
        %v3176 = vsub.s32 4294967266, %v3171
        %v3177 = vadd.s32 %v3176, 127
        %v3178 = vshll.u32 %v3177, 23
        %v3179 = vor.u32 4788187, %v3178
        %v3180 = vand.u32 2147483647, %v3179
        %v3182 = vcvt.s32.f32 %v3175
        %v3183 = vmul.f32 %v3182, %v3180
        %v3184 = vxor.u32 %v3183, 2147483648
        %v3185 = vsel %vm3102, %v3184, %v3183
        %v3186 = vsub.s32 4, %v3162
        %v3187 = vsel %vm3102, %v3186, %v3162
        %v3188 = vsel %vm3101, %v1382, %v3185
        %v3189 = vsel %vm3101, 0, %v3187
        %v3190 = vcosq.f32.pop %v3188
        %v3191 = vsinq.f32.pop %v3188
        %vm3192 = vweird.f32 %v1382
        %v3193 = vadd.s32 %v3189, 3
        %v3194 = vand.u32 %v3193, 3
        %vm3195 = vcmp.lt.s32.totalorder %v3194, 2
        %vm3196 = vcmp.eq.s32.totalorder %v3194, 0
        %v3197 = vxor.u32 %v3191, 2147483648
        %v3198 = vsel %vm3196, %v3190, %v3197
        %vm3199 = vcmp.eq.s32.totalorder %v3194, 2
        %v3200 = vxor.u32 %v3190, 2147483648
        %v3201 = vsel %vm3199, %v3200, %v3191
        %v3202 = vsel %vm3195, %v3198, %v3201
        %v3203 = vsel %vm3192, nan, %v3202
        %v3204 = vand.u32 2147483647, %v1384
        %vm3205 = vcmp.le.f32.partialorder %v3204, 0.7853982
        %vm3206 = vcmp.lt.s32.totalorder %v1384, 0
        %v3207 = vand.u32 %v1384, 2139095040
        %v3208 = vshrl.u32 %v3207, 23
        %v3209 = vsub.s32 %v3208, 127
        %v3210 = vand.u32 2147483647, %v1384
        %v3211 = vand.u32 %v3210, 8388607
        %v3212 = vor.u32 %v3211, 8388608
        %v3213 = vsub.s32 0, %v3212
        %v3214 = vadd.s32 %v3209, 1
        %vm3215 = vcmp.gt.s32.totalorder %v3214, 0
        %v3216 = vsel %vm3215, %v3214, 0
        %v3217 = vshrl.u32 %v3216, 5
        %v3218 = vand.u32 %v3216, 31
        %v3219 = vsub.s32 32, %v3218
        %v3220 = vshrl.u32 683565275, %v3219
        %v3221 = vshll.u32 683565275, %v3218
        %v3222 = vshrl.u32 2475754826, %v3219
        %v3223 = vor.u32 %v3221, %v3222
        %v3224 = vshll.u32 2475754826, %v3218
        %v3225 = vshrl.u32 2131351028, %v3219
        %v3226 = vor.u32 %v3224, %v3225
        %v3227 = vshll.u32 2131351028, %v3218
        %v3228 = vshrl.u32 2102212464, %v3219
        %v3229 = vor.u32 %v3227, %v3228
        %v3230 = vshll.u32 2102212464, %v3218
        %v3231 = vshrl.u32 920167782, %v3219
        %v3232 = vor.u32 %v3230, %v3231
        %v3233 = vshll.u32 920167782, %v3218
        %v3234 = vshrl.u32 1326507024, %v3219
        %v3235 = vor.u32 %v3233, %v3234
        %vm3236 = vcmp.lt.s32.totalorder %v3217, 1
        %vm3237 = vcmp.lt.s32.totalorder %v3217, 2
        %vm3238 = vcmp.lt.s32.totalorder %v3217, 3
        %vm3239 = vcmp.lt.s32.totalorder %v3217, 4
        %v3240 = vsel %vm3236, %v3220, %v3223
        %v3241 = vsel %vm3239, %v3229, 2102212464
        %v3242 = vsel %vm3238, %v3226, %v3241
        %v3243 = vsel %vm3237, %v3240, %v3242
        %v3244 = vsel %vm3236, %v3223, %v3226
        %v3245 = vsel %vm3239, %v3232, 920167782
        %v3246 = vsel %vm3238, %v3229, %v3245
        %v3247 = vsel %vm3237, %v3244, %v3246
        %v3248 = vsel %vm3236, %v3226, %v3229
        %v3249 = vsel %vm3239, %v3235, 1326507024
        %v3250 = vsel %vm3238, %v3232, %v3249
        %v3251 = vsel %vm3237, %v3248, %v3250
        %v3252 = vshll.u32 %v3212, 8
        %v3253 = vmul.u32.u64.compose %v3252, %v3251
        %v3254 = vextract.low.u32 %v3253
        %v3255 = vextract.high.u32 %v3253
        %v3256 = vmul.u32.u64.compose %v3252, %v3247
        %v3257 = vextract.low.u32 %v3256
        %v3258 = vextract.high.u32 %v3256
        %v3259 = vmul.u32 %v3252, %v3243
        %v3260 = vadd.s32 %v3255, %v3257
        %vm3261 = vc.u32 %v3255, %v3257
        %v3262 = vadd.s32 %v3258, 1
        %v3263 = vsel %vm3261, %v3262, %v3258
        %v3264 = vadd.s32 %v3259, %v3263
        %v3265 = vadd.s32 %v3264, 536870912
        %v3266 = vshrl.u32 %v3265, 30
        %v3267 = vshll.u32 %v3266, 30
        %v3268 = vsub.s32 %v3264, %v3267
        %vm3269 = vcmp.lt.s32.totalorder %v3268, 0
        %v3270 = vsub.s32 0, %v3268
        %v3271 = vsel %vm3269, %v3270, %v3268
        %v3272 = vclz %v3271
        %v3273 = vsub.s32 %v3272, 2
        %vm3274 = vcmp.gt.s32.totalorder 0, %v3273
        %v3275 = vsel %vm3274, 0, %v3273
        %v3276 = vsub.s32 32, %v3275
        %v3277 = vshll.u32 %v3268, %v3275
        %v3278 = vshrl.u32 %v3260, %v3276
        %v3279 = vor.u32 %v3277, %v3278
        %v3280 = vsub.s32 4294967266, %v3275
        %v3281 = vadd.s32 %v3280, 127
        %v3282 = vshll.u32 %v3281, 23
        %v3283 = vor.u32 4788187, %v3282
        %v3284 = vand.u32 2147483647, %v3283
        %v3286 = vcvt.s32.f32 %v3279
        %v3287 = vmul.f32 %v3286, %v3284
        %v3288 = vxor.u32 %v3287, 2147483648
        %v3289 = vsel %vm3206, %v3288, %v3287
        %v3290 = vsub.s32 4, %v3266
        %v3291 = vsel %vm3206, %v3290, %v3266
        %v3292 = vsel %vm3205, %v1384, %v3289
        %v3293 = vsel %vm3205, 0, %v3291
        %v3294 = vcosq.f32.pop %v3292
        %v3295 = vsinq.f32.pop %v3292
        %vm3296 = vweird.f32 %v1384
        %v3297 = vadd.s32 %v3293, 3
        %v3298 = vand.u32 %v3297, 3
        %vm3299 = vcmp.lt.s32.totalorder %v3298, 2
        %vm3300 = vcmp.eq.s32.totalorder %v3298, 0
        %v3301 = vxor.u32 %v3295, 2147483648
        %v3302 = vsel %vm3300, %v3294, %v3301
        %vm3303 = vcmp.eq.s32.totalorder %v3298, 2
        %v3304 = vxor.u32 %v3294, 2147483648
        %v3305 = vsel %vm3303, %v3304, %v3295
        %v3306 = vsel %vm3299, %v3302, %v3305
        %v3307 = vsel %vm3296, nan, %v3306
        %v3308 = vand.u32 2147483647, %v2582
        %vm3309 = vcmp.le.f32.partialorder %v3308, 0.7853982
        %vm3310 = vcmp.lt.s32.totalorder %v2582, 0
        %v3311 = vand.u32 %v2582, 2139095040
        %v3312 = vshrl.u32 %v3311, 23
        %v3313 = vsub.s32 %v3312, 127
        %v3314 = vand.u32 2147483647, %v2582
        %v3315 = vand.u32 %v3314, 8388607
        %v3316 = vor.u32 %v3315, 8388608
        %v3317 = vsub.s32 0, %v3316
        %v3318 = vadd.s32 %v3313, 1
        %vm3319 = vcmp.gt.s32.totalorder %v3318, 0
        %v3320 = vsel %vm3319, %v3318, 0
        %v3321 = vshrl.u32 %v3320, 5
        %v3322 = vand.u32 %v3320, 31
        %v3323 = vsub.s32 32, %v3322
        %v3324 = vshrl.u32 683565275, %v3323
        %v3325 = vshll.u32 683565275, %v3322
        %v3326 = vshrl.u32 2475754826, %v3323
        %v3327 = vor.u32 %v3325, %v3326
        %v3328 = vshll.u32 2475754826, %v3322
        %v3329 = vshrl.u32 2131351028, %v3323
        %v3330 = vor.u32 %v3328, %v3329
        %v3331 = vshll.u32 2131351028, %v3322
        %v3332 = vshrl.u32 2102212464, %v3323
        %v3333 = vor.u32 %v3331, %v3332
        %v3334 = vshll.u32 2102212464, %v3322
        %v3335 = vshrl.u32 920167782, %v3323
        %v3336 = vor.u32 %v3334, %v3335
        %v3337 = vshll.u32 920167782, %v3322
        %v3338 = vshrl.u32 1326507024, %v3323
        %v3339 = vor.u32 %v3337, %v3338
        %vm3340 = vcmp.lt.s32.totalorder %v3321, 1
        %vm3341 = vcmp.lt.s32.totalorder %v3321, 2
        %vm3342 = vcmp.lt.s32.totalorder %v3321, 3
        %vm3343 = vcmp.lt.s32.totalorder %v3321, 4
        %v3344 = vsel %vm3340, %v3324, %v3327
        %v3345 = vsel %vm3343, %v3333, 2102212464
        %v3346 = vsel %vm3342, %v3330, %v3345
        %v3347 = vsel %vm3341, %v3344, %v3346
        %v3348 = vsel %vm3340, %v3327, %v3330
        %v3349 = vsel %vm3343, %v3336, 920167782
        %v3350 = vsel %vm3342, %v3333, %v3349
        %v3351 = vsel %vm3341, %v3348, %v3350
        %v3352 = vsel %vm3340, %v3330, %v3333
        %v3353 = vsel %vm3343, %v3339, 1326507024
        %v3354 = vsel %vm3342, %v3336, %v3353
        %v3355 = vsel %vm3341, %v3352, %v3354
        %v3356 = vshll.u32 %v3316, 8
        %v3357 = vmul.u32.u64.compose %v3356, %v3355
        %v3358 = vextract.low.u32 %v3357
        %v3359 = vextract.high.u32 %v3357
        %v3360 = vmul.u32.u64.compose %v3356, %v3351
        %v3361 = vextract.low.u32 %v3360
        %v3362 = vextract.high.u32 %v3360
        %v3363 = vmul.u32 %v3356, %v3347
        %v3364 = vadd.s32 %v3359, %v3361
        %vm3365 = vc.u32 %v3359, %v3361
        %v3366 = vadd.s32 %v3362, 1
        %v3367 = vsel %vm3365, %v3366, %v3362
        %v3368 = vadd.s32 %v3363, %v3367
        %v3369 = vadd.s32 %v3368, 536870912
        %v3370 = vshrl.u32 %v3369, 30
        %v3371 = vshll.u32 %v3370, 30
        %v3372 = vsub.s32 %v3368, %v3371
        %vm3373 = vcmp.lt.s32.totalorder %v3372, 0
        %v3374 = vsub.s32 0, %v3372
        %v3375 = vsel %vm3373, %v3374, %v3372
        %v3376 = vclz %v3375
        %v3377 = vsub.s32 %v3376, 2
        %vm3378 = vcmp.gt.s32.totalorder 0, %v3377
        %v3379 = vsel %vm3378, 0, %v3377
        %v3380 = vsub.s32 32, %v3379
        %v3381 = vshll.u32 %v3372, %v3379
        %v3382 = vshrl.u32 %v3364, %v3380
        %v3383 = vor.u32 %v3381, %v3382
        %v3384 = vsub.s32 4294967266, %v3379
        %v3385 = vadd.s32 %v3384, 127
        %v3386 = vshll.u32 %v3385, 23
        %v3387 = vor.u32 4788187, %v3386
        %v3388 = vand.u32 2147483647, %v3387
        %v3390 = vcvt.s32.f32 %v3383
        %v3391 = vmul.f32 %v3390, %v3388
        %v3392 = vxor.u32 %v3391, 2147483648
        %v3393 = vsel %vm3310, %v3392, %v3391
        %v3394 = vsub.s32 4, %v3370
        %v3395 = vsel %vm3310, %v3394, %v3370
        %v3396 = vsel %vm3309, %v2582, %v3393
        %v3397 = vsel %vm3309, 0, %v3395
        %v3398 = vcosq.f32.pop %v3396
        %v3399 = vsinq.f32.pop %v3396
        %vm3400 = vweird.f32 %v2582
        %v3401 = vadd.s32 %v3397, 3
        %v3402 = vand.u32 %v3401, 3
        %vm3403 = vcmp.lt.s32.totalorder %v3402, 2
        %vm3404 = vcmp.eq.s32.totalorder %v3402, 0
        %v3405 = vxor.u32 %v3399, 2147483648
        %v3406 = vsel %vm3404, %v3398, %v3405
        %vm3407 = vcmp.eq.s32.totalorder %v3402, 2
        %v3408 = vxor.u32 %v3398, 2147483648
        %v3409 = vsel %vm3407, %v3408, %v3399
        %v3410 = vsel %vm3403, %v3406, %v3409
        %v3411 = vsel %vm3400, nan, %v3410
        %v3412 = vand.u32 2147483647, %v2584
        %vm3413 = vcmp.le.f32.partialorder %v3412, 0.7853982
        %vm3414 = vcmp.lt.s32.totalorder %v2584, 0
        %v3415 = vand.u32 %v2584, 2139095040
        %v3416 = vshrl.u32 %v3415, 23
        %v3417 = vsub.s32 %v3416, 127
        %v3418 = vand.u32 2147483647, %v2584
        %v3419 = vand.u32 %v3418, 8388607
        %v3420 = vor.u32 %v3419, 8388608
        %v3421 = vsub.s32 0, %v3420
        %v3422 = vadd.s32 %v3417, 1
        %vm3423 = vcmp.gt.s32.totalorder %v3422, 0
        %v3424 = vsel %vm3423, %v3422, 0
        %v3425 = vshrl.u32 %v3424, 5
        %v3426 = vand.u32 %v3424, 31
        %v3427 = vsub.s32 32, %v3426
        %v3428 = vshrl.u32 683565275, %v3427
        %v3429 = vshll.u32 683565275, %v3426
        %v3430 = vshrl.u32 2475754826, %v3427
        %v3431 = vor.u32 %v3429, %v3430
        %v3432 = vshll.u32 2475754826, %v3426
        %v3433 = vshrl.u32 2131351028, %v3427
        %v3434 = vor.u32 %v3432, %v3433
        %v3435 = vshll.u32 2131351028, %v3426
        %v3436 = vshrl.u32 2102212464, %v3427
        %v3437 = vor.u32 %v3435, %v3436
        %v3438 = vshll.u32 2102212464, %v3426
        %v3439 = vshrl.u32 920167782, %v3427
        %v3440 = vor.u32 %v3438, %v3439
        %v3441 = vshll.u32 920167782, %v3426
        %v3442 = vshrl.u32 1326507024, %v3427
        %v3443 = vor.u32 %v3441, %v3442
        %vm3444 = vcmp.lt.s32.totalorder %v3425, 1
        %vm3445 = vcmp.lt.s32.totalorder %v3425, 2
        %vm3446 = vcmp.lt.s32.totalorder %v3425, 3
        %vm3447 = vcmp.lt.s32.totalorder %v3425, 4
        %v3448 = vsel %vm3444, %v3428, %v3431
        %v3449 = vsel %vm3447, %v3437, 2102212464
        %v3450 = vsel %vm3446, %v3434, %v3449
        %v3451 = vsel %vm3445, %v3448, %v3450
        %v3452 = vsel %vm3444, %v3431, %v3434
        %v3453 = vsel %vm3447, %v3440, 920167782
        %v3454 = vsel %vm3446, %v3437, %v3453
        %v3455 = vsel %vm3445, %v3452, %v3454
        %v3456 = vsel %vm3444, %v3434, %v3437
        %v3457 = vsel %vm3447, %v3443, 1326507024
        %v3458 = vsel %vm3446, %v3440, %v3457
        %v3459 = vsel %vm3445, %v3456, %v3458
        %v3460 = vshll.u32 %v3420, 8
        %v3461 = vmul.u32.u64.compose %v3460, %v3459
        %v3462 = vextract.low.u32 %v3461
        %v3463 = vextract.high.u32 %v3461
        %v3464 = vmul.u32.u64.compose %v3460, %v3455
        %v3465 = vextract.low.u32 %v3464
        %v3466 = vextract.high.u32 %v3464
        %v3467 = vmul.u32 %v3460, %v3451
        %v3468 = vadd.s32 %v3463, %v3465
        %vm3469 = vc.u32 %v3463, %v3465
        %v3470 = vadd.s32 %v3466, 1
        %v3471 = vsel %vm3469, %v3470, %v3466
        %v3472 = vadd.s32 %v3467, %v3471
        %v3473 = vadd.s32 %v3472, 536870912
        %v3474 = vshrl.u32 %v3473, 30
        %v3475 = vshll.u32 %v3474, 30
        %v3476 = vsub.s32 %v3472, %v3475
        %vm3477 = vcmp.lt.s32.totalorder %v3476, 0
        %v3478 = vsub.s32 0, %v3476
        %v3479 = vsel %vm3477, %v3478, %v3476
        %v3480 = vclz %v3479
        %v3481 = vsub.s32 %v3480, 2
        %vm3482 = vcmp.gt.s32.totalorder 0, %v3481
        %v3483 = vsel %vm3482, 0, %v3481
        %v3484 = vsub.s32 32, %v3483
        %v3485 = vshll.u32 %v3476, %v3483
        %v3486 = vshrl.u32 %v3468, %v3484
        %v3487 = vor.u32 %v3485, %v3486
        %v3488 = vsub.s32 4294967266, %v3483
        %v3489 = vadd.s32 %v3488, 127
        %v3490 = vshll.u32 %v3489, 23
        %v3491 = vor.u32 4788187, %v3490
        %v3492 = vand.u32 2147483647, %v3491
        %v3494 = vcvt.s32.f32 %v3487
        %v3495 = vmul.f32 %v3494, %v3492
        %v3496 = vxor.u32 %v3495, 2147483648
        %v3497 = vsel %vm3414, %v3496, %v3495
        %v3498 = vsub.s32 4, %v3474
        %v3499 = vsel %vm3414, %v3498, %v3474
        %v3500 = vsel %vm3413, %v2584, %v3497
        %v3501 = vsel %vm3413, 0, %v3499
        %v3502 = vcosq.f32.pop %v3500
        %v3503 = vsinq.f32.pop %v3500
        %vm3504 = vweird.f32 %v2584
        %v3505 = vadd.s32 %v3501, 3
        %v3506 = vand.u32 %v3505, 3
        %vm3507 = vcmp.lt.s32.totalorder %v3506, 2
        %vm3508 = vcmp.eq.s32.totalorder %v3506, 0
        %v3509 = vxor.u32 %v3503, 2147483648
        %v3510 = vsel %vm3508, %v3502, %v3509
        %vm3511 = vcmp.eq.s32.totalorder %v3506, 2
        %v3512 = vxor.u32 %v3502, 2147483648
        %v3513 = vsel %vm3511, %v3512, %v3503
        %v3514 = vsel %vm3507, %v3510, %v3513
        %v3515 = vsel %vm3504, nan, %v3514
        %v3516 = vand.u32 2147483647, %v1389
        %vm3517 = vcmp.le.f32.partialorder %v3516, 0.7853982
        %vm3518 = vcmp.lt.s32.totalorder %v1389, 0
        %v3519 = vand.u32 %v1389, 2139095040
        %v3520 = vshrl.u32 %v3519, 23
        %v3521 = vsub.s32 %v3520, 127
        %v3522 = vand.u32 2147483647, %v1389
        %v3523 = vand.u32 %v3522, 8388607
        %v3524 = vor.u32 %v3523, 8388608
        %v3525 = vsub.s32 0, %v3524
        %v3526 = vadd.s32 %v3521, 1
        %vm3527 = vcmp.gt.s32.totalorder %v3526, 0
        %v3528 = vsel %vm3527, %v3526, 0
        %v3529 = vshrl.u32 %v3528, 5
        %v3530 = vand.u32 %v3528, 31
        %v3531 = vsub.s32 32, %v3530
        %v3532 = vshrl.u32 683565275, %v3531
        %v3533 = vshll.u32 683565275, %v3530
        %v3534 = vshrl.u32 2475754826, %v3531
        %v3535 = vor.u32 %v3533, %v3534
        %v3536 = vshll.u32 2475754826, %v3530
        %v3537 = vshrl.u32 2131351028, %v3531
        %v3538 = vor.u32 %v3536, %v3537
        %v3539 = vshll.u32 2131351028, %v3530
        %v3540 = vshrl.u32 2102212464, %v3531
        %v3541 = vor.u32 %v3539, %v3540
        %v3542 = vshll.u32 2102212464, %v3530
        %v3543 = vshrl.u32 920167782, %v3531
        %v3544 = vor.u32 %v3542, %v3543
        %v3545 = vshll.u32 920167782, %v3530
        %v3546 = vshrl.u32 1326507024, %v3531
        %v3547 = vor.u32 %v3545, %v3546
        %vm3548 = vcmp.lt.s32.totalorder %v3529, 1
        %vm3549 = vcmp.lt.s32.totalorder %v3529, 2
        %vm3550 = vcmp.lt.s32.totalorder %v3529, 3
        %vm3551 = vcmp.lt.s32.totalorder %v3529, 4
        %v3552 = vsel %vm3548, %v3532, %v3535
        %v3553 = vsel %vm3551, %v3541, 2102212464
        %v3554 = vsel %vm3550, %v3538, %v3553
        %v3555 = vsel %vm3549, %v3552, %v3554
        %v3556 = vsel %vm3548, %v3535, %v3538
        %v3557 = vsel %vm3551, %v3544, 920167782
        %v3558 = vsel %vm3550, %v3541, %v3557
        %v3559 = vsel %vm3549, %v3556, %v3558
        %v3560 = vsel %vm3548, %v3538, %v3541
        %v3561 = vsel %vm3551, %v3547, 1326507024
        %v3562 = vsel %vm3550, %v3544, %v3561
        %v3563 = vsel %vm3549, %v3560, %v3562
        %v3564 = vshll.u32 %v3524, 8
        %v3565 = vmul.u32.u64.compose %v3564, %v3563
        %v3566 = vextract.low.u32 %v3565
        %v3567 = vextract.high.u32 %v3565
        %v3568 = vmul.u32.u64.compose %v3564, %v3559
        %v3569 = vextract.low.u32 %v3568
        %v3570 = vextract.high.u32 %v3568
        %v3571 = vmul.u32 %v3564, %v3555
        %v3572 = vadd.s32 %v3567, %v3569
        %vm3573 = vc.u32 %v3567, %v3569
        %v3574 = vadd.s32 %v3570, 1
        %v3575 = vsel %vm3573, %v3574, %v3570
        %v3576 = vadd.s32 %v3571, %v3575
        %v3577 = vadd.s32 %v3576, 536870912
        %v3578 = vshrl.u32 %v3577, 30
        %v3579 = vshll.u32 %v3578, 30
        %v3580 = vsub.s32 %v3576, %v3579
        %vm3581 = vcmp.lt.s32.totalorder %v3580, 0
        %v3582 = vsub.s32 0, %v3580
        %v3583 = vsel %vm3581, %v3582, %v3580
        %v3584 = vclz %v3583
        %v3585 = vsub.s32 %v3584, 2
        %vm3586 = vcmp.gt.s32.totalorder 0, %v3585
        %v3587 = vsel %vm3586, 0, %v3585
        %v3588 = vsub.s32 32, %v3587
        %v3589 = vshll.u32 %v3580, %v3587
        %v3590 = vshrl.u32 %v3572, %v3588
        %v3591 = vor.u32 %v3589, %v3590
        %v3592 = vsub.s32 4294967266, %v3587
        %v3593 = vadd.s32 %v3592, 127
        %v3594 = vshll.u32 %v3593, 23
        %v3595 = vor.u32 4788187, %v3594
        %v3596 = vand.u32 2147483647, %v3595
        %v3598 = vcvt.s32.f32 %v3591
        %v3599 = vmul.f32 %v3598, %v3596
        %v3600 = vxor.u32 %v3599, 2147483648
        %v3601 = vsel %vm3518, %v3600, %v3599
        %v3602 = vsub.s32 4, %v3578
        %v3603 = vsel %vm3518, %v3602, %v3578
        %v3604 = vsel %vm3517, %v1389, %v3601
        %v3605 = vsel %vm3517, 0, %v3603
        %v3606 = vcosq.f32.pop %v3604
        %v3607 = vsinq.f32.pop %v3604
        %vm3608 = vweird.f32 %v1389
        %v3609 = vadd.s32 %v3605, 3
        %v3610 = vand.u32 %v3609, 3
        %vm3611 = vcmp.lt.s32.totalorder %v3610, 2
        %vm3612 = vcmp.eq.s32.totalorder %v3610, 0
        %v3613 = vxor.u32 %v3607, 2147483648
        %v3614 = vsel %vm3612, %v3606, %v3613
        %vm3615 = vcmp.eq.s32.totalorder %v3610, 2
        %v3616 = vxor.u32 %v3606, 2147483648
        %v3617 = vsel %vm3615, %v3616, %v3607
        %v3618 = vsel %vm3611, %v3614, %v3617
        %v3619 = vsel %vm3608, nan, %v3618
        %v3620 = vand.u32 2147483647, %v1391
        %vm3621 = vcmp.le.f32.partialorder %v3620, 0.7853982
        %vm3622 = vcmp.lt.s32.totalorder %v1391, 0
        %v3623 = vand.u32 %v1391, 2139095040
        %v3624 = vshrl.u32 %v3623, 23
        %v3625 = vsub.s32 %v3624, 127
        %v3626 = vand.u32 2147483647, %v1391
        %v3627 = vand.u32 %v3626, 8388607
        %v3628 = vor.u32 %v3627, 8388608
        %v3629 = vsub.s32 0, %v3628
        %v3630 = vadd.s32 %v3625, 1
        %vm3631 = vcmp.gt.s32.totalorder %v3630, 0
        %v3632 = vsel %vm3631, %v3630, 0
        %v3633 = vshrl.u32 %v3632, 5
        %v3634 = vand.u32 %v3632, 31
        %v3635 = vsub.s32 32, %v3634
        %v3636 = vshrl.u32 683565275, %v3635
        %v3637 = vshll.u32 683565275, %v3634
        %v3638 = vshrl.u32 2475754826, %v3635
        %v3639 = vor.u32 %v3637, %v3638
        %v3640 = vshll.u32 2475754826, %v3634
        %v3641 = vshrl.u32 2131351028, %v3635
        %v3642 = vor.u32 %v3640, %v3641
        %v3643 = vshll.u32 2131351028, %v3634
        %v3644 = vshrl.u32 2102212464, %v3635
        %v3645 = vor.u32 %v3643, %v3644
        %v3646 = vshll.u32 2102212464, %v3634
        %v3647 = vshrl.u32 920167782, %v3635
        %v3648 = vor.u32 %v3646, %v3647
        %v3649 = vshll.u32 920167782, %v3634
        %v3650 = vshrl.u32 1326507024, %v3635
        %v3651 = vor.u32 %v3649, %v3650
        %vm3652 = vcmp.lt.s32.totalorder %v3633, 1
        %vm3653 = vcmp.lt.s32.totalorder %v3633, 2
        %vm3654 = vcmp.lt.s32.totalorder %v3633, 3
        %vm3655 = vcmp.lt.s32.totalorder %v3633, 4
        %v3656 = vsel %vm3652, %v3636, %v3639
        %v3657 = vsel %vm3655, %v3645, 2102212464
        %v3658 = vsel %vm3654, %v3642, %v3657
        %v3659 = vsel %vm3653, %v3656, %v3658
        %v3660 = vsel %vm3652, %v3639, %v3642
        %v3661 = vsel %vm3655, %v3648, 920167782
        %v3662 = vsel %vm3654, %v3645, %v3661
        %v3663 = vsel %vm3653, %v3660, %v3662
        %v3664 = vsel %vm3652, %v3642, %v3645
        %v3665 = vsel %vm3655, %v3651, 1326507024
        %v3666 = vsel %vm3654, %v3648, %v3665
        %v3667 = vsel %vm3653, %v3664, %v3666
        %v3668 = vshll.u32 %v3628, 8
        %v3669 = vmul.u32.u64.compose %v3668, %v3667
        %v3670 = vextract.low.u32 %v3669
        %v3671 = vextract.high.u32 %v3669
        %v3672 = vmul.u32.u64.compose %v3668, %v3663
        %v3673 = vextract.low.u32 %v3672
        %v3674 = vextract.high.u32 %v3672
        %v3675 = vmul.u32 %v3668, %v3659
        %v3676 = vadd.s32 %v3671, %v3673
        %vm3677 = vc.u32 %v3671, %v3673
        %v3678 = vadd.s32 %v3674, 1
        %v3679 = vsel %vm3677, %v3678, %v3674
        %v3680 = vadd.s32 %v3675, %v3679
        %v3681 = vadd.s32 %v3680, 536870912
        %v3682 = vshrl.u32 %v3681, 30
        %v3683 = vshll.u32 %v3682, 30
        %v3684 = vsub.s32 %v3680, %v3683
        %vm3685 = vcmp.lt.s32.totalorder %v3684, 0
        %v3686 = vsub.s32 0, %v3684
        %v3687 = vsel %vm3685, %v3686, %v3684
        %v3688 = vclz %v3687
        %v3689 = vsub.s32 %v3688, 2
        %vm3690 = vcmp.gt.s32.totalorder 0, %v3689
        %v3691 = vsel %vm3690, 0, %v3689
        %v3692 = vsub.s32 32, %v3691
        %v3693 = vshll.u32 %v3684, %v3691
        %v3694 = vshrl.u32 %v3676, %v3692
        %v3695 = vor.u32 %v3693, %v3694
        %v3696 = vsub.s32 4294967266, %v3691
        %v3697 = vadd.s32 %v3696, 127
        %v3698 = vshll.u32 %v3697, 23
        %v3699 = vor.u32 4788187, %v3698
        %v3700 = vand.u32 2147483647, %v3699
        %v3702 = vcvt.s32.f32 %v3695
        %v3703 = vmul.f32 %v3702, %v3700
        %v3704 = vxor.u32 %v3703, 2147483648
        %v3705 = vsel %vm3622, %v3704, %v3703
        %v3706 = vsub.s32 4, %v3682
        %v3707 = vsel %vm3622, %v3706, %v3682
        %v3708 = vsel %vm3621, %v1391, %v3705
        %v3709 = vsel %vm3621, 0, %v3707
        %v3710 = vcosq.f32.pop %v3708
        %v3711 = vsinq.f32.pop %v3708
        %vm3712 = vweird.f32 %v1391
        %v3713 = vadd.s32 %v3709, 3
        %v3714 = vand.u32 %v3713, 3
        %vm3715 = vcmp.lt.s32.totalorder %v3714, 2
        %vm3716 = vcmp.eq.s32.totalorder %v3714, 0
        %v3717 = vxor.u32 %v3711, 2147483648
        %v3718 = vsel %vm3716, %v3710, %v3717
        %vm3719 = vcmp.eq.s32.totalorder %v3714, 2
        %v3720 = vxor.u32 %v3710, 2147483648
        %v3721 = vsel %vm3719, %v3720, %v3711
        %v3722 = vsel %vm3715, %v3718, %v3721
        %v3723 = vsel %vm3712, nan, %v3722
        %v3724 = vand.u32 2147483647, %v2589
        %vm3725 = vcmp.le.f32.partialorder %v3724, 0.7853982
        %vm3726 = vcmp.lt.s32.totalorder %v2589, 0
        %v3727 = vand.u32 %v2589, 2139095040
        %v3728 = vshrl.u32 %v3727, 23
        %v3729 = vsub.s32 %v3728, 127
        %v3730 = vand.u32 2147483647, %v2589
        %v3731 = vand.u32 %v3730, 8388607
        %v3732 = vor.u32 %v3731, 8388608
        %v3733 = vsub.s32 0, %v3732
        %v3734 = vadd.s32 %v3729, 1
        %vm3735 = vcmp.gt.s32.totalorder %v3734, 0
        %v3736 = vsel %vm3735, %v3734, 0
        %v3737 = vshrl.u32 %v3736, 5
        %v3738 = vand.u32 %v3736, 31
        %v3739 = vsub.s32 32, %v3738
        %v3740 = vshrl.u32 683565275, %v3739
        %v3741 = vshll.u32 683565275, %v3738
        %v3742 = vshrl.u32 2475754826, %v3739
        %v3743 = vor.u32 %v3741, %v3742
        %v3744 = vshll.u32 2475754826, %v3738
        %v3745 = vshrl.u32 2131351028, %v3739
        %v3746 = vor.u32 %v3744, %v3745
        %v3747 = vshll.u32 2131351028, %v3738
        %v3748 = vshrl.u32 2102212464, %v3739
        %v3749 = vor.u32 %v3747, %v3748
        %v3750 = vshll.u32 2102212464, %v3738
        %v3751 = vshrl.u32 920167782, %v3739
        %v3752 = vor.u32 %v3750, %v3751
        %v3753 = vshll.u32 920167782, %v3738
        %v3754 = vshrl.u32 1326507024, %v3739
        %v3755 = vor.u32 %v3753, %v3754
        %vm3756 = vcmp.lt.s32.totalorder %v3737, 1
        %vm3757 = vcmp.lt.s32.totalorder %v3737, 2
        %vm3758 = vcmp.lt.s32.totalorder %v3737, 3
        %vm3759 = vcmp.lt.s32.totalorder %v3737, 4
        %v3760 = vsel %vm3756, %v3740, %v3743
        %v3761 = vsel %vm3759, %v3749, 2102212464
        %v3762 = vsel %vm3758, %v3746, %v3761
        %v3763 = vsel %vm3757, %v3760, %v3762
        %v3764 = vsel %vm3756, %v3743, %v3746
        %v3765 = vsel %vm3759, %v3752, 920167782
        %v3766 = vsel %vm3758, %v3749, %v3765
        %v3767 = vsel %vm3757, %v3764, %v3766
        %v3768 = vsel %vm3756, %v3746, %v3749
        %v3769 = vsel %vm3759, %v3755, 1326507024
        %v3770 = vsel %vm3758, %v3752, %v3769
        %v3771 = vsel %vm3757, %v3768, %v3770
        %v3772 = vshll.u32 %v3732, 8
        %v3773 = vmul.u32.u64.compose %v3772, %v3771
        %v3774 = vextract.low.u32 %v3773
        %v3775 = vextract.high.u32 %v3773
        %v3776 = vmul.u32.u64.compose %v3772, %v3767
        %v3777 = vextract.low.u32 %v3776
        %v3778 = vextract.high.u32 %v3776
        %v3779 = vmul.u32 %v3772, %v3763
        %v3780 = vadd.s32 %v3775, %v3777
        %vm3781 = vc.u32 %v3775, %v3777
        %v3782 = vadd.s32 %v3778, 1
        %v3783 = vsel %vm3781, %v3782, %v3778
        %v3784 = vadd.s32 %v3779, %v3783
        %v3785 = vadd.s32 %v3784, 536870912
        %v3786 = vshrl.u32 %v3785, 30
        %v3787 = vshll.u32 %v3786, 30
        %v3788 = vsub.s32 %v3784, %v3787
        %vm3789 = vcmp.lt.s32.totalorder %v3788, 0
        %v3790 = vsub.s32 0, %v3788
        %v3791 = vsel %vm3789, %v3790, %v3788
        %v3792 = vclz %v3791
        %v3793 = vsub.s32 %v3792, 2
        %vm3794 = vcmp.gt.s32.totalorder 0, %v3793
        %v3795 = vsel %vm3794, 0, %v3793
        %v3796 = vsub.s32 32, %v3795
        %v3797 = vshll.u32 %v3788, %v3795
        %v3798 = vshrl.u32 %v3780, %v3796
        %v3799 = vor.u32 %v3797, %v3798
        %v3800 = vsub.s32 4294967266, %v3795
        %v3801 = vadd.s32 %v3800, 127
        %v3802 = vshll.u32 %v3801, 23
        %v3803 = vor.u32 4788187, %v3802
        %v3804 = vand.u32 2147483647, %v3803
        %v3806 = vcvt.s32.f32 %v3799
        %v3807 = vmul.f32 %v3806, %v3804
        %v3808 = vxor.u32 %v3807, 2147483648
        %v3809 = vsel %vm3726, %v3808, %v3807
        %v3810 = vsub.s32 4, %v3786
        %v3811 = vsel %vm3726, %v3810, %v3786
        %v3812 = vsel %vm3725, %v2589, %v3809
        %v3813 = vsel %vm3725, 0, %v3811
        %v3814 = vcosq.f32.pop %v3812
        %v3815 = vsinq.f32.pop %v3812
        %vm3816 = vweird.f32 %v2589
        %v3817 = vadd.s32 %v3813, 3
        %v3818 = vand.u32 %v3817, 3
        %vm3819 = vcmp.lt.s32.totalorder %v3818, 2
        %vm3820 = vcmp.eq.s32.totalorder %v3818, 0
        %v3821 = vxor.u32 %v3815, 2147483648
        %v3822 = vsel %vm3820, %v3814, %v3821
        %vm3823 = vcmp.eq.s32.totalorder %v3818, 2
        %v3824 = vxor.u32 %v3814, 2147483648
        %v3825 = vsel %vm3823, %v3824, %v3815
        %v3826 = vsel %vm3819, %v3822, %v3825
        %v3827 = vsel %vm3816, nan, %v3826
        %v3828 = vand.u32 2147483647, %v2591
        %vm3829 = vcmp.le.f32.partialorder %v3828, 0.7853982
        %vm3830 = vcmp.lt.s32.totalorder %v2591, 0
        %v3831 = vand.u32 %v2591, 2139095040
        %v3832 = vshrl.u32 %v3831, 23
        %v3833 = vsub.s32 %v3832, 127
        %v3834 = vand.u32 2147483647, %v2591
        %v3835 = vand.u32 %v3834, 8388607
        %v3836 = vor.u32 %v3835, 8388608
        %v3837 = vsub.s32 0, %v3836
        %v3838 = vadd.s32 %v3833, 1
        %vm3839 = vcmp.gt.s32.totalorder %v3838, 0
        %v3840 = vsel %vm3839, %v3838, 0
        %v3841 = vshrl.u32 %v3840, 5
        %v3842 = vand.u32 %v3840, 31
        %v3843 = vsub.s32 32, %v3842
        %v3844 = vshrl.u32 683565275, %v3843
        %v3845 = vshll.u32 683565275, %v3842
        %v3846 = vshrl.u32 2475754826, %v3843
        %v3847 = vor.u32 %v3845, %v3846
        %v3848 = vshll.u32 2475754826, %v3842
        %v3849 = vshrl.u32 2131351028, %v3843
        %v3850 = vor.u32 %v3848, %v3849
        %v3851 = vshll.u32 2131351028, %v3842
        %v3852 = vshrl.u32 2102212464, %v3843
        %v3853 = vor.u32 %v3851, %v3852
        %v3854 = vshll.u32 2102212464, %v3842
        %v3855 = vshrl.u32 920167782, %v3843
        %v3856 = vor.u32 %v3854, %v3855
        %v3857 = vshll.u32 920167782, %v3842
        %v3858 = vshrl.u32 1326507024, %v3843
        %v3859 = vor.u32 %v3857, %v3858
        %vm3860 = vcmp.lt.s32.totalorder %v3841, 1
        %vm3861 = vcmp.lt.s32.totalorder %v3841, 2
        %vm3862 = vcmp.lt.s32.totalorder %v3841, 3
        %vm3863 = vcmp.lt.s32.totalorder %v3841, 4
        %v3864 = vsel %vm3860, %v3844, %v3847
        %v3865 = vsel %vm3863, %v3853, 2102212464
        %v3866 = vsel %vm3862, %v3850, %v3865
        %v3867 = vsel %vm3861, %v3864, %v3866
        %v3868 = vsel %vm3860, %v3847, %v3850
        %v3869 = vsel %vm3863, %v3856, 920167782
        %v3870 = vsel %vm3862, %v3853, %v3869
        %v3871 = vsel %vm3861, %v3868, %v3870
        %v3872 = vsel %vm3860, %v3850, %v3853
        %v3873 = vsel %vm3863, %v3859, 1326507024
        %v3874 = vsel %vm3862, %v3856, %v3873
        %v3875 = vsel %vm3861, %v3872, %v3874
        %v3876 = vshll.u32 %v3836, 8
        %v3877 = vmul.u32.u64.compose %v3876, %v3875
        %v3878 = vextract.low.u32 %v3877
        %v3879 = vextract.high.u32 %v3877
        %v3880 = vmul.u32.u64.compose %v3876, %v3871
        %v3881 = vextract.low.u32 %v3880
        %v3882 = vextract.high.u32 %v3880
        %v3883 = vmul.u32 %v3876, %v3867
        %v3884 = vadd.s32 %v3879, %v3881
        %vm3885 = vc.u32 %v3879, %v3881
        %v3886 = vadd.s32 %v3882, 1
        %v3887 = vsel %vm3885, %v3886, %v3882
        %v3888 = vadd.s32 %v3883, %v3887
        %v3889 = vadd.s32 %v3888, 536870912
        %v3890 = vshrl.u32 %v3889, 30
        %v3891 = vshll.u32 %v3890, 30
        %v3892 = vsub.s32 %v3888, %v3891
        %vm3893 = vcmp.lt.s32.totalorder %v3892, 0
        %v3894 = vsub.s32 0, %v3892
        %v3895 = vsel %vm3893, %v3894, %v3892
        %v3896 = vclz %v3895
        %v3897 = vsub.s32 %v3896, 2
        %vm3898 = vcmp.gt.s32.totalorder 0, %v3897
        %v3899 = vsel %vm3898, 0, %v3897
        %v3900 = vsub.s32 32, %v3899
        %v3901 = vshll.u32 %v3892, %v3899
        %v3902 = vshrl.u32 %v3884, %v3900
        %v3903 = vor.u32 %v3901, %v3902
        %v3904 = vsub.s32 4294967266, %v3899
        %v3905 = vadd.s32 %v3904, 127
        %v3906 = vshll.u32 %v3905, 23
        %v3907 = vor.u32 4788187, %v3906
        %v3908 = vand.u32 2147483647, %v3907
        %v3910 = vcvt.s32.f32 %v3903
        %v3911 = vmul.f32 %v3910, %v3908
        %v3912 = vxor.u32 %v3911, 2147483648
        %v3913 = vsel %vm3830, %v3912, %v3911
        %v3914 = vsub.s32 4, %v3890
        %v3915 = vsel %vm3830, %v3914, %v3890
        %v3916 = vsel %vm3829, %v2591, %v3913
        %v3917 = vsel %vm3829, 0, %v3915
        %v3918 = vcosq.f32.pop %v3916
        %v3919 = vsinq.f32.pop %v3916
        %vm3920 = vweird.f32 %v2591
        %v3921 = vadd.s32 %v3917, 3
        %v3922 = vand.u32 %v3921, 3
        %vm3923 = vcmp.lt.s32.totalorder %v3922, 2
        %vm3924 = vcmp.eq.s32.totalorder %v3922, 0
        %v3925 = vxor.u32 %v3919, 2147483648
        %v3926 = vsel %vm3924, %v3918, %v3925
        %vm3927 = vcmp.eq.s32.totalorder %v3922, 2
        %v3928 = vxor.u32 %v3918, 2147483648
        %v3929 = vsel %vm3927, %v3928, %v3919
        %v3930 = vsel %vm3923, %v3926, %v3929
        %v3931 = vsel %vm3920, nan, %v3930
        %v3932 = vand.u32 2147483647, %v1396
        %vm3933 = vcmp.le.f32.partialorder %v3932, 0.7853982
        %vm3934 = vcmp.lt.s32.totalorder %v1396, 0
        %v3935 = vand.u32 %v1396, 2139095040
        %v3936 = vshrl.u32 %v3935, 23
        %v3937 = vsub.s32 %v3936, 127
        %v3938 = vand.u32 2147483647, %v1396
        %v3939 = vand.u32 %v3938, 8388607
        %v3940 = vor.u32 %v3939, 8388608
        %v3941 = vsub.s32 0, %v3940
        %v3942 = vadd.s32 %v3937, 1
        %vm3943 = vcmp.gt.s32.totalorder %v3942, 0
        %v3944 = vsel %vm3943, %v3942, 0
        %v3945 = vshrl.u32 %v3944, 5
        %v3946 = vand.u32 %v3944, 31
        %v3947 = vsub.s32 32, %v3946
        %v3948 = vshrl.u32 683565275, %v3947
        %v3949 = vshll.u32 683565275, %v3946
        %v3950 = vshrl.u32 2475754826, %v3947
        %v3951 = vor.u32 %v3949, %v3950
        %v3952 = vshll.u32 2475754826, %v3946
        %v3953 = vshrl.u32 2131351028, %v3947
        %v3954 = vor.u32 %v3952, %v3953
        %v3955 = vshll.u32 2131351028, %v3946
        %v3956 = vshrl.u32 2102212464, %v3947
        %v3957 = vor.u32 %v3955, %v3956
        %v3958 = vshll.u32 2102212464, %v3946
        %v3959 = vshrl.u32 920167782, %v3947
        %v3960 = vor.u32 %v3958, %v3959
        %v3961 = vshll.u32 920167782, %v3946
        %v3962 = vshrl.u32 1326507024, %v3947
        %v3963 = vor.u32 %v3961, %v3962
        %vm3964 = vcmp.lt.s32.totalorder %v3945, 1
        %vm3965 = vcmp.lt.s32.totalorder %v3945, 2
        %vm3966 = vcmp.lt.s32.totalorder %v3945, 3
        %vm3967 = vcmp.lt.s32.totalorder %v3945, 4
        %v3968 = vsel %vm3964, %v3948, %v3951
        %v3969 = vsel %vm3967, %v3957, 2102212464
        %v3970 = vsel %vm3966, %v3954, %v3969
        %v3971 = vsel %vm3965, %v3968, %v3970
        %v3972 = vsel %vm3964, %v3951, %v3954
        %v3973 = vsel %vm3967, %v3960, 920167782
        %v3974 = vsel %vm3966, %v3957, %v3973
        %v3975 = vsel %vm3965, %v3972, %v3974
        %v3976 = vsel %vm3964, %v3954, %v3957
        %v3977 = vsel %vm3967, %v3963, 1326507024
        %v3978 = vsel %vm3966, %v3960, %v3977
        %v3979 = vsel %vm3965, %v3976, %v3978
        %v3980 = vshll.u32 %v3940, 8
        %v3981 = vmul.u32.u64.compose %v3980, %v3979
        %v3982 = vextract.low.u32 %v3981
        %v3983 = vextract.high.u32 %v3981
        %v3984 = vmul.u32.u64.compose %v3980, %v3975
        %v3985 = vextract.low.u32 %v3984
        %v3986 = vextract.high.u32 %v3984
        %v3987 = vmul.u32 %v3980, %v3971
        %v3988 = vadd.s32 %v3983, %v3985
        %vm3989 = vc.u32 %v3983, %v3985
        %v3990 = vadd.s32 %v3986, 1
        %v3991 = vsel %vm3989, %v3990, %v3986
        %v3992 = vadd.s32 %v3987, %v3991
        %v3993 = vadd.s32 %v3992, 536870912
        %v3994 = vshrl.u32 %v3993, 30
        %v3995 = vshll.u32 %v3994, 30
        %v3996 = vsub.s32 %v3992, %v3995
        %vm3997 = vcmp.lt.s32.totalorder %v3996, 0
        %v3998 = vsub.s32 0, %v3996
        %v3999 = vsel %vm3997, %v3998, %v3996
        %v4000 = vclz %v3999
        %v4001 = vsub.s32 %v4000, 2
        %vm4002 = vcmp.gt.s32.totalorder 0, %v4001
        %v4003 = vsel %vm4002, 0, %v4001
        %v4004 = vsub.s32 32, %v4003
        %v4005 = vshll.u32 %v3996, %v4003
        %v4006 = vshrl.u32 %v3988, %v4004
        %v4007 = vor.u32 %v4005, %v4006
        %v4008 = vsub.s32 4294967266, %v4003
        %v4009 = vadd.s32 %v4008, 127
        %v4010 = vshll.u32 %v4009, 23
        %v4011 = vor.u32 4788187, %v4010
        %v4012 = vand.u32 2147483647, %v4011
        %v4014 = vcvt.s32.f32 %v4007
        %v4015 = vmul.f32 %v4014, %v4012
        %v4016 = vxor.u32 %v4015, 2147483648
        %v4017 = vsel %vm3934, %v4016, %v4015
        %v4018 = vsub.s32 4, %v3994
        %v4019 = vsel %vm3934, %v4018, %v3994
        %v4020 = vsel %vm3933, %v1396, %v4017
        %v4021 = vsel %vm3933, 0, %v4019
        %v4022 = vcosq.f32.pop %v4020
        %v4023 = vsinq.f32.pop %v4020
        %vm4024 = vweird.f32 %v1396
        %v4025 = vadd.s32 %v4021, 3
        %v4026 = vand.u32 %v4025, 3
        %vm4027 = vcmp.lt.s32.totalorder %v4026, 2
        %vm4028 = vcmp.eq.s32.totalorder %v4026, 0
        %v4029 = vxor.u32 %v4023, 2147483648
        %v4030 = vsel %vm4028, %v4022, %v4029
        %vm4031 = vcmp.eq.s32.totalorder %v4026, 2
        %v4032 = vxor.u32 %v4022, 2147483648
        %v4033 = vsel %vm4031, %v4032, %v4023
        %v4034 = vsel %vm4027, %v4030, %v4033
        %v4035 = vsel %vm4024, nan, %v4034
        %v4036 = vand.u32 2147483647, %v1398
        %vm4037 = vcmp.le.f32.partialorder %v4036, 0.7853982
        %vm4038 = vcmp.lt.s32.totalorder %v1398, 0
        %v4039 = vand.u32 %v1398, 2139095040
        %v4040 = vshrl.u32 %v4039, 23
        %v4041 = vsub.s32 %v4040, 127
        %v4042 = vand.u32 2147483647, %v1398
        %v4043 = vand.u32 %v4042, 8388607
        %v4044 = vor.u32 %v4043, 8388608
        %v4045 = vsub.s32 0, %v4044
        %v4046 = vadd.s32 %v4041, 1
        %vm4047 = vcmp.gt.s32.totalorder %v4046, 0
        %v4048 = vsel %vm4047, %v4046, 0
        %v4049 = vshrl.u32 %v4048, 5
        %v4050 = vand.u32 %v4048, 31
        %v4051 = vsub.s32 32, %v4050
        %v4052 = vshrl.u32 683565275, %v4051
        %v4053 = vshll.u32 683565275, %v4050
        %v4054 = vshrl.u32 2475754826, %v4051
        %v4055 = vor.u32 %v4053, %v4054
        %v4056 = vshll.u32 2475754826, %v4050
        %v4057 = vshrl.u32 2131351028, %v4051
        %v4058 = vor.u32 %v4056, %v4057
        %v4059 = vshll.u32 2131351028, %v4050
        %v4060 = vshrl.u32 2102212464, %v4051
        %v4061 = vor.u32 %v4059, %v4060
        %v4062 = vshll.u32 2102212464, %v4050
        %v4063 = vshrl.u32 920167782, %v4051
        %v4064 = vor.u32 %v4062, %v4063
        %v4065 = vshll.u32 920167782, %v4050
        %v4066 = vshrl.u32 1326507024, %v4051
        %v4067 = vor.u32 %v4065, %v4066
        %vm4068 = vcmp.lt.s32.totalorder %v4049, 1
        %vm4069 = vcmp.lt.s32.totalorder %v4049, 2
        %vm4070 = vcmp.lt.s32.totalorder %v4049, 3
        %vm4071 = vcmp.lt.s32.totalorder %v4049, 4
        %v4072 = vsel %vm4068, %v4052, %v4055
        %v4073 = vsel %vm4071, %v4061, 2102212464
        %v4074 = vsel %vm4070, %v4058, %v4073
        %v4075 = vsel %vm4069, %v4072, %v4074
        %v4076 = vsel %vm4068, %v4055, %v4058
        %v4077 = vsel %vm4071, %v4064, 920167782
        %v4078 = vsel %vm4070, %v4061, %v4077
        %v4079 = vsel %vm4069, %v4076, %v4078
        %v4080 = vsel %vm4068, %v4058, %v4061
        %v4081 = vsel %vm4071, %v4067, 1326507024
        %v4082 = vsel %vm4070, %v4064, %v4081
        %v4083 = vsel %vm4069, %v4080, %v4082
        %v4084 = vshll.u32 %v4044, 8
        %v4085 = vmul.u32.u64.compose %v4084, %v4083
        %v4086 = vextract.low.u32 %v4085
        %v4087 = vextract.high.u32 %v4085
        %v4088 = vmul.u32.u64.compose %v4084, %v4079
        %v4089 = vextract.low.u32 %v4088
        %v4090 = vextract.high.u32 %v4088
        %v4091 = vmul.u32 %v4084, %v4075
        %v4092 = vadd.s32 %v4087, %v4089
        %vm4093 = vc.u32 %v4087, %v4089
        %v4094 = vadd.s32 %v4090, 1
        %v4095 = vsel %vm4093, %v4094, %v4090
        %v4096 = vadd.s32 %v4091, %v4095
        %v4097 = vadd.s32 %v4096, 536870912
        %v4098 = vshrl.u32 %v4097, 30
        %v4099 = vshll.u32 %v4098, 30
        %v4100 = vsub.s32 %v4096, %v4099
        %vm4101 = vcmp.lt.s32.totalorder %v4100, 0
        %v4102 = vsub.s32 0, %v4100
        %v4103 = vsel %vm4101, %v4102, %v4100
        %v4104 = vclz %v4103
        %v4105 = vsub.s32 %v4104, 2
        %vm4106 = vcmp.gt.s32.totalorder 0, %v4105
        %v4107 = vsel %vm4106, 0, %v4105
        %v4108 = vsub.s32 32, %v4107
        %v4109 = vshll.u32 %v4100, %v4107
        %v4110 = vshrl.u32 %v4092, %v4108
        %v4111 = vor.u32 %v4109, %v4110
        %v4112 = vsub.s32 4294967266, %v4107
        %v4113 = vadd.s32 %v4112, 127
        %v4114 = vshll.u32 %v4113, 23
        %v4115 = vor.u32 4788187, %v4114
        %v4116 = vand.u32 2147483647, %v4115
        %v4118 = vcvt.s32.f32 %v4111
        %v4119 = vmul.f32 %v4118, %v4116
        %v4120 = vxor.u32 %v4119, 2147483648
        %v4121 = vsel %vm4038, %v4120, %v4119
        %v4122 = vsub.s32 4, %v4098
        %v4123 = vsel %vm4038, %v4122, %v4098
        %v4124 = vsel %vm4037, %v1398, %v4121
        %v4125 = vsel %vm4037, 0, %v4123
        %v4126 = vcosq.f32.pop %v4124
        %v4127 = vsinq.f32.pop %v4124
        %vm4128 = vweird.f32 %v1398
        %v4129 = vadd.s32 %v4125, 3
        %v4130 = vand.u32 %v4129, 3
        %vm4131 = vcmp.lt.s32.totalorder %v4130, 2
        %vm4132 = vcmp.eq.s32.totalorder %v4130, 0
        %v4133 = vxor.u32 %v4127, 2147483648
        %v4134 = vsel %vm4132, %v4126, %v4133
        %vm4135 = vcmp.eq.s32.totalorder %v4130, 2
        %v4136 = vxor.u32 %v4126, 2147483648
        %v4137 = vsel %vm4135, %v4136, %v4127
        %v4138 = vsel %vm4131, %v4134, %v4137
        %v4139 = vsel %vm4128, nan, %v4138
        %v4140 = vand.u32 2147483647, %v2596
        %vm4141 = vcmp.le.f32.partialorder %v4140, 0.7853982
        %vm4142 = vcmp.lt.s32.totalorder %v2596, 0
        %v4143 = vand.u32 %v2596, 2139095040
        %v4144 = vshrl.u32 %v4143, 23
        %v4145 = vsub.s32 %v4144, 127
        %v4146 = vand.u32 2147483647, %v2596
        %v4147 = vand.u32 %v4146, 8388607
        %v4148 = vor.u32 %v4147, 8388608
        %v4149 = vsub.s32 0, %v4148
        %v4150 = vadd.s32 %v4145, 1
        %vm4151 = vcmp.gt.s32.totalorder %v4150, 0
        %v4152 = vsel %vm4151, %v4150, 0
        %v4153 = vshrl.u32 %v4152, 5
        %v4154 = vand.u32 %v4152, 31
        %v4155 = vsub.s32 32, %v4154
        %v4156 = vshrl.u32 683565275, %v4155
        %v4157 = vshll.u32 683565275, %v4154
        %v4158 = vshrl.u32 2475754826, %v4155
        %v4159 = vor.u32 %v4157, %v4158
        %v4160 = vshll.u32 2475754826, %v4154
        %v4161 = vshrl.u32 2131351028, %v4155
        %v4162 = vor.u32 %v4160, %v4161
        %v4163 = vshll.u32 2131351028, %v4154
        %v4164 = vshrl.u32 2102212464, %v4155
        %v4165 = vor.u32 %v4163, %v4164
        %v4166 = vshll.u32 2102212464, %v4154
        %v4167 = vshrl.u32 920167782, %v4155
        %v4168 = vor.u32 %v4166, %v4167
        %v4169 = vshll.u32 920167782, %v4154
        %v4170 = vshrl.u32 1326507024, %v4155
        %v4171 = vor.u32 %v4169, %v4170
        %vm4172 = vcmp.lt.s32.totalorder %v4153, 1
        %vm4173 = vcmp.lt.s32.totalorder %v4153, 2
        %vm4174 = vcmp.lt.s32.totalorder %v4153, 3
        %vm4175 = vcmp.lt.s32.totalorder %v4153, 4
        %v4176 = vsel %vm4172, %v4156, %v4159
        %v4177 = vsel %vm4175, %v4165, 2102212464
        %v4178 = vsel %vm4174, %v4162, %v4177
        %v4179 = vsel %vm4173, %v4176, %v4178
        %v4180 = vsel %vm4172, %v4159, %v4162
        %v4181 = vsel %vm4175, %v4168, 920167782
        %v4182 = vsel %vm4174, %v4165, %v4181
        %v4183 = vsel %vm4173, %v4180, %v4182
        %v4184 = vsel %vm4172, %v4162, %v4165
        %v4185 = vsel %vm4175, %v4171, 1326507024
        %v4186 = vsel %vm4174, %v4168, %v4185
        %v4187 = vsel %vm4173, %v4184, %v4186
        %v4188 = vshll.u32 %v4148, 8
        %v4189 = vmul.u32.u64.compose %v4188, %v4187
        %v4190 = vextract.low.u32 %v4189
        %v4191 = vextract.high.u32 %v4189
        %v4192 = vmul.u32.u64.compose %v4188, %v4183
        %v4193 = vextract.low.u32 %v4192
        %v4194 = vextract.high.u32 %v4192
        %v4195 = vmul.u32 %v4188, %v4179
        %v4196 = vadd.s32 %v4191, %v4193
        %vm4197 = vc.u32 %v4191, %v4193
        %v4198 = vadd.s32 %v4194, 1
        %v4199 = vsel %vm4197, %v4198, %v4194
        %v4200 = vadd.s32 %v4195, %v4199
        %v4201 = vadd.s32 %v4200, 536870912
        %v4202 = vshrl.u32 %v4201, 30
        %v4203 = vshll.u32 %v4202, 30
        %v4204 = vsub.s32 %v4200, %v4203
        %vm4205 = vcmp.lt.s32.totalorder %v4204, 0
        %v4206 = vsub.s32 0, %v4204
        %v4207 = vsel %vm4205, %v4206, %v4204
        %v4208 = vclz %v4207
        %v4209 = vsub.s32 %v4208, 2
        %vm4210 = vcmp.gt.s32.totalorder 0, %v4209
        %v4211 = vsel %vm4210, 0, %v4209
        %v4212 = vsub.s32 32, %v4211
        %v4213 = vshll.u32 %v4204, %v4211
        %v4214 = vshrl.u32 %v4196, %v4212
        %v4215 = vor.u32 %v4213, %v4214
        %v4216 = vsub.s32 4294967266, %v4211
        %v4217 = vadd.s32 %v4216, 127
        %v4218 = vshll.u32 %v4217, 23
        %v4219 = vor.u32 4788187, %v4218
        %v4220 = vand.u32 2147483647, %v4219
        %v4222 = vcvt.s32.f32 %v4215
        %v4223 = vmul.f32 %v4222, %v4220
        %v4224 = vxor.u32 %v4223, 2147483648
        %v4225 = vsel %vm4142, %v4224, %v4223
        %v4226 = vsub.s32 4, %v4202
        %v4227 = vsel %vm4142, %v4226, %v4202
        %v4228 = vsel %vm4141, %v2596, %v4225
        %v4229 = vsel %vm4141, 0, %v4227
        %v4230 = vcosq.f32.pop %v4228
        %v4231 = vsinq.f32.pop %v4228
        %vm4232 = vweird.f32 %v2596
        %v4233 = vadd.s32 %v4229, 3
        %v4234 = vand.u32 %v4233, 3
        %vm4235 = vcmp.lt.s32.totalorder %v4234, 2
        %vm4236 = vcmp.eq.s32.totalorder %v4234, 0
        %v4237 = vxor.u32 %v4231, 2147483648
        %v4238 = vsel %vm4236, %v4230, %v4237
        %vm4239 = vcmp.eq.s32.totalorder %v4234, 2
        %v4240 = vxor.u32 %v4230, 2147483648
        %v4241 = vsel %vm4239, %v4240, %v4231
        %v4242 = vsel %vm4235, %v4238, %v4241
        %v4243 = vsel %vm4232, nan, %v4242
        %v4244 = vand.u32 2147483647, %v2598
        %vm4245 = vcmp.le.f32.partialorder %v4244, 0.7853982
        %vm4246 = vcmp.lt.s32.totalorder %v2598, 0
        %v4247 = vand.u32 %v2598, 2139095040
        %v4248 = vshrl.u32 %v4247, 23
        %v4249 = vsub.s32 %v4248, 127
        %v4250 = vand.u32 2147483647, %v2598
        %v4251 = vand.u32 %v4250, 8388607
        %v4252 = vor.u32 %v4251, 8388608
        %v4253 = vsub.s32 0, %v4252
        %v4254 = vadd.s32 %v4249, 1
        %vm4255 = vcmp.gt.s32.totalorder %v4254, 0
        %v4256 = vsel %vm4255, %v4254, 0
        %v4257 = vshrl.u32 %v4256, 5
        %v4258 = vand.u32 %v4256, 31
        %v4259 = vsub.s32 32, %v4258
        %v4260 = vshrl.u32 683565275, %v4259
        %v4261 = vshll.u32 683565275, %v4258
        %v4262 = vshrl.u32 2475754826, %v4259
        %v4263 = vor.u32 %v4261, %v4262
        %v4264 = vshll.u32 2475754826, %v4258
        %v4265 = vshrl.u32 2131351028, %v4259
        %v4266 = vor.u32 %v4264, %v4265
        %v4267 = vshll.u32 2131351028, %v4258
        %v4268 = vshrl.u32 2102212464, %v4259
        %v4269 = vor.u32 %v4267, %v4268
        %v4270 = vshll.u32 2102212464, %v4258
        %v4271 = vshrl.u32 920167782, %v4259
        %v4272 = vor.u32 %v4270, %v4271
        %v4273 = vshll.u32 920167782, %v4258
        %v4274 = vshrl.u32 1326507024, %v4259
        %v4275 = vor.u32 %v4273, %v4274
        %vm4276 = vcmp.lt.s32.totalorder %v4257, 1
        %vm4277 = vcmp.lt.s32.totalorder %v4257, 2
        %vm4278 = vcmp.lt.s32.totalorder %v4257, 3
        %vm4279 = vcmp.lt.s32.totalorder %v4257, 4
        %v4280 = vsel %vm4276, %v4260, %v4263
        %v4281 = vsel %vm4279, %v4269, 2102212464
        %v4282 = vsel %vm4278, %v4266, %v4281
        %v4283 = vsel %vm4277, %v4280, %v4282
        %v4284 = vsel %vm4276, %v4263, %v4266
        %v4285 = vsel %vm4279, %v4272, 920167782
        %v4286 = vsel %vm4278, %v4269, %v4285
        %v4287 = vsel %vm4277, %v4284, %v4286
        %v4288 = vsel %vm4276, %v4266, %v4269
        %v4289 = vsel %vm4279, %v4275, 1326507024
        %v4290 = vsel %vm4278, %v4272, %v4289
        %v4291 = vsel %vm4277, %v4288, %v4290
        %v4292 = vshll.u32 %v4252, 8
        %v4293 = vmul.u32.u64.compose %v4292, %v4291
        %v4294 = vextract.low.u32 %v4293
        %v4295 = vextract.high.u32 %v4293
        %v4296 = vmul.u32.u64.compose %v4292, %v4287
        %v4297 = vextract.low.u32 %v4296
        %v4298 = vextract.high.u32 %v4296
        %v4299 = vmul.u32 %v4292, %v4283
        %v4300 = vadd.s32 %v4295, %v4297
        %vm4301 = vc.u32 %v4295, %v4297
        %v4302 = vadd.s32 %v4298, 1
        %v4303 = vsel %vm4301, %v4302, %v4298
        %v4304 = vadd.s32 %v4299, %v4303
        %v4305 = vadd.s32 %v4304, 536870912
        %v4306 = vshrl.u32 %v4305, 30
        %v4307 = vshll.u32 %v4306, 30
        %v4308 = vsub.s32 %v4304, %v4307
        %vm4309 = vcmp.lt.s32.totalorder %v4308, 0
        %v4310 = vsub.s32 0, %v4308
        %v4311 = vsel %vm4309, %v4310, %v4308
        %v4312 = vclz %v4311
        %v4313 = vsub.s32 %v4312, 2
        %vm4314 = vcmp.gt.s32.totalorder 0, %v4313
        %v4315 = vsel %vm4314, 0, %v4313
        %v4316 = vsub.s32 32, %v4315
        %v4317 = vshll.u32 %v4308, %v4315
        %v4318 = vshrl.u32 %v4300, %v4316
        %v4319 = vor.u32 %v4317, %v4318
        %v4320 = vsub.s32 4294967266, %v4315
        %v4321 = vadd.s32 %v4320, 127
        %v4322 = vshll.u32 %v4321, 23
        %v4323 = vor.u32 4788187, %v4322
        %v4324 = vand.u32 2147483647, %v4323
        %v4326 = vcvt.s32.f32 %v4319
        %v4327 = vmul.f32 %v4326, %v4324
        %v4328 = vxor.u32 %v4327, 2147483648
        %v4329 = vsel %vm4246, %v4328, %v4327
        %v4330 = vsub.s32 4, %v4306
        %v4331 = vsel %vm4246, %v4330, %v4306
        %v4332 = vsel %vm4245, %v2598, %v4329
        %v4333 = vsel %vm4245, 0, %v4331
        %v4334 = vcosq.f32.pop %v4332
        %v4335 = vsinq.f32.pop %v4332
        %vm4336 = vweird.f32 %v2598
        %v4337 = vadd.s32 %v4333, 3
        %v4338 = vand.u32 %v4337, 3
        %vm4339 = vcmp.lt.s32.totalorder %v4338, 2
        %vm4340 = vcmp.eq.s32.totalorder %v4338, 0
        %v4341 = vxor.u32 %v4335, 2147483648
        %v4342 = vsel %vm4340, %v4334, %v4341
        %vm4343 = vcmp.eq.s32.totalorder %v4338, 2
        %v4344 = vxor.u32 %v4334, 2147483648
        %v4345 = vsel %vm4343, %v4344, %v4335
        %v4346 = vsel %vm4339, %v4342, %v4345
        %v4347 = vsel %vm4336, nan, %v4346
        %v4348 = vand.u32 2147483647, %v1403
        %vm4349 = vcmp.le.f32.partialorder %v4348, 0.7853982
        %vm4350 = vcmp.lt.s32.totalorder %v1403, 0
        %v4351 = vand.u32 %v1403, 2139095040
        %v4352 = vshrl.u32 %v4351, 23
        %v4353 = vsub.s32 %v4352, 127
        %v4354 = vand.u32 2147483647, %v1403
        %v4355 = vand.u32 %v4354, 8388607
        %v4356 = vor.u32 %v4355, 8388608
        %v4357 = vsub.s32 0, %v4356
        %v4358 = vadd.s32 %v4353, 1
        %vm4359 = vcmp.gt.s32.totalorder %v4358, 0
        %v4360 = vsel %vm4359, %v4358, 0
        %v4361 = vshrl.u32 %v4360, 5
        %v4362 = vand.u32 %v4360, 31
        %v4363 = vsub.s32 32, %v4362
        %v4364 = vshrl.u32 683565275, %v4363
        %v4365 = vshll.u32 683565275, %v4362
        %v4366 = vshrl.u32 2475754826, %v4363
        %v4367 = vor.u32 %v4365, %v4366
        %v4368 = vshll.u32 2475754826, %v4362
        %v4369 = vshrl.u32 2131351028, %v4363
        %v4370 = vor.u32 %v4368, %v4369
        %v4371 = vshll.u32 2131351028, %v4362
        %v4372 = vshrl.u32 2102212464, %v4363
        %v4373 = vor.u32 %v4371, %v4372
        %v4374 = vshll.u32 2102212464, %v4362
        %v4375 = vshrl.u32 920167782, %v4363
        %v4376 = vor.u32 %v4374, %v4375
        %v4377 = vshll.u32 920167782, %v4362
        %v4378 = vshrl.u32 1326507024, %v4363
        %v4379 = vor.u32 %v4377, %v4378
        %vm4380 = vcmp.lt.s32.totalorder %v4361, 1
        %vm4381 = vcmp.lt.s32.totalorder %v4361, 2
        %vm4382 = vcmp.lt.s32.totalorder %v4361, 3
        %vm4383 = vcmp.lt.s32.totalorder %v4361, 4
        %v4384 = vsel %vm4380, %v4364, %v4367
        %v4385 = vsel %vm4383, %v4373, 2102212464
        %v4386 = vsel %vm4382, %v4370, %v4385
        %v4387 = vsel %vm4381, %v4384, %v4386
        %v4388 = vsel %vm4380, %v4367, %v4370
        %v4389 = vsel %vm4383, %v4376, 920167782
        %v4390 = vsel %vm4382, %v4373, %v4389
        %v4391 = vsel %vm4381, %v4388, %v4390
        %v4392 = vsel %vm4380, %v4370, %v4373
        %v4393 = vsel %vm4383, %v4379, 1326507024
        %v4394 = vsel %vm4382, %v4376, %v4393
        %v4395 = vsel %vm4381, %v4392, %v4394
        %v4396 = vshll.u32 %v4356, 8
        %v4397 = vmul.u32.u64.compose %v4396, %v4395
        %v4398 = vextract.low.u32 %v4397
        %v4399 = vextract.high.u32 %v4397
        %v4400 = vmul.u32.u64.compose %v4396, %v4391
        %v4401 = vextract.low.u32 %v4400
        %v4402 = vextract.high.u32 %v4400
        %v4403 = vmul.u32 %v4396, %v4387
        %v4404 = vadd.s32 %v4399, %v4401
        %vm4405 = vc.u32 %v4399, %v4401
        %v4406 = vadd.s32 %v4402, 1
        %v4407 = vsel %vm4405, %v4406, %v4402
        %v4408 = vadd.s32 %v4403, %v4407
        %v4409 = vadd.s32 %v4408, 536870912
        %v4410 = vshrl.u32 %v4409, 30
        %v4411 = vshll.u32 %v4410, 30
        %v4412 = vsub.s32 %v4408, %v4411
        %vm4413 = vcmp.lt.s32.totalorder %v4412, 0
        %v4414 = vsub.s32 0, %v4412
        %v4415 = vsel %vm4413, %v4414, %v4412
        %v4416 = vclz %v4415
        %v4417 = vsub.s32 %v4416, 2
        %vm4418 = vcmp.gt.s32.totalorder 0, %v4417
        %v4419 = vsel %vm4418, 0, %v4417
        %v4420 = vsub.s32 32, %v4419
        %v4421 = vshll.u32 %v4412, %v4419
        %v4422 = vshrl.u32 %v4404, %v4420
        %v4423 = vor.u32 %v4421, %v4422
        %v4424 = vsub.s32 4294967266, %v4419
        %v4425 = vadd.s32 %v4424, 127
        %v4426 = vshll.u32 %v4425, 23
        %v4427 = vor.u32 4788187, %v4426
        %v4428 = vand.u32 2147483647, %v4427
        %v4430 = vcvt.s32.f32 %v4423
        %v4431 = vmul.f32 %v4430, %v4428
        %v4432 = vxor.u32 %v4431, 2147483648
        %v4433 = vsel %vm4350, %v4432, %v4431
        %v4434 = vsub.s32 4, %v4410
        %v4435 = vsel %vm4350, %v4434, %v4410
        %v4436 = vsel %vm4349, %v1403, %v4433
        %v4437 = vsel %vm4349, 0, %v4435
        %v4438 = vcosq.f32.pop %v4436
        %v4439 = vsinq.f32.pop %v4436
        %vm4440 = vweird.f32 %v1403
        %v4441 = vadd.s32 %v4437, 3
        %v4442 = vand.u32 %v4441, 3
        %vm4443 = vcmp.lt.s32.totalorder %v4442, 2
        %vm4444 = vcmp.eq.s32.totalorder %v4442, 0
        %v4445 = vxor.u32 %v4439, 2147483648
        %v4446 = vsel %vm4444, %v4438, %v4445
        %vm4447 = vcmp.eq.s32.totalorder %v4442, 2
        %v4448 = vxor.u32 %v4438, 2147483648
        %v4449 = vsel %vm4447, %v4448, %v4439
        %v4450 = vsel %vm4443, %v4446, %v4449
        %v4451 = vsel %vm4440, nan, %v4450
        %v4452 = vand.u32 2147483647, %v1405
        %vm4453 = vcmp.le.f32.partialorder %v4452, 0.7853982
        %vm4454 = vcmp.lt.s32.totalorder %v1405, 0
        %v4455 = vand.u32 %v1405, 2139095040
        %v4456 = vshrl.u32 %v4455, 23
        %v4457 = vsub.s32 %v4456, 127
        %v4458 = vand.u32 2147483647, %v1405
        %v4459 = vand.u32 %v4458, 8388607
        %v4460 = vor.u32 %v4459, 8388608
        %v4461 = vsub.s32 0, %v4460
        %v4462 = vadd.s32 %v4457, 1
        %vm4463 = vcmp.gt.s32.totalorder %v4462, 0
        %v4464 = vsel %vm4463, %v4462, 0
        %v4465 = vshrl.u32 %v4464, 5
        %v4466 = vand.u32 %v4464, 31
        %v4467 = vsub.s32 32, %v4466
        %v4468 = vshrl.u32 683565275, %v4467
        %v4469 = vshll.u32 683565275, %v4466
        %v4470 = vshrl.u32 2475754826, %v4467
        %v4471 = vor.u32 %v4469, %v4470
        %v4472 = vshll.u32 2475754826, %v4466
        %v4473 = vshrl.u32 2131351028, %v4467
        %v4474 = vor.u32 %v4472, %v4473
        %v4475 = vshll.u32 2131351028, %v4466
        %v4476 = vshrl.u32 2102212464, %v4467
        %v4477 = vor.u32 %v4475, %v4476
        %v4478 = vshll.u32 2102212464, %v4466
        %v4479 = vshrl.u32 920167782, %v4467
        %v4480 = vor.u32 %v4478, %v4479
        %v4481 = vshll.u32 920167782, %v4466
        %v4482 = vshrl.u32 1326507024, %v4467
        %v4483 = vor.u32 %v4481, %v4482
        %vm4484 = vcmp.lt.s32.totalorder %v4465, 1
        %vm4485 = vcmp.lt.s32.totalorder %v4465, 2
        %vm4486 = vcmp.lt.s32.totalorder %v4465, 3
        %vm4487 = vcmp.lt.s32.totalorder %v4465, 4
        %v4488 = vsel %vm4484, %v4468, %v4471
        %v4489 = vsel %vm4487, %v4477, 2102212464
        %v4490 = vsel %vm4486, %v4474, %v4489
        %v4491 = vsel %vm4485, %v4488, %v4490
        %v4492 = vsel %vm4484, %v4471, %v4474
        %v4493 = vsel %vm4487, %v4480, 920167782
        %v4494 = vsel %vm4486, %v4477, %v4493
        %v4495 = vsel %vm4485, %v4492, %v4494
        %v4496 = vsel %vm4484, %v4474, %v4477
        %v4497 = vsel %vm4487, %v4483, 1326507024
        %v4498 = vsel %vm4486, %v4480, %v4497
        %v4499 = vsel %vm4485, %v4496, %v4498
        %v4500 = vshll.u32 %v4460, 8
        %v4501 = vmul.u32.u64.compose %v4500, %v4499
        %v4502 = vextract.low.u32 %v4501
        %v4503 = vextract.high.u32 %v4501
        %v4504 = vmul.u32.u64.compose %v4500, %v4495
        %v4505 = vextract.low.u32 %v4504
        %v4506 = vextract.high.u32 %v4504
        %v4507 = vmul.u32 %v4500, %v4491
        %v4508 = vadd.s32 %v4503, %v4505
        %vm4509 = vc.u32 %v4503, %v4505
        %v4510 = vadd.s32 %v4506, 1
        %v4511 = vsel %vm4509, %v4510, %v4506
        %v4512 = vadd.s32 %v4507, %v4511
        %v4513 = vadd.s32 %v4512, 536870912
        %v4514 = vshrl.u32 %v4513, 30
        %v4515 = vshll.u32 %v4514, 30
        %v4516 = vsub.s32 %v4512, %v4515
        %vm4517 = vcmp.lt.s32.totalorder %v4516, 0
        %v4518 = vsub.s32 0, %v4516
        %v4519 = vsel %vm4517, %v4518, %v4516
        %v4520 = vclz %v4519
        %v4521 = vsub.s32 %v4520, 2
        %vm4522 = vcmp.gt.s32.totalorder 0, %v4521
        %v4523 = vsel %vm4522, 0, %v4521
        %v4524 = vsub.s32 32, %v4523
        %v4525 = vshll.u32 %v4516, %v4523
        %v4526 = vshrl.u32 %v4508, %v4524
        %v4527 = vor.u32 %v4525, %v4526
        %v4528 = vsub.s32 4294967266, %v4523
        %v4529 = vadd.s32 %v4528, 127
        %v4530 = vshll.u32 %v4529, 23
        %v4531 = vor.u32 4788187, %v4530
        %v4532 = vand.u32 2147483647, %v4531
        %v4534 = vcvt.s32.f32 %v4527
        %v4535 = vmul.f32 %v4534, %v4532
        %v4536 = vxor.u32 %v4535, 2147483648
        %v4537 = vsel %vm4454, %v4536, %v4535
        %v4538 = vsub.s32 4, %v4514
        %v4539 = vsel %vm4454, %v4538, %v4514
        %v4540 = vsel %vm4453, %v1405, %v4537
        %v4541 = vsel %vm4453, 0, %v4539
        %v4542 = vcosq.f32.pop %v4540
        %v4543 = vsinq.f32.pop %v4540
        %vm4544 = vweird.f32 %v1405
        %v4545 = vadd.s32 %v4541, 3
        %v4546 = vand.u32 %v4545, 3
        %vm4547 = vcmp.lt.s32.totalorder %v4546, 2
        %vm4548 = vcmp.eq.s32.totalorder %v4546, 0
        %v4549 = vxor.u32 %v4543, 2147483648
        %v4550 = vsel %vm4548, %v4542, %v4549
        %vm4551 = vcmp.eq.s32.totalorder %v4546, 2
        %v4552 = vxor.u32 %v4542, 2147483648
        %v4553 = vsel %vm4551, %v4552, %v4543
        %v4554 = vsel %vm4547, %v4550, %v4553
        %v4555 = vsel %vm4544, nan, %v4554
        %v4556 = vand.u32 2147483647, %v2603
        %vm4557 = vcmp.le.f32.partialorder %v4556, 0.7853982
        %vm4558 = vcmp.lt.s32.totalorder %v2603, 0
        %v4559 = vand.u32 %v2603, 2139095040
        %v4560 = vshrl.u32 %v4559, 23
        %v4561 = vsub.s32 %v4560, 127
        %v4562 = vand.u32 2147483647, %v2603
        %v4563 = vand.u32 %v4562, 8388607
        %v4564 = vor.u32 %v4563, 8388608
        %v4565 = vsub.s32 0, %v4564
        %v4566 = vadd.s32 %v4561, 1
        %vm4567 = vcmp.gt.s32.totalorder %v4566, 0
        %v4568 = vsel %vm4567, %v4566, 0
        %v4569 = vshrl.u32 %v4568, 5
        %v4570 = vand.u32 %v4568, 31
        %v4571 = vsub.s32 32, %v4570
        %v4572 = vshrl.u32 683565275, %v4571
        %v4573 = vshll.u32 683565275, %v4570
        %v4574 = vshrl.u32 2475754826, %v4571
        %v4575 = vor.u32 %v4573, %v4574
        %v4576 = vshll.u32 2475754826, %v4570
        %v4577 = vshrl.u32 2131351028, %v4571
        %v4578 = vor.u32 %v4576, %v4577
        %v4579 = vshll.u32 2131351028, %v4570
        %v4580 = vshrl.u32 2102212464, %v4571
        %v4581 = vor.u32 %v4579, %v4580
        %v4582 = vshll.u32 2102212464, %v4570
        %v4583 = vshrl.u32 920167782, %v4571
        %v4584 = vor.u32 %v4582, %v4583
        %v4585 = vshll.u32 920167782, %v4570
        %v4586 = vshrl.u32 1326507024, %v4571
        %v4587 = vor.u32 %v4585, %v4586
        %vm4588 = vcmp.lt.s32.totalorder %v4569, 1
        %vm4589 = vcmp.lt.s32.totalorder %v4569, 2
        %vm4590 = vcmp.lt.s32.totalorder %v4569, 3
        %vm4591 = vcmp.lt.s32.totalorder %v4569, 4
        %v4592 = vsel %vm4588, %v4572, %v4575
        %v4593 = vsel %vm4591, %v4581, 2102212464
        %v4594 = vsel %vm4590, %v4578, %v4593
        %v4595 = vsel %vm4589, %v4592, %v4594
        %v4596 = vsel %vm4588, %v4575, %v4578
        %v4597 = vsel %vm4591, %v4584, 920167782
        %v4598 = vsel %vm4590, %v4581, %v4597
        %v4599 = vsel %vm4589, %v4596, %v4598
        %v4600 = vsel %vm4588, %v4578, %v4581
        %v4601 = vsel %vm4591, %v4587, 1326507024
        %v4602 = vsel %vm4590, %v4584, %v4601
        %v4603 = vsel %vm4589, %v4600, %v4602
        %v4604 = vshll.u32 %v4564, 8
        %v4605 = vmul.u32.u64.compose %v4604, %v4603
        %v4606 = vextract.low.u32 %v4605
        %v4607 = vextract.high.u32 %v4605
        %v4608 = vmul.u32.u64.compose %v4604, %v4599
        %v4609 = vextract.low.u32 %v4608
        %v4610 = vextract.high.u32 %v4608
        %v4611 = vmul.u32 %v4604, %v4595
        %v4612 = vadd.s32 %v4607, %v4609
        %vm4613 = vc.u32 %v4607, %v4609
        %v4614 = vadd.s32 %v4610, 1
        %v4615 = vsel %vm4613, %v4614, %v4610
        %v4616 = vadd.s32 %v4611, %v4615
        %v4617 = vadd.s32 %v4616, 536870912
        %v4618 = vshrl.u32 %v4617, 30
        %v4619 = vshll.u32 %v4618, 30
        %v4620 = vsub.s32 %v4616, %v4619
        %vm4621 = vcmp.lt.s32.totalorder %v4620, 0
        %v4622 = vsub.s32 0, %v4620
        %v4623 = vsel %vm4621, %v4622, %v4620
        %v4624 = vclz %v4623
        %v4625 = vsub.s32 %v4624, 2
        %vm4626 = vcmp.gt.s32.totalorder 0, %v4625
        %v4627 = vsel %vm4626, 0, %v4625
        %v4628 = vsub.s32 32, %v4627
        %v4629 = vshll.u32 %v4620, %v4627
        %v4630 = vshrl.u32 %v4612, %v4628
        %v4631 = vor.u32 %v4629, %v4630
        %v4632 = vsub.s32 4294967266, %v4627
        %v4633 = vadd.s32 %v4632, 127
        %v4634 = vshll.u32 %v4633, 23
        %v4635 = vor.u32 4788187, %v4634
        %v4636 = vand.u32 2147483647, %v4635
        %v4638 = vcvt.s32.f32 %v4631
        %v4639 = vmul.f32 %v4638, %v4636
        %v4640 = vxor.u32 %v4639, 2147483648
        %v4641 = vsel %vm4558, %v4640, %v4639
        %v4642 = vsub.s32 4, %v4618
        %v4643 = vsel %vm4558, %v4642, %v4618
        %v4644 = vsel %vm4557, %v2603, %v4641
        %v4645 = vsel %vm4557, 0, %v4643
        %v4646 = vcosq.f32.pop %v4644
        %v4647 = vsinq.f32.pop %v4644
        %vm4648 = vweird.f32 %v2603
        %v4649 = vadd.s32 %v4645, 3
        %v4650 = vand.u32 %v4649, 3
        %vm4651 = vcmp.lt.s32.totalorder %v4650, 2
        %vm4652 = vcmp.eq.s32.totalorder %v4650, 0
        %v4653 = vxor.u32 %v4647, 2147483648
        %v4654 = vsel %vm4652, %v4646, %v4653
        %vm4655 = vcmp.eq.s32.totalorder %v4650, 2
        %v4656 = vxor.u32 %v4646, 2147483648
        %v4657 = vsel %vm4655, %v4656, %v4647
        %v4658 = vsel %vm4651, %v4654, %v4657
        %v4659 = vsel %vm4648, nan, %v4658
        %v4660 = vand.u32 2147483647, %v2605
        %vm4661 = vcmp.le.f32.partialorder %v4660, 0.7853982
        %vm4662 = vcmp.lt.s32.totalorder %v2605, 0
        %v4663 = vand.u32 %v2605, 2139095040
        %v4664 = vshrl.u32 %v4663, 23
        %v4665 = vsub.s32 %v4664, 127
        %v4666 = vand.u32 2147483647, %v2605
        %v4667 = vand.u32 %v4666, 8388607
        %v4668 = vor.u32 %v4667, 8388608
        %v4669 = vsub.s32 0, %v4668
        %v4670 = vadd.s32 %v4665, 1
        %vm4671 = vcmp.gt.s32.totalorder %v4670, 0
        %v4672 = vsel %vm4671, %v4670, 0
        %v4673 = vshrl.u32 %v4672, 5
        %v4674 = vand.u32 %v4672, 31
        %v4675 = vsub.s32 32, %v4674
        %v4676 = vshrl.u32 683565275, %v4675
        %v4677 = vshll.u32 683565275, %v4674
        %v4678 = vshrl.u32 2475754826, %v4675
        %v4679 = vor.u32 %v4677, %v4678
        %v4680 = vshll.u32 2475754826, %v4674
        %v4681 = vshrl.u32 2131351028, %v4675
        %v4682 = vor.u32 %v4680, %v4681
        %v4683 = vshll.u32 2131351028, %v4674
        %v4684 = vshrl.u32 2102212464, %v4675
        %v4685 = vor.u32 %v4683, %v4684
        %v4686 = vshll.u32 2102212464, %v4674
        %v4687 = vshrl.u32 920167782, %v4675
        %v4688 = vor.u32 %v4686, %v4687
        %v4689 = vshll.u32 920167782, %v4674
        %v4690 = vshrl.u32 1326507024, %v4675
        %v4691 = vor.u32 %v4689, %v4690
        %vm4692 = vcmp.lt.s32.totalorder %v4673, 1
        %vm4693 = vcmp.lt.s32.totalorder %v4673, 2
        %vm4694 = vcmp.lt.s32.totalorder %v4673, 3
        %vm4695 = vcmp.lt.s32.totalorder %v4673, 4
        %v4696 = vsel %vm4692, %v4676, %v4679
        %v4697 = vsel %vm4695, %v4685, 2102212464
        %v4698 = vsel %vm4694, %v4682, %v4697
        %v4699 = vsel %vm4693, %v4696, %v4698
        %v4700 = vsel %vm4692, %v4679, %v4682
        %v4701 = vsel %vm4695, %v4688, 920167782
        %v4702 = vsel %vm4694, %v4685, %v4701
        %v4703 = vsel %vm4693, %v4700, %v4702
        %v4704 = vsel %vm4692, %v4682, %v4685
        %v4705 = vsel %vm4695, %v4691, 1326507024
        %v4706 = vsel %vm4694, %v4688, %v4705
        %v4707 = vsel %vm4693, %v4704, %v4706
        %v4708 = vshll.u32 %v4668, 8
        %v4709 = vmul.u32.u64.compose %v4708, %v4707
        %v4710 = vextract.low.u32 %v4709
        %v4711 = vextract.high.u32 %v4709
        %v4712 = vmul.u32.u64.compose %v4708, %v4703
        %v4713 = vextract.low.u32 %v4712
        %v4714 = vextract.high.u32 %v4712
        %v4715 = vmul.u32 %v4708, %v4699
        %v4716 = vadd.s32 %v4711, %v4713
        %vm4717 = vc.u32 %v4711, %v4713
        %v4718 = vadd.s32 %v4714, 1
        %v4719 = vsel %vm4717, %v4718, %v4714
        %v4720 = vadd.s32 %v4715, %v4719
        %v4721 = vadd.s32 %v4720, 536870912
        %v4722 = vshrl.u32 %v4721, 30
        %v4723 = vshll.u32 %v4722, 30
        %v4724 = vsub.s32 %v4720, %v4723
        %vm4725 = vcmp.lt.s32.totalorder %v4724, 0
        %v4726 = vsub.s32 0, %v4724
        %v4727 = vsel %vm4725, %v4726, %v4724
        %v4728 = vclz %v4727
        %v4729 = vsub.s32 %v4728, 2
        %vm4730 = vcmp.gt.s32.totalorder 0, %v4729
        %v4731 = vsel %vm4730, 0, %v4729
        %v4732 = vsub.s32 32, %v4731
        %v4733 = vshll.u32 %v4724, %v4731
        %v4734 = vshrl.u32 %v4716, %v4732
        %v4735 = vor.u32 %v4733, %v4734
        %v4736 = vsub.s32 4294967266, %v4731
        %v4737 = vadd.s32 %v4736, 127
        %v4738 = vshll.u32 %v4737, 23
        %v4739 = vor.u32 4788187, %v4738
        %v4740 = vand.u32 2147483647, %v4739
        %v4742 = vcvt.s32.f32 %v4735
        %v4743 = vmul.f32 %v4742, %v4740
        %v4744 = vxor.u32 %v4743, 2147483648
        %v4745 = vsel %vm4662, %v4744, %v4743
        %v4746 = vsub.s32 4, %v4722
        %v4747 = vsel %vm4662, %v4746, %v4722
        %v4748 = vsel %vm4661, %v2605, %v4745
        %v4749 = vsel %vm4661, 0, %v4747
        %v4750 = vcosq.f32.pop %v4748
        %v4751 = vsinq.f32.pop %v4748
        %vm4752 = vweird.f32 %v2605
        %v4753 = vadd.s32 %v4749, 3
        %v4754 = vand.u32 %v4753, 3
        %vm4755 = vcmp.lt.s32.totalorder %v4754, 2
        %vm4756 = vcmp.eq.s32.totalorder %v4754, 0
        %v4757 = vxor.u32 %v4751, 2147483648
        %v4758 = vsel %vm4756, %v4750, %v4757
        %vm4759 = vcmp.eq.s32.totalorder %v4754, 2
        %v4760 = vxor.u32 %v4750, 2147483648
        %v4761 = vsel %vm4759, %v4760, %v4751
        %v4762 = vsel %vm4755, %v4758, %v4761
        %v4763 = vsel %vm4752, nan, %v4762
        %v4764 = vand.u32 2147483647, %v1410
        %vm4765 = vcmp.le.f32.partialorder %v4764, 0.7853982
        %vm4766 = vcmp.lt.s32.totalorder %v1410, 0
        %v4767 = vand.u32 %v1410, 2139095040
        %v4768 = vshrl.u32 %v4767, 23
        %v4769 = vsub.s32 %v4768, 127
        %v4770 = vand.u32 2147483647, %v1410
        %v4771 = vand.u32 %v4770, 8388607
        %v4772 = vor.u32 %v4771, 8388608
        %v4773 = vsub.s32 0, %v4772
        %v4774 = vadd.s32 %v4769, 1
        %vm4775 = vcmp.gt.s32.totalorder %v4774, 0
        %v4776 = vsel %vm4775, %v4774, 0
        %v4777 = vshrl.u32 %v4776, 5
        %v4778 = vand.u32 %v4776, 31
        %v4779 = vsub.s32 32, %v4778
        %v4780 = vshrl.u32 683565275, %v4779
        %v4781 = vshll.u32 683565275, %v4778
        %v4782 = vshrl.u32 2475754826, %v4779
        %v4783 = vor.u32 %v4781, %v4782
        %v4784 = vshll.u32 2475754826, %v4778
        %v4785 = vshrl.u32 2131351028, %v4779
        %v4786 = vor.u32 %v4784, %v4785
        %v4787 = vshll.u32 2131351028, %v4778
        %v4788 = vshrl.u32 2102212464, %v4779
        %v4789 = vor.u32 %v4787, %v4788
        %v4790 = vshll.u32 2102212464, %v4778
        %v4791 = vshrl.u32 920167782, %v4779
        %v4792 = vor.u32 %v4790, %v4791
        %v4793 = vshll.u32 920167782, %v4778
        %v4794 = vshrl.u32 1326507024, %v4779
        %v4795 = vor.u32 %v4793, %v4794
        %vm4796 = vcmp.lt.s32.totalorder %v4777, 1
        %vm4797 = vcmp.lt.s32.totalorder %v4777, 2
        %vm4798 = vcmp.lt.s32.totalorder %v4777, 3
        %vm4799 = vcmp.lt.s32.totalorder %v4777, 4
        %v4800 = vsel %vm4796, %v4780, %v4783
        %v4801 = vsel %vm4799, %v4789, 2102212464
        %v4802 = vsel %vm4798, %v4786, %v4801
        %v4803 = vsel %vm4797, %v4800, %v4802
        %v4804 = vsel %vm4796, %v4783, %v4786
        %v4805 = vsel %vm4799, %v4792, 920167782
        %v4806 = vsel %vm4798, %v4789, %v4805
        %v4807 = vsel %vm4797, %v4804, %v4806
        %v4808 = vsel %vm4796, %v4786, %v4789
        %v4809 = vsel %vm4799, %v4795, 1326507024
        %v4810 = vsel %vm4798, %v4792, %v4809
        %v4811 = vsel %vm4797, %v4808, %v4810
        %v4812 = vshll.u32 %v4772, 8
        %v4813 = vmul.u32.u64.compose %v4812, %v4811
        %v4814 = vextract.low.u32 %v4813
        %v4815 = vextract.high.u32 %v4813
        %v4816 = vmul.u32.u64.compose %v4812, %v4807
        %v4817 = vextract.low.u32 %v4816
        %v4818 = vextract.high.u32 %v4816
        %v4819 = vmul.u32 %v4812, %v4803
        %v4820 = vadd.s32 %v4815, %v4817
        %vm4821 = vc.u32 %v4815, %v4817
        %v4822 = vadd.s32 %v4818, 1
        %v4823 = vsel %vm4821, %v4822, %v4818
        %v4824 = vadd.s32 %v4819, %v4823
        %v4825 = vadd.s32 %v4824, 536870912
        %v4826 = vshrl.u32 %v4825, 30
        %v4827 = vshll.u32 %v4826, 30
        %v4828 = vsub.s32 %v4824, %v4827
        %vm4829 = vcmp.lt.s32.totalorder %v4828, 0
        %v4830 = vsub.s32 0, %v4828
        %v4831 = vsel %vm4829, %v4830, %v4828
        %v4832 = vclz %v4831
        %v4833 = vsub.s32 %v4832, 2
        %vm4834 = vcmp.gt.s32.totalorder 0, %v4833
        %v4835 = vsel %vm4834, 0, %v4833
        %v4836 = vsub.s32 32, %v4835
        %v4837 = vshll.u32 %v4828, %v4835
        %v4838 = vshrl.u32 %v4820, %v4836
        %v4839 = vor.u32 %v4837, %v4838
        %v4840 = vsub.s32 4294967266, %v4835
        %v4841 = vadd.s32 %v4840, 127
        %v4842 = vshll.u32 %v4841, 23
        %v4843 = vor.u32 4788187, %v4842
        %v4844 = vand.u32 2147483647, %v4843
        %v4846 = vcvt.s32.f32 %v4839
        %v4847 = vmul.f32 %v4846, %v4844
        %v4848 = vxor.u32 %v4847, 2147483648
        %v4849 = vsel %vm4766, %v4848, %v4847
        %v4850 = vsub.s32 4, %v4826
        %v4851 = vsel %vm4766, %v4850, %v4826
        %v4852 = vsel %vm4765, %v1410, %v4849
        %v4853 = vsel %vm4765, 0, %v4851
        %v4854 = vcosq.f32.pop %v4852
        %v4855 = vsinq.f32.pop %v4852
        %vm4856 = vweird.f32 %v1410
        %v4857 = vadd.s32 %v4853, 3
        %v4858 = vand.u32 %v4857, 3
        %vm4859 = vcmp.lt.s32.totalorder %v4858, 2
        %vm4860 = vcmp.eq.s32.totalorder %v4858, 0
        %v4861 = vxor.u32 %v4855, 2147483648
        %v4862 = vsel %vm4860, %v4854, %v4861
        %vm4863 = vcmp.eq.s32.totalorder %v4858, 2
        %v4864 = vxor.u32 %v4854, 2147483648
        %v4865 = vsel %vm4863, %v4864, %v4855
        %v4866 = vsel %vm4859, %v4862, %v4865
        %v4867 = vsel %vm4856, nan, %v4866
        %v4868 = vand.u32 2147483647, %v1412
        %vm4869 = vcmp.le.f32.partialorder %v4868, 0.7853982
        %vm4870 = vcmp.lt.s32.totalorder %v1412, 0
        %v4871 = vand.u32 %v1412, 2139095040
        %v4872 = vshrl.u32 %v4871, 23
        %v4873 = vsub.s32 %v4872, 127
        %v4874 = vand.u32 2147483647, %v1412
        %v4875 = vand.u32 %v4874, 8388607
        %v4876 = vor.u32 %v4875, 8388608
        %v4877 = vsub.s32 0, %v4876
        %v4878 = vadd.s32 %v4873, 1
        %vm4879 = vcmp.gt.s32.totalorder %v4878, 0
        %v4880 = vsel %vm4879, %v4878, 0
        %v4881 = vshrl.u32 %v4880, 5
        %v4882 = vand.u32 %v4880, 31
        %v4883 = vsub.s32 32, %v4882
        %v4884 = vshrl.u32 683565275, %v4883
        %v4885 = vshll.u32 683565275, %v4882
        %v4886 = vshrl.u32 2475754826, %v4883
        %v4887 = vor.u32 %v4885, %v4886
        %v4888 = vshll.u32 2475754826, %v4882
        %v4889 = vshrl.u32 2131351028, %v4883
        %v4890 = vor.u32 %v4888, %v4889
        %v4891 = vshll.u32 2131351028, %v4882
        %v4892 = vshrl.u32 2102212464, %v4883
        %v4893 = vor.u32 %v4891, %v4892
        %v4894 = vshll.u32 2102212464, %v4882
        %v4895 = vshrl.u32 920167782, %v4883
        %v4896 = vor.u32 %v4894, %v4895
        %v4897 = vshll.u32 920167782, %v4882
        %v4898 = vshrl.u32 1326507024, %v4883
        %v4899 = vor.u32 %v4897, %v4898
        %vm4900 = vcmp.lt.s32.totalorder %v4881, 1
        %vm4901 = vcmp.lt.s32.totalorder %v4881, 2
        %vm4902 = vcmp.lt.s32.totalorder %v4881, 3
        %vm4903 = vcmp.lt.s32.totalorder %v4881, 4
        %v4904 = vsel %vm4900, %v4884, %v4887
        %v4905 = vsel %vm4903, %v4893, 2102212464
        %v4906 = vsel %vm4902, %v4890, %v4905
        %v4907 = vsel %vm4901, %v4904, %v4906
        %v4908 = vsel %vm4900, %v4887, %v4890
        %v4909 = vsel %vm4903, %v4896, 920167782
        %v4910 = vsel %vm4902, %v4893, %v4909
        %v4911 = vsel %vm4901, %v4908, %v4910
        %v4912 = vsel %vm4900, %v4890, %v4893
        %v4913 = vsel %vm4903, %v4899, 1326507024
        %v4914 = vsel %vm4902, %v4896, %v4913
        %v4915 = vsel %vm4901, %v4912, %v4914
        %v4916 = vshll.u32 %v4876, 8
        %v4917 = vmul.u32.u64.compose %v4916, %v4915
        %v4918 = vextract.low.u32 %v4917
        %v4919 = vextract.high.u32 %v4917
        %v4920 = vmul.u32.u64.compose %v4916, %v4911
        %v4921 = vextract.low.u32 %v4920
        %v4922 = vextract.high.u32 %v4920
        %v4923 = vmul.u32 %v4916, %v4907
        %v4924 = vadd.s32 %v4919, %v4921
        %vm4925 = vc.u32 %v4919, %v4921
        %v4926 = vadd.s32 %v4922, 1
        %v4927 = vsel %vm4925, %v4926, %v4922
        %v4928 = vadd.s32 %v4923, %v4927
        %v4929 = vadd.s32 %v4928, 536870912
        %v4930 = vshrl.u32 %v4929, 30
        %v4931 = vshll.u32 %v4930, 30
        %v4932 = vsub.s32 %v4928, %v4931
        %vm4933 = vcmp.lt.s32.totalorder %v4932, 0
        %v4934 = vsub.s32 0, %v4932
        %v4935 = vsel %vm4933, %v4934, %v4932
        %v4936 = vclz %v4935
        %v4937 = vsub.s32 %v4936, 2
        %vm4938 = vcmp.gt.s32.totalorder 0, %v4937
        %v4939 = vsel %vm4938, 0, %v4937
        %v4940 = vsub.s32 32, %v4939
        %v4941 = vshll.u32 %v4932, %v4939
        %v4942 = vshrl.u32 %v4924, %v4940
        %v4943 = vor.u32 %v4941, %v4942
        %v4944 = vsub.s32 4294967266, %v4939
        %v4945 = vadd.s32 %v4944, 127
        %v4946 = vshll.u32 %v4945, 23
        %v4947 = vor.u32 4788187, %v4946
        %v4948 = vand.u32 2147483647, %v4947
        %v4950 = vcvt.s32.f32 %v4943
        %v4951 = vmul.f32 %v4950, %v4948
        %v4952 = vxor.u32 %v4951, 2147483648
        %v4953 = vsel %vm4870, %v4952, %v4951
        %v4954 = vsub.s32 4, %v4930
        %v4955 = vsel %vm4870, %v4954, %v4930
        %v4956 = vsel %vm4869, %v1412, %v4953
        %v4957 = vsel %vm4869, 0, %v4955
        %v4958 = vcosq.f32.pop %v4956
        %v4959 = vsinq.f32.pop %v4956
        %vm4960 = vweird.f32 %v1412
        %v4961 = vadd.s32 %v4957, 3
        %v4962 = vand.u32 %v4961, 3
        %vm4963 = vcmp.lt.s32.totalorder %v4962, 2
        %vm4964 = vcmp.eq.s32.totalorder %v4962, 0
        %v4965 = vxor.u32 %v4959, 2147483648
        %v4966 = vsel %vm4964, %v4958, %v4965
        %vm4967 = vcmp.eq.s32.totalorder %v4962, 2
        %v4968 = vxor.u32 %v4958, 2147483648
        %v4969 = vsel %vm4967, %v4968, %v4959
        %v4970 = vsel %vm4963, %v4966, %v4969
        %v4971 = vsel %vm4960, nan, %v4970
        %v4972 = vand.u32 2147483647, %v2610
        %vm4973 = vcmp.le.f32.partialorder %v4972, 0.7853982
        %vm4974 = vcmp.lt.s32.totalorder %v2610, 0
        %v4975 = vand.u32 %v2610, 2139095040
        %v4976 = vshrl.u32 %v4975, 23
        %v4977 = vsub.s32 %v4976, 127
        %v4978 = vand.u32 2147483647, %v2610
        %v4979 = vand.u32 %v4978, 8388607
        %v4980 = vor.u32 %v4979, 8388608
        %v4981 = vsub.s32 0, %v4980
        %v4982 = vadd.s32 %v4977, 1
        %vm4983 = vcmp.gt.s32.totalorder %v4982, 0
        %v4984 = vsel %vm4983, %v4982, 0
        %v4985 = vshrl.u32 %v4984, 5
        %v4986 = vand.u32 %v4984, 31
        %v4987 = vsub.s32 32, %v4986
        %v4988 = vshrl.u32 683565275, %v4987
        %v4989 = vshll.u32 683565275, %v4986
        %v4990 = vshrl.u32 2475754826, %v4987
        %v4991 = vor.u32 %v4989, %v4990
        %v4992 = vshll.u32 2475754826, %v4986
        %v4993 = vshrl.u32 2131351028, %v4987
        %v4994 = vor.u32 %v4992, %v4993
        %v4995 = vshll.u32 2131351028, %v4986
        %v4996 = vshrl.u32 2102212464, %v4987
        %v4997 = vor.u32 %v4995, %v4996
        %v4998 = vshll.u32 2102212464, %v4986
        %v4999 = vshrl.u32 920167782, %v4987
        %v5000 = vor.u32 %v4998, %v4999
        %v5001 = vshll.u32 920167782, %v4986
        %v5002 = vshrl.u32 1326507024, %v4987
        %v5003 = vor.u32 %v5001, %v5002
        %vm5004 = vcmp.lt.s32.totalorder %v4985, 1
        %vm5005 = vcmp.lt.s32.totalorder %v4985, 2
        %vm5006 = vcmp.lt.s32.totalorder %v4985, 3
        %vm5007 = vcmp.lt.s32.totalorder %v4985, 4
        %v5008 = vsel %vm5004, %v4988, %v4991
        %v5009 = vsel %vm5007, %v4997, 2102212464
        %v5010 = vsel %vm5006, %v4994, %v5009
        %v5011 = vsel %vm5005, %v5008, %v5010
        %v5012 = vsel %vm5004, %v4991, %v4994
        %v5013 = vsel %vm5007, %v5000, 920167782
        %v5014 = vsel %vm5006, %v4997, %v5013
        %v5015 = vsel %vm5005, %v5012, %v5014
        %v5016 = vsel %vm5004, %v4994, %v4997
        %v5017 = vsel %vm5007, %v5003, 1326507024
        %v5018 = vsel %vm5006, %v5000, %v5017
        %v5019 = vsel %vm5005, %v5016, %v5018
        %v5020 = vshll.u32 %v4980, 8
        %v5021 = vmul.u32.u64.compose %v5020, %v5019
        %v5022 = vextract.low.u32 %v5021
        %v5023 = vextract.high.u32 %v5021
        %v5024 = vmul.u32.u64.compose %v5020, %v5015
        %v5025 = vextract.low.u32 %v5024
        %v5026 = vextract.high.u32 %v5024
        %v5027 = vmul.u32 %v5020, %v5011
        %v5028 = vadd.s32 %v5023, %v5025
        %vm5029 = vc.u32 %v5023, %v5025
        %v5030 = vadd.s32 %v5026, 1
        %v5031 = vsel %vm5029, %v5030, %v5026
        %v5032 = vadd.s32 %v5027, %v5031
        %v5033 = vadd.s32 %v5032, 536870912
        %v5034 = vshrl.u32 %v5033, 30
        %v5035 = vshll.u32 %v5034, 30
        %v5036 = vsub.s32 %v5032, %v5035
        %vm5037 = vcmp.lt.s32.totalorder %v5036, 0
        %v5038 = vsub.s32 0, %v5036
        %v5039 = vsel %vm5037, %v5038, %v5036
        %v5040 = vclz %v5039
        %v5041 = vsub.s32 %v5040, 2
        %vm5042 = vcmp.gt.s32.totalorder 0, %v5041
        %v5043 = vsel %vm5042, 0, %v5041
        %v5044 = vsub.s32 32, %v5043
        %v5045 = vshll.u32 %v5036, %v5043
        %v5046 = vshrl.u32 %v5028, %v5044
        %v5047 = vor.u32 %v5045, %v5046
        %v5048 = vsub.s32 4294967266, %v5043
        %v5049 = vadd.s32 %v5048, 127
        %v5050 = vshll.u32 %v5049, 23
        %v5051 = vor.u32 4788187, %v5050
        %v5052 = vand.u32 2147483647, %v5051
        %v5054 = vcvt.s32.f32 %v5047
        %v5055 = vmul.f32 %v5054, %v5052
        %v5056 = vxor.u32 %v5055, 2147483648
        %v5057 = vsel %vm4974, %v5056, %v5055
        %v5058 = vsub.s32 4, %v5034
        %v5059 = vsel %vm4974, %v5058, %v5034
        %v5060 = vsel %vm4973, %v2610, %v5057
        %v5061 = vsel %vm4973, 0, %v5059
        %v5062 = vcosq.f32.pop %v5060
        %v5063 = vsinq.f32.pop %v5060
        %vm5064 = vweird.f32 %v2610
        %v5065 = vadd.s32 %v5061, 3
        %v5066 = vand.u32 %v5065, 3
        %vm5067 = vcmp.lt.s32.totalorder %v5066, 2
        %vm5068 = vcmp.eq.s32.totalorder %v5066, 0
        %v5069 = vxor.u32 %v5063, 2147483648
        %v5070 = vsel %vm5068, %v5062, %v5069
        %vm5071 = vcmp.eq.s32.totalorder %v5066, 2
        %v5072 = vxor.u32 %v5062, 2147483648
        %v5073 = vsel %vm5071, %v5072, %v5063
        %v5074 = vsel %vm5067, %v5070, %v5073
        %v5075 = vsel %vm5064, nan, %v5074
        %v5076 = vand.u32 2147483647, %v2612
        %vm5077 = vcmp.le.f32.partialorder %v5076, 0.7853982
        %vm5078 = vcmp.lt.s32.totalorder %v2612, 0
        %v5079 = vand.u32 %v2612, 2139095040
        %v5080 = vshrl.u32 %v5079, 23
        %v5081 = vsub.s32 %v5080, 127
        %v5082 = vand.u32 2147483647, %v2612
        %v5083 = vand.u32 %v5082, 8388607
        %v5084 = vor.u32 %v5083, 8388608
        %v5085 = vsub.s32 0, %v5084
        %v5086 = vadd.s32 %v5081, 1
        %vm5087 = vcmp.gt.s32.totalorder %v5086, 0
        %v5088 = vsel %vm5087, %v5086, 0
        %v5089 = vshrl.u32 %v5088, 5
        %v5090 = vand.u32 %v5088, 31
        %v5091 = vsub.s32 32, %v5090
        %v5092 = vshrl.u32 683565275, %v5091
        %v5093 = vshll.u32 683565275, %v5090
        %v5094 = vshrl.u32 2475754826, %v5091
        %v5095 = vor.u32 %v5093, %v5094
        %v5096 = vshll.u32 2475754826, %v5090
        %v5097 = vshrl.u32 2131351028, %v5091
        %v5098 = vor.u32 %v5096, %v5097
        %v5099 = vshll.u32 2131351028, %v5090
        %v5100 = vshrl.u32 2102212464, %v5091
        %v5101 = vor.u32 %v5099, %v5100
        %v5102 = vshll.u32 2102212464, %v5090
        %v5103 = vshrl.u32 920167782, %v5091
        %v5104 = vor.u32 %v5102, %v5103
        %v5105 = vshll.u32 920167782, %v5090
        %v5106 = vshrl.u32 1326507024, %v5091
        %v5107 = vor.u32 %v5105, %v5106
        %vm5108 = vcmp.lt.s32.totalorder %v5089, 1
        %vm5109 = vcmp.lt.s32.totalorder %v5089, 2
        %vm5110 = vcmp.lt.s32.totalorder %v5089, 3
        %vm5111 = vcmp.lt.s32.totalorder %v5089, 4
        %v5112 = vsel %vm5108, %v5092, %v5095
        %v5113 = vsel %vm5111, %v5101, 2102212464
        %v5114 = vsel %vm5110, %v5098, %v5113
        %v5115 = vsel %vm5109, %v5112, %v5114
        %v5116 = vsel %vm5108, %v5095, %v5098
        %v5117 = vsel %vm5111, %v5104, 920167782
        %v5118 = vsel %vm5110, %v5101, %v5117
        %v5119 = vsel %vm5109, %v5116, %v5118
        %v5120 = vsel %vm5108, %v5098, %v5101
        %v5121 = vsel %vm5111, %v5107, 1326507024
        %v5122 = vsel %vm5110, %v5104, %v5121
        %v5123 = vsel %vm5109, %v5120, %v5122
        %v5124 = vshll.u32 %v5084, 8
        %v5125 = vmul.u32.u64.compose %v5124, %v5123
        %v5126 = vextract.low.u32 %v5125
        %v5127 = vextract.high.u32 %v5125
        %v5128 = vmul.u32.u64.compose %v5124, %v5119
        %v5129 = vextract.low.u32 %v5128
        %v5130 = vextract.high.u32 %v5128
        %v5131 = vmul.u32 %v5124, %v5115
        %v5132 = vadd.s32 %v5127, %v5129
        %vm5133 = vc.u32 %v5127, %v5129
        %v5134 = vadd.s32 %v5130, 1
        %v5135 = vsel %vm5133, %v5134, %v5130
        %v5136 = vadd.s32 %v5131, %v5135
        %v5137 = vadd.s32 %v5136, 536870912
        %v5138 = vshrl.u32 %v5137, 30
        %v5139 = vshll.u32 %v5138, 30
        %v5140 = vsub.s32 %v5136, %v5139
        %vm5141 = vcmp.lt.s32.totalorder %v5140, 0
        %v5142 = vsub.s32 0, %v5140
        %v5143 = vsel %vm5141, %v5142, %v5140
        %v5144 = vclz %v5143
        %v5145 = vsub.s32 %v5144, 2
        %vm5146 = vcmp.gt.s32.totalorder 0, %v5145
        %v5147 = vsel %vm5146, 0, %v5145
        %v5148 = vsub.s32 32, %v5147
        %v5149 = vshll.u32 %v5140, %v5147
        %v5150 = vshrl.u32 %v5132, %v5148
        %v5151 = vor.u32 %v5149, %v5150
        %v5152 = vsub.s32 4294967266, %v5147
        %v5153 = vadd.s32 %v5152, 127
        %v5154 = vshll.u32 %v5153, 23
        %v5155 = vor.u32 4788187, %v5154
        %v5156 = vand.u32 2147483647, %v5155
        %v5158 = vcvt.s32.f32 %v5151
        %v5159 = vmul.f32 %v5158, %v5156
        %v5160 = vxor.u32 %v5159, 2147483648
        %v5161 = vsel %vm5078, %v5160, %v5159
        %v5162 = vsub.s32 4, %v5138
        %v5163 = vsel %vm5078, %v5162, %v5138
        %v5164 = vsel %vm5077, %v2612, %v5161
        %v5165 = vsel %vm5077, 0, %v5163
        %v5166 = vcosq.f32.pop %v5164
        %v5167 = vsinq.f32.pop %v5164
        %vm5168 = vweird.f32 %v2612
        %v5169 = vadd.s32 %v5165, 3
        %v5170 = vand.u32 %v5169, 3
        %vm5171 = vcmp.lt.s32.totalorder %v5170, 2
        %vm5172 = vcmp.eq.s32.totalorder %v5170, 0
        %v5173 = vxor.u32 %v5167, 2147483648
        %v5174 = vsel %vm5172, %v5166, %v5173
        %vm5175 = vcmp.eq.s32.totalorder %v5170, 2
        %v5176 = vxor.u32 %v5166, 2147483648
        %v5177 = vsel %vm5175, %v5176, %v5167
        %v5178 = vsel %vm5171, %v5174, %v5177
        %v5179 = vsel %vm5168, nan, %v5178
        %v5180 = vand.u32 2147483647, %v1417
        %vm5181 = vcmp.le.f32.partialorder %v5180, 0.7853982
        %vm5182 = vcmp.lt.s32.totalorder %v1417, 0
        %v5183 = vand.u32 %v1417, 2139095040
        %v5184 = vshrl.u32 %v5183, 23
        %v5185 = vsub.s32 %v5184, 127
        %v5186 = vand.u32 2147483647, %v1417
        %v5187 = vand.u32 %v5186, 8388607
        %v5188 = vor.u32 %v5187, 8388608
        %v5189 = vsub.s32 0, %v5188
        %v5190 = vadd.s32 %v5185, 1
        %vm5191 = vcmp.gt.s32.totalorder %v5190, 0
        %v5192 = vsel %vm5191, %v5190, 0
        %v5193 = vshrl.u32 %v5192, 5
        %v5194 = vand.u32 %v5192, 31
        %v5195 = vsub.s32 32, %v5194
        %v5196 = vshrl.u32 683565275, %v5195
        %v5197 = vshll.u32 683565275, %v5194
        %v5198 = vshrl.u32 2475754826, %v5195
        %v5199 = vor.u32 %v5197, %v5198
        %v5200 = vshll.u32 2475754826, %v5194
        %v5201 = vshrl.u32 2131351028, %v5195
        %v5202 = vor.u32 %v5200, %v5201
        %v5203 = vshll.u32 2131351028, %v5194
        %v5204 = vshrl.u32 2102212464, %v5195
        %v5205 = vor.u32 %v5203, %v5204
        %v5206 = vshll.u32 2102212464, %v5194
        %v5207 = vshrl.u32 920167782, %v5195
        %v5208 = vor.u32 %v5206, %v5207
        %v5209 = vshll.u32 920167782, %v5194
        %v5210 = vshrl.u32 1326507024, %v5195
        %v5211 = vor.u32 %v5209, %v5210
        %vm5212 = vcmp.lt.s32.totalorder %v5193, 1
        %vm5213 = vcmp.lt.s32.totalorder %v5193, 2
        %vm5214 = vcmp.lt.s32.totalorder %v5193, 3
        %vm5215 = vcmp.lt.s32.totalorder %v5193, 4
        %v5216 = vsel %vm5212, %v5196, %v5199
        %v5217 = vsel %vm5215, %v5205, 2102212464
        %v5218 = vsel %vm5214, %v5202, %v5217
        %v5219 = vsel %vm5213, %v5216, %v5218
        %v5220 = vsel %vm5212, %v5199, %v5202
        %v5221 = vsel %vm5215, %v5208, 920167782
        %v5222 = vsel %vm5214, %v5205, %v5221
        %v5223 = vsel %vm5213, %v5220, %v5222
        %v5224 = vsel %vm5212, %v5202, %v5205
        %v5225 = vsel %vm5215, %v5211, 1326507024
        %v5226 = vsel %vm5214, %v5208, %v5225
        %v5227 = vsel %vm5213, %v5224, %v5226
        %v5228 = vshll.u32 %v5188, 8
        %v5229 = vmul.u32.u64.compose %v5228, %v5227
        %v5230 = vextract.low.u32 %v5229
        %v5231 = vextract.high.u32 %v5229
        %v5232 = vmul.u32.u64.compose %v5228, %v5223
        %v5233 = vextract.low.u32 %v5232
        %v5234 = vextract.high.u32 %v5232
        %v5235 = vmul.u32 %v5228, %v5219
        %v5236 = vadd.s32 %v5231, %v5233
        %vm5237 = vc.u32 %v5231, %v5233
        %v5238 = vadd.s32 %v5234, 1
        %v5239 = vsel %vm5237, %v5238, %v5234
        %v5240 = vadd.s32 %v5235, %v5239
        %v5241 = vadd.s32 %v5240, 536870912
        %v5242 = vshrl.u32 %v5241, 30
        %v5243 = vshll.u32 %v5242, 30
        %v5244 = vsub.s32 %v5240, %v5243
        %vm5245 = vcmp.lt.s32.totalorder %v5244, 0
        %v5246 = vsub.s32 0, %v5244
        %v5247 = vsel %vm5245, %v5246, %v5244
        %v5248 = vclz %v5247
        %v5249 = vsub.s32 %v5248, 2
        %vm5250 = vcmp.gt.s32.totalorder 0, %v5249
        %v5251 = vsel %vm5250, 0, %v5249
        %v5252 = vsub.s32 32, %v5251
        %v5253 = vshll.u32 %v5244, %v5251
        %v5254 = vshrl.u32 %v5236, %v5252
        %v5255 = vor.u32 %v5253, %v5254
        %v5256 = vsub.s32 4294967266, %v5251
        %v5257 = vadd.s32 %v5256, 127
        %v5258 = vshll.u32 %v5257, 23
        %v5259 = vor.u32 4788187, %v5258
        %v5260 = vand.u32 2147483647, %v5259
        %v5262 = vcvt.s32.f32 %v5255
        %v5263 = vmul.f32 %v5262, %v5260
        %v5264 = vxor.u32 %v5263, 2147483648
        %v5265 = vsel %vm5182, %v5264, %v5263
        %v5266 = vsub.s32 4, %v5242
        %v5267 = vsel %vm5182, %v5266, %v5242
        %v5268 = vsel %vm5181, %v1417, %v5265
        %v5269 = vsel %vm5181, 0, %v5267
        %v5270 = vcosq.f32.pop %v5268
        %v5271 = vsinq.f32.pop %v5268
        %vm5272 = vweird.f32 %v1417
        %v5273 = vadd.s32 %v5269, 3
        %v5274 = vand.u32 %v5273, 3
        %vm5275 = vcmp.lt.s32.totalorder %v5274, 2
        %vm5276 = vcmp.eq.s32.totalorder %v5274, 0
        %v5277 = vxor.u32 %v5271, 2147483648
        %v5278 = vsel %vm5276, %v5270, %v5277
        %vm5279 = vcmp.eq.s32.totalorder %v5274, 2
        %v5280 = vxor.u32 %v5270, 2147483648
        %v5281 = vsel %vm5279, %v5280, %v5271
        %v5282 = vsel %vm5275, %v5278, %v5281
        %v5283 = vsel %vm5272, nan, %v5282
        %v5284 = vand.u32 2147483647, %v1419
        %vm5285 = vcmp.le.f32.partialorder %v5284, 0.7853982
        %vm5286 = vcmp.lt.s32.totalorder %v1419, 0
        %v5287 = vand.u32 %v1419, 2139095040
        %v5288 = vshrl.u32 %v5287, 23
        %v5289 = vsub.s32 %v5288, 127
        %v5290 = vand.u32 2147483647, %v1419
        %v5291 = vand.u32 %v5290, 8388607
        %v5292 = vor.u32 %v5291, 8388608
        %v5293 = vsub.s32 0, %v5292
        %v5294 = vadd.s32 %v5289, 1
        %vm5295 = vcmp.gt.s32.totalorder %v5294, 0
        %v5296 = vsel %vm5295, %v5294, 0
        %v5297 = vshrl.u32 %v5296, 5
        %v5298 = vand.u32 %v5296, 31
        %v5299 = vsub.s32 32, %v5298
        %v5300 = vshrl.u32 683565275, %v5299
        %v5301 = vshll.u32 683565275, %v5298
        %v5302 = vshrl.u32 2475754826, %v5299
        %v5303 = vor.u32 %v5301, %v5302
        %v5304 = vshll.u32 2475754826, %v5298
        %v5305 = vshrl.u32 2131351028, %v5299
        %v5306 = vor.u32 %v5304, %v5305
        %v5307 = vshll.u32 2131351028, %v5298
        %v5308 = vshrl.u32 2102212464, %v5299
        %v5309 = vor.u32 %v5307, %v5308
        %v5310 = vshll.u32 2102212464, %v5298
        %v5311 = vshrl.u32 920167782, %v5299
        %v5312 = vor.u32 %v5310, %v5311
        %v5313 = vshll.u32 920167782, %v5298
        %v5314 = vshrl.u32 1326507024, %v5299
        %v5315 = vor.u32 %v5313, %v5314
        %vm5316 = vcmp.lt.s32.totalorder %v5297, 1
        %vm5317 = vcmp.lt.s32.totalorder %v5297, 2
        %vm5318 = vcmp.lt.s32.totalorder %v5297, 3
        %vm5319 = vcmp.lt.s32.totalorder %v5297, 4
        %v5320 = vsel %vm5316, %v5300, %v5303
        %v5321 = vsel %vm5319, %v5309, 2102212464
        %v5322 = vsel %vm5318, %v5306, %v5321
        %v5323 = vsel %vm5317, %v5320, %v5322
        %v5324 = vsel %vm5316, %v5303, %v5306
        %v5325 = vsel %vm5319, %v5312, 920167782
        %v5326 = vsel %vm5318, %v5309, %v5325
        %v5327 = vsel %vm5317, %v5324, %v5326
        %v5328 = vsel %vm5316, %v5306, %v5309
        %v5329 = vsel %vm5319, %v5315, 1326507024
        %v5330 = vsel %vm5318, %v5312, %v5329
        %v5331 = vsel %vm5317, %v5328, %v5330
        %v5332 = vshll.u32 %v5292, 8
        %v5333 = vmul.u32.u64.compose %v5332, %v5331
        %v5334 = vextract.low.u32 %v5333
        %v5335 = vextract.high.u32 %v5333
        %v5336 = vmul.u32.u64.compose %v5332, %v5327
        %v5337 = vextract.low.u32 %v5336
        %v5338 = vextract.high.u32 %v5336
        %v5339 = vmul.u32 %v5332, %v5323
        %v5340 = vadd.s32 %v5335, %v5337
        %vm5341 = vc.u32 %v5335, %v5337
        %v5342 = vadd.s32 %v5338, 1
        %v5343 = vsel %vm5341, %v5342, %v5338
        %v5344 = vadd.s32 %v5339, %v5343
        %v5345 = vadd.s32 %v5344, 536870912
        %v5346 = vshrl.u32 %v5345, 30
        %v5347 = vshll.u32 %v5346, 30
        %v5348 = vsub.s32 %v5344, %v5347
        %vm5349 = vcmp.lt.s32.totalorder %v5348, 0
        %v5350 = vsub.s32 0, %v5348
        %v5351 = vsel %vm5349, %v5350, %v5348
        %v5352 = vclz %v5351
        %v5353 = vsub.s32 %v5352, 2
        %vm5354 = vcmp.gt.s32.totalorder 0, %v5353
        %v5355 = vsel %vm5354, 0, %v5353
        %v5356 = vsub.s32 32, %v5355
        %v5357 = vshll.u32 %v5348, %v5355
        %v5358 = vshrl.u32 %v5340, %v5356
        %v5359 = vor.u32 %v5357, %v5358
        %v5360 = vsub.s32 4294967266, %v5355
        %v5361 = vadd.s32 %v5360, 127
        %v5362 = vshll.u32 %v5361, 23
        %v5363 = vor.u32 4788187, %v5362
        %v5364 = vand.u32 2147483647, %v5363
        %v5366 = vcvt.s32.f32 %v5359
        %v5367 = vmul.f32 %v5366, %v5364
        %v5368 = vxor.u32 %v5367, 2147483648
        %v5369 = vsel %vm5286, %v5368, %v5367
        %v5370 = vsub.s32 4, %v5346
        %v5371 = vsel %vm5286, %v5370, %v5346
        %v5372 = vsel %vm5285, %v1419, %v5369
        %v5373 = vsel %vm5285, 0, %v5371
        %v5374 = vcosq.f32.pop %v5372
        %v5375 = vsinq.f32.pop %v5372
        %vm5376 = vweird.f32 %v1419
        %v5377 = vadd.s32 %v5373, 3
        %v5378 = vand.u32 %v5377, 3
        %vm5379 = vcmp.lt.s32.totalorder %v5378, 2
        %vm5380 = vcmp.eq.s32.totalorder %v5378, 0
        %v5381 = vxor.u32 %v5375, 2147483648
        %v5382 = vsel %vm5380, %v5374, %v5381
        %vm5383 = vcmp.eq.s32.totalorder %v5378, 2
        %v5384 = vxor.u32 %v5374, 2147483648
        %v5385 = vsel %vm5383, %v5384, %v5375
        %v5386 = vsel %vm5379, %v5382, %v5385
        %v5387 = vsel %vm5376, nan, %v5386
        %v5388 = vand.u32 2147483647, %v2617
        %vm5389 = vcmp.le.f32.partialorder %v5388, 0.7853982
        %vm5390 = vcmp.lt.s32.totalorder %v2617, 0
        %v5391 = vand.u32 %v2617, 2139095040
        %v5392 = vshrl.u32 %v5391, 23
        %v5393 = vsub.s32 %v5392, 127
        %v5394 = vand.u32 2147483647, %v2617
        %v5395 = vand.u32 %v5394, 8388607
        %v5396 = vor.u32 %v5395, 8388608
        %v5397 = vsub.s32 0, %v5396
        %v5398 = vadd.s32 %v5393, 1
        %vm5399 = vcmp.gt.s32.totalorder %v5398, 0
        %v5400 = vsel %vm5399, %v5398, 0
        %v5401 = vshrl.u32 %v5400, 5
        %v5402 = vand.u32 %v5400, 31
        %v5403 = vsub.s32 32, %v5402
        %v5404 = vshrl.u32 683565275, %v5403
        %v5405 = vshll.u32 683565275, %v5402
        %v5406 = vshrl.u32 2475754826, %v5403
        %v5407 = vor.u32 %v5405, %v5406
        %v5408 = vshll.u32 2475754826, %v5402
        %v5409 = vshrl.u32 2131351028, %v5403
        %v5410 = vor.u32 %v5408, %v5409
        %v5411 = vshll.u32 2131351028, %v5402
        %v5412 = vshrl.u32 2102212464, %v5403
        %v5413 = vor.u32 %v5411, %v5412
        %v5414 = vshll.u32 2102212464, %v5402
        %v5415 = vshrl.u32 920167782, %v5403
        %v5416 = vor.u32 %v5414, %v5415
        %v5417 = vshll.u32 920167782, %v5402
        %v5418 = vshrl.u32 1326507024, %v5403
        %v5419 = vor.u32 %v5417, %v5418
        %vm5420 = vcmp.lt.s32.totalorder %v5401, 1
        %vm5421 = vcmp.lt.s32.totalorder %v5401, 2
        %vm5422 = vcmp.lt.s32.totalorder %v5401, 3
        %vm5423 = vcmp.lt.s32.totalorder %v5401, 4
        %v5424 = vsel %vm5420, %v5404, %v5407
        %v5425 = vsel %vm5423, %v5413, 2102212464
        %v5426 = vsel %vm5422, %v5410, %v5425
        %v5427 = vsel %vm5421, %v5424, %v5426
        %v5428 = vsel %vm5420, %v5407, %v5410
        %v5429 = vsel %vm5423, %v5416, 920167782
        %v5430 = vsel %vm5422, %v5413, %v5429
        %v5431 = vsel %vm5421, %v5428, %v5430
        %v5432 = vsel %vm5420, %v5410, %v5413
        %v5433 = vsel %vm5423, %v5419, 1326507024
        %v5434 = vsel %vm5422, %v5416, %v5433
        %v5435 = vsel %vm5421, %v5432, %v5434
        %v5436 = vshll.u32 %v5396, 8
        %v5437 = vmul.u32.u64.compose %v5436, %v5435
        %v5438 = vextract.low.u32 %v5437
        %v5439 = vextract.high.u32 %v5437
        %v5440 = vmul.u32.u64.compose %v5436, %v5431
        %v5441 = vextract.low.u32 %v5440
        %v5442 = vextract.high.u32 %v5440
        %v5443 = vmul.u32 %v5436, %v5427
        %v5444 = vadd.s32 %v5439, %v5441
        %vm5445 = vc.u32 %v5439, %v5441
        %v5446 = vadd.s32 %v5442, 1
        %v5447 = vsel %vm5445, %v5446, %v5442
        %v5448 = vadd.s32 %v5443, %v5447
        %v5449 = vadd.s32 %v5448, 536870912
        %v5450 = vshrl.u32 %v5449, 30
        %v5451 = vshll.u32 %v5450, 30
        %v5452 = vsub.s32 %v5448, %v5451
        %vm5453 = vcmp.lt.s32.totalorder %v5452, 0
        %v5454 = vsub.s32 0, %v5452
        %v5455 = vsel %vm5453, %v5454, %v5452
        %v5456 = vclz %v5455
        %v5457 = vsub.s32 %v5456, 2
        %vm5458 = vcmp.gt.s32.totalorder 0, %v5457
        %v5459 = vsel %vm5458, 0, %v5457
        %v5460 = vsub.s32 32, %v5459
        %v5461 = vshll.u32 %v5452, %v5459
        %v5462 = vshrl.u32 %v5444, %v5460
        %v5463 = vor.u32 %v5461, %v5462
        %v5464 = vsub.s32 4294967266, %v5459
        %v5465 = vadd.s32 %v5464, 127
        %v5466 = vshll.u32 %v5465, 23
        %v5467 = vor.u32 4788187, %v5466
        %v5468 = vand.u32 2147483647, %v5467
        %v5470 = vcvt.s32.f32 %v5463
        %v5471 = vmul.f32 %v5470, %v5468
        %v5472 = vxor.u32 %v5471, 2147483648
        %v5473 = vsel %vm5390, %v5472, %v5471
        %v5474 = vsub.s32 4, %v5450
        %v5475 = vsel %vm5390, %v5474, %v5450
        %v5476 = vsel %vm5389, %v2617, %v5473
        %v5477 = vsel %vm5389, 0, %v5475
        %v5478 = vcosq.f32.pop %v5476
        %v5479 = vsinq.f32.pop %v5476
        %vm5480 = vweird.f32 %v2617
        %v5481 = vadd.s32 %v5477, 3
        %v5482 = vand.u32 %v5481, 3
        %vm5483 = vcmp.lt.s32.totalorder %v5482, 2
        %vm5484 = vcmp.eq.s32.totalorder %v5482, 0
        %v5485 = vxor.u32 %v5479, 2147483648
        %v5486 = vsel %vm5484, %v5478, %v5485
        %vm5487 = vcmp.eq.s32.totalorder %v5482, 2
        %v5488 = vxor.u32 %v5478, 2147483648
        %v5489 = vsel %vm5487, %v5488, %v5479
        %v5490 = vsel %vm5483, %v5486, %v5489
        %v5491 = vsel %vm5480, nan, %v5490
        %v5492 = vand.u32 2147483647, %v2619
        %vm5493 = vcmp.le.f32.partialorder %v5492, 0.7853982
        %vm5494 = vcmp.lt.s32.totalorder %v2619, 0
        %v5495 = vand.u32 %v2619, 2139095040
        %v5496 = vshrl.u32 %v5495, 23
        %v5497 = vsub.s32 %v5496, 127
        %v5498 = vand.u32 2147483647, %v2619
        %v5499 = vand.u32 %v5498, 8388607
        %v5500 = vor.u32 %v5499, 8388608
        %v5501 = vsub.s32 0, %v5500
        %v5502 = vadd.s32 %v5497, 1
        %vm5503 = vcmp.gt.s32.totalorder %v5502, 0
        %v5504 = vsel %vm5503, %v5502, 0
        %v5505 = vshrl.u32 %v5504, 5
        %v5506 = vand.u32 %v5504, 31
        %v5507 = vsub.s32 32, %v5506
        %v5508 = vshrl.u32 683565275, %v5507
        %v5509 = vshll.u32 683565275, %v5506
        %v5510 = vshrl.u32 2475754826, %v5507
        %v5511 = vor.u32 %v5509, %v5510
        %v5512 = vshll.u32 2475754826, %v5506
        %v5513 = vshrl.u32 2131351028, %v5507
        %v5514 = vor.u32 %v5512, %v5513
        %v5515 = vshll.u32 2131351028, %v5506
        %v5516 = vshrl.u32 2102212464, %v5507
        %v5517 = vor.u32 %v5515, %v5516
        %v5518 = vshll.u32 2102212464, %v5506
        %v5519 = vshrl.u32 920167782, %v5507
        %v5520 = vor.u32 %v5518, %v5519
        %v5521 = vshll.u32 920167782, %v5506
        %v5522 = vshrl.u32 1326507024, %v5507
        %v5523 = vor.u32 %v5521, %v5522
        %vm5524 = vcmp.lt.s32.totalorder %v5505, 1
        %vm5525 = vcmp.lt.s32.totalorder %v5505, 2
        %vm5526 = vcmp.lt.s32.totalorder %v5505, 3
        %vm5527 = vcmp.lt.s32.totalorder %v5505, 4
        %v5528 = vsel %vm5524, %v5508, %v5511
        %v5529 = vsel %vm5527, %v5517, 2102212464
        %v5530 = vsel %vm5526, %v5514, %v5529
        %v5531 = vsel %vm5525, %v5528, %v5530
        %v5532 = vsel %vm5524, %v5511, %v5514
        %v5533 = vsel %vm5527, %v5520, 920167782
        %v5534 = vsel %vm5526, %v5517, %v5533
        %v5535 = vsel %vm5525, %v5532, %v5534
        %v5536 = vsel %vm5524, %v5514, %v5517
        %v5537 = vsel %vm5527, %v5523, 1326507024
        %v5538 = vsel %vm5526, %v5520, %v5537
        %v5539 = vsel %vm5525, %v5536, %v5538
        %v5540 = vshll.u32 %v5500, 8
        %v5541 = vmul.u32.u64.compose %v5540, %v5539
        %v5542 = vextract.low.u32 %v5541
        %v5543 = vextract.high.u32 %v5541
        %v5544 = vmul.u32.u64.compose %v5540, %v5535
        %v5545 = vextract.low.u32 %v5544
        %v5546 = vextract.high.u32 %v5544
        %v5547 = vmul.u32 %v5540, %v5531
        %v5548 = vadd.s32 %v5543, %v5545
        %vm5549 = vc.u32 %v5543, %v5545
        %v5550 = vadd.s32 %v5546, 1
        %v5551 = vsel %vm5549, %v5550, %v5546
        %v5552 = vadd.s32 %v5547, %v5551
        %v5553 = vadd.s32 %v5552, 536870912
        %v5554 = vshrl.u32 %v5553, 30
        %v5555 = vshll.u32 %v5554, 30
        %v5556 = vsub.s32 %v5552, %v5555
        %vm5557 = vcmp.lt.s32.totalorder %v5556, 0
        %v5558 = vsub.s32 0, %v5556
        %v5559 = vsel %vm5557, %v5558, %v5556
        %v5560 = vclz %v5559
        %v5561 = vsub.s32 %v5560, 2
        %vm5562 = vcmp.gt.s32.totalorder 0, %v5561
        %v5563 = vsel %vm5562, 0, %v5561
        %v5564 = vsub.s32 32, %v5563
        %v5565 = vshll.u32 %v5556, %v5563
        %v5566 = vshrl.u32 %v5548, %v5564
        %v5567 = vor.u32 %v5565, %v5566
        %v5568 = vsub.s32 4294967266, %v5563
        %v5569 = vadd.s32 %v5568, 127
        %v5570 = vshll.u32 %v5569, 23
        %v5571 = vor.u32 4788187, %v5570
        %v5572 = vand.u32 2147483647, %v5571
        %v5574 = vcvt.s32.f32 %v5567
        %v5575 = vmul.f32 %v5574, %v5572
        %v5576 = vxor.u32 %v5575, 2147483648
        %v5577 = vsel %vm5494, %v5576, %v5575
        %v5578 = vsub.s32 4, %v5554
        %v5579 = vsel %vm5494, %v5578, %v5554
        %v5580 = vsel %vm5493, %v2619, %v5577
        %v5581 = vsel %vm5493, 0, %v5579
        %v5582 = vcosq.f32.pop %v5580
        %v5583 = vsinq.f32.pop %v5580
        %vm5584 = vweird.f32 %v2619
        %v5585 = vadd.s32 %v5581, 3
        %v5586 = vand.u32 %v5585, 3
        %vm5587 = vcmp.lt.s32.totalorder %v5586, 2
        %vm5588 = vcmp.eq.s32.totalorder %v5586, 0
        %v5589 = vxor.u32 %v5583, 2147483648
        %v5590 = vsel %vm5588, %v5582, %v5589
        %vm5591 = vcmp.eq.s32.totalorder %v5586, 2
        %v5592 = vxor.u32 %v5582, 2147483648
        %v5593 = vsel %vm5591, %v5592, %v5583
        %v5594 = vsel %vm5587, %v5590, %v5593
        %v5595 = vsel %vm5584, nan, %v5594
        %v5596 = vand.u32 2147483647, %v1424
        %vm5597 = vcmp.le.f32.partialorder %v5596, 0.7853982
        %vm5598 = vcmp.lt.s32.totalorder %v1424, 0
        %v5599 = vand.u32 %v1424, 2139095040
        %v5600 = vshrl.u32 %v5599, 23
        %v5601 = vsub.s32 %v5600, 127
        %v5602 = vand.u32 2147483647, %v1424
        %v5603 = vand.u32 %v5602, 8388607
        %v5604 = vor.u32 %v5603, 8388608
        %v5605 = vsub.s32 0, %v5604
        %v5606 = vadd.s32 %v5601, 1
        %vm5607 = vcmp.gt.s32.totalorder %v5606, 0
        %v5608 = vsel %vm5607, %v5606, 0
        %v5609 = vshrl.u32 %v5608, 5
        %v5610 = vand.u32 %v5608, 31
        %v5611 = vsub.s32 32, %v5610
        %v5612 = vshrl.u32 683565275, %v5611
        %v5613 = vshll.u32 683565275, %v5610
        %v5614 = vshrl.u32 2475754826, %v5611
        %v5615 = vor.u32 %v5613, %v5614
        %v5616 = vshll.u32 2475754826, %v5610
        %v5617 = vshrl.u32 2131351028, %v5611
        %v5618 = vor.u32 %v5616, %v5617
        %v5619 = vshll.u32 2131351028, %v5610
        %v5620 = vshrl.u32 2102212464, %v5611
        %v5621 = vor.u32 %v5619, %v5620
        %v5622 = vshll.u32 2102212464, %v5610
        %v5623 = vshrl.u32 920167782, %v5611
        %v5624 = vor.u32 %v5622, %v5623
        %v5625 = vshll.u32 920167782, %v5610
        %v5626 = vshrl.u32 1326507024, %v5611
        %v5627 = vor.u32 %v5625, %v5626
        %vm5628 = vcmp.lt.s32.totalorder %v5609, 1
        %vm5629 = vcmp.lt.s32.totalorder %v5609, 2
        %vm5630 = vcmp.lt.s32.totalorder %v5609, 3
        %vm5631 = vcmp.lt.s32.totalorder %v5609, 4
        %v5632 = vsel %vm5628, %v5612, %v5615
        %v5633 = vsel %vm5631, %v5621, 2102212464
        %v5634 = vsel %vm5630, %v5618, %v5633
        %v5635 = vsel %vm5629, %v5632, %v5634
        %v5636 = vsel %vm5628, %v5615, %v5618
        %v5637 = vsel %vm5631, %v5624, 920167782
        %v5638 = vsel %vm5630, %v5621, %v5637
        %v5639 = vsel %vm5629, %v5636, %v5638
        %v5640 = vsel %vm5628, %v5618, %v5621
        %v5641 = vsel %vm5631, %v5627, 1326507024
        %v5642 = vsel %vm5630, %v5624, %v5641
        %v5643 = vsel %vm5629, %v5640, %v5642
        %v5644 = vshll.u32 %v5604, 8
        %v5645 = vmul.u32.u64.compose %v5644, %v5643
        %v5646 = vextract.low.u32 %v5645
        %v5647 = vextract.high.u32 %v5645
        %v5648 = vmul.u32.u64.compose %v5644, %v5639
        %v5649 = vextract.low.u32 %v5648
        %v5650 = vextract.high.u32 %v5648
        %v5651 = vmul.u32 %v5644, %v5635
        %v5652 = vadd.s32 %v5647, %v5649
        %vm5653 = vc.u32 %v5647, %v5649
        %v5654 = vadd.s32 %v5650, 1
        %v5655 = vsel %vm5653, %v5654, %v5650
        %v5656 = vadd.s32 %v5651, %v5655
        %v5657 = vadd.s32 %v5656, 536870912
        %v5658 = vshrl.u32 %v5657, 30
        %v5659 = vshll.u32 %v5658, 30
        %v5660 = vsub.s32 %v5656, %v5659
        %vm5661 = vcmp.lt.s32.totalorder %v5660, 0
        %v5662 = vsub.s32 0, %v5660
        %v5663 = vsel %vm5661, %v5662, %v5660
        %v5664 = vclz %v5663
        %v5665 = vsub.s32 %v5664, 2
        %vm5666 = vcmp.gt.s32.totalorder 0, %v5665
        %v5667 = vsel %vm5666, 0, %v5665
        %v5668 = vsub.s32 32, %v5667
        %v5669 = vshll.u32 %v5660, %v5667
        %v5670 = vshrl.u32 %v5652, %v5668
        %v5671 = vor.u32 %v5669, %v5670
        %v5672 = vsub.s32 4294967266, %v5667
        %v5673 = vadd.s32 %v5672, 127
        %v5674 = vshll.u32 %v5673, 23
        %v5675 = vor.u32 4788187, %v5674
        %v5676 = vand.u32 2147483647, %v5675
        %v5678 = vcvt.s32.f32 %v5671
        %v5679 = vmul.f32 %v5678, %v5676
        %v5680 = vxor.u32 %v5679, 2147483648
        %v5681 = vsel %vm5598, %v5680, %v5679
        %v5682 = vsub.s32 4, %v5658
        %v5683 = vsel %vm5598, %v5682, %v5658
        %v5684 = vsel %vm5597, %v1424, %v5681
        %v5685 = vsel %vm5597, 0, %v5683
        %v5686 = vcosq.f32.pop %v5684
        %v5687 = vsinq.f32.pop %v5684
        %vm5688 = vweird.f32 %v1424
        %v5689 = vadd.s32 %v5685, 3
        %v5690 = vand.u32 %v5689, 3
        %vm5691 = vcmp.lt.s32.totalorder %v5690, 2
        %vm5692 = vcmp.eq.s32.totalorder %v5690, 0
        %v5693 = vxor.u32 %v5687, 2147483648
        %v5694 = vsel %vm5692, %v5686, %v5693
        %vm5695 = vcmp.eq.s32.totalorder %v5690, 2
        %v5696 = vxor.u32 %v5686, 2147483648
        %v5697 = vsel %vm5695, %v5696, %v5687
        %v5698 = vsel %vm5691, %v5694, %v5697
        %v5699 = vsel %vm5688, nan, %v5698
        %v5700 = vand.u32 2147483647, %v1426
        %vm5701 = vcmp.le.f32.partialorder %v5700, 0.7853982
        %vm5702 = vcmp.lt.s32.totalorder %v1426, 0
        %v5703 = vand.u32 %v1426, 2139095040
        %v5704 = vshrl.u32 %v5703, 23
        %v5705 = vsub.s32 %v5704, 127
        %v5706 = vand.u32 2147483647, %v1426
        %v5707 = vand.u32 %v5706, 8388607
        %v5708 = vor.u32 %v5707, 8388608
        %v5709 = vsub.s32 0, %v5708
        %v5710 = vadd.s32 %v5705, 1
        %vm5711 = vcmp.gt.s32.totalorder %v5710, 0
        %v5712 = vsel %vm5711, %v5710, 0
        %v5713 = vshrl.u32 %v5712, 5
        %v5714 = vand.u32 %v5712, 31
        %v5715 = vsub.s32 32, %v5714
        %v5716 = vshrl.u32 683565275, %v5715
        %v5717 = vshll.u32 683565275, %v5714
        %v5718 = vshrl.u32 2475754826, %v5715
        %v5719 = vor.u32 %v5717, %v5718
        %v5720 = vshll.u32 2475754826, %v5714
        %v5721 = vshrl.u32 2131351028, %v5715
        %v5722 = vor.u32 %v5720, %v5721
        %v5723 = vshll.u32 2131351028, %v5714
        %v5724 = vshrl.u32 2102212464, %v5715
        %v5725 = vor.u32 %v5723, %v5724
        %v5726 = vshll.u32 2102212464, %v5714
        %v5727 = vshrl.u32 920167782, %v5715
        %v5728 = vor.u32 %v5726, %v5727
        %v5729 = vshll.u32 920167782, %v5714
        %v5730 = vshrl.u32 1326507024, %v5715
        %v5731 = vor.u32 %v5729, %v5730
        %vm5732 = vcmp.lt.s32.totalorder %v5713, 1
        %vm5733 = vcmp.lt.s32.totalorder %v5713, 2
        %vm5734 = vcmp.lt.s32.totalorder %v5713, 3
        %vm5735 = vcmp.lt.s32.totalorder %v5713, 4
        %v5736 = vsel %vm5732, %v5716, %v5719
        %v5737 = vsel %vm5735, %v5725, 2102212464
        %v5738 = vsel %vm5734, %v5722, %v5737
        %v5739 = vsel %vm5733, %v5736, %v5738
        %v5740 = vsel %vm5732, %v5719, %v5722
        %v5741 = vsel %vm5735, %v5728, 920167782
        %v5742 = vsel %vm5734, %v5725, %v5741
        %v5743 = vsel %vm5733, %v5740, %v5742
        %v5744 = vsel %vm5732, %v5722, %v5725
        %v5745 = vsel %vm5735, %v5731, 1326507024
        %v5746 = vsel %vm5734, %v5728, %v5745
        %v5747 = vsel %vm5733, %v5744, %v5746
        %v5748 = vshll.u32 %v5708, 8
        %v5749 = vmul.u32.u64.compose %v5748, %v5747
        %v5750 = vextract.low.u32 %v5749
        %v5751 = vextract.high.u32 %v5749
        %v5752 = vmul.u32.u64.compose %v5748, %v5743
        %v5753 = vextract.low.u32 %v5752
        %v5754 = vextract.high.u32 %v5752
        %v5755 = vmul.u32 %v5748, %v5739
        %v5756 = vadd.s32 %v5751, %v5753
        %vm5757 = vc.u32 %v5751, %v5753
        %v5758 = vadd.s32 %v5754, 1
        %v5759 = vsel %vm5757, %v5758, %v5754
        %v5760 = vadd.s32 %v5755, %v5759
        %v5761 = vadd.s32 %v5760, 536870912
        %v5762 = vshrl.u32 %v5761, 30
        %v5763 = vshll.u32 %v5762, 30
        %v5764 = vsub.s32 %v5760, %v5763
        %vm5765 = vcmp.lt.s32.totalorder %v5764, 0
        %v5766 = vsub.s32 0, %v5764
        %v5767 = vsel %vm5765, %v5766, %v5764
        %v5768 = vclz %v5767
        %v5769 = vsub.s32 %v5768, 2
        %vm5770 = vcmp.gt.s32.totalorder 0, %v5769
        %v5771 = vsel %vm5770, 0, %v5769
        %v5772 = vsub.s32 32, %v5771
        %v5773 = vshll.u32 %v5764, %v5771
        %v5774 = vshrl.u32 %v5756, %v5772
        %v5775 = vor.u32 %v5773, %v5774
        %v5776 = vsub.s32 4294967266, %v5771
        %v5777 = vadd.s32 %v5776, 127
        %v5778 = vshll.u32 %v5777, 23
        %v5779 = vor.u32 4788187, %v5778
        %v5780 = vand.u32 2147483647, %v5779
        %v5782 = vcvt.s32.f32 %v5775
        %v5783 = vmul.f32 %v5782, %v5780
        %v5784 = vxor.u32 %v5783, 2147483648
        %v5785 = vsel %vm5702, %v5784, %v5783
        %v5786 = vsub.s32 4, %v5762
        %v5787 = vsel %vm5702, %v5786, %v5762
        %v5788 = vsel %vm5701, %v1426, %v5785
        %v5789 = vsel %vm5701, 0, %v5787
        %v5790 = vcosq.f32.pop %v5788
        %v5791 = vsinq.f32.pop %v5788
        %vm5792 = vweird.f32 %v1426
        %v5793 = vadd.s32 %v5789, 3
        %v5794 = vand.u32 %v5793, 3
        %vm5795 = vcmp.lt.s32.totalorder %v5794, 2
        %vm5796 = vcmp.eq.s32.totalorder %v5794, 0
        %v5797 = vxor.u32 %v5791, 2147483648
        %v5798 = vsel %vm5796, %v5790, %v5797
        %vm5799 = vcmp.eq.s32.totalorder %v5794, 2
        %v5800 = vxor.u32 %v5790, 2147483648
        %v5801 = vsel %vm5799, %v5800, %v5791
        %v5802 = vsel %vm5795, %v5798, %v5801
        %v5803 = vsel %vm5792, nan, %v5802
        %v5804 = vand.u32 2147483647, %v2624
        %vm5805 = vcmp.le.f32.partialorder %v5804, 0.7853982
        %vm5806 = vcmp.lt.s32.totalorder %v2624, 0
        %v5807 = vand.u32 %v2624, 2139095040
        %v5808 = vshrl.u32 %v5807, 23
        %v5809 = vsub.s32 %v5808, 127
        %v5810 = vand.u32 2147483647, %v2624
        %v5811 = vand.u32 %v5810, 8388607
        %v5812 = vor.u32 %v5811, 8388608
        %v5813 = vsub.s32 0, %v5812
        %v5814 = vadd.s32 %v5809, 1
        %vm5815 = vcmp.gt.s32.totalorder %v5814, 0
        %v5816 = vsel %vm5815, %v5814, 0
        %v5817 = vshrl.u32 %v5816, 5
        %v5818 = vand.u32 %v5816, 31
        %v5819 = vsub.s32 32, %v5818
        %v5820 = vshrl.u32 683565275, %v5819
        %v5821 = vshll.u32 683565275, %v5818
        %v5822 = vshrl.u32 2475754826, %v5819
        %v5823 = vor.u32 %v5821, %v5822
        %v5824 = vshll.u32 2475754826, %v5818
        %v5825 = vshrl.u32 2131351028, %v5819
        %v5826 = vor.u32 %v5824, %v5825
        %v5827 = vshll.u32 2131351028, %v5818
        %v5828 = vshrl.u32 2102212464, %v5819
        %v5829 = vor.u32 %v5827, %v5828
        %v5830 = vshll.u32 2102212464, %v5818
        %v5831 = vshrl.u32 920167782, %v5819
        %v5832 = vor.u32 %v5830, %v5831
        %v5833 = vshll.u32 920167782, %v5818
        %v5834 = vshrl.u32 1326507024, %v5819
        %v5835 = vor.u32 %v5833, %v5834
        %vm5836 = vcmp.lt.s32.totalorder %v5817, 1
        %vm5837 = vcmp.lt.s32.totalorder %v5817, 2
        %vm5838 = vcmp.lt.s32.totalorder %v5817, 3
        %vm5839 = vcmp.lt.s32.totalorder %v5817, 4
        %v5840 = vsel %vm5836, %v5820, %v5823
        %v5841 = vsel %vm5839, %v5829, 2102212464
        %v5842 = vsel %vm5838, %v5826, %v5841
        %v5843 = vsel %vm5837, %v5840, %v5842
        %v5844 = vsel %vm5836, %v5823, %v5826
        %v5845 = vsel %vm5839, %v5832, 920167782
        %v5846 = vsel %vm5838, %v5829, %v5845
        %v5847 = vsel %vm5837, %v5844, %v5846
        %v5848 = vsel %vm5836, %v5826, %v5829
        %v5849 = vsel %vm5839, %v5835, 1326507024
        %v5850 = vsel %vm5838, %v5832, %v5849
        %v5851 = vsel %vm5837, %v5848, %v5850
        %v5852 = vshll.u32 %v5812, 8
        %v5853 = vmul.u32.u64.compose %v5852, %v5851
        %v5854 = vextract.low.u32 %v5853
        %v5855 = vextract.high.u32 %v5853
        %v5856 = vmul.u32.u64.compose %v5852, %v5847
        %v5857 = vextract.low.u32 %v5856
        %v5858 = vextract.high.u32 %v5856
        %v5859 = vmul.u32 %v5852, %v5843
        %v5860 = vadd.s32 %v5855, %v5857
        %vm5861 = vc.u32 %v5855, %v5857
        %v5862 = vadd.s32 %v5858, 1
        %v5863 = vsel %vm5861, %v5862, %v5858
        %v5864 = vadd.s32 %v5859, %v5863
        %v5865 = vadd.s32 %v5864, 536870912
        %v5866 = vshrl.u32 %v5865, 30
        %v5867 = vshll.u32 %v5866, 30
        %v5868 = vsub.s32 %v5864, %v5867
        %vm5869 = vcmp.lt.s32.totalorder %v5868, 0
        %v5870 = vsub.s32 0, %v5868
        %v5871 = vsel %vm5869, %v5870, %v5868
        %v5872 = vclz %v5871
        %v5873 = vsub.s32 %v5872, 2
        %vm5874 = vcmp.gt.s32.totalorder 0, %v5873
        %v5875 = vsel %vm5874, 0, %v5873
        %v5876 = vsub.s32 32, %v5875
        %v5877 = vshll.u32 %v5868, %v5875
        %v5878 = vshrl.u32 %v5860, %v5876
        %v5879 = vor.u32 %v5877, %v5878
        %v5880 = vsub.s32 4294967266, %v5875
        %v5881 = vadd.s32 %v5880, 127
        %v5882 = vshll.u32 %v5881, 23
        %v5883 = vor.u32 4788187, %v5882
        %v5884 = vand.u32 2147483647, %v5883
        %v5886 = vcvt.s32.f32 %v5879
        %v5887 = vmul.f32 %v5886, %v5884
        %v5888 = vxor.u32 %v5887, 2147483648
        %v5889 = vsel %vm5806, %v5888, %v5887
        %v5890 = vsub.s32 4, %v5866
        %v5891 = vsel %vm5806, %v5890, %v5866
        %v5892 = vsel %vm5805, %v2624, %v5889
        %v5893 = vsel %vm5805, 0, %v5891
        %v5894 = vcosq.f32.pop %v5892
        %v5895 = vsinq.f32.pop %v5892
        %vm5896 = vweird.f32 %v2624
        %v5897 = vadd.s32 %v5893, 3
        %v5898 = vand.u32 %v5897, 3
        %vm5899 = vcmp.lt.s32.totalorder %v5898, 2
        %vm5900 = vcmp.eq.s32.totalorder %v5898, 0
        %v5901 = vxor.u32 %v5895, 2147483648
        %v5902 = vsel %vm5900, %v5894, %v5901
        %vm5903 = vcmp.eq.s32.totalorder %v5898, 2
        %v5904 = vxor.u32 %v5894, 2147483648
        %v5905 = vsel %vm5903, %v5904, %v5895
        %v5906 = vsel %vm5899, %v5902, %v5905
        %v5907 = vsel %vm5896, nan, %v5906
        %v5908 = vand.u32 2147483647, %v2626
        %vm5909 = vcmp.le.f32.partialorder %v5908, 0.7853982
        %vm5910 = vcmp.lt.s32.totalorder %v2626, 0
        %v5911 = vand.u32 %v2626, 2139095040
        %v5912 = vshrl.u32 %v5911, 23
        %v5913 = vsub.s32 %v5912, 127
        %v5914 = vand.u32 2147483647, %v2626
        %v5915 = vand.u32 %v5914, 8388607
        %v5916 = vor.u32 %v5915, 8388608
        %v5917 = vsub.s32 0, %v5916
        %v5918 = vadd.s32 %v5913, 1
        %vm5919 = vcmp.gt.s32.totalorder %v5918, 0
        %v5920 = vsel %vm5919, %v5918, 0
        %v5921 = vshrl.u32 %v5920, 5
        %v5922 = vand.u32 %v5920, 31
        %v5923 = vsub.s32 32, %v5922
        %v5924 = vshrl.u32 683565275, %v5923
        %v5925 = vshll.u32 683565275, %v5922
        %v5926 = vshrl.u32 2475754826, %v5923
        %v5927 = vor.u32 %v5925, %v5926
        %v5928 = vshll.u32 2475754826, %v5922
        %v5929 = vshrl.u32 2131351028, %v5923
        %v5930 = vor.u32 %v5928, %v5929
        %v5931 = vshll.u32 2131351028, %v5922
        %v5932 = vshrl.u32 2102212464, %v5923
        %v5933 = vor.u32 %v5931, %v5932
        %v5934 = vshll.u32 2102212464, %v5922
        %v5935 = vshrl.u32 920167782, %v5923
        %v5936 = vor.u32 %v5934, %v5935
        %v5937 = vshll.u32 920167782, %v5922
        %v5938 = vshrl.u32 1326507024, %v5923
        %v5939 = vor.u32 %v5937, %v5938
        %vm5940 = vcmp.lt.s32.totalorder %v5921, 1
        %vm5941 = vcmp.lt.s32.totalorder %v5921, 2
        %vm5942 = vcmp.lt.s32.totalorder %v5921, 3
        %vm5943 = vcmp.lt.s32.totalorder %v5921, 4
        %v5944 = vsel %vm5940, %v5924, %v5927
        %v5945 = vsel %vm5943, %v5933, 2102212464
        %v5946 = vsel %vm5942, %v5930, %v5945
        %v5947 = vsel %vm5941, %v5944, %v5946
        %v5948 = vsel %vm5940, %v5927, %v5930
        %v5949 = vsel %vm5943, %v5936, 920167782
        %v5950 = vsel %vm5942, %v5933, %v5949
        %v5951 = vsel %vm5941, %v5948, %v5950
        %v5952 = vsel %vm5940, %v5930, %v5933
        %v5953 = vsel %vm5943, %v5939, 1326507024
        %v5954 = vsel %vm5942, %v5936, %v5953
        %v5955 = vsel %vm5941, %v5952, %v5954
        %v5956 = vshll.u32 %v5916, 8
        %v5957 = vmul.u32.u64.compose %v5956, %v5955
        %v5958 = vextract.low.u32 %v5957
        %v5959 = vextract.high.u32 %v5957
        %v5960 = vmul.u32.u64.compose %v5956, %v5951
        %v5961 = vextract.low.u32 %v5960
        %v5962 = vextract.high.u32 %v5960
        %v5963 = vmul.u32 %v5956, %v5947
        %v5964 = vadd.s32 %v5959, %v5961
        %vm5965 = vc.u32 %v5959, %v5961
        %v5966 = vadd.s32 %v5962, 1
        %v5967 = vsel %vm5965, %v5966, %v5962
        %v5968 = vadd.s32 %v5963, %v5967
        %v5969 = vadd.s32 %v5968, 536870912
        %v5970 = vshrl.u32 %v5969, 30
        %v5971 = vshll.u32 %v5970, 30
        %v5972 = vsub.s32 %v5968, %v5971
        %vm5973 = vcmp.lt.s32.totalorder %v5972, 0
        %v5974 = vsub.s32 0, %v5972
        %v5975 = vsel %vm5973, %v5974, %v5972
        %v5976 = vclz %v5975
        %v5977 = vsub.s32 %v5976, 2
        %vm5978 = vcmp.gt.s32.totalorder 0, %v5977
        %v5979 = vsel %vm5978, 0, %v5977
        %v5980 = vsub.s32 32, %v5979
        %v5981 = vshll.u32 %v5972, %v5979
        %v5982 = vshrl.u32 %v5964, %v5980
        %v5983 = vor.u32 %v5981, %v5982
        %v5984 = vsub.s32 4294967266, %v5979
        %v5985 = vadd.s32 %v5984, 127
        %v5986 = vshll.u32 %v5985, 23
        %v5987 = vor.u32 4788187, %v5986
        %v5988 = vand.u32 2147483647, %v5987
        %v5990 = vcvt.s32.f32 %v5983
        %v5991 = vmul.f32 %v5990, %v5988
        %v5992 = vxor.u32 %v5991, 2147483648
        %v5993 = vsel %vm5910, %v5992, %v5991
        %v5994 = vsub.s32 4, %v5970
        %v5995 = vsel %vm5910, %v5994, %v5970
        %v5996 = vsel %vm5909, %v2626, %v5993
        %v5997 = vsel %vm5909, 0, %v5995
        %v5998 = vcosq.f32.pop %v5996
        %v5999 = vsinq.f32.pop %v5996
        %vm6000 = vweird.f32 %v2626
        %v6001 = vadd.s32 %v5997, 3
        %v6002 = vand.u32 %v6001, 3
        %vm6003 = vcmp.lt.s32.totalorder %v6002, 2
        %vm6004 = vcmp.eq.s32.totalorder %v6002, 0
        %v6005 = vxor.u32 %v5999, 2147483648
        %v6006 = vsel %vm6004, %v5998, %v6005
        %vm6007 = vcmp.eq.s32.totalorder %v6002, 2
        %v6008 = vxor.u32 %v5998, 2147483648
        %v6009 = vsel %vm6007, %v6008, %v5999
        %v6010 = vsel %vm6003, %v6006, %v6009
        %v6011 = vsel %vm6000, nan, %v6010
        %v6012 = vand.u32 2147483647, %v1431
        %vm6013 = vcmp.le.f32.partialorder %v6012, 0.7853982
        %vm6014 = vcmp.lt.s32.totalorder %v1431, 0
        %v6015 = vand.u32 %v1431, 2139095040
        %v6016 = vshrl.u32 %v6015, 23
        %v6017 = vsub.s32 %v6016, 127
        %v6018 = vand.u32 2147483647, %v1431
        %v6019 = vand.u32 %v6018, 8388607
        %v6020 = vor.u32 %v6019, 8388608
        %v6021 = vsub.s32 0, %v6020
        %v6022 = vadd.s32 %v6017, 1
        %vm6023 = vcmp.gt.s32.totalorder %v6022, 0
        %v6024 = vsel %vm6023, %v6022, 0
        %v6025 = vshrl.u32 %v6024, 5
        %v6026 = vand.u32 %v6024, 31
        %v6027 = vsub.s32 32, %v6026
        %v6028 = vshrl.u32 683565275, %v6027
        %v6029 = vshll.u32 683565275, %v6026
        %v6030 = vshrl.u32 2475754826, %v6027
        %v6031 = vor.u32 %v6029, %v6030
        %v6032 = vshll.u32 2475754826, %v6026
        %v6033 = vshrl.u32 2131351028, %v6027
        %v6034 = vor.u32 %v6032, %v6033
        %v6035 = vshll.u32 2131351028, %v6026
        %v6036 = vshrl.u32 2102212464, %v6027
        %v6037 = vor.u32 %v6035, %v6036
        %v6038 = vshll.u32 2102212464, %v6026
        %v6039 = vshrl.u32 920167782, %v6027
        %v6040 = vor.u32 %v6038, %v6039
        %v6041 = vshll.u32 920167782, %v6026
        %v6042 = vshrl.u32 1326507024, %v6027
        %v6043 = vor.u32 %v6041, %v6042
        %vm6044 = vcmp.lt.s32.totalorder %v6025, 1
        %vm6045 = vcmp.lt.s32.totalorder %v6025, 2
        %vm6046 = vcmp.lt.s32.totalorder %v6025, 3
        %vm6047 = vcmp.lt.s32.totalorder %v6025, 4
        %v6048 = vsel %vm6044, %v6028, %v6031
        %v6049 = vsel %vm6047, %v6037, 2102212464
        %v6050 = vsel %vm6046, %v6034, %v6049
        %v6051 = vsel %vm6045, %v6048, %v6050
        %v6052 = vsel %vm6044, %v6031, %v6034
        %v6053 = vsel %vm6047, %v6040, 920167782
        %v6054 = vsel %vm6046, %v6037, %v6053
        %v6055 = vsel %vm6045, %v6052, %v6054
        %v6056 = vsel %vm6044, %v6034, %v6037
        %v6057 = vsel %vm6047, %v6043, 1326507024
        %v6058 = vsel %vm6046, %v6040, %v6057
        %v6059 = vsel %vm6045, %v6056, %v6058
        %v6060 = vshll.u32 %v6020, 8
        %v6061 = vmul.u32.u64.compose %v6060, %v6059
        %v6062 = vextract.low.u32 %v6061
        %v6063 = vextract.high.u32 %v6061
        %v6064 = vmul.u32.u64.compose %v6060, %v6055
        %v6065 = vextract.low.u32 %v6064
        %v6066 = vextract.high.u32 %v6064
        %v6067 = vmul.u32 %v6060, %v6051
        %v6068 = vadd.s32 %v6063, %v6065
        %vm6069 = vc.u32 %v6063, %v6065
        %v6070 = vadd.s32 %v6066, 1
        %v6071 = vsel %vm6069, %v6070, %v6066
        %v6072 = vadd.s32 %v6067, %v6071
        %v6073 = vadd.s32 %v6072, 536870912
        %v6074 = vshrl.u32 %v6073, 30
        %v6075 = vshll.u32 %v6074, 30
        %v6076 = vsub.s32 %v6072, %v6075
        %vm6077 = vcmp.lt.s32.totalorder %v6076, 0
        %v6078 = vsub.s32 0, %v6076
        %v6079 = vsel %vm6077, %v6078, %v6076
        %v6080 = vclz %v6079
        %v6081 = vsub.s32 %v6080, 2
        %vm6082 = vcmp.gt.s32.totalorder 0, %v6081
        %v6083 = vsel %vm6082, 0, %v6081
        %v6084 = vsub.s32 32, %v6083
        %v6085 = vshll.u32 %v6076, %v6083
        %v6086 = vshrl.u32 %v6068, %v6084
        %v6087 = vor.u32 %v6085, %v6086
        %v6088 = vsub.s32 4294967266, %v6083
        %v6089 = vadd.s32 %v6088, 127
        %v6090 = vshll.u32 %v6089, 23
        %v6091 = vor.u32 4788187, %v6090
        %v6092 = vand.u32 2147483647, %v6091
        %v6094 = vcvt.s32.f32 %v6087
        %v6095 = vmul.f32 %v6094, %v6092
        %v6096 = vxor.u32 %v6095, 2147483648
        %v6097 = vsel %vm6014, %v6096, %v6095
        %v6098 = vsub.s32 4, %v6074
        %v6099 = vsel %vm6014, %v6098, %v6074
        %v6100 = vsel %vm6013, %v1431, %v6097
        %v6101 = vsel %vm6013, 0, %v6099
        %v6102 = vcosq.f32.pop %v6100
        %v6103 = vsinq.f32.pop %v6100
        %vm6104 = vweird.f32 %v1431
        %v6105 = vadd.s32 %v6101, 3
        %v6106 = vand.u32 %v6105, 3
        %vm6107 = vcmp.lt.s32.totalorder %v6106, 2
        %vm6108 = vcmp.eq.s32.totalorder %v6106, 0
        %v6109 = vxor.u32 %v6103, 2147483648
        %v6110 = vsel %vm6108, %v6102, %v6109
        %vm6111 = vcmp.eq.s32.totalorder %v6106, 2
        %v6112 = vxor.u32 %v6102, 2147483648
        %v6113 = vsel %vm6111, %v6112, %v6103
        %v6114 = vsel %vm6107, %v6110, %v6113
        %v6115 = vsel %vm6104, nan, %v6114
        %v6116 = vand.u32 2147483647, %v1433
        %vm6117 = vcmp.le.f32.partialorder %v6116, 0.7853982
        %vm6118 = vcmp.lt.s32.totalorder %v1433, 0
        %v6119 = vand.u32 %v1433, 2139095040
        %v6120 = vshrl.u32 %v6119, 23
        %v6121 = vsub.s32 %v6120, 127
        %v6122 = vand.u32 2147483647, %v1433
        %v6123 = vand.u32 %v6122, 8388607
        %v6124 = vor.u32 %v6123, 8388608
        %v6125 = vsub.s32 0, %v6124
        %v6126 = vadd.s32 %v6121, 1
        %vm6127 = vcmp.gt.s32.totalorder %v6126, 0
        %v6128 = vsel %vm6127, %v6126, 0
        %v6129 = vshrl.u32 %v6128, 5
        %v6130 = vand.u32 %v6128, 31
        %v6131 = vsub.s32 32, %v6130
        %v6132 = vshrl.u32 683565275, %v6131
        %v6133 = vshll.u32 683565275, %v6130
        %v6134 = vshrl.u32 2475754826, %v6131
        %v6135 = vor.u32 %v6133, %v6134
        %v6136 = vshll.u32 2475754826, %v6130
        %v6137 = vshrl.u32 2131351028, %v6131
        %v6138 = vor.u32 %v6136, %v6137
        %v6139 = vshll.u32 2131351028, %v6130
        %v6140 = vshrl.u32 2102212464, %v6131
        %v6141 = vor.u32 %v6139, %v6140
        %v6142 = vshll.u32 2102212464, %v6130
        %v6143 = vshrl.u32 920167782, %v6131
        %v6144 = vor.u32 %v6142, %v6143
        %v6145 = vshll.u32 920167782, %v6130
        %v6146 = vshrl.u32 1326507024, %v6131
        %v6147 = vor.u32 %v6145, %v6146
        %vm6148 = vcmp.lt.s32.totalorder %v6129, 1
        %vm6149 = vcmp.lt.s32.totalorder %v6129, 2
        %vm6150 = vcmp.lt.s32.totalorder %v6129, 3
        %vm6151 = vcmp.lt.s32.totalorder %v6129, 4
        %v6152 = vsel %vm6148, %v6132, %v6135
        %v6153 = vsel %vm6151, %v6141, 2102212464
        %v6154 = vsel %vm6150, %v6138, %v6153
        %v6155 = vsel %vm6149, %v6152, %v6154
        %v6156 = vsel %vm6148, %v6135, %v6138
        %v6157 = vsel %vm6151, %v6144, 920167782
        %v6158 = vsel %vm6150, %v6141, %v6157
        %v6159 = vsel %vm6149, %v6156, %v6158
        %v6160 = vsel %vm6148, %v6138, %v6141
        %v6161 = vsel %vm6151, %v6147, 1326507024
        %v6162 = vsel %vm6150, %v6144, %v6161
        %v6163 = vsel %vm6149, %v6160, %v6162
        %v6164 = vshll.u32 %v6124, 8
        %v6165 = vmul.u32.u64.compose %v6164, %v6163
        %v6166 = vextract.low.u32 %v6165
        %v6167 = vextract.high.u32 %v6165
        %v6168 = vmul.u32.u64.compose %v6164, %v6159
        %v6169 = vextract.low.u32 %v6168
        %v6170 = vextract.high.u32 %v6168
        %v6171 = vmul.u32 %v6164, %v6155
        %v6172 = vadd.s32 %v6167, %v6169
        %vm6173 = vc.u32 %v6167, %v6169
        %v6174 = vadd.s32 %v6170, 1
        %v6175 = vsel %vm6173, %v6174, %v6170
        %v6176 = vadd.s32 %v6171, %v6175
        %v6177 = vadd.s32 %v6176, 536870912
        %v6178 = vshrl.u32 %v6177, 30
        %v6179 = vshll.u32 %v6178, 30
        %v6180 = vsub.s32 %v6176, %v6179
        %vm6181 = vcmp.lt.s32.totalorder %v6180, 0
        %v6182 = vsub.s32 0, %v6180
        %v6183 = vsel %vm6181, %v6182, %v6180
        %v6184 = vclz %v6183
        %v6185 = vsub.s32 %v6184, 2
        %vm6186 = vcmp.gt.s32.totalorder 0, %v6185
        %v6187 = vsel %vm6186, 0, %v6185
        %v6188 = vsub.s32 32, %v6187
        %v6189 = vshll.u32 %v6180, %v6187
        %v6190 = vshrl.u32 %v6172, %v6188
        %v6191 = vor.u32 %v6189, %v6190
        %v6192 = vsub.s32 4294967266, %v6187
        %v6193 = vadd.s32 %v6192, 127
        %v6194 = vshll.u32 %v6193, 23
        %v6195 = vor.u32 4788187, %v6194
        %v6196 = vand.u32 2147483647, %v6195
        %v6198 = vcvt.s32.f32 %v6191
        %v6199 = vmul.f32 %v6198, %v6196
        %v6200 = vxor.u32 %v6199, 2147483648
        %v6201 = vsel %vm6118, %v6200, %v6199
        %v6202 = vsub.s32 4, %v6178
        %v6203 = vsel %vm6118, %v6202, %v6178
        %v6204 = vsel %vm6117, %v1433, %v6201
        %v6205 = vsel %vm6117, 0, %v6203
        %v6206 = vcosq.f32.pop %v6204
        %v6207 = vsinq.f32.pop %v6204
        %vm6208 = vweird.f32 %v1433
        %v6209 = vadd.s32 %v6205, 3
        %v6210 = vand.u32 %v6209, 3
        %vm6211 = vcmp.lt.s32.totalorder %v6210, 2
        %vm6212 = vcmp.eq.s32.totalorder %v6210, 0
        %v6213 = vxor.u32 %v6207, 2147483648
        %v6214 = vsel %vm6212, %v6206, %v6213
        %vm6215 = vcmp.eq.s32.totalorder %v6210, 2
        %v6216 = vxor.u32 %v6206, 2147483648
        %v6217 = vsel %vm6215, %v6216, %v6207
        %v6218 = vsel %vm6211, %v6214, %v6217
        %v6219 = vsel %vm6208, nan, %v6218
        %v6220 = vand.u32 2147483647, %v2631
        %vm6221 = vcmp.le.f32.partialorder %v6220, 0.7853982
        %vm6222 = vcmp.lt.s32.totalorder %v2631, 0
        %v6223 = vand.u32 %v2631, 2139095040
        %v6224 = vshrl.u32 %v6223, 23
        %v6225 = vsub.s32 %v6224, 127
        %v6226 = vand.u32 2147483647, %v2631
        %v6227 = vand.u32 %v6226, 8388607
        %v6228 = vor.u32 %v6227, 8388608
        %v6229 = vsub.s32 0, %v6228
        %v6230 = vadd.s32 %v6225, 1
        %vm6231 = vcmp.gt.s32.totalorder %v6230, 0
        %v6232 = vsel %vm6231, %v6230, 0
        %v6233 = vshrl.u32 %v6232, 5
        %v6234 = vand.u32 %v6232, 31
        %v6235 = vsub.s32 32, %v6234
        %v6236 = vshrl.u32 683565275, %v6235
        %v6237 = vshll.u32 683565275, %v6234
        %v6238 = vshrl.u32 2475754826, %v6235
        %v6239 = vor.u32 %v6237, %v6238
        %v6240 = vshll.u32 2475754826, %v6234
        %v6241 = vshrl.u32 2131351028, %v6235
        %v6242 = vor.u32 %v6240, %v6241
        %v6243 = vshll.u32 2131351028, %v6234
        %v6244 = vshrl.u32 2102212464, %v6235
        %v6245 = vor.u32 %v6243, %v6244
        %v6246 = vshll.u32 2102212464, %v6234
        %v6247 = vshrl.u32 920167782, %v6235
        %v6248 = vor.u32 %v6246, %v6247
        %v6249 = vshll.u32 920167782, %v6234
        %v6250 = vshrl.u32 1326507024, %v6235
        %v6251 = vor.u32 %v6249, %v6250
        %vm6252 = vcmp.lt.s32.totalorder %v6233, 1
        %vm6253 = vcmp.lt.s32.totalorder %v6233, 2
        %vm6254 = vcmp.lt.s32.totalorder %v6233, 3
        %vm6255 = vcmp.lt.s32.totalorder %v6233, 4
        %v6256 = vsel %vm6252, %v6236, %v6239
        %v6257 = vsel %vm6255, %v6245, 2102212464
        %v6258 = vsel %vm6254, %v6242, %v6257
        %v6259 = vsel %vm6253, %v6256, %v6258
        %v6260 = vsel %vm6252, %v6239, %v6242
        %v6261 = vsel %vm6255, %v6248, 920167782
        %v6262 = vsel %vm6254, %v6245, %v6261
        %v6263 = vsel %vm6253, %v6260, %v6262
        %v6264 = vsel %vm6252, %v6242, %v6245
        %v6265 = vsel %vm6255, %v6251, 1326507024
        %v6266 = vsel %vm6254, %v6248, %v6265
        %v6267 = vsel %vm6253, %v6264, %v6266
        %v6268 = vshll.u32 %v6228, 8
        %v6269 = vmul.u32.u64.compose %v6268, %v6267
        %v6270 = vextract.low.u32 %v6269
        %v6271 = vextract.high.u32 %v6269
        %v6272 = vmul.u32.u64.compose %v6268, %v6263
        %v6273 = vextract.low.u32 %v6272
        %v6274 = vextract.high.u32 %v6272
        %v6275 = vmul.u32 %v6268, %v6259
        %v6276 = vadd.s32 %v6271, %v6273
        %vm6277 = vc.u32 %v6271, %v6273
        %v6278 = vadd.s32 %v6274, 1
        %v6279 = vsel %vm6277, %v6278, %v6274
        %v6280 = vadd.s32 %v6275, %v6279
        %v6281 = vadd.s32 %v6280, 536870912
        %v6282 = vshrl.u32 %v6281, 30
        %v6283 = vshll.u32 %v6282, 30
        %v6284 = vsub.s32 %v6280, %v6283
        %vm6285 = vcmp.lt.s32.totalorder %v6284, 0
        %v6286 = vsub.s32 0, %v6284
        %v6287 = vsel %vm6285, %v6286, %v6284
        %v6288 = vclz %v6287
        %v6289 = vsub.s32 %v6288, 2
        %vm6290 = vcmp.gt.s32.totalorder 0, %v6289
        %v6291 = vsel %vm6290, 0, %v6289
        %v6292 = vsub.s32 32, %v6291
        %v6293 = vshll.u32 %v6284, %v6291
        %v6294 = vshrl.u32 %v6276, %v6292
        %v6295 = vor.u32 %v6293, %v6294
        %v6296 = vsub.s32 4294967266, %v6291
        %v6297 = vadd.s32 %v6296, 127
        %v6298 = vshll.u32 %v6297, 23
        %v6299 = vor.u32 4788187, %v6298
        %v6300 = vand.u32 2147483647, %v6299
        %v6302 = vcvt.s32.f32 %v6295
        %v6303 = vmul.f32 %v6302, %v6300
        %v6304 = vxor.u32 %v6303, 2147483648
        %v6305 = vsel %vm6222, %v6304, %v6303
        %v6306 = vsub.s32 4, %v6282
        %v6307 = vsel %vm6222, %v6306, %v6282
        %v6308 = vsel %vm6221, %v2631, %v6305
        %v6309 = vsel %vm6221, 0, %v6307
        %v6310 = vcosq.f32.pop %v6308
        %v6311 = vsinq.f32.pop %v6308
        %vm6312 = vweird.f32 %v2631
        %v6313 = vadd.s32 %v6309, 3
        %v6314 = vand.u32 %v6313, 3
        %vm6315 = vcmp.lt.s32.totalorder %v6314, 2
        %vm6316 = vcmp.eq.s32.totalorder %v6314, 0
        %v6317 = vxor.u32 %v6311, 2147483648
        %v6318 = vsel %vm6316, %v6310, %v6317
        %vm6319 = vcmp.eq.s32.totalorder %v6314, 2
        %v6320 = vxor.u32 %v6310, 2147483648
        %v6321 = vsel %vm6319, %v6320, %v6311
        %v6322 = vsel %vm6315, %v6318, %v6321
        %v6323 = vsel %vm6312, nan, %v6322
        %v6324 = vand.u32 2147483647, %v2633
        %vm6325 = vcmp.le.f32.partialorder %v6324, 0.7853982
        %vm6326 = vcmp.lt.s32.totalorder %v2633, 0
        %v6327 = vand.u32 %v2633, 2139095040
        %v6328 = vshrl.u32 %v6327, 23
        %v6329 = vsub.s32 %v6328, 127
        %v6330 = vand.u32 2147483647, %v2633
        %v6331 = vand.u32 %v6330, 8388607
        %v6332 = vor.u32 %v6331, 8388608
        %v6333 = vsub.s32 0, %v6332
        %v6334 = vadd.s32 %v6329, 1
        %vm6335 = vcmp.gt.s32.totalorder %v6334, 0
        %v6336 = vsel %vm6335, %v6334, 0
        %v6337 = vshrl.u32 %v6336, 5
        %v6338 = vand.u32 %v6336, 31
        %v6339 = vsub.s32 32, %v6338
        %v6340 = vshrl.u32 683565275, %v6339
        %v6341 = vshll.u32 683565275, %v6338
        %v6342 = vshrl.u32 2475754826, %v6339
        %v6343 = vor.u32 %v6341, %v6342
        %v6344 = vshll.u32 2475754826, %v6338
        %v6345 = vshrl.u32 2131351028, %v6339
        %v6346 = vor.u32 %v6344, %v6345
        %v6347 = vshll.u32 2131351028, %v6338
        %v6348 = vshrl.u32 2102212464, %v6339
        %v6349 = vor.u32 %v6347, %v6348
        %v6350 = vshll.u32 2102212464, %v6338
        %v6351 = vshrl.u32 920167782, %v6339
        %v6352 = vor.u32 %v6350, %v6351
        %v6353 = vshll.u32 920167782, %v6338
        %v6354 = vshrl.u32 1326507024, %v6339
        %v6355 = vor.u32 %v6353, %v6354
        %vm6356 = vcmp.lt.s32.totalorder %v6337, 1
        %vm6357 = vcmp.lt.s32.totalorder %v6337, 2
        %vm6358 = vcmp.lt.s32.totalorder %v6337, 3
        %vm6359 = vcmp.lt.s32.totalorder %v6337, 4
        %v6360 = vsel %vm6356, %v6340, %v6343
        %v6361 = vsel %vm6359, %v6349, 2102212464
        %v6362 = vsel %vm6358, %v6346, %v6361
        %v6363 = vsel %vm6357, %v6360, %v6362
        %v6364 = vsel %vm6356, %v6343, %v6346
        %v6365 = vsel %vm6359, %v6352, 920167782
        %v6366 = vsel %vm6358, %v6349, %v6365
        %v6367 = vsel %vm6357, %v6364, %v6366
        %v6368 = vsel %vm6356, %v6346, %v6349
        %v6369 = vsel %vm6359, %v6355, 1326507024
        %v6370 = vsel %vm6358, %v6352, %v6369
        %v6371 = vsel %vm6357, %v6368, %v6370
        %v6372 = vshll.u32 %v6332, 8
        %v6373 = vmul.u32.u64.compose %v6372, %v6371
        %v6374 = vextract.low.u32 %v6373
        %v6375 = vextract.high.u32 %v6373
        %v6376 = vmul.u32.u64.compose %v6372, %v6367
        %v6377 = vextract.low.u32 %v6376
        %v6378 = vextract.high.u32 %v6376
        %v6379 = vmul.u32 %v6372, %v6363
        %v6380 = vadd.s32 %v6375, %v6377
        %vm6381 = vc.u32 %v6375, %v6377
        %v6382 = vadd.s32 %v6378, 1
        %v6383 = vsel %vm6381, %v6382, %v6378
        %v6384 = vadd.s32 %v6379, %v6383
        %v6385 = vadd.s32 %v6384, 536870912
        %v6386 = vshrl.u32 %v6385, 30
        %v6387 = vshll.u32 %v6386, 30
        %v6388 = vsub.s32 %v6384, %v6387
        %vm6389 = vcmp.lt.s32.totalorder %v6388, 0
        %v6390 = vsub.s32 0, %v6388
        %v6391 = vsel %vm6389, %v6390, %v6388
        %v6392 = vclz %v6391
        %v6393 = vsub.s32 %v6392, 2
        %vm6394 = vcmp.gt.s32.totalorder 0, %v6393
        %v6395 = vsel %vm6394, 0, %v6393
        %v6396 = vsub.s32 32, %v6395
        %v6397 = vshll.u32 %v6388, %v6395
        %v6398 = vshrl.u32 %v6380, %v6396
        %v6399 = vor.u32 %v6397, %v6398
        %v6400 = vsub.s32 4294967266, %v6395
        %v6401 = vadd.s32 %v6400, 127
        %v6402 = vshll.u32 %v6401, 23
        %v6403 = vor.u32 4788187, %v6402
        %v6404 = vand.u32 2147483647, %v6403
        %v6406 = vcvt.s32.f32 %v6399
        %v6407 = vmul.f32 %v6406, %v6404
        %v6408 = vxor.u32 %v6407, 2147483648
        %v6409 = vsel %vm6326, %v6408, %v6407
        %v6410 = vsub.s32 4, %v6386
        %v6411 = vsel %vm6326, %v6410, %v6386
        %v6412 = vsel %vm6325, %v2633, %v6409
        %v6413 = vsel %vm6325, 0, %v6411
        %v6414 = vcosq.f32.pop %v6412
        %v6415 = vsinq.f32.pop %v6412
        %vm6416 = vweird.f32 %v2633
        %v6417 = vadd.s32 %v6413, 3
        %v6418 = vand.u32 %v6417, 3
        %vm6419 = vcmp.lt.s32.totalorder %v6418, 2
        %vm6420 = vcmp.eq.s32.totalorder %v6418, 0
        %v6421 = vxor.u32 %v6415, 2147483648
        %v6422 = vsel %vm6420, %v6414, %v6421
        %vm6423 = vcmp.eq.s32.totalorder %v6418, 2
        %v6424 = vxor.u32 %v6414, 2147483648
        %v6425 = vsel %vm6423, %v6424, %v6415
        %v6426 = vsel %vm6419, %v6422, %v6425
        %v6427 = vsel %vm6416, nan, %v6426
        %v6428 = vand.u32 2147483647, %v1438
        %vm6429 = vcmp.le.f32.partialorder %v6428, 0.7853982
        %vm6430 = vcmp.lt.s32.totalorder %v1438, 0
        %v6431 = vand.u32 %v1438, 2139095040
        %v6432 = vshrl.u32 %v6431, 23
        %v6433 = vsub.s32 %v6432, 127
        %v6434 = vand.u32 2147483647, %v1438
        %v6435 = vand.u32 %v6434, 8388607
        %v6436 = vor.u32 %v6435, 8388608
        %v6437 = vsub.s32 0, %v6436
        %v6438 = vadd.s32 %v6433, 1
        %vm6439 = vcmp.gt.s32.totalorder %v6438, 0
        %v6440 = vsel %vm6439, %v6438, 0
        %v6441 = vshrl.u32 %v6440, 5
        %v6442 = vand.u32 %v6440, 31
        %v6443 = vsub.s32 32, %v6442
        %v6444 = vshrl.u32 683565275, %v6443
        %v6445 = vshll.u32 683565275, %v6442
        %v6446 = vshrl.u32 2475754826, %v6443
        %v6447 = vor.u32 %v6445, %v6446
        %v6448 = vshll.u32 2475754826, %v6442
        %v6449 = vshrl.u32 2131351028, %v6443
        %v6450 = vor.u32 %v6448, %v6449
        %v6451 = vshll.u32 2131351028, %v6442
        %v6452 = vshrl.u32 2102212464, %v6443
        %v6453 = vor.u32 %v6451, %v6452
        %v6454 = vshll.u32 2102212464, %v6442
        %v6455 = vshrl.u32 920167782, %v6443
        %v6456 = vor.u32 %v6454, %v6455
        %v6457 = vshll.u32 920167782, %v6442
        %v6458 = vshrl.u32 1326507024, %v6443
        %v6459 = vor.u32 %v6457, %v6458
        %vm6460 = vcmp.lt.s32.totalorder %v6441, 1
        %vm6461 = vcmp.lt.s32.totalorder %v6441, 2
        %vm6462 = vcmp.lt.s32.totalorder %v6441, 3
        %vm6463 = vcmp.lt.s32.totalorder %v6441, 4
        %v6464 = vsel %vm6460, %v6444, %v6447
        %v6465 = vsel %vm6463, %v6453, 2102212464
        %v6466 = vsel %vm6462, %v6450, %v6465
        %v6467 = vsel %vm6461, %v6464, %v6466
        %v6468 = vsel %vm6460, %v6447, %v6450
        %v6469 = vsel %vm6463, %v6456, 920167782
        %v6470 = vsel %vm6462, %v6453, %v6469
        %v6471 = vsel %vm6461, %v6468, %v6470
        %v6472 = vsel %vm6460, %v6450, %v6453
        %v6473 = vsel %vm6463, %v6459, 1326507024
        %v6474 = vsel %vm6462, %v6456, %v6473
        %v6475 = vsel %vm6461, %v6472, %v6474
        %v6476 = vshll.u32 %v6436, 8
        %v6477 = vmul.u32.u64.compose %v6476, %v6475
        %v6478 = vextract.low.u32 %v6477
        %v6479 = vextract.high.u32 %v6477
        %v6480 = vmul.u32.u64.compose %v6476, %v6471
        %v6481 = vextract.low.u32 %v6480
        %v6482 = vextract.high.u32 %v6480
        %v6483 = vmul.u32 %v6476, %v6467
        %v6484 = vadd.s32 %v6479, %v6481
        %vm6485 = vc.u32 %v6479, %v6481
        %v6486 = vadd.s32 %v6482, 1
        %v6487 = vsel %vm6485, %v6486, %v6482
        %v6488 = vadd.s32 %v6483, %v6487
        %v6489 = vadd.s32 %v6488, 536870912
        %v6490 = vshrl.u32 %v6489, 30
        %v6491 = vshll.u32 %v6490, 30
        %v6492 = vsub.s32 %v6488, %v6491
        %vm6493 = vcmp.lt.s32.totalorder %v6492, 0
        %v6494 = vsub.s32 0, %v6492
        %v6495 = vsel %vm6493, %v6494, %v6492
        %v6496 = vclz %v6495
        %v6497 = vsub.s32 %v6496, 2
        %vm6498 = vcmp.gt.s32.totalorder 0, %v6497
        %v6499 = vsel %vm6498, 0, %v6497
        %v6500 = vsub.s32 32, %v6499
        %v6501 = vshll.u32 %v6492, %v6499
        %v6502 = vshrl.u32 %v6484, %v6500
        %v6503 = vor.u32 %v6501, %v6502
        %v6504 = vsub.s32 4294967266, %v6499
        %v6505 = vadd.s32 %v6504, 127
        %v6506 = vshll.u32 %v6505, 23
        %v6507 = vor.u32 4788187, %v6506
        %v6508 = vand.u32 2147483647, %v6507
        %v6510 = vcvt.s32.f32 %v6503
        %v6511 = vmul.f32 %v6510, %v6508
        %v6512 = vxor.u32 %v6511, 2147483648
        %v6513 = vsel %vm6430, %v6512, %v6511
        %v6514 = vsub.s32 4, %v6490
        %v6515 = vsel %vm6430, %v6514, %v6490
        %v6516 = vsel %vm6429, %v1438, %v6513
        %v6517 = vsel %vm6429, 0, %v6515
        %v6518 = vcosq.f32.pop %v6516
        %v6519 = vsinq.f32.pop %v6516
        %vm6520 = vweird.f32 %v1438
        %v6521 = vadd.s32 %v6517, 3
        %v6522 = vand.u32 %v6521, 3
        %vm6523 = vcmp.lt.s32.totalorder %v6522, 2
        %vm6524 = vcmp.eq.s32.totalorder %v6522, 0
        %v6525 = vxor.u32 %v6519, 2147483648
        %v6526 = vsel %vm6524, %v6518, %v6525
        %vm6527 = vcmp.eq.s32.totalorder %v6522, 2
        %v6528 = vxor.u32 %v6518, 2147483648
        %v6529 = vsel %vm6527, %v6528, %v6519
        %v6530 = vsel %vm6523, %v6526, %v6529
        %v6531 = vsel %vm6520, nan, %v6530
        %v6532 = vand.u32 2147483647, %v1440
        %vm6533 = vcmp.le.f32.partialorder %v6532, 0.7853982
        %vm6534 = vcmp.lt.s32.totalorder %v1440, 0
        %v6535 = vand.u32 %v1440, 2139095040
        %v6536 = vshrl.u32 %v6535, 23
        %v6537 = vsub.s32 %v6536, 127
        %v6538 = vand.u32 2147483647, %v1440
        %v6539 = vand.u32 %v6538, 8388607
        %v6540 = vor.u32 %v6539, 8388608
        %v6541 = vsub.s32 0, %v6540
        %v6542 = vadd.s32 %v6537, 1
        %vm6543 = vcmp.gt.s32.totalorder %v6542, 0
        %v6544 = vsel %vm6543, %v6542, 0
        %v6545 = vshrl.u32 %v6544, 5
        %v6546 = vand.u32 %v6544, 31
        %v6547 = vsub.s32 32, %v6546
        %v6548 = vshrl.u32 683565275, %v6547
        %v6549 = vshll.u32 683565275, %v6546
        %v6550 = vshrl.u32 2475754826, %v6547
        %v6551 = vor.u32 %v6549, %v6550
        %v6552 = vshll.u32 2475754826, %v6546
        %v6553 = vshrl.u32 2131351028, %v6547
        %v6554 = vor.u32 %v6552, %v6553
        %v6555 = vshll.u32 2131351028, %v6546
        %v6556 = vshrl.u32 2102212464, %v6547
        %v6557 = vor.u32 %v6555, %v6556
        %v6558 = vshll.u32 2102212464, %v6546
        %v6559 = vshrl.u32 920167782, %v6547
        %v6560 = vor.u32 %v6558, %v6559
        %v6561 = vshll.u32 920167782, %v6546
        %v6562 = vshrl.u32 1326507024, %v6547
        %v6563 = vor.u32 %v6561, %v6562
        %vm6564 = vcmp.lt.s32.totalorder %v6545, 1
        %vm6565 = vcmp.lt.s32.totalorder %v6545, 2
        %vm6566 = vcmp.lt.s32.totalorder %v6545, 3
        %vm6567 = vcmp.lt.s32.totalorder %v6545, 4
        %v6568 = vsel %vm6564, %v6548, %v6551
        %v6569 = vsel %vm6567, %v6557, 2102212464
        %v6570 = vsel %vm6566, %v6554, %v6569
        %v6571 = vsel %vm6565, %v6568, %v6570
        %v6572 = vsel %vm6564, %v6551, %v6554
        %v6573 = vsel %vm6567, %v6560, 920167782
        %v6574 = vsel %vm6566, %v6557, %v6573
        %v6575 = vsel %vm6565, %v6572, %v6574
        %v6576 = vsel %vm6564, %v6554, %v6557
        %v6577 = vsel %vm6567, %v6563, 1326507024
        %v6578 = vsel %vm6566, %v6560, %v6577
        %v6579 = vsel %vm6565, %v6576, %v6578
        %v6580 = vshll.u32 %v6540, 8
        %v6581 = vmul.u32.u64.compose %v6580, %v6579
        %v6582 = vextract.low.u32 %v6581
        %v6583 = vextract.high.u32 %v6581
        %v6584 = vmul.u32.u64.compose %v6580, %v6575
        %v6585 = vextract.low.u32 %v6584
        %v6586 = vextract.high.u32 %v6584
        %v6587 = vmul.u32 %v6580, %v6571
        %v6588 = vadd.s32 %v6583, %v6585
        %vm6589 = vc.u32 %v6583, %v6585
        %v6590 = vadd.s32 %v6586, 1
        %v6591 = vsel %vm6589, %v6590, %v6586
        %v6592 = vadd.s32 %v6587, %v6591
        %v6593 = vadd.s32 %v6592, 536870912
        %v6594 = vshrl.u32 %v6593, 30
        %v6595 = vshll.u32 %v6594, 30
        %v6596 = vsub.s32 %v6592, %v6595
        %vm6597 = vcmp.lt.s32.totalorder %v6596, 0
        %v6598 = vsub.s32 0, %v6596
        %v6599 = vsel %vm6597, %v6598, %v6596
        %v6600 = vclz %v6599
        %v6601 = vsub.s32 %v6600, 2
        %vm6602 = vcmp.gt.s32.totalorder 0, %v6601
        %v6603 = vsel %vm6602, 0, %v6601
        %v6604 = vsub.s32 32, %v6603
        %v6605 = vshll.u32 %v6596, %v6603
        %v6606 = vshrl.u32 %v6588, %v6604
        %v6607 = vor.u32 %v6605, %v6606
        %v6608 = vsub.s32 4294967266, %v6603
        %v6609 = vadd.s32 %v6608, 127
        %v6610 = vshll.u32 %v6609, 23
        %v6611 = vor.u32 4788187, %v6610
        %v6612 = vand.u32 2147483647, %v6611
        %v6614 = vcvt.s32.f32 %v6607
        %v6615 = vmul.f32 %v6614, %v6612
        %v6616 = vxor.u32 %v6615, 2147483648
        %v6617 = vsel %vm6534, %v6616, %v6615
        %v6618 = vsub.s32 4, %v6594
        %v6619 = vsel %vm6534, %v6618, %v6594
        %v6620 = vsel %vm6533, %v1440, %v6617
        %v6621 = vsel %vm6533, 0, %v6619
        %v6622 = vcosq.f32.pop %v6620
        %v6623 = vsinq.f32.pop %v6620
        %vm6624 = vweird.f32 %v1440
        %v6625 = vadd.s32 %v6621, 3
        %v6626 = vand.u32 %v6625, 3
        %vm6627 = vcmp.lt.s32.totalorder %v6626, 2
        %vm6628 = vcmp.eq.s32.totalorder %v6626, 0
        %v6629 = vxor.u32 %v6623, 2147483648
        %v6630 = vsel %vm6628, %v6622, %v6629
        %vm6631 = vcmp.eq.s32.totalorder %v6626, 2
        %v6632 = vxor.u32 %v6622, 2147483648
        %v6633 = vsel %vm6631, %v6632, %v6623
        %v6634 = vsel %vm6627, %v6630, %v6633
        %v6635 = vsel %vm6624, nan, %v6634
        %v6636 = vand.u32 2147483647, %v2638
        %vm6637 = vcmp.le.f32.partialorder %v6636, 0.7853982
        %vm6638 = vcmp.lt.s32.totalorder %v2638, 0
        %v6639 = vand.u32 %v2638, 2139095040
        %v6640 = vshrl.u32 %v6639, 23
        %v6641 = vsub.s32 %v6640, 127
        %v6642 = vand.u32 2147483647, %v2638
        %v6643 = vand.u32 %v6642, 8388607
        %v6644 = vor.u32 %v6643, 8388608
        %v6645 = vsub.s32 0, %v6644
        %v6646 = vadd.s32 %v6641, 1
        %vm6647 = vcmp.gt.s32.totalorder %v6646, 0
        %v6648 = vsel %vm6647, %v6646, 0
        %v6649 = vshrl.u32 %v6648, 5
        %v6650 = vand.u32 %v6648, 31
        %v6651 = vsub.s32 32, %v6650
        %v6652 = vshrl.u32 683565275, %v6651
        %v6653 = vshll.u32 683565275, %v6650
        %v6654 = vshrl.u32 2475754826, %v6651
        %v6655 = vor.u32 %v6653, %v6654
        %v6656 = vshll.u32 2475754826, %v6650
        %v6657 = vshrl.u32 2131351028, %v6651
        %v6658 = vor.u32 %v6656, %v6657
        %v6659 = vshll.u32 2131351028, %v6650
        %v6660 = vshrl.u32 2102212464, %v6651
        %v6661 = vor.u32 %v6659, %v6660
        %v6662 = vshll.u32 2102212464, %v6650
        %v6663 = vshrl.u32 920167782, %v6651
        %v6664 = vor.u32 %v6662, %v6663
        %v6665 = vshll.u32 920167782, %v6650
        %v6666 = vshrl.u32 1326507024, %v6651
        %v6667 = vor.u32 %v6665, %v6666
        %vm6668 = vcmp.lt.s32.totalorder %v6649, 1
        %vm6669 = vcmp.lt.s32.totalorder %v6649, 2
        %vm6670 = vcmp.lt.s32.totalorder %v6649, 3
        %vm6671 = vcmp.lt.s32.totalorder %v6649, 4
        %v6672 = vsel %vm6668, %v6652, %v6655
        %v6673 = vsel %vm6671, %v6661, 2102212464
        %v6674 = vsel %vm6670, %v6658, %v6673
        %v6675 = vsel %vm6669, %v6672, %v6674
        %v6676 = vsel %vm6668, %v6655, %v6658
        %v6677 = vsel %vm6671, %v6664, 920167782
        %v6678 = vsel %vm6670, %v6661, %v6677
        %v6679 = vsel %vm6669, %v6676, %v6678
        %v6680 = vsel %vm6668, %v6658, %v6661
        %v6681 = vsel %vm6671, %v6667, 1326507024
        %v6682 = vsel %vm6670, %v6664, %v6681
        %v6683 = vsel %vm6669, %v6680, %v6682
        %v6684 = vshll.u32 %v6644, 8
        %v6685 = vmul.u32.u64.compose %v6684, %v6683
        %v6686 = vextract.low.u32 %v6685
        %v6687 = vextract.high.u32 %v6685
        %v6688 = vmul.u32.u64.compose %v6684, %v6679
        %v6689 = vextract.low.u32 %v6688
        %v6690 = vextract.high.u32 %v6688
        %v6691 = vmul.u32 %v6684, %v6675
        %v6692 = vadd.s32 %v6687, %v6689
        %vm6693 = vc.u32 %v6687, %v6689
        %v6694 = vadd.s32 %v6690, 1
        %v6695 = vsel %vm6693, %v6694, %v6690
        %v6696 = vadd.s32 %v6691, %v6695
        %v6697 = vadd.s32 %v6696, 536870912
        %v6698 = vshrl.u32 %v6697, 30
        %v6699 = vshll.u32 %v6698, 30
        %v6700 = vsub.s32 %v6696, %v6699
        %vm6701 = vcmp.lt.s32.totalorder %v6700, 0
        %v6702 = vsub.s32 0, %v6700
        %v6703 = vsel %vm6701, %v6702, %v6700
        %v6704 = vclz %v6703
        %v6705 = vsub.s32 %v6704, 2
        %vm6706 = vcmp.gt.s32.totalorder 0, %v6705
        %v6707 = vsel %vm6706, 0, %v6705
        %v6708 = vsub.s32 32, %v6707
        %v6709 = vshll.u32 %v6700, %v6707
        %v6710 = vshrl.u32 %v6692, %v6708
        %v6711 = vor.u32 %v6709, %v6710
        %v6712 = vsub.s32 4294967266, %v6707
        %v6713 = vadd.s32 %v6712, 127
        %v6714 = vshll.u32 %v6713, 23
        %v6715 = vor.u32 4788187, %v6714
        %v6716 = vand.u32 2147483647, %v6715
        %v6718 = vcvt.s32.f32 %v6711
        %v6719 = vmul.f32 %v6718, %v6716
        %v6720 = vxor.u32 %v6719, 2147483648
        %v6721 = vsel %vm6638, %v6720, %v6719
        %v6722 = vsub.s32 4, %v6698
        %v6723 = vsel %vm6638, %v6722, %v6698
        %v6724 = vsel %vm6637, %v2638, %v6721
        %v6725 = vsel %vm6637, 0, %v6723
        %v6726 = vcosq.f32.pop %v6724
        %v6727 = vsinq.f32.pop %v6724
        %vm6728 = vweird.f32 %v2638
        %v6729 = vadd.s32 %v6725, 3
        %v6730 = vand.u32 %v6729, 3
        %vm6731 = vcmp.lt.s32.totalorder %v6730, 2
        %vm6732 = vcmp.eq.s32.totalorder %v6730, 0
        %v6733 = vxor.u32 %v6727, 2147483648
        %v6734 = vsel %vm6732, %v6726, %v6733
        %vm6735 = vcmp.eq.s32.totalorder %v6730, 2
        %v6736 = vxor.u32 %v6726, 2147483648
        %v6737 = vsel %vm6735, %v6736, %v6727
        %v6738 = vsel %vm6731, %v6734, %v6737
        %v6739 = vsel %vm6728, nan, %v6738
        %v6740 = vand.u32 2147483647, %v2640
        %vm6741 = vcmp.le.f32.partialorder %v6740, 0.7853982
        %vm6742 = vcmp.lt.s32.totalorder %v2640, 0
        %v6743 = vand.u32 %v2640, 2139095040
        %v6744 = vshrl.u32 %v6743, 23
        %v6745 = vsub.s32 %v6744, 127
        %v6746 = vand.u32 2147483647, %v2640
        %v6747 = vand.u32 %v6746, 8388607
        %v6748 = vor.u32 %v6747, 8388608
        %v6749 = vsub.s32 0, %v6748
        %v6750 = vadd.s32 %v6745, 1
        %vm6751 = vcmp.gt.s32.totalorder %v6750, 0
        %v6752 = vsel %vm6751, %v6750, 0
        %v6753 = vshrl.u32 %v6752, 5
        %v6754 = vand.u32 %v6752, 31
        %v6755 = vsub.s32 32, %v6754
        %v6756 = vshrl.u32 683565275, %v6755
        %v6757 = vshll.u32 683565275, %v6754
        %v6758 = vshrl.u32 2475754826, %v6755
        %v6759 = vor.u32 %v6757, %v6758
        %v6760 = vshll.u32 2475754826, %v6754
        %v6761 = vshrl.u32 2131351028, %v6755
        %v6762 = vor.u32 %v6760, %v6761
        %v6763 = vshll.u32 2131351028, %v6754
        %v6764 = vshrl.u32 2102212464, %v6755
        %v6765 = vor.u32 %v6763, %v6764
        %v6766 = vshll.u32 2102212464, %v6754
        %v6767 = vshrl.u32 920167782, %v6755
        %v6768 = vor.u32 %v6766, %v6767
        %v6769 = vshll.u32 920167782, %v6754
        %v6770 = vshrl.u32 1326507024, %v6755
        %v6771 = vor.u32 %v6769, %v6770
        %vm6772 = vcmp.lt.s32.totalorder %v6753, 1
        %vm6773 = vcmp.lt.s32.totalorder %v6753, 2
        %vm6774 = vcmp.lt.s32.totalorder %v6753, 3
        %vm6775 = vcmp.lt.s32.totalorder %v6753, 4
        %v6776 = vsel %vm6772, %v6756, %v6759
        %v6777 = vsel %vm6775, %v6765, 2102212464
        %v6778 = vsel %vm6774, %v6762, %v6777
        %v6779 = vsel %vm6773, %v6776, %v6778
        %v6780 = vsel %vm6772, %v6759, %v6762
        %v6781 = vsel %vm6775, %v6768, 920167782
        %v6782 = vsel %vm6774, %v6765, %v6781
        %v6783 = vsel %vm6773, %v6780, %v6782
        %v6784 = vsel %vm6772, %v6762, %v6765
        %v6785 = vsel %vm6775, %v6771, 1326507024
        %v6786 = vsel %vm6774, %v6768, %v6785
        %v6787 = vsel %vm6773, %v6784, %v6786
        %v6788 = vshll.u32 %v6748, 8
        %v6789 = vmul.u32.u64.compose %v6788, %v6787
        %v6790 = vextract.low.u32 %v6789
        %v6791 = vextract.high.u32 %v6789
        %v6792 = vmul.u32.u64.compose %v6788, %v6783
        %v6793 = vextract.low.u32 %v6792
        %v6794 = vextract.high.u32 %v6792
        %v6795 = vmul.u32 %v6788, %v6779
        %v6796 = vadd.s32 %v6791, %v6793
        %vm6797 = vc.u32 %v6791, %v6793
        %v6798 = vadd.s32 %v6794, 1
        %v6799 = vsel %vm6797, %v6798, %v6794
        %v6800 = vadd.s32 %v6795, %v6799
        %v6801 = vadd.s32 %v6800, 536870912
        %v6802 = vshrl.u32 %v6801, 30
        %v6803 = vshll.u32 %v6802, 30
        %v6804 = vsub.s32 %v6800, %v6803
        %vm6805 = vcmp.lt.s32.totalorder %v6804, 0
        %v6806 = vsub.s32 0, %v6804
        %v6807 = vsel %vm6805, %v6806, %v6804
        %v6808 = vclz %v6807
        %v6809 = vsub.s32 %v6808, 2
        %vm6810 = vcmp.gt.s32.totalorder 0, %v6809
        %v6811 = vsel %vm6810, 0, %v6809
        %v6812 = vsub.s32 32, %v6811
        %v6813 = vshll.u32 %v6804, %v6811
        %v6814 = vshrl.u32 %v6796, %v6812
        %v6815 = vor.u32 %v6813, %v6814
        %v6816 = vsub.s32 4294967266, %v6811
        %v6817 = vadd.s32 %v6816, 127
        %v6818 = vshll.u32 %v6817, 23
        %v6819 = vor.u32 4788187, %v6818
        %v6820 = vand.u32 2147483647, %v6819
        %v6822 = vcvt.s32.f32 %v6815
        %v6823 = vmul.f32 %v6822, %v6820
        %v6824 = vxor.u32 %v6823, 2147483648
        %v6825 = vsel %vm6742, %v6824, %v6823
        %v6826 = vsub.s32 4, %v6802
        %v6827 = vsel %vm6742, %v6826, %v6802
        %v6828 = vsel %vm6741, %v2640, %v6825
        %v6829 = vsel %vm6741, 0, %v6827
        %v6830 = vcosq.f32.pop %v6828
        %v6831 = vsinq.f32.pop %v6828
        %vm6832 = vweird.f32 %v2640
        %v6833 = vadd.s32 %v6829, 3
        %v6834 = vand.u32 %v6833, 3
        %vm6835 = vcmp.lt.s32.totalorder %v6834, 2
        %vm6836 = vcmp.eq.s32.totalorder %v6834, 0
        %v6837 = vxor.u32 %v6831, 2147483648
        %v6838 = vsel %vm6836, %v6830, %v6837
        %vm6839 = vcmp.eq.s32.totalorder %v6834, 2
        %v6840 = vxor.u32 %v6830, 2147483648
        %v6841 = vsel %vm6839, %v6840, %v6831
        %v6842 = vsel %vm6835, %v6838, %v6841
        %v6843 = vsel %vm6832, nan, %v6842
        %v6844 = vand.u32 2147483647, %v1445
        %vm6845 = vcmp.le.f32.partialorder %v6844, 0.7853982
        %vm6846 = vcmp.lt.s32.totalorder %v1445, 0
        %v6847 = vand.u32 %v1445, 2139095040
        %v6848 = vshrl.u32 %v6847, 23
        %v6849 = vsub.s32 %v6848, 127
        %v6850 = vand.u32 2147483647, %v1445
        %v6851 = vand.u32 %v6850, 8388607
        %v6852 = vor.u32 %v6851, 8388608
        %v6853 = vsub.s32 0, %v6852
        %v6854 = vadd.s32 %v6849, 1
        %vm6855 = vcmp.gt.s32.totalorder %v6854, 0
        %v6856 = vsel %vm6855, %v6854, 0
        %v6857 = vshrl.u32 %v6856, 5
        %v6858 = vand.u32 %v6856, 31
        %v6859 = vsub.s32 32, %v6858
        %v6860 = vshrl.u32 683565275, %v6859
        %v6861 = vshll.u32 683565275, %v6858
        %v6862 = vshrl.u32 2475754826, %v6859
        %v6863 = vor.u32 %v6861, %v6862
        %v6864 = vshll.u32 2475754826, %v6858
        %v6865 = vshrl.u32 2131351028, %v6859
        %v6866 = vor.u32 %v6864, %v6865
        %v6867 = vshll.u32 2131351028, %v6858
        %v6868 = vshrl.u32 2102212464, %v6859
        %v6869 = vor.u32 %v6867, %v6868
        %v6870 = vshll.u32 2102212464, %v6858
        %v6871 = vshrl.u32 920167782, %v6859
        %v6872 = vor.u32 %v6870, %v6871
        %v6873 = vshll.u32 920167782, %v6858
        %v6874 = vshrl.u32 1326507024, %v6859
        %v6875 = vor.u32 %v6873, %v6874
        %vm6876 = vcmp.lt.s32.totalorder %v6857, 1
        %vm6877 = vcmp.lt.s32.totalorder %v6857, 2
        %vm6878 = vcmp.lt.s32.totalorder %v6857, 3
        %vm6879 = vcmp.lt.s32.totalorder %v6857, 4
        %v6880 = vsel %vm6876, %v6860, %v6863
        %v6881 = vsel %vm6879, %v6869, 2102212464
        %v6882 = vsel %vm6878, %v6866, %v6881
        %v6883 = vsel %vm6877, %v6880, %v6882
        %v6884 = vsel %vm6876, %v6863, %v6866
        %v6885 = vsel %vm6879, %v6872, 920167782
        %v6886 = vsel %vm6878, %v6869, %v6885
        %v6887 = vsel %vm6877, %v6884, %v6886
        %v6888 = vsel %vm6876, %v6866, %v6869
        %v6889 = vsel %vm6879, %v6875, 1326507024
        %v6890 = vsel %vm6878, %v6872, %v6889
        %v6891 = vsel %vm6877, %v6888, %v6890
        %v6892 = vshll.u32 %v6852, 8
        %v6893 = vmul.u32.u64.compose %v6892, %v6891
        %v6894 = vextract.low.u32 %v6893
        %v6895 = vextract.high.u32 %v6893
        %v6896 = vmul.u32.u64.compose %v6892, %v6887
        %v6897 = vextract.low.u32 %v6896
        %v6898 = vextract.high.u32 %v6896
        %v6899 = vmul.u32 %v6892, %v6883
        %v6900 = vadd.s32 %v6895, %v6897
        %vm6901 = vc.u32 %v6895, %v6897
        %v6902 = vadd.s32 %v6898, 1
        %v6903 = vsel %vm6901, %v6902, %v6898
        %v6904 = vadd.s32 %v6899, %v6903
        %v6905 = vadd.s32 %v6904, 536870912
        %v6906 = vshrl.u32 %v6905, 30
        %v6907 = vshll.u32 %v6906, 30
        %v6908 = vsub.s32 %v6904, %v6907
        %vm6909 = vcmp.lt.s32.totalorder %v6908, 0
        %v6910 = vsub.s32 0, %v6908
        %v6911 = vsel %vm6909, %v6910, %v6908
        %v6912 = vclz %v6911
        %v6913 = vsub.s32 %v6912, 2
        %vm6914 = vcmp.gt.s32.totalorder 0, %v6913
        %v6915 = vsel %vm6914, 0, %v6913
        %v6916 = vsub.s32 32, %v6915
        %v6917 = vshll.u32 %v6908, %v6915
        %v6918 = vshrl.u32 %v6900, %v6916
        %v6919 = vor.u32 %v6917, %v6918
        %v6920 = vsub.s32 4294967266, %v6915
        %v6921 = vadd.s32 %v6920, 127
        %v6922 = vshll.u32 %v6921, 23
        %v6923 = vor.u32 4788187, %v6922
        %v6924 = vand.u32 2147483647, %v6923
        %v6926 = vcvt.s32.f32 %v6919
        %v6927 = vmul.f32 %v6926, %v6924
        %v6928 = vxor.u32 %v6927, 2147483648
        %v6929 = vsel %vm6846, %v6928, %v6927
        %v6930 = vsub.s32 4, %v6906
        %v6931 = vsel %vm6846, %v6930, %v6906
        %v6932 = vsel %vm6845, %v1445, %v6929
        %v6933 = vsel %vm6845, 0, %v6931
        %v6934 = vcosq.f32.pop %v6932
        %v6935 = vsinq.f32.pop %v6932
        %vm6936 = vweird.f32 %v1445
        %v6937 = vadd.s32 %v6933, 3
        %v6938 = vand.u32 %v6937, 3
        %vm6939 = vcmp.lt.s32.totalorder %v6938, 2
        %vm6940 = vcmp.eq.s32.totalorder %v6938, 0
        %v6941 = vxor.u32 %v6935, 2147483648
        %v6942 = vsel %vm6940, %v6934, %v6941
        %vm6943 = vcmp.eq.s32.totalorder %v6938, 2
        %v6944 = vxor.u32 %v6934, 2147483648
        %v6945 = vsel %vm6943, %v6944, %v6935
        %v6946 = vsel %vm6939, %v6942, %v6945
        %v6947 = vsel %vm6936, nan, %v6946
        %v6948 = vand.u32 2147483647, %v1447
        %vm6949 = vcmp.le.f32.partialorder %v6948, 0.7853982
        %vm6950 = vcmp.lt.s32.totalorder %v1447, 0
        %v6951 = vand.u32 %v1447, 2139095040
        %v6952 = vshrl.u32 %v6951, 23
        %v6953 = vsub.s32 %v6952, 127
        %v6954 = vand.u32 2147483647, %v1447
        %v6955 = vand.u32 %v6954, 8388607
        %v6956 = vor.u32 %v6955, 8388608
        %v6957 = vsub.s32 0, %v6956
        %v6958 = vadd.s32 %v6953, 1
        %vm6959 = vcmp.gt.s32.totalorder %v6958, 0
        %v6960 = vsel %vm6959, %v6958, 0
        %v6961 = vshrl.u32 %v6960, 5
        %v6962 = vand.u32 %v6960, 31
        %v6963 = vsub.s32 32, %v6962
        %v6964 = vshrl.u32 683565275, %v6963
        %v6965 = vshll.u32 683565275, %v6962
        %v6966 = vshrl.u32 2475754826, %v6963
        %v6967 = vor.u32 %v6965, %v6966
        %v6968 = vshll.u32 2475754826, %v6962
        %v6969 = vshrl.u32 2131351028, %v6963
        %v6970 = vor.u32 %v6968, %v6969
        %v6971 = vshll.u32 2131351028, %v6962
        %v6972 = vshrl.u32 2102212464, %v6963
        %v6973 = vor.u32 %v6971, %v6972
        %v6974 = vshll.u32 2102212464, %v6962
        %v6975 = vshrl.u32 920167782, %v6963
        %v6976 = vor.u32 %v6974, %v6975
        %v6977 = vshll.u32 920167782, %v6962
        %v6978 = vshrl.u32 1326507024, %v6963
        %v6979 = vor.u32 %v6977, %v6978
        %vm6980 = vcmp.lt.s32.totalorder %v6961, 1
        %vm6981 = vcmp.lt.s32.totalorder %v6961, 2
        %vm6982 = vcmp.lt.s32.totalorder %v6961, 3
        %vm6983 = vcmp.lt.s32.totalorder %v6961, 4
        %v6984 = vsel %vm6980, %v6964, %v6967
        %v6985 = vsel %vm6983, %v6973, 2102212464
        %v6986 = vsel %vm6982, %v6970, %v6985
        %v6987 = vsel %vm6981, %v6984, %v6986
        %v6988 = vsel %vm6980, %v6967, %v6970
        %v6989 = vsel %vm6983, %v6976, 920167782
        %v6990 = vsel %vm6982, %v6973, %v6989
        %v6991 = vsel %vm6981, %v6988, %v6990
        %v6992 = vsel %vm6980, %v6970, %v6973
        %v6993 = vsel %vm6983, %v6979, 1326507024
        %v6994 = vsel %vm6982, %v6976, %v6993
        %v6995 = vsel %vm6981, %v6992, %v6994
        %v6996 = vshll.u32 %v6956, 8
        %v6997 = vmul.u32.u64.compose %v6996, %v6995
        %v6998 = vextract.low.u32 %v6997
        %v6999 = vextract.high.u32 %v6997
        %v7000 = vmul.u32.u64.compose %v6996, %v6991
        %v7001 = vextract.low.u32 %v7000
        %v7002 = vextract.high.u32 %v7000
        %v7003 = vmul.u32 %v6996, %v6987
        %v7004 = vadd.s32 %v6999, %v7001
        %vm7005 = vc.u32 %v6999, %v7001
        %v7006 = vadd.s32 %v7002, 1
        %v7007 = vsel %vm7005, %v7006, %v7002
        %v7008 = vadd.s32 %v7003, %v7007
        %v7009 = vadd.s32 %v7008, 536870912
        %v7010 = vshrl.u32 %v7009, 30
        %v7011 = vshll.u32 %v7010, 30
        %v7012 = vsub.s32 %v7008, %v7011
        %vm7013 = vcmp.lt.s32.totalorder %v7012, 0
        %v7014 = vsub.s32 0, %v7012
        %v7015 = vsel %vm7013, %v7014, %v7012
        %v7016 = vclz %v7015
        %v7017 = vsub.s32 %v7016, 2
        %vm7018 = vcmp.gt.s32.totalorder 0, %v7017
        %v7019 = vsel %vm7018, 0, %v7017
        %v7020 = vsub.s32 32, %v7019
        %v7021 = vshll.u32 %v7012, %v7019
        %v7022 = vshrl.u32 %v7004, %v7020
        %v7023 = vor.u32 %v7021, %v7022
        %v7024 = vsub.s32 4294967266, %v7019
        %v7025 = vadd.s32 %v7024, 127
        %v7026 = vshll.u32 %v7025, 23
        %v7027 = vor.u32 4788187, %v7026
        %v7028 = vand.u32 2147483647, %v7027
        %v7030 = vcvt.s32.f32 %v7023
        %v7031 = vmul.f32 %v7030, %v7028
        %v7032 = vxor.u32 %v7031, 2147483648
        %v7033 = vsel %vm6950, %v7032, %v7031
        %v7034 = vsub.s32 4, %v7010
        %v7035 = vsel %vm6950, %v7034, %v7010
        %v7036 = vsel %vm6949, %v1447, %v7033
        %v7037 = vsel %vm6949, 0, %v7035
        %v7038 = vcosq.f32.pop %v7036
        %v7039 = vsinq.f32.pop %v7036
        %vm7040 = vweird.f32 %v1447
        %v7041 = vadd.s32 %v7037, 3
        %v7042 = vand.u32 %v7041, 3
        %vm7043 = vcmp.lt.s32.totalorder %v7042, 2
        %vm7044 = vcmp.eq.s32.totalorder %v7042, 0
        %v7045 = vxor.u32 %v7039, 2147483648
        %v7046 = vsel %vm7044, %v7038, %v7045
        %vm7047 = vcmp.eq.s32.totalorder %v7042, 2
        %v7048 = vxor.u32 %v7038, 2147483648
        %v7049 = vsel %vm7047, %v7048, %v7039
        %v7050 = vsel %vm7043, %v7046, %v7049
        %v7051 = vsel %vm7040, nan, %v7050
        %v7052 = vand.u32 2147483647, %v2645
        %vm7053 = vcmp.le.f32.partialorder %v7052, 0.7853982
        %vm7054 = vcmp.lt.s32.totalorder %v2645, 0
        %v7055 = vand.u32 %v2645, 2139095040
        %v7056 = vshrl.u32 %v7055, 23
        %v7057 = vsub.s32 %v7056, 127
        %v7058 = vand.u32 2147483647, %v2645
        %v7059 = vand.u32 %v7058, 8388607
        %v7060 = vor.u32 %v7059, 8388608
        %v7061 = vsub.s32 0, %v7060
        %v7062 = vadd.s32 %v7057, 1
        %vm7063 = vcmp.gt.s32.totalorder %v7062, 0
        %v7064 = vsel %vm7063, %v7062, 0
        %v7065 = vshrl.u32 %v7064, 5
        %v7066 = vand.u32 %v7064, 31
        %v7067 = vsub.s32 32, %v7066
        %v7068 = vshrl.u32 683565275, %v7067
        %v7069 = vshll.u32 683565275, %v7066
        %v7070 = vshrl.u32 2475754826, %v7067
        %v7071 = vor.u32 %v7069, %v7070
        %v7072 = vshll.u32 2475754826, %v7066
        %v7073 = vshrl.u32 2131351028, %v7067
        %v7074 = vor.u32 %v7072, %v7073
        %v7075 = vshll.u32 2131351028, %v7066
        %v7076 = vshrl.u32 2102212464, %v7067
        %v7077 = vor.u32 %v7075, %v7076
        %v7078 = vshll.u32 2102212464, %v7066
        %v7079 = vshrl.u32 920167782, %v7067
        %v7080 = vor.u32 %v7078, %v7079
        %v7081 = vshll.u32 920167782, %v7066
        %v7082 = vshrl.u32 1326507024, %v7067
        %v7083 = vor.u32 %v7081, %v7082
        %vm7084 = vcmp.lt.s32.totalorder %v7065, 1
        %vm7085 = vcmp.lt.s32.totalorder %v7065, 2
        %vm7086 = vcmp.lt.s32.totalorder %v7065, 3
        %vm7087 = vcmp.lt.s32.totalorder %v7065, 4
        %v7088 = vsel %vm7084, %v7068, %v7071
        %v7089 = vsel %vm7087, %v7077, 2102212464
        %v7090 = vsel %vm7086, %v7074, %v7089
        %v7091 = vsel %vm7085, %v7088, %v7090
        %v7092 = vsel %vm7084, %v7071, %v7074
        %v7093 = vsel %vm7087, %v7080, 920167782
        %v7094 = vsel %vm7086, %v7077, %v7093
        %v7095 = vsel %vm7085, %v7092, %v7094
        %v7096 = vsel %vm7084, %v7074, %v7077
        %v7097 = vsel %vm7087, %v7083, 1326507024
        %v7098 = vsel %vm7086, %v7080, %v7097
        %v7099 = vsel %vm7085, %v7096, %v7098
        %v7100 = vshll.u32 %v7060, 8
        %v7101 = vmul.u32.u64.compose %v7100, %v7099
        %v7102 = vextract.low.u32 %v7101
        %v7103 = vextract.high.u32 %v7101
        %v7104 = vmul.u32.u64.compose %v7100, %v7095
        %v7105 = vextract.low.u32 %v7104
        %v7106 = vextract.high.u32 %v7104
        %v7107 = vmul.u32 %v7100, %v7091
        %v7108 = vadd.s32 %v7103, %v7105
        %vm7109 = vc.u32 %v7103, %v7105
        %v7110 = vadd.s32 %v7106, 1
        %v7111 = vsel %vm7109, %v7110, %v7106
        %v7112 = vadd.s32 %v7107, %v7111
        %v7113 = vadd.s32 %v7112, 536870912
        %v7114 = vshrl.u32 %v7113, 30
        %v7115 = vshll.u32 %v7114, 30
        %v7116 = vsub.s32 %v7112, %v7115
        %vm7117 = vcmp.lt.s32.totalorder %v7116, 0
        %v7118 = vsub.s32 0, %v7116
        %v7119 = vsel %vm7117, %v7118, %v7116
        %v7120 = vclz %v7119
        %v7121 = vsub.s32 %v7120, 2
        %vm7122 = vcmp.gt.s32.totalorder 0, %v7121
        %v7123 = vsel %vm7122, 0, %v7121
        %v7124 = vsub.s32 32, %v7123
        %v7125 = vshll.u32 %v7116, %v7123
        %v7126 = vshrl.u32 %v7108, %v7124
        %v7127 = vor.u32 %v7125, %v7126
        %v7128 = vsub.s32 4294967266, %v7123
        %v7129 = vadd.s32 %v7128, 127
        %v7130 = vshll.u32 %v7129, 23
        %v7131 = vor.u32 4788187, %v7130
        %v7132 = vand.u32 2147483647, %v7131
        %v7134 = vcvt.s32.f32 %v7127
        %v7135 = vmul.f32 %v7134, %v7132
        %v7136 = vxor.u32 %v7135, 2147483648
        %v7137 = vsel %vm7054, %v7136, %v7135
        %v7138 = vsub.s32 4, %v7114
        %v7139 = vsel %vm7054, %v7138, %v7114
        %v7140 = vsel %vm7053, %v2645, %v7137
        %v7141 = vsel %vm7053, 0, %v7139
        %v7142 = vcosq.f32.pop %v7140
        %v7143 = vsinq.f32.pop %v7140
        %vm7144 = vweird.f32 %v2645
        %v7145 = vadd.s32 %v7141, 3
        %v7146 = vand.u32 %v7145, 3
        %vm7147 = vcmp.lt.s32.totalorder %v7146, 2
        %vm7148 = vcmp.eq.s32.totalorder %v7146, 0
        %v7149 = vxor.u32 %v7143, 2147483648
        %v7150 = vsel %vm7148, %v7142, %v7149
        %vm7151 = vcmp.eq.s32.totalorder %v7146, 2
        %v7152 = vxor.u32 %v7142, 2147483648
        %v7153 = vsel %vm7151, %v7152, %v7143
        %v7154 = vsel %vm7147, %v7150, %v7153
        %v7155 = vsel %vm7144, nan, %v7154
        %v7156 = vand.u32 2147483647, %v2647
        %vm7157 = vcmp.le.f32.partialorder %v7156, 0.7853982
        %vm7158 = vcmp.lt.s32.totalorder %v2647, 0
        %v7159 = vand.u32 %v2647, 2139095040
        %v7160 = vshrl.u32 %v7159, 23
        %v7161 = vsub.s32 %v7160, 127
        %v7162 = vand.u32 2147483647, %v2647
        %v7163 = vand.u32 %v7162, 8388607
        %v7164 = vor.u32 %v7163, 8388608
        %v7165 = vsub.s32 0, %v7164
        %v7166 = vadd.s32 %v7161, 1
        %vm7167 = vcmp.gt.s32.totalorder %v7166, 0
        %v7168 = vsel %vm7167, %v7166, 0
        %v7169 = vshrl.u32 %v7168, 5
        %v7170 = vand.u32 %v7168, 31
        %v7171 = vsub.s32 32, %v7170
        %v7172 = vshrl.u32 683565275, %v7171
        %v7173 = vshll.u32 683565275, %v7170
        %v7174 = vshrl.u32 2475754826, %v7171
        %v7175 = vor.u32 %v7173, %v7174
        %v7176 = vshll.u32 2475754826, %v7170
        %v7177 = vshrl.u32 2131351028, %v7171
        %v7178 = vor.u32 %v7176, %v7177
        %v7179 = vshll.u32 2131351028, %v7170
        %v7180 = vshrl.u32 2102212464, %v7171
        %v7181 = vor.u32 %v7179, %v7180
        %v7182 = vshll.u32 2102212464, %v7170
        %v7183 = vshrl.u32 920167782, %v7171
        %v7184 = vor.u32 %v7182, %v7183
        %v7185 = vshll.u32 920167782, %v7170
        %v7186 = vshrl.u32 1326507024, %v7171
        %v7187 = vor.u32 %v7185, %v7186
        %vm7188 = vcmp.lt.s32.totalorder %v7169, 1
        %vm7189 = vcmp.lt.s32.totalorder %v7169, 2
        %vm7190 = vcmp.lt.s32.totalorder %v7169, 3
        %vm7191 = vcmp.lt.s32.totalorder %v7169, 4
        %v7192 = vsel %vm7188, %v7172, %v7175
        %v7193 = vsel %vm7191, %v7181, 2102212464
        %v7194 = vsel %vm7190, %v7178, %v7193
        %v7195 = vsel %vm7189, %v7192, %v7194
        %v7196 = vsel %vm7188, %v7175, %v7178
        %v7197 = vsel %vm7191, %v7184, 920167782
        %v7198 = vsel %vm7190, %v7181, %v7197
        %v7199 = vsel %vm7189, %v7196, %v7198
        %v7200 = vsel %vm7188, %v7178, %v7181
        %v7201 = vsel %vm7191, %v7187, 1326507024
        %v7202 = vsel %vm7190, %v7184, %v7201
        %v7203 = vsel %vm7189, %v7200, %v7202
        %v7204 = vshll.u32 %v7164, 8
        %v7205 = vmul.u32.u64.compose %v7204, %v7203
        %v7206 = vextract.low.u32 %v7205
        %v7207 = vextract.high.u32 %v7205
        %v7208 = vmul.u32.u64.compose %v7204, %v7199
        %v7209 = vextract.low.u32 %v7208
        %v7210 = vextract.high.u32 %v7208
        %v7211 = vmul.u32 %v7204, %v7195
        %v7212 = vadd.s32 %v7207, %v7209
        %vm7213 = vc.u32 %v7207, %v7209
        %v7214 = vadd.s32 %v7210, 1
        %v7215 = vsel %vm7213, %v7214, %v7210
        %v7216 = vadd.s32 %v7211, %v7215
        %v7217 = vadd.s32 %v7216, 536870912
        %v7218 = vshrl.u32 %v7217, 30
        %v7219 = vshll.u32 %v7218, 30
        %v7220 = vsub.s32 %v7216, %v7219
        %vm7221 = vcmp.lt.s32.totalorder %v7220, 0
        %v7222 = vsub.s32 0, %v7220
        %v7223 = vsel %vm7221, %v7222, %v7220
        %v7224 = vclz %v7223
        %v7225 = vsub.s32 %v7224, 2
        %vm7226 = vcmp.gt.s32.totalorder 0, %v7225
        %v7227 = vsel %vm7226, 0, %v7225
        %v7228 = vsub.s32 32, %v7227
        %v7229 = vshll.u32 %v7220, %v7227
        %v7230 = vshrl.u32 %v7212, %v7228
        %v7231 = vor.u32 %v7229, %v7230
        %v7232 = vsub.s32 4294967266, %v7227
        %v7233 = vadd.s32 %v7232, 127
        %v7234 = vshll.u32 %v7233, 23
        %v7235 = vor.u32 4788187, %v7234
        %v7236 = vand.u32 2147483647, %v7235
        %v7238 = vcvt.s32.f32 %v7231
        %v7239 = vmul.f32 %v7238, %v7236
        %v7240 = vxor.u32 %v7239, 2147483648
        %v7241 = vsel %vm7158, %v7240, %v7239
        %v7242 = vsub.s32 4, %v7218
        %v7243 = vsel %vm7158, %v7242, %v7218
        %v7244 = vsel %vm7157, %v2647, %v7241
        %v7245 = vsel %vm7157, 0, %v7243
        %v7246 = vcosq.f32.pop %v7244
        %v7247 = vsinq.f32.pop %v7244
        %vm7248 = vweird.f32 %v2647
        %v7249 = vadd.s32 %v7245, 3
        %v7250 = vand.u32 %v7249, 3
        %vm7251 = vcmp.lt.s32.totalorder %v7250, 2
        %vm7252 = vcmp.eq.s32.totalorder %v7250, 0
        %v7253 = vxor.u32 %v7247, 2147483648
        %v7254 = vsel %vm7252, %v7246, %v7253
        %vm7255 = vcmp.eq.s32.totalorder %v7250, 2
        %v7256 = vxor.u32 %v7246, 2147483648
        %v7257 = vsel %vm7255, %v7256, %v7247
        %v7258 = vsel %vm7251, %v7254, %v7257
        %v7259 = vsel %vm7248, nan, %v7258
        %v7260 = vand.u32 2147483647, %v1452
        %vm7261 = vcmp.le.f32.partialorder %v7260, 0.7853982
        %vm7262 = vcmp.lt.s32.totalorder %v1452, 0
        %v7263 = vand.u32 %v1452, 2139095040
        %v7264 = vshrl.u32 %v7263, 23
        %v7265 = vsub.s32 %v7264, 127
        %v7266 = vand.u32 2147483647, %v1452
        %v7267 = vand.u32 %v7266, 8388607
        %v7268 = vor.u32 %v7267, 8388608
        %v7269 = vsub.s32 0, %v7268
        %v7270 = vadd.s32 %v7265, 1
        %vm7271 = vcmp.gt.s32.totalorder %v7270, 0
        %v7272 = vsel %vm7271, %v7270, 0
        %v7273 = vshrl.u32 %v7272, 5
        %v7274 = vand.u32 %v7272, 31
        %v7275 = vsub.s32 32, %v7274
        %v7276 = vshrl.u32 683565275, %v7275
        %v7277 = vshll.u32 683565275, %v7274
        %v7278 = vshrl.u32 2475754826, %v7275
        %v7279 = vor.u32 %v7277, %v7278
        %v7280 = vshll.u32 2475754826, %v7274
        %v7281 = vshrl.u32 2131351028, %v7275
        %v7282 = vor.u32 %v7280, %v7281
        %v7283 = vshll.u32 2131351028, %v7274
        %v7284 = vshrl.u32 2102212464, %v7275
        %v7285 = vor.u32 %v7283, %v7284
        %v7286 = vshll.u32 2102212464, %v7274
        %v7287 = vshrl.u32 920167782, %v7275
        %v7288 = vor.u32 %v7286, %v7287
        %v7289 = vshll.u32 920167782, %v7274
        %v7290 = vshrl.u32 1326507024, %v7275
        %v7291 = vor.u32 %v7289, %v7290
        %vm7292 = vcmp.lt.s32.totalorder %v7273, 1
        %vm7293 = vcmp.lt.s32.totalorder %v7273, 2
        %vm7294 = vcmp.lt.s32.totalorder %v7273, 3
        %vm7295 = vcmp.lt.s32.totalorder %v7273, 4
        %v7296 = vsel %vm7292, %v7276, %v7279
        %v7297 = vsel %vm7295, %v7285, 2102212464
        %v7298 = vsel %vm7294, %v7282, %v7297
        %v7299 = vsel %vm7293, %v7296, %v7298
        %v7300 = vsel %vm7292, %v7279, %v7282
        %v7301 = vsel %vm7295, %v7288, 920167782
        %v7302 = vsel %vm7294, %v7285, %v7301
        %v7303 = vsel %vm7293, %v7300, %v7302
        %v7304 = vsel %vm7292, %v7282, %v7285
        %v7305 = vsel %vm7295, %v7291, 1326507024
        %v7306 = vsel %vm7294, %v7288, %v7305
        %v7307 = vsel %vm7293, %v7304, %v7306
        %v7308 = vshll.u32 %v7268, 8
        %v7309 = vmul.u32.u64.compose %v7308, %v7307
        %v7310 = vextract.low.u32 %v7309
        %v7311 = vextract.high.u32 %v7309
        %v7312 = vmul.u32.u64.compose %v7308, %v7303
        %v7313 = vextract.low.u32 %v7312
        %v7314 = vextract.high.u32 %v7312
        %v7315 = vmul.u32 %v7308, %v7299
        %v7316 = vadd.s32 %v7311, %v7313
        %vm7317 = vc.u32 %v7311, %v7313
        %v7318 = vadd.s32 %v7314, 1
        %v7319 = vsel %vm7317, %v7318, %v7314
        %v7320 = vadd.s32 %v7315, %v7319
        %v7321 = vadd.s32 %v7320, 536870912
        %v7322 = vshrl.u32 %v7321, 30
        %v7323 = vshll.u32 %v7322, 30
        %v7324 = vsub.s32 %v7320, %v7323
        %vm7325 = vcmp.lt.s32.totalorder %v7324, 0
        %v7326 = vsub.s32 0, %v7324
        %v7327 = vsel %vm7325, %v7326, %v7324
        %v7328 = vclz %v7327
        %v7329 = vsub.s32 %v7328, 2
        %vm7330 = vcmp.gt.s32.totalorder 0, %v7329
        %v7331 = vsel %vm7330, 0, %v7329
        %v7332 = vsub.s32 32, %v7331
        %v7333 = vshll.u32 %v7324, %v7331
        %v7334 = vshrl.u32 %v7316, %v7332
        %v7335 = vor.u32 %v7333, %v7334
        %v7336 = vsub.s32 4294967266, %v7331
        %v7337 = vadd.s32 %v7336, 127
        %v7338 = vshll.u32 %v7337, 23
        %v7339 = vor.u32 4788187, %v7338
        %v7340 = vand.u32 2147483647, %v7339
        %v7342 = vcvt.s32.f32 %v7335
        %v7343 = vmul.f32 %v7342, %v7340
        %v7344 = vxor.u32 %v7343, 2147483648
        %v7345 = vsel %vm7262, %v7344, %v7343
        %v7346 = vsub.s32 4, %v7322
        %v7347 = vsel %vm7262, %v7346, %v7322
        %v7348 = vsel %vm7261, %v1452, %v7345
        %v7349 = vsel %vm7261, 0, %v7347
        %v7350 = vcosq.f32.pop %v7348
        %v7351 = vsinq.f32.pop %v7348
        %vm7352 = vweird.f32 %v1452
        %v7353 = vadd.s32 %v7349, 3
        %v7354 = vand.u32 %v7353, 3
        %vm7355 = vcmp.lt.s32.totalorder %v7354, 2
        %vm7356 = vcmp.eq.s32.totalorder %v7354, 0
        %v7357 = vxor.u32 %v7351, 2147483648
        %v7358 = vsel %vm7356, %v7350, %v7357
        %vm7359 = vcmp.eq.s32.totalorder %v7354, 2
        %v7360 = vxor.u32 %v7350, 2147483648
        %v7361 = vsel %vm7359, %v7360, %v7351
        %v7362 = vsel %vm7355, %v7358, %v7361
        %v7363 = vsel %vm7352, nan, %v7362
        %v7364 = vand.u32 2147483647, %v1454
        %vm7365 = vcmp.le.f32.partialorder %v7364, 0.7853982
        %vm7366 = vcmp.lt.s32.totalorder %v1454, 0
        %v7367 = vand.u32 %v1454, 2139095040
        %v7368 = vshrl.u32 %v7367, 23
        %v7369 = vsub.s32 %v7368, 127
        %v7370 = vand.u32 2147483647, %v1454
        %v7371 = vand.u32 %v7370, 8388607
        %v7372 = vor.u32 %v7371, 8388608
        %v7373 = vsub.s32 0, %v7372
        %v7374 = vadd.s32 %v7369, 1
        %vm7375 = vcmp.gt.s32.totalorder %v7374, 0
        %v7376 = vsel %vm7375, %v7374, 0
        %v7377 = vshrl.u32 %v7376, 5
        %v7378 = vand.u32 %v7376, 31
        %v7379 = vsub.s32 32, %v7378
        %v7380 = vshrl.u32 683565275, %v7379
        %v7381 = vshll.u32 683565275, %v7378
        %v7382 = vshrl.u32 2475754826, %v7379
        %v7383 = vor.u32 %v7381, %v7382
        %v7384 = vshll.u32 2475754826, %v7378
        %v7385 = vshrl.u32 2131351028, %v7379
        %v7386 = vor.u32 %v7384, %v7385
        %v7387 = vshll.u32 2131351028, %v7378
        %v7388 = vshrl.u32 2102212464, %v7379
        %v7389 = vor.u32 %v7387, %v7388
        %v7390 = vshll.u32 2102212464, %v7378
        %v7391 = vshrl.u32 920167782, %v7379
        %v7392 = vor.u32 %v7390, %v7391
        %v7393 = vshll.u32 920167782, %v7378
        %v7394 = vshrl.u32 1326507024, %v7379
        %v7395 = vor.u32 %v7393, %v7394
        %vm7396 = vcmp.lt.s32.totalorder %v7377, 1
        %vm7397 = vcmp.lt.s32.totalorder %v7377, 2
        %vm7398 = vcmp.lt.s32.totalorder %v7377, 3
        %vm7399 = vcmp.lt.s32.totalorder %v7377, 4
        %v7400 = vsel %vm7396, %v7380, %v7383
        %v7401 = vsel %vm7399, %v7389, 2102212464
        %v7402 = vsel %vm7398, %v7386, %v7401
        %v7403 = vsel %vm7397, %v7400, %v7402
        %v7404 = vsel %vm7396, %v7383, %v7386
        %v7405 = vsel %vm7399, %v7392, 920167782
        %v7406 = vsel %vm7398, %v7389, %v7405
        %v7407 = vsel %vm7397, %v7404, %v7406
        %v7408 = vsel %vm7396, %v7386, %v7389
        %v7409 = vsel %vm7399, %v7395, 1326507024
        %v7410 = vsel %vm7398, %v7392, %v7409
        %v7411 = vsel %vm7397, %v7408, %v7410
        %v7412 = vshll.u32 %v7372, 8
        %v7413 = vmul.u32.u64.compose %v7412, %v7411
        %v7414 = vextract.low.u32 %v7413
        %v7415 = vextract.high.u32 %v7413
        %v7416 = vmul.u32.u64.compose %v7412, %v7407
        %v7417 = vextract.low.u32 %v7416
        %v7418 = vextract.high.u32 %v7416
        %v7419 = vmul.u32 %v7412, %v7403
        %v7420 = vadd.s32 %v7415, %v7417
        %vm7421 = vc.u32 %v7415, %v7417
        %v7422 = vadd.s32 %v7418, 1
        %v7423 = vsel %vm7421, %v7422, %v7418
        %v7424 = vadd.s32 %v7419, %v7423
        %v7425 = vadd.s32 %v7424, 536870912
        %v7426 = vshrl.u32 %v7425, 30
        %v7427 = vshll.u32 %v7426, 30
        %v7428 = vsub.s32 %v7424, %v7427
        %vm7429 = vcmp.lt.s32.totalorder %v7428, 0
        %v7430 = vsub.s32 0, %v7428
        %v7431 = vsel %vm7429, %v7430, %v7428
        %v7432 = vclz %v7431
        %v7433 = vsub.s32 %v7432, 2
        %vm7434 = vcmp.gt.s32.totalorder 0, %v7433
        %v7435 = vsel %vm7434, 0, %v7433
        %v7436 = vsub.s32 32, %v7435
        %v7437 = vshll.u32 %v7428, %v7435
        %v7438 = vshrl.u32 %v7420, %v7436
        %v7439 = vor.u32 %v7437, %v7438
        %v7440 = vsub.s32 4294967266, %v7435
        %v7441 = vadd.s32 %v7440, 127
        %v7442 = vshll.u32 %v7441, 23
        %v7443 = vor.u32 4788187, %v7442
        %v7444 = vand.u32 2147483647, %v7443
        %v7446 = vcvt.s32.f32 %v7439
        %v7447 = vmul.f32 %v7446, %v7444
        %v7448 = vxor.u32 %v7447, 2147483648
        %v7449 = vsel %vm7366, %v7448, %v7447
        %v7450 = vsub.s32 4, %v7426
        %v7451 = vsel %vm7366, %v7450, %v7426
        %v7452 = vsel %vm7365, %v1454, %v7449
        %v7453 = vsel %vm7365, 0, %v7451
        %v7454 = vcosq.f32.pop %v7452
        %v7455 = vsinq.f32.pop %v7452
        %vm7456 = vweird.f32 %v1454
        %v7457 = vadd.s32 %v7453, 3
        %v7458 = vand.u32 %v7457, 3
        %vm7459 = vcmp.lt.s32.totalorder %v7458, 2
        %vm7460 = vcmp.eq.s32.totalorder %v7458, 0
        %v7461 = vxor.u32 %v7455, 2147483648
        %v7462 = vsel %vm7460, %v7454, %v7461
        %vm7463 = vcmp.eq.s32.totalorder %v7458, 2
        %v7464 = vxor.u32 %v7454, 2147483648
        %v7465 = vsel %vm7463, %v7464, %v7455
        %v7466 = vsel %vm7459, %v7462, %v7465
        %v7467 = vsel %vm7456, nan, %v7466
        %v7468 = vand.u32 2147483647, %v2652
        %vm7469 = vcmp.le.f32.partialorder %v7468, 0.7853982
        %vm7470 = vcmp.lt.s32.totalorder %v2652, 0
        %v7471 = vand.u32 %v2652, 2139095040
        %v7472 = vshrl.u32 %v7471, 23
        %v7473 = vsub.s32 %v7472, 127
        %v7474 = vand.u32 2147483647, %v2652
        %v7475 = vand.u32 %v7474, 8388607
        %v7476 = vor.u32 %v7475, 8388608
        %v7477 = vsub.s32 0, %v7476
        %v7478 = vadd.s32 %v7473, 1
        %vm7479 = vcmp.gt.s32.totalorder %v7478, 0
        %v7480 = vsel %vm7479, %v7478, 0
        %v7481 = vshrl.u32 %v7480, 5
        %v7482 = vand.u32 %v7480, 31
        %v7483 = vsub.s32 32, %v7482
        %v7484 = vshrl.u32 683565275, %v7483
        %v7485 = vshll.u32 683565275, %v7482
        %v7486 = vshrl.u32 2475754826, %v7483
        %v7487 = vor.u32 %v7485, %v7486
        %v7488 = vshll.u32 2475754826, %v7482
        %v7489 = vshrl.u32 2131351028, %v7483
        %v7490 = vor.u32 %v7488, %v7489
        %v7491 = vshll.u32 2131351028, %v7482
        %v7492 = vshrl.u32 2102212464, %v7483
        %v7493 = vor.u32 %v7491, %v7492
        %v7494 = vshll.u32 2102212464, %v7482
        %v7495 = vshrl.u32 920167782, %v7483
        %v7496 = vor.u32 %v7494, %v7495
        %v7497 = vshll.u32 920167782, %v7482
        %v7498 = vshrl.u32 1326507024, %v7483
        %v7499 = vor.u32 %v7497, %v7498
        %vm7500 = vcmp.lt.s32.totalorder %v7481, 1
        %vm7501 = vcmp.lt.s32.totalorder %v7481, 2
        %vm7502 = vcmp.lt.s32.totalorder %v7481, 3
        %vm7503 = vcmp.lt.s32.totalorder %v7481, 4
        %v7504 = vsel %vm7500, %v7484, %v7487
        %v7505 = vsel %vm7503, %v7493, 2102212464
        %v7506 = vsel %vm7502, %v7490, %v7505
        %v7507 = vsel %vm7501, %v7504, %v7506
        %v7508 = vsel %vm7500, %v7487, %v7490
        %v7509 = vsel %vm7503, %v7496, 920167782
        %v7510 = vsel %vm7502, %v7493, %v7509
        %v7511 = vsel %vm7501, %v7508, %v7510
        %v7512 = vsel %vm7500, %v7490, %v7493
        %v7513 = vsel %vm7503, %v7499, 1326507024
        %v7514 = vsel %vm7502, %v7496, %v7513
        %v7515 = vsel %vm7501, %v7512, %v7514
        %v7516 = vshll.u32 %v7476, 8
        %v7517 = vmul.u32.u64.compose %v7516, %v7515
        %v7518 = vextract.low.u32 %v7517
        %v7519 = vextract.high.u32 %v7517
        %v7520 = vmul.u32.u64.compose %v7516, %v7511
        %v7521 = vextract.low.u32 %v7520
        %v7522 = vextract.high.u32 %v7520
        %v7523 = vmul.u32 %v7516, %v7507
        %v7524 = vadd.s32 %v7519, %v7521
        %vm7525 = vc.u32 %v7519, %v7521
        %v7526 = vadd.s32 %v7522, 1
        %v7527 = vsel %vm7525, %v7526, %v7522
        %v7528 = vadd.s32 %v7523, %v7527
        %v7529 = vadd.s32 %v7528, 536870912
        %v7530 = vshrl.u32 %v7529, 30
        %v7531 = vshll.u32 %v7530, 30
        %v7532 = vsub.s32 %v7528, %v7531
        %vm7533 = vcmp.lt.s32.totalorder %v7532, 0
        %v7534 = vsub.s32 0, %v7532
        %v7535 = vsel %vm7533, %v7534, %v7532
        %v7536 = vclz %v7535
        %v7537 = vsub.s32 %v7536, 2
        %vm7538 = vcmp.gt.s32.totalorder 0, %v7537
        %v7539 = vsel %vm7538, 0, %v7537
        %v7540 = vsub.s32 32, %v7539
        %v7541 = vshll.u32 %v7532, %v7539
        %v7542 = vshrl.u32 %v7524, %v7540
        %v7543 = vor.u32 %v7541, %v7542
        %v7544 = vsub.s32 4294967266, %v7539
        %v7545 = vadd.s32 %v7544, 127
        %v7546 = vshll.u32 %v7545, 23
        %v7547 = vor.u32 4788187, %v7546
        %v7548 = vand.u32 2147483647, %v7547
        %v7550 = vcvt.s32.f32 %v7543
        %v7551 = vmul.f32 %v7550, %v7548
        %v7552 = vxor.u32 %v7551, 2147483648
        %v7553 = vsel %vm7470, %v7552, %v7551
        %v7554 = vsub.s32 4, %v7530
        %v7555 = vsel %vm7470, %v7554, %v7530
        %v7556 = vsel %vm7469, %v2652, %v7553
        %v7557 = vsel %vm7469, 0, %v7555
        %v7558 = vcosq.f32.pop %v7556
        %v7559 = vsinq.f32.pop %v7556
        %vm7560 = vweird.f32 %v2652
        %v7561 = vadd.s32 %v7557, 3
        %v7562 = vand.u32 %v7561, 3
        %vm7563 = vcmp.lt.s32.totalorder %v7562, 2
        %vm7564 = vcmp.eq.s32.totalorder %v7562, 0
        %v7565 = vxor.u32 %v7559, 2147483648
        %v7566 = vsel %vm7564, %v7558, %v7565
        %vm7567 = vcmp.eq.s32.totalorder %v7562, 2
        %v7568 = vxor.u32 %v7558, 2147483648
        %v7569 = vsel %vm7567, %v7568, %v7559
        %v7570 = vsel %vm7563, %v7566, %v7569
        %v7571 = vsel %vm7560, nan, %v7570
        %v7572 = vand.u32 2147483647, %v2654
        %vm7573 = vcmp.le.f32.partialorder %v7572, 0.7853982
        %vm7574 = vcmp.lt.s32.totalorder %v2654, 0
        %v7575 = vand.u32 %v2654, 2139095040
        %v7576 = vshrl.u32 %v7575, 23
        %v7577 = vsub.s32 %v7576, 127
        %v7578 = vand.u32 2147483647, %v2654
        %v7579 = vand.u32 %v7578, 8388607
        %v7580 = vor.u32 %v7579, 8388608
        %v7581 = vsub.s32 0, %v7580
        %v7582 = vadd.s32 %v7577, 1
        %vm7583 = vcmp.gt.s32.totalorder %v7582, 0
        %v7584 = vsel %vm7583, %v7582, 0
        %v7585 = vshrl.u32 %v7584, 5
        %v7586 = vand.u32 %v7584, 31
        %v7587 = vsub.s32 32, %v7586
        %v7588 = vshrl.u32 683565275, %v7587
        %v7589 = vshll.u32 683565275, %v7586
        %v7590 = vshrl.u32 2475754826, %v7587
        %v7591 = vor.u32 %v7589, %v7590
        %v7592 = vshll.u32 2475754826, %v7586
        %v7593 = vshrl.u32 2131351028, %v7587
        %v7594 = vor.u32 %v7592, %v7593
        %v7595 = vshll.u32 2131351028, %v7586
        %v7596 = vshrl.u32 2102212464, %v7587
        %v7597 = vor.u32 %v7595, %v7596
        %v7598 = vshll.u32 2102212464, %v7586
        %v7599 = vshrl.u32 920167782, %v7587
        %v7600 = vor.u32 %v7598, %v7599
        %v7601 = vshll.u32 920167782, %v7586
        %v7602 = vshrl.u32 1326507024, %v7587
        %v7603 = vor.u32 %v7601, %v7602
        %vm7604 = vcmp.lt.s32.totalorder %v7585, 1
        %vm7605 = vcmp.lt.s32.totalorder %v7585, 2
        %vm7606 = vcmp.lt.s32.totalorder %v7585, 3
        %vm7607 = vcmp.lt.s32.totalorder %v7585, 4
        %v7608 = vsel %vm7604, %v7588, %v7591
        %v7609 = vsel %vm7607, %v7597, 2102212464
        %v7610 = vsel %vm7606, %v7594, %v7609
        %v7611 = vsel %vm7605, %v7608, %v7610
        %v7612 = vsel %vm7604, %v7591, %v7594
        %v7613 = vsel %vm7607, %v7600, 920167782
        %v7614 = vsel %vm7606, %v7597, %v7613
        %v7615 = vsel %vm7605, %v7612, %v7614
        %v7616 = vsel %vm7604, %v7594, %v7597
        %v7617 = vsel %vm7607, %v7603, 1326507024
        %v7618 = vsel %vm7606, %v7600, %v7617
        %v7619 = vsel %vm7605, %v7616, %v7618
        %v7620 = vshll.u32 %v7580, 8
        %v7621 = vmul.u32.u64.compose %v7620, %v7619
        %v7622 = vextract.low.u32 %v7621
        %v7623 = vextract.high.u32 %v7621
        %v7624 = vmul.u32.u64.compose %v7620, %v7615
        %v7625 = vextract.low.u32 %v7624
        %v7626 = vextract.high.u32 %v7624
        %v7627 = vmul.u32 %v7620, %v7611
        %v7628 = vadd.s32 %v7623, %v7625
        %vm7629 = vc.u32 %v7623, %v7625
        %v7630 = vadd.s32 %v7626, 1
        %v7631 = vsel %vm7629, %v7630, %v7626
        %v7632 = vadd.s32 %v7627, %v7631
        %v7633 = vadd.s32 %v7632, 536870912
        %v7634 = vshrl.u32 %v7633, 30
        %v7635 = vshll.u32 %v7634, 30
        %v7636 = vsub.s32 %v7632, %v7635
        %vm7637 = vcmp.lt.s32.totalorder %v7636, 0
        %v7638 = vsub.s32 0, %v7636
        %v7639 = vsel %vm7637, %v7638, %v7636
        %v7640 = vclz %v7639
        %v7641 = vsub.s32 %v7640, 2
        %vm7642 = vcmp.gt.s32.totalorder 0, %v7641
        %v7643 = vsel %vm7642, 0, %v7641
        %v7644 = vsub.s32 32, %v7643
        %v7645 = vshll.u32 %v7636, %v7643
        %v7646 = vshrl.u32 %v7628, %v7644
        %v7647 = vor.u32 %v7645, %v7646
        %v7648 = vsub.s32 4294967266, %v7643
        %v7649 = vadd.s32 %v7648, 127
        %v7650 = vshll.u32 %v7649, 23
        %v7651 = vor.u32 4788187, %v7650
        %v7652 = vand.u32 2147483647, %v7651
        %v7654 = vcvt.s32.f32 %v7647
        %v7655 = vmul.f32 %v7654, %v7652
        %v7656 = vxor.u32 %v7655, 2147483648
        %v7657 = vsel %vm7574, %v7656, %v7655
        %v7658 = vsub.s32 4, %v7634
        %v7659 = vsel %vm7574, %v7658, %v7634
        %v7660 = vsel %vm7573, %v2654, %v7657
        %v7661 = vsel %vm7573, 0, %v7659
        %v7662 = vcosq.f32.pop %v7660
        %v7663 = vsinq.f32.pop %v7660
        %vm7664 = vweird.f32 %v2654
        %v7665 = vadd.s32 %v7661, 3
        %v7666 = vand.u32 %v7665, 3
        %vm7667 = vcmp.lt.s32.totalorder %v7666, 2
        %vm7668 = vcmp.eq.s32.totalorder %v7666, 0
        %v7669 = vxor.u32 %v7663, 2147483648
        %v7670 = vsel %vm7668, %v7662, %v7669
        %vm7671 = vcmp.eq.s32.totalorder %v7666, 2
        %v7672 = vxor.u32 %v7662, 2147483648
        %v7673 = vsel %vm7671, %v7672, %v7663
        %v7674 = vsel %vm7667, %v7670, %v7673
        %v7675 = vsel %vm7664, nan, %v7674
        %v7676 = vand.u32 2147483647, %v1459
        %vm7677 = vcmp.le.f32.partialorder %v7676, 0.7853982
        %vm7678 = vcmp.lt.s32.totalorder %v1459, 0
        %v7679 = vand.u32 %v1459, 2139095040
        %v7680 = vshrl.u32 %v7679, 23
        %v7681 = vsub.s32 %v7680, 127
        %v7682 = vand.u32 2147483647, %v1459
        %v7683 = vand.u32 %v7682, 8388607
        %v7684 = vor.u32 %v7683, 8388608
        %v7685 = vsub.s32 0, %v7684
        %v7686 = vadd.s32 %v7681, 1
        %vm7687 = vcmp.gt.s32.totalorder %v7686, 0
        %v7688 = vsel %vm7687, %v7686, 0
        %v7689 = vshrl.u32 %v7688, 5
        %v7690 = vand.u32 %v7688, 31
        %v7691 = vsub.s32 32, %v7690
        %v7692 = vshrl.u32 683565275, %v7691
        %v7693 = vshll.u32 683565275, %v7690
        %v7694 = vshrl.u32 2475754826, %v7691
        %v7695 = vor.u32 %v7693, %v7694
        %v7696 = vshll.u32 2475754826, %v7690
        %v7697 = vshrl.u32 2131351028, %v7691
        %v7698 = vor.u32 %v7696, %v7697
        %v7699 = vshll.u32 2131351028, %v7690
        %v7700 = vshrl.u32 2102212464, %v7691
        %v7701 = vor.u32 %v7699, %v7700
        %v7702 = vshll.u32 2102212464, %v7690
        %v7703 = vshrl.u32 920167782, %v7691
        %v7704 = vor.u32 %v7702, %v7703
        %v7705 = vshll.u32 920167782, %v7690
        %v7706 = vshrl.u32 1326507024, %v7691
        %v7707 = vor.u32 %v7705, %v7706
        %vm7708 = vcmp.lt.s32.totalorder %v7689, 1
        %vm7709 = vcmp.lt.s32.totalorder %v7689, 2
        %vm7710 = vcmp.lt.s32.totalorder %v7689, 3
        %vm7711 = vcmp.lt.s32.totalorder %v7689, 4
        %v7712 = vsel %vm7708, %v7692, %v7695
        %v7713 = vsel %vm7711, %v7701, 2102212464
        %v7714 = vsel %vm7710, %v7698, %v7713
        %v7715 = vsel %vm7709, %v7712, %v7714
        %v7716 = vsel %vm7708, %v7695, %v7698
        %v7717 = vsel %vm7711, %v7704, 920167782
        %v7718 = vsel %vm7710, %v7701, %v7717
        %v7719 = vsel %vm7709, %v7716, %v7718
        %v7720 = vsel %vm7708, %v7698, %v7701
        %v7721 = vsel %vm7711, %v7707, 1326507024
        %v7722 = vsel %vm7710, %v7704, %v7721
        %v7723 = vsel %vm7709, %v7720, %v7722
        %v7724 = vshll.u32 %v7684, 8
        %v7725 = vmul.u32.u64.compose %v7724, %v7723
        %v7726 = vextract.low.u32 %v7725
        %v7727 = vextract.high.u32 %v7725
        %v7728 = vmul.u32.u64.compose %v7724, %v7719
        %v7729 = vextract.low.u32 %v7728
        %v7730 = vextract.high.u32 %v7728
        %v7731 = vmul.u32 %v7724, %v7715
        %v7732 = vadd.s32 %v7727, %v7729
        %vm7733 = vc.u32 %v7727, %v7729
        %v7734 = vadd.s32 %v7730, 1
        %v7735 = vsel %vm7733, %v7734, %v7730
        %v7736 = vadd.s32 %v7731, %v7735
        %v7737 = vadd.s32 %v7736, 536870912
        %v7738 = vshrl.u32 %v7737, 30
        %v7739 = vshll.u32 %v7738, 30
        %v7740 = vsub.s32 %v7736, %v7739
        %vm7741 = vcmp.lt.s32.totalorder %v7740, 0
        %v7742 = vsub.s32 0, %v7740
        %v7743 = vsel %vm7741, %v7742, %v7740
        %v7744 = vclz %v7743
        %v7745 = vsub.s32 %v7744, 2
        %vm7746 = vcmp.gt.s32.totalorder 0, %v7745
        %v7747 = vsel %vm7746, 0, %v7745
        %v7748 = vsub.s32 32, %v7747
        %v7749 = vshll.u32 %v7740, %v7747
        %v7750 = vshrl.u32 %v7732, %v7748
        %v7751 = vor.u32 %v7749, %v7750
        %v7752 = vsub.s32 4294967266, %v7747
        %v7753 = vadd.s32 %v7752, 127
        %v7754 = vshll.u32 %v7753, 23
        %v7755 = vor.u32 4788187, %v7754
        %v7756 = vand.u32 2147483647, %v7755
        %v7758 = vcvt.s32.f32 %v7751
        %v7759 = vmul.f32 %v7758, %v7756
        %v7760 = vxor.u32 %v7759, 2147483648
        %v7761 = vsel %vm7678, %v7760, %v7759
        %v7762 = vsub.s32 4, %v7738
        %v7763 = vsel %vm7678, %v7762, %v7738
        %v7764 = vsel %vm7677, %v1459, %v7761
        %v7765 = vsel %vm7677, 0, %v7763
        %v7766 = vcosq.f32.pop %v7764
        %v7767 = vsinq.f32.pop %v7764
        %vm7768 = vweird.f32 %v1459
        %v7769 = vadd.s32 %v7765, 3
        %v7770 = vand.u32 %v7769, 3
        %vm7771 = vcmp.lt.s32.totalorder %v7770, 2
        %vm7772 = vcmp.eq.s32.totalorder %v7770, 0
        %v7773 = vxor.u32 %v7767, 2147483648
        %v7774 = vsel %vm7772, %v7766, %v7773
        %vm7775 = vcmp.eq.s32.totalorder %v7770, 2
        %v7776 = vxor.u32 %v7766, 2147483648
        %v7777 = vsel %vm7775, %v7776, %v7767
        %v7778 = vsel %vm7771, %v7774, %v7777
        %v7779 = vsel %vm7768, nan, %v7778
        %v7780 = vand.u32 2147483647, %v1461
        %vm7781 = vcmp.le.f32.partialorder %v7780, 0.7853982
        %vm7782 = vcmp.lt.s32.totalorder %v1461, 0
        %v7783 = vand.u32 %v1461, 2139095040
        %v7784 = vshrl.u32 %v7783, 23
        %v7785 = vsub.s32 %v7784, 127
        %v7786 = vand.u32 2147483647, %v1461
        %v7787 = vand.u32 %v7786, 8388607
        %v7788 = vor.u32 %v7787, 8388608
        %v7789 = vsub.s32 0, %v7788
        %v7790 = vadd.s32 %v7785, 1
        %vm7791 = vcmp.gt.s32.totalorder %v7790, 0
        %v7792 = vsel %vm7791, %v7790, 0
        %v7793 = vshrl.u32 %v7792, 5
        %v7794 = vand.u32 %v7792, 31
        %v7795 = vsub.s32 32, %v7794
        %v7796 = vshrl.u32 683565275, %v7795
        %v7797 = vshll.u32 683565275, %v7794
        %v7798 = vshrl.u32 2475754826, %v7795
        %v7799 = vor.u32 %v7797, %v7798
        %v7800 = vshll.u32 2475754826, %v7794
        %v7801 = vshrl.u32 2131351028, %v7795
        %v7802 = vor.u32 %v7800, %v7801
        %v7803 = vshll.u32 2131351028, %v7794
        %v7804 = vshrl.u32 2102212464, %v7795
        %v7805 = vor.u32 %v7803, %v7804
        %v7806 = vshll.u32 2102212464, %v7794
        %v7807 = vshrl.u32 920167782, %v7795
        %v7808 = vor.u32 %v7806, %v7807
        %v7809 = vshll.u32 920167782, %v7794
        %v7810 = vshrl.u32 1326507024, %v7795
        %v7811 = vor.u32 %v7809, %v7810
        %vm7812 = vcmp.lt.s32.totalorder %v7793, 1
        %vm7813 = vcmp.lt.s32.totalorder %v7793, 2
        %vm7814 = vcmp.lt.s32.totalorder %v7793, 3
        %vm7815 = vcmp.lt.s32.totalorder %v7793, 4
        %v7816 = vsel %vm7812, %v7796, %v7799
        %v7817 = vsel %vm7815, %v7805, 2102212464
        %v7818 = vsel %vm7814, %v7802, %v7817
        %v7819 = vsel %vm7813, %v7816, %v7818
        %v7820 = vsel %vm7812, %v7799, %v7802
        %v7821 = vsel %vm7815, %v7808, 920167782
        %v7822 = vsel %vm7814, %v7805, %v7821
        %v7823 = vsel %vm7813, %v7820, %v7822
        %v7824 = vsel %vm7812, %v7802, %v7805
        %v7825 = vsel %vm7815, %v7811, 1326507024
        %v7826 = vsel %vm7814, %v7808, %v7825
        %v7827 = vsel %vm7813, %v7824, %v7826
        %v7828 = vshll.u32 %v7788, 8
        %v7829 = vmul.u32.u64.compose %v7828, %v7827
        %v7830 = vextract.low.u32 %v7829
        %v7831 = vextract.high.u32 %v7829
        %v7832 = vmul.u32.u64.compose %v7828, %v7823
        %v7833 = vextract.low.u32 %v7832
        %v7834 = vextract.high.u32 %v7832
        %v7835 = vmul.u32 %v7828, %v7819
        %v7836 = vadd.s32 %v7831, %v7833
        %vm7837 = vc.u32 %v7831, %v7833
        %v7838 = vadd.s32 %v7834, 1
        %v7839 = vsel %vm7837, %v7838, %v7834
        %v7840 = vadd.s32 %v7835, %v7839
        %v7841 = vadd.s32 %v7840, 536870912
        %v7842 = vshrl.u32 %v7841, 30
        %v7843 = vshll.u32 %v7842, 30
        %v7844 = vsub.s32 %v7840, %v7843
        %vm7845 = vcmp.lt.s32.totalorder %v7844, 0
        %v7846 = vsub.s32 0, %v7844
        %v7847 = vsel %vm7845, %v7846, %v7844
        %v7848 = vclz %v7847
        %v7849 = vsub.s32 %v7848, 2
        %vm7850 = vcmp.gt.s32.totalorder 0, %v7849
        %v7851 = vsel %vm7850, 0, %v7849
        %v7852 = vsub.s32 32, %v7851
        %v7853 = vshll.u32 %v7844, %v7851
        %v7854 = vshrl.u32 %v7836, %v7852
        %v7855 = vor.u32 %v7853, %v7854
        %v7856 = vsub.s32 4294967266, %v7851
        %v7857 = vadd.s32 %v7856, 127
        %v7858 = vshll.u32 %v7857, 23
        %v7859 = vor.u32 4788187, %v7858
        %v7860 = vand.u32 2147483647, %v7859
        %v7862 = vcvt.s32.f32 %v7855
        %v7863 = vmul.f32 %v7862, %v7860
        %v7864 = vxor.u32 %v7863, 2147483648
        %v7865 = vsel %vm7782, %v7864, %v7863
        %v7866 = vsub.s32 4, %v7842
        %v7867 = vsel %vm7782, %v7866, %v7842
        %v7868 = vsel %vm7781, %v1461, %v7865
        %v7869 = vsel %vm7781, 0, %v7867
        %v7870 = vcosq.f32.pop %v7868
        %v7871 = vsinq.f32.pop %v7868
        %vm7872 = vweird.f32 %v1461
        %v7873 = vadd.s32 %v7869, 3
        %v7874 = vand.u32 %v7873, 3
        %vm7875 = vcmp.lt.s32.totalorder %v7874, 2
        %vm7876 = vcmp.eq.s32.totalorder %v7874, 0
        %v7877 = vxor.u32 %v7871, 2147483648
        %v7878 = vsel %vm7876, %v7870, %v7877
        %vm7879 = vcmp.eq.s32.totalorder %v7874, 2
        %v7880 = vxor.u32 %v7870, 2147483648
        %v7881 = vsel %vm7879, %v7880, %v7871
        %v7882 = vsel %vm7875, %v7878, %v7881
        %v7883 = vsel %vm7872, nan, %v7882
        %v7884 = vand.u32 2147483647, %v2659
        %vm7885 = vcmp.le.f32.partialorder %v7884, 0.7853982
        %vm7886 = vcmp.lt.s32.totalorder %v2659, 0
        %v7887 = vand.u32 %v2659, 2139095040
        %v7888 = vshrl.u32 %v7887, 23
        %v7889 = vsub.s32 %v7888, 127
        %v7890 = vand.u32 2147483647, %v2659
        %v7891 = vand.u32 %v7890, 8388607
        %v7892 = vor.u32 %v7891, 8388608
        %v7893 = vsub.s32 0, %v7892
        %v7894 = vadd.s32 %v7889, 1
        %vm7895 = vcmp.gt.s32.totalorder %v7894, 0
        %v7896 = vsel %vm7895, %v7894, 0
        %v7897 = vshrl.u32 %v7896, 5
        %v7898 = vand.u32 %v7896, 31
        %v7899 = vsub.s32 32, %v7898
        %v7900 = vshrl.u32 683565275, %v7899
        %v7901 = vshll.u32 683565275, %v7898
        %v7902 = vshrl.u32 2475754826, %v7899
        %v7903 = vor.u32 %v7901, %v7902
        %v7904 = vshll.u32 2475754826, %v7898
        %v7905 = vshrl.u32 2131351028, %v7899
        %v7906 = vor.u32 %v7904, %v7905
        %v7907 = vshll.u32 2131351028, %v7898
        %v7908 = vshrl.u32 2102212464, %v7899
        %v7909 = vor.u32 %v7907, %v7908
        %v7910 = vshll.u32 2102212464, %v7898
        %v7911 = vshrl.u32 920167782, %v7899
        %v7912 = vor.u32 %v7910, %v7911
        %v7913 = vshll.u32 920167782, %v7898
        %v7914 = vshrl.u32 1326507024, %v7899
        %v7915 = vor.u32 %v7913, %v7914
        %vm7916 = vcmp.lt.s32.totalorder %v7897, 1
        %vm7917 = vcmp.lt.s32.totalorder %v7897, 2
        %vm7918 = vcmp.lt.s32.totalorder %v7897, 3
        %vm7919 = vcmp.lt.s32.totalorder %v7897, 4
        %v7920 = vsel %vm7916, %v7900, %v7903
        %v7921 = vsel %vm7919, %v7909, 2102212464
        %v7922 = vsel %vm7918, %v7906, %v7921
        %v7923 = vsel %vm7917, %v7920, %v7922
        %v7924 = vsel %vm7916, %v7903, %v7906
        %v7925 = vsel %vm7919, %v7912, 920167782
        %v7926 = vsel %vm7918, %v7909, %v7925
        %v7927 = vsel %vm7917, %v7924, %v7926
        %v7928 = vsel %vm7916, %v7906, %v7909
        %v7929 = vsel %vm7919, %v7915, 1326507024
        %v7930 = vsel %vm7918, %v7912, %v7929
        %v7931 = vsel %vm7917, %v7928, %v7930
        %v7932 = vshll.u32 %v7892, 8
        %v7933 = vmul.u32.u64.compose %v7932, %v7931
        %v7934 = vextract.low.u32 %v7933
        %v7935 = vextract.high.u32 %v7933
        %v7936 = vmul.u32.u64.compose %v7932, %v7927
        %v7937 = vextract.low.u32 %v7936
        %v7938 = vextract.high.u32 %v7936
        %v7939 = vmul.u32 %v7932, %v7923
        %v7940 = vadd.s32 %v7935, %v7937
        %vm7941 = vc.u32 %v7935, %v7937
        %v7942 = vadd.s32 %v7938, 1
        %v7943 = vsel %vm7941, %v7942, %v7938
        %v7944 = vadd.s32 %v7939, %v7943
        %v7945 = vadd.s32 %v7944, 536870912
        %v7946 = vshrl.u32 %v7945, 30
        %v7947 = vshll.u32 %v7946, 30
        %v7948 = vsub.s32 %v7944, %v7947
        %vm7949 = vcmp.lt.s32.totalorder %v7948, 0
        %v7950 = vsub.s32 0, %v7948
        %v7951 = vsel %vm7949, %v7950, %v7948
        %v7952 = vclz %v7951
        %v7953 = vsub.s32 %v7952, 2
        %vm7954 = vcmp.gt.s32.totalorder 0, %v7953
        %v7955 = vsel %vm7954, 0, %v7953
        %v7956 = vsub.s32 32, %v7955
        %v7957 = vshll.u32 %v7948, %v7955
        %v7958 = vshrl.u32 %v7940, %v7956
        %v7959 = vor.u32 %v7957, %v7958
        %v7960 = vsub.s32 4294967266, %v7955
        %v7961 = vadd.s32 %v7960, 127
        %v7962 = vshll.u32 %v7961, 23
        %v7963 = vor.u32 4788187, %v7962
        %v7964 = vand.u32 2147483647, %v7963
        %v7966 = vcvt.s32.f32 %v7959
        %v7967 = vmul.f32 %v7966, %v7964
        %v7968 = vxor.u32 %v7967, 2147483648
        %v7969 = vsel %vm7886, %v7968, %v7967
        %v7970 = vsub.s32 4, %v7946
        %v7971 = vsel %vm7886, %v7970, %v7946
        %v7972 = vsel %vm7885, %v2659, %v7969
        %v7973 = vsel %vm7885, 0, %v7971
        %v7974 = vcosq.f32.pop %v7972
        %v7975 = vsinq.f32.pop %v7972
        %vm7976 = vweird.f32 %v2659
        %v7977 = vadd.s32 %v7973, 3
        %v7978 = vand.u32 %v7977, 3
        %vm7979 = vcmp.lt.s32.totalorder %v7978, 2
        %vm7980 = vcmp.eq.s32.totalorder %v7978, 0
        %v7981 = vxor.u32 %v7975, 2147483648
        %v7982 = vsel %vm7980, %v7974, %v7981
        %vm7983 = vcmp.eq.s32.totalorder %v7978, 2
        %v7984 = vxor.u32 %v7974, 2147483648
        %v7985 = vsel %vm7983, %v7984, %v7975
        %v7986 = vsel %vm7979, %v7982, %v7985
        %v7987 = vsel %vm7976, nan, %v7986
        %v7988 = vand.u32 2147483647, %v2661
        %vm7989 = vcmp.le.f32.partialorder %v7988, 0.7853982
        %vm7990 = vcmp.lt.s32.totalorder %v2661, 0
        %v7991 = vand.u32 %v2661, 2139095040
        %v7992 = vshrl.u32 %v7991, 23
        %v7993 = vsub.s32 %v7992, 127
        %v7994 = vand.u32 2147483647, %v2661
        %v7995 = vand.u32 %v7994, 8388607
        %v7996 = vor.u32 %v7995, 8388608
        %v7997 = vsub.s32 0, %v7996
        %v7998 = vadd.s32 %v7993, 1
        %vm7999 = vcmp.gt.s32.totalorder %v7998, 0
        %v8000 = vsel %vm7999, %v7998, 0
        %v8001 = vshrl.u32 %v8000, 5
        %v8002 = vand.u32 %v8000, 31
        %v8003 = vsub.s32 32, %v8002
        %v8004 = vshrl.u32 683565275, %v8003
        %v8005 = vshll.u32 683565275, %v8002
        %v8006 = vshrl.u32 2475754826, %v8003
        %v8007 = vor.u32 %v8005, %v8006
        %v8008 = vshll.u32 2475754826, %v8002
        %v8009 = vshrl.u32 2131351028, %v8003
        %v8010 = vor.u32 %v8008, %v8009
        %v8011 = vshll.u32 2131351028, %v8002
        %v8012 = vshrl.u32 2102212464, %v8003
        %v8013 = vor.u32 %v8011, %v8012
        %v8014 = vshll.u32 2102212464, %v8002
        %v8015 = vshrl.u32 920167782, %v8003
        %v8016 = vor.u32 %v8014, %v8015
        %v8017 = vshll.u32 920167782, %v8002
        %v8018 = vshrl.u32 1326507024, %v8003
        %v8019 = vor.u32 %v8017, %v8018
        %vm8020 = vcmp.lt.s32.totalorder %v8001, 1
        %vm8021 = vcmp.lt.s32.totalorder %v8001, 2
        %vm8022 = vcmp.lt.s32.totalorder %v8001, 3
        %vm8023 = vcmp.lt.s32.totalorder %v8001, 4
        %v8024 = vsel %vm8020, %v8004, %v8007
        %v8025 = vsel %vm8023, %v8013, 2102212464
        %v8026 = vsel %vm8022, %v8010, %v8025
        %v8027 = vsel %vm8021, %v8024, %v8026
        %v8028 = vsel %vm8020, %v8007, %v8010
        %v8029 = vsel %vm8023, %v8016, 920167782
        %v8030 = vsel %vm8022, %v8013, %v8029
        %v8031 = vsel %vm8021, %v8028, %v8030
        %v8032 = vsel %vm8020, %v8010, %v8013
        %v8033 = vsel %vm8023, %v8019, 1326507024
        %v8034 = vsel %vm8022, %v8016, %v8033
        %v8035 = vsel %vm8021, %v8032, %v8034
        %v8036 = vshll.u32 %v7996, 8
        %v8037 = vmul.u32.u64.compose %v8036, %v8035
        %v8038 = vextract.low.u32 %v8037
        %v8039 = vextract.high.u32 %v8037
        %v8040 = vmul.u32.u64.compose %v8036, %v8031
        %v8041 = vextract.low.u32 %v8040
        %v8042 = vextract.high.u32 %v8040
        %v8043 = vmul.u32 %v8036, %v8027
        %v8044 = vadd.s32 %v8039, %v8041
        %vm8045 = vc.u32 %v8039, %v8041
        %v8046 = vadd.s32 %v8042, 1
        %v8047 = vsel %vm8045, %v8046, %v8042
        %v8048 = vadd.s32 %v8043, %v8047
        %v8049 = vadd.s32 %v8048, 536870912
        %v8050 = vshrl.u32 %v8049, 30
        %v8051 = vshll.u32 %v8050, 30
        %v8052 = vsub.s32 %v8048, %v8051
        %vm8053 = vcmp.lt.s32.totalorder %v8052, 0
        %v8054 = vsub.s32 0, %v8052
        %v8055 = vsel %vm8053, %v8054, %v8052
        %v8056 = vclz %v8055
        %v8057 = vsub.s32 %v8056, 2
        %vm8058 = vcmp.gt.s32.totalorder 0, %v8057
        %v8059 = vsel %vm8058, 0, %v8057
        %v8060 = vsub.s32 32, %v8059
        %v8061 = vshll.u32 %v8052, %v8059
        %v8062 = vshrl.u32 %v8044, %v8060
        %v8063 = vor.u32 %v8061, %v8062
        %v8064 = vsub.s32 4294967266, %v8059
        %v8065 = vadd.s32 %v8064, 127
        %v8066 = vshll.u32 %v8065, 23
        %v8067 = vor.u32 4788187, %v8066
        %v8068 = vand.u32 2147483647, %v8067
        %v8070 = vcvt.s32.f32 %v8063
        %v8071 = vmul.f32 %v8070, %v8068
        %v8072 = vxor.u32 %v8071, 2147483648
        %v8073 = vsel %vm7990, %v8072, %v8071
        %v8074 = vsub.s32 4, %v8050
        %v8075 = vsel %vm7990, %v8074, %v8050
        %v8076 = vsel %vm7989, %v2661, %v8073
        %v8077 = vsel %vm7989, 0, %v8075
        %v8078 = vcosq.f32.pop %v8076
        %v8079 = vsinq.f32.pop %v8076
        %vm8080 = vweird.f32 %v2661
        %v8081 = vadd.s32 %v8077, 3
        %v8082 = vand.u32 %v8081, 3
        %vm8083 = vcmp.lt.s32.totalorder %v8082, 2
        %vm8084 = vcmp.eq.s32.totalorder %v8082, 0
        %v8085 = vxor.u32 %v8079, 2147483648
        %v8086 = vsel %vm8084, %v8078, %v8085
        %vm8087 = vcmp.eq.s32.totalorder %v8082, 2
        %v8088 = vxor.u32 %v8078, 2147483648
        %v8089 = vsel %vm8087, %v8088, %v8079
        %v8090 = vsel %vm8083, %v8086, %v8089
        %v8091 = vsel %vm8080, nan, %v8090
        %v8092 = vand.u32 2147483647, %v1466
        %vm8093 = vcmp.le.f32.partialorder %v8092, 0.7853982
        %vm8094 = vcmp.lt.s32.totalorder %v1466, 0
        %v8095 = vand.u32 %v1466, 2139095040
        %v8096 = vshrl.u32 %v8095, 23
        %v8097 = vsub.s32 %v8096, 127
        %v8098 = vand.u32 2147483647, %v1466
        %v8099 = vand.u32 %v8098, 8388607
        %v8100 = vor.u32 %v8099, 8388608
        %v8101 = vsub.s32 0, %v8100
        %v8102 = vadd.s32 %v8097, 1
        %vm8103 = vcmp.gt.s32.totalorder %v8102, 0
        %v8104 = vsel %vm8103, %v8102, 0
        %v8105 = vshrl.u32 %v8104, 5
        %v8106 = vand.u32 %v8104, 31
        %v8107 = vsub.s32 32, %v8106
        %v8108 = vshrl.u32 683565275, %v8107
        %v8109 = vshll.u32 683565275, %v8106
        %v8110 = vshrl.u32 2475754826, %v8107
        %v8111 = vor.u32 %v8109, %v8110
        %v8112 = vshll.u32 2475754826, %v8106
        %v8113 = vshrl.u32 2131351028, %v8107
        %v8114 = vor.u32 %v8112, %v8113
        %v8115 = vshll.u32 2131351028, %v8106
        %v8116 = vshrl.u32 2102212464, %v8107
        %v8117 = vor.u32 %v8115, %v8116
        %v8118 = vshll.u32 2102212464, %v8106
        %v8119 = vshrl.u32 920167782, %v8107
        %v8120 = vor.u32 %v8118, %v8119
        %v8121 = vshll.u32 920167782, %v8106
        %v8122 = vshrl.u32 1326507024, %v8107
        %v8123 = vor.u32 %v8121, %v8122
        %vm8124 = vcmp.lt.s32.totalorder %v8105, 1
        %vm8125 = vcmp.lt.s32.totalorder %v8105, 2
        %vm8126 = vcmp.lt.s32.totalorder %v8105, 3
        %vm8127 = vcmp.lt.s32.totalorder %v8105, 4
        %v8128 = vsel %vm8124, %v8108, %v8111
        %v8129 = vsel %vm8127, %v8117, 2102212464
        %v8130 = vsel %vm8126, %v8114, %v8129
        %v8131 = vsel %vm8125, %v8128, %v8130
        %v8132 = vsel %vm8124, %v8111, %v8114
        %v8133 = vsel %vm8127, %v8120, 920167782
        %v8134 = vsel %vm8126, %v8117, %v8133
        %v8135 = vsel %vm8125, %v8132, %v8134
        %v8136 = vsel %vm8124, %v8114, %v8117
        %v8137 = vsel %vm8127, %v8123, 1326507024
        %v8138 = vsel %vm8126, %v8120, %v8137
        %v8139 = vsel %vm8125, %v8136, %v8138
        %v8140 = vshll.u32 %v8100, 8
        %v8141 = vmul.u32.u64.compose %v8140, %v8139
        %v8142 = vextract.low.u32 %v8141
        %v8143 = vextract.high.u32 %v8141
        %v8144 = vmul.u32.u64.compose %v8140, %v8135
        %v8145 = vextract.low.u32 %v8144
        %v8146 = vextract.high.u32 %v8144
        %v8147 = vmul.u32 %v8140, %v8131
        %v8148 = vadd.s32 %v8143, %v8145
        %vm8149 = vc.u32 %v8143, %v8145
        %v8150 = vadd.s32 %v8146, 1
        %v8151 = vsel %vm8149, %v8150, %v8146
        %v8152 = vadd.s32 %v8147, %v8151
        %v8153 = vadd.s32 %v8152, 536870912
        %v8154 = vshrl.u32 %v8153, 30
        %v8155 = vshll.u32 %v8154, 30
        %v8156 = vsub.s32 %v8152, %v8155
        %vm8157 = vcmp.lt.s32.totalorder %v8156, 0
        %v8158 = vsub.s32 0, %v8156
        %v8159 = vsel %vm8157, %v8158, %v8156
        %v8160 = vclz %v8159
        %v8161 = vsub.s32 %v8160, 2
        %vm8162 = vcmp.gt.s32.totalorder 0, %v8161
        %v8163 = vsel %vm8162, 0, %v8161
        %v8164 = vsub.s32 32, %v8163
        %v8165 = vshll.u32 %v8156, %v8163
        %v8166 = vshrl.u32 %v8148, %v8164
        %v8167 = vor.u32 %v8165, %v8166
        %v8168 = vsub.s32 4294967266, %v8163
        %v8169 = vadd.s32 %v8168, 127
        %v8170 = vshll.u32 %v8169, 23
        %v8171 = vor.u32 4788187, %v8170
        %v8172 = vand.u32 2147483647, %v8171
        %v8174 = vcvt.s32.f32 %v8167
        %v8175 = vmul.f32 %v8174, %v8172
        %v8176 = vxor.u32 %v8175, 2147483648
        %v8177 = vsel %vm8094, %v8176, %v8175
        %v8178 = vsub.s32 4, %v8154
        %v8179 = vsel %vm8094, %v8178, %v8154
        %v8180 = vsel %vm8093, %v1466, %v8177
        %v8181 = vsel %vm8093, 0, %v8179
        %v8182 = vcosq.f32.pop %v8180
        %v8183 = vsinq.f32.pop %v8180
        %vm8184 = vweird.f32 %v1466
        %v8185 = vadd.s32 %v8181, 3
        %v8186 = vand.u32 %v8185, 3
        %vm8187 = vcmp.lt.s32.totalorder %v8186, 2
        %vm8188 = vcmp.eq.s32.totalorder %v8186, 0
        %v8189 = vxor.u32 %v8183, 2147483648
        %v8190 = vsel %vm8188, %v8182, %v8189
        %vm8191 = vcmp.eq.s32.totalorder %v8186, 2
        %v8192 = vxor.u32 %v8182, 2147483648
        %v8193 = vsel %vm8191, %v8192, %v8183
        %v8194 = vsel %vm8187, %v8190, %v8193
        %v8195 = vsel %vm8184, nan, %v8194
        %v8196 = vand.u32 2147483647, %v1468
        %vm8197 = vcmp.le.f32.partialorder %v8196, 0.7853982
        %vm8198 = vcmp.lt.s32.totalorder %v1468, 0
        %v8199 = vand.u32 %v1468, 2139095040
        %v8200 = vshrl.u32 %v8199, 23
        %v8201 = vsub.s32 %v8200, 127
        %v8202 = vand.u32 2147483647, %v1468
        %v8203 = vand.u32 %v8202, 8388607
        %v8204 = vor.u32 %v8203, 8388608
        %v8205 = vsub.s32 0, %v8204
        %v8206 = vadd.s32 %v8201, 1
        %vm8207 = vcmp.gt.s32.totalorder %v8206, 0
        %v8208 = vsel %vm8207, %v8206, 0
        %v8209 = vshrl.u32 %v8208, 5
        %v8210 = vand.u32 %v8208, 31
        %v8211 = vsub.s32 32, %v8210
        %v8212 = vshrl.u32 683565275, %v8211
        %v8213 = vshll.u32 683565275, %v8210
        %v8214 = vshrl.u32 2475754826, %v8211
        %v8215 = vor.u32 %v8213, %v8214
        %v8216 = vshll.u32 2475754826, %v8210
        %v8217 = vshrl.u32 2131351028, %v8211
        %v8218 = vor.u32 %v8216, %v8217
        %v8219 = vshll.u32 2131351028, %v8210
        %v8220 = vshrl.u32 2102212464, %v8211
        %v8221 = vor.u32 %v8219, %v8220
        %v8222 = vshll.u32 2102212464, %v8210
        %v8223 = vshrl.u32 920167782, %v8211
        %v8224 = vor.u32 %v8222, %v8223
        %v8225 = vshll.u32 920167782, %v8210
        %v8226 = vshrl.u32 1326507024, %v8211
        %v8227 = vor.u32 %v8225, %v8226
        %vm8228 = vcmp.lt.s32.totalorder %v8209, 1
        %vm8229 = vcmp.lt.s32.totalorder %v8209, 2
        %vm8230 = vcmp.lt.s32.totalorder %v8209, 3
        %vm8231 = vcmp.lt.s32.totalorder %v8209, 4
        %v8232 = vsel %vm8228, %v8212, %v8215
        %v8233 = vsel %vm8231, %v8221, 2102212464
        %v8234 = vsel %vm8230, %v8218, %v8233
        %v8235 = vsel %vm8229, %v8232, %v8234
        %v8236 = vsel %vm8228, %v8215, %v8218
        %v8237 = vsel %vm8231, %v8224, 920167782
        %v8238 = vsel %vm8230, %v8221, %v8237
        %v8239 = vsel %vm8229, %v8236, %v8238
        %v8240 = vsel %vm8228, %v8218, %v8221
        %v8241 = vsel %vm8231, %v8227, 1326507024
        %v8242 = vsel %vm8230, %v8224, %v8241
        %v8243 = vsel %vm8229, %v8240, %v8242
        %v8244 = vshll.u32 %v8204, 8
        %v8245 = vmul.u32.u64.compose %v8244, %v8243
        %v8246 = vextract.low.u32 %v8245
        %v8247 = vextract.high.u32 %v8245
        %v8248 = vmul.u32.u64.compose %v8244, %v8239
        %v8249 = vextract.low.u32 %v8248
        %v8250 = vextract.high.u32 %v8248
        %v8251 = vmul.u32 %v8244, %v8235
        %v8252 = vadd.s32 %v8247, %v8249
        %vm8253 = vc.u32 %v8247, %v8249
        %v8254 = vadd.s32 %v8250, 1
        %v8255 = vsel %vm8253, %v8254, %v8250
        %v8256 = vadd.s32 %v8251, %v8255
        %v8257 = vadd.s32 %v8256, 536870912
        %v8258 = vshrl.u32 %v8257, 30
        %v8259 = vshll.u32 %v8258, 30
        %v8260 = vsub.s32 %v8256, %v8259
        %vm8261 = vcmp.lt.s32.totalorder %v8260, 0
        %v8262 = vsub.s32 0, %v8260
        %v8263 = vsel %vm8261, %v8262, %v8260
        %v8264 = vclz %v8263
        %v8265 = vsub.s32 %v8264, 2
        %vm8266 = vcmp.gt.s32.totalorder 0, %v8265
        %v8267 = vsel %vm8266, 0, %v8265
        %v8268 = vsub.s32 32, %v8267
        %v8269 = vshll.u32 %v8260, %v8267
        %v8270 = vshrl.u32 %v8252, %v8268
        %v8271 = vor.u32 %v8269, %v8270
        %v8272 = vsub.s32 4294967266, %v8267
        %v8273 = vadd.s32 %v8272, 127
        %v8274 = vshll.u32 %v8273, 23
        %v8275 = vor.u32 4788187, %v8274
        %v8276 = vand.u32 2147483647, %v8275
        %v8278 = vcvt.s32.f32 %v8271
        %v8279 = vmul.f32 %v8278, %v8276
        %v8280 = vxor.u32 %v8279, 2147483648
        %v8281 = vsel %vm8198, %v8280, %v8279
        %v8282 = vsub.s32 4, %v8258
        %v8283 = vsel %vm8198, %v8282, %v8258
        %v8284 = vsel %vm8197, %v1468, %v8281
        %v8285 = vsel %vm8197, 0, %v8283
        %v8286 = vcosq.f32.pop %v8284
        %v8287 = vsinq.f32.pop %v8284
        %vm8288 = vweird.f32 %v1468
        %v8289 = vadd.s32 %v8285, 3
        %v8290 = vand.u32 %v8289, 3
        %vm8291 = vcmp.lt.s32.totalorder %v8290, 2
        %vm8292 = vcmp.eq.s32.totalorder %v8290, 0
        %v8293 = vxor.u32 %v8287, 2147483648
        %v8294 = vsel %vm8292, %v8286, %v8293
        %vm8295 = vcmp.eq.s32.totalorder %v8290, 2
        %v8296 = vxor.u32 %v8286, 2147483648
        %v8297 = vsel %vm8295, %v8296, %v8287
        %v8298 = vsel %vm8291, %v8294, %v8297
        %v8299 = vsel %vm8288, nan, %v8298
        %v8300 = vand.u32 2147483647, %v2666
        %vm8301 = vcmp.le.f32.partialorder %v8300, 0.7853982
        %vm8302 = vcmp.lt.s32.totalorder %v2666, 0
        %v8303 = vand.u32 %v2666, 2139095040
        %v8304 = vshrl.u32 %v8303, 23
        %v8305 = vsub.s32 %v8304, 127
        %v8306 = vand.u32 2147483647, %v2666
        %v8307 = vand.u32 %v8306, 8388607
        %v8308 = vor.u32 %v8307, 8388608
        %v8309 = vsub.s32 0, %v8308
        %v8310 = vadd.s32 %v8305, 1
        %vm8311 = vcmp.gt.s32.totalorder %v8310, 0
        %v8312 = vsel %vm8311, %v8310, 0
        %v8313 = vshrl.u32 %v8312, 5
        %v8314 = vand.u32 %v8312, 31
        %v8315 = vsub.s32 32, %v8314
        %v8316 = vshrl.u32 683565275, %v8315
        %v8317 = vshll.u32 683565275, %v8314
        %v8318 = vshrl.u32 2475754826, %v8315
        %v8319 = vor.u32 %v8317, %v8318
        %v8320 = vshll.u32 2475754826, %v8314
        %v8321 = vshrl.u32 2131351028, %v8315
        %v8322 = vor.u32 %v8320, %v8321
        %v8323 = vshll.u32 2131351028, %v8314
        %v8324 = vshrl.u32 2102212464, %v8315
        %v8325 = vor.u32 %v8323, %v8324
        %v8326 = vshll.u32 2102212464, %v8314
        %v8327 = vshrl.u32 920167782, %v8315
        %v8328 = vor.u32 %v8326, %v8327
        %v8329 = vshll.u32 920167782, %v8314
        %v8330 = vshrl.u32 1326507024, %v8315
        %v8331 = vor.u32 %v8329, %v8330
        %vm8332 = vcmp.lt.s32.totalorder %v8313, 1
        %vm8333 = vcmp.lt.s32.totalorder %v8313, 2
        %vm8334 = vcmp.lt.s32.totalorder %v8313, 3
        %vm8335 = vcmp.lt.s32.totalorder %v8313, 4
        %v8336 = vsel %vm8332, %v8316, %v8319
        %v8337 = vsel %vm8335, %v8325, 2102212464
        %v8338 = vsel %vm8334, %v8322, %v8337
        %v8339 = vsel %vm8333, %v8336, %v8338
        %v8340 = vsel %vm8332, %v8319, %v8322
        %v8341 = vsel %vm8335, %v8328, 920167782
        %v8342 = vsel %vm8334, %v8325, %v8341
        %v8343 = vsel %vm8333, %v8340, %v8342
        %v8344 = vsel %vm8332, %v8322, %v8325
        %v8345 = vsel %vm8335, %v8331, 1326507024
        %v8346 = vsel %vm8334, %v8328, %v8345
        %v8347 = vsel %vm8333, %v8344, %v8346
        %v8348 = vshll.u32 %v8308, 8
        %v8349 = vmul.u32.u64.compose %v8348, %v8347
        %v8350 = vextract.low.u32 %v8349
        %v8351 = vextract.high.u32 %v8349
        %v8352 = vmul.u32.u64.compose %v8348, %v8343
        %v8353 = vextract.low.u32 %v8352
        %v8354 = vextract.high.u32 %v8352
        %v8355 = vmul.u32 %v8348, %v8339
        %v8356 = vadd.s32 %v8351, %v8353
        %vm8357 = vc.u32 %v8351, %v8353
        %v8358 = vadd.s32 %v8354, 1
        %v8359 = vsel %vm8357, %v8358, %v8354
        %v8360 = vadd.s32 %v8355, %v8359
        %v8361 = vadd.s32 %v8360, 536870912
        %v8362 = vshrl.u32 %v8361, 30
        %v8363 = vshll.u32 %v8362, 30
        %v8364 = vsub.s32 %v8360, %v8363
        %vm8365 = vcmp.lt.s32.totalorder %v8364, 0
        %v8366 = vsub.s32 0, %v8364
        %v8367 = vsel %vm8365, %v8366, %v8364
        %v8368 = vclz %v8367
        %v8369 = vsub.s32 %v8368, 2
        %vm8370 = vcmp.gt.s32.totalorder 0, %v8369
        %v8371 = vsel %vm8370, 0, %v8369
        %v8372 = vsub.s32 32, %v8371
        %v8373 = vshll.u32 %v8364, %v8371
        %v8374 = vshrl.u32 %v8356, %v8372
        %v8375 = vor.u32 %v8373, %v8374
        %v8376 = vsub.s32 4294967266, %v8371
        %v8377 = vadd.s32 %v8376, 127
        %v8378 = vshll.u32 %v8377, 23
        %v8379 = vor.u32 4788187, %v8378
        %v8380 = vand.u32 2147483647, %v8379
        %v8382 = vcvt.s32.f32 %v8375
        %v8383 = vmul.f32 %v8382, %v8380
        %v8384 = vxor.u32 %v8383, 2147483648
        %v8385 = vsel %vm8302, %v8384, %v8383
        %v8386 = vsub.s32 4, %v8362
        %v8387 = vsel %vm8302, %v8386, %v8362
        %v8388 = vsel %vm8301, %v2666, %v8385
        %v8389 = vsel %vm8301, 0, %v8387
        %v8390 = vcosq.f32.pop %v8388
        %v8391 = vsinq.f32.pop %v8388
        %vm8392 = vweird.f32 %v2666
        %v8393 = vadd.s32 %v8389, 3
        %v8394 = vand.u32 %v8393, 3
        %vm8395 = vcmp.lt.s32.totalorder %v8394, 2
        %vm8396 = vcmp.eq.s32.totalorder %v8394, 0
        %v8397 = vxor.u32 %v8391, 2147483648
        %v8398 = vsel %vm8396, %v8390, %v8397
        %vm8399 = vcmp.eq.s32.totalorder %v8394, 2
        %v8400 = vxor.u32 %v8390, 2147483648
        %v8401 = vsel %vm8399, %v8400, %v8391
        %v8402 = vsel %vm8395, %v8398, %v8401
        %v8403 = vsel %vm8392, nan, %v8402
        %v8404 = vand.u32 2147483647, %v2668
        %vm8405 = vcmp.le.f32.partialorder %v8404, 0.7853982
        %vm8406 = vcmp.lt.s32.totalorder %v2668, 0
        %v8407 = vand.u32 %v2668, 2139095040
        %v8408 = vshrl.u32 %v8407, 23
        %v8409 = vsub.s32 %v8408, 127
        %v8410 = vand.u32 2147483647, %v2668
        %v8411 = vand.u32 %v8410, 8388607
        %v8412 = vor.u32 %v8411, 8388608
        %v8413 = vsub.s32 0, %v8412
        %v8414 = vadd.s32 %v8409, 1
        %vm8415 = vcmp.gt.s32.totalorder %v8414, 0
        %v8416 = vsel %vm8415, %v8414, 0
        %v8417 = vshrl.u32 %v8416, 5
        %v8418 = vand.u32 %v8416, 31
        %v8419 = vsub.s32 32, %v8418
        %v8420 = vshrl.u32 683565275, %v8419
        %v8421 = vshll.u32 683565275, %v8418
        %v8422 = vshrl.u32 2475754826, %v8419
        %v8423 = vor.u32 %v8421, %v8422
        %v8424 = vshll.u32 2475754826, %v8418
        %v8425 = vshrl.u32 2131351028, %v8419
        %v8426 = vor.u32 %v8424, %v8425
        %v8427 = vshll.u32 2131351028, %v8418
        %v8428 = vshrl.u32 2102212464, %v8419
        %v8429 = vor.u32 %v8427, %v8428
        %v8430 = vshll.u32 2102212464, %v8418
        %v8431 = vshrl.u32 920167782, %v8419
        %v8432 = vor.u32 %v8430, %v8431
        %v8433 = vshll.u32 920167782, %v8418
        %v8434 = vshrl.u32 1326507024, %v8419
        %v8435 = vor.u32 %v8433, %v8434
        %vm8436 = vcmp.lt.s32.totalorder %v8417, 1
        %vm8437 = vcmp.lt.s32.totalorder %v8417, 2
        %vm8438 = vcmp.lt.s32.totalorder %v8417, 3
        %vm8439 = vcmp.lt.s32.totalorder %v8417, 4
        %v8440 = vsel %vm8436, %v8420, %v8423
        %v8441 = vsel %vm8439, %v8429, 2102212464
        %v8442 = vsel %vm8438, %v8426, %v8441
        %v8443 = vsel %vm8437, %v8440, %v8442
        %v8444 = vsel %vm8436, %v8423, %v8426
        %v8445 = vsel %vm8439, %v8432, 920167782
        %v8446 = vsel %vm8438, %v8429, %v8445
        %v8447 = vsel %vm8437, %v8444, %v8446
        %v8448 = vsel %vm8436, %v8426, %v8429
        %v8449 = vsel %vm8439, %v8435, 1326507024
        %v8450 = vsel %vm8438, %v8432, %v8449
        %v8451 = vsel %vm8437, %v8448, %v8450
        %v8452 = vshll.u32 %v8412, 8
        %v8453 = vmul.u32.u64.compose %v8452, %v8451
        %v8454 = vextract.low.u32 %v8453
        %v8455 = vextract.high.u32 %v8453
        %v8456 = vmul.u32.u64.compose %v8452, %v8447
        %v8457 = vextract.low.u32 %v8456
        %v8458 = vextract.high.u32 %v8456
        %v8459 = vmul.u32 %v8452, %v8443
        %v8460 = vadd.s32 %v8455, %v8457
        %vm8461 = vc.u32 %v8455, %v8457
        %v8462 = vadd.s32 %v8458, 1
        %v8463 = vsel %vm8461, %v8462, %v8458
        %v8464 = vadd.s32 %v8459, %v8463
        %v8465 = vadd.s32 %v8464, 536870912
        %v8466 = vshrl.u32 %v8465, 30
        %v8467 = vshll.u32 %v8466, 30
        %v8468 = vsub.s32 %v8464, %v8467
        %vm8469 = vcmp.lt.s32.totalorder %v8468, 0
        %v8470 = vsub.s32 0, %v8468
        %v8471 = vsel %vm8469, %v8470, %v8468
        %v8472 = vclz %v8471
        %v8473 = vsub.s32 %v8472, 2
        %vm8474 = vcmp.gt.s32.totalorder 0, %v8473
        %v8475 = vsel %vm8474, 0, %v8473
        %v8476 = vsub.s32 32, %v8475
        %v8477 = vshll.u32 %v8468, %v8475
        %v8478 = vshrl.u32 %v8460, %v8476
        %v8479 = vor.u32 %v8477, %v8478
        %v8480 = vsub.s32 4294967266, %v8475
        %v8481 = vadd.s32 %v8480, 127
        %v8482 = vshll.u32 %v8481, 23
        %v8483 = vor.u32 4788187, %v8482
        %v8484 = vand.u32 2147483647, %v8483
        %v8486 = vcvt.s32.f32 %v8479
        %v8487 = vmul.f32 %v8486, %v8484
        %v8488 = vxor.u32 %v8487, 2147483648
        %v8489 = vsel %vm8406, %v8488, %v8487
        %v8490 = vsub.s32 4, %v8466
        %v8491 = vsel %vm8406, %v8490, %v8466
        %v8492 = vsel %vm8405, %v2668, %v8489
        %v8493 = vsel %vm8405, 0, %v8491
        %v8494 = vcosq.f32.pop %v8492
        %v8495 = vsinq.f32.pop %v8492
        %vm8496 = vweird.f32 %v2668
        %v8497 = vadd.s32 %v8493, 3
        %v8498 = vand.u32 %v8497, 3
        %vm8499 = vcmp.lt.s32.totalorder %v8498, 2
        %vm8500 = vcmp.eq.s32.totalorder %v8498, 0
        %v8501 = vxor.u32 %v8495, 2147483648
        %v8502 = vsel %vm8500, %v8494, %v8501
        %vm8503 = vcmp.eq.s32.totalorder %v8498, 2
        %v8504 = vxor.u32 %v8494, 2147483648
        %v8505 = vsel %vm8503, %v8504, %v8495
        %v8506 = vsel %vm8499, %v8502, %v8505
        %v8507 = vsel %vm8496, nan, %v8506
        %v8508 = vand.u32 2147483647, %v1473
        %vm8509 = vcmp.le.f32.partialorder %v8508, 0.7853982
        %vm8510 = vcmp.lt.s32.totalorder %v1473, 0
        %v8511 = vand.u32 %v1473, 2139095040
        %v8512 = vshrl.u32 %v8511, 23
        %v8513 = vsub.s32 %v8512, 127
        %v8514 = vand.u32 2147483647, %v1473
        %v8515 = vand.u32 %v8514, 8388607
        %v8516 = vor.u32 %v8515, 8388608
        %v8517 = vsub.s32 0, %v8516
        %v8518 = vadd.s32 %v8513, 1
        %vm8519 = vcmp.gt.s32.totalorder %v8518, 0
        %v8520 = vsel %vm8519, %v8518, 0
        %v8521 = vshrl.u32 %v8520, 5
        %v8522 = vand.u32 %v8520, 31
        %v8523 = vsub.s32 32, %v8522
        %v8524 = vshrl.u32 683565275, %v8523
        %v8525 = vshll.u32 683565275, %v8522
        %v8526 = vshrl.u32 2475754826, %v8523
        %v8527 = vor.u32 %v8525, %v8526
        %v8528 = vshll.u32 2475754826, %v8522
        %v8529 = vshrl.u32 2131351028, %v8523
        %v8530 = vor.u32 %v8528, %v8529
        %v8531 = vshll.u32 2131351028, %v8522
        %v8532 = vshrl.u32 2102212464, %v8523
        %v8533 = vor.u32 %v8531, %v8532
        %v8534 = vshll.u32 2102212464, %v8522
        %v8535 = vshrl.u32 920167782, %v8523
        %v8536 = vor.u32 %v8534, %v8535
        %v8537 = vshll.u32 920167782, %v8522
        %v8538 = vshrl.u32 1326507024, %v8523
        %v8539 = vor.u32 %v8537, %v8538
        %vm8540 = vcmp.lt.s32.totalorder %v8521, 1
        %vm8541 = vcmp.lt.s32.totalorder %v8521, 2
        %vm8542 = vcmp.lt.s32.totalorder %v8521, 3
        %vm8543 = vcmp.lt.s32.totalorder %v8521, 4
        %v8544 = vsel %vm8540, %v8524, %v8527
        %v8545 = vsel %vm8543, %v8533, 2102212464
        %v8546 = vsel %vm8542, %v8530, %v8545
        %v8547 = vsel %vm8541, %v8544, %v8546
        %v8548 = vsel %vm8540, %v8527, %v8530
        %v8549 = vsel %vm8543, %v8536, 920167782
        %v8550 = vsel %vm8542, %v8533, %v8549
        %v8551 = vsel %vm8541, %v8548, %v8550
        %v8552 = vsel %vm8540, %v8530, %v8533
        %v8553 = vsel %vm8543, %v8539, 1326507024
        %v8554 = vsel %vm8542, %v8536, %v8553
        %v8555 = vsel %vm8541, %v8552, %v8554
        %v8556 = vshll.u32 %v8516, 8
        %v8557 = vmul.u32.u64.compose %v8556, %v8555
        %v8558 = vextract.low.u32 %v8557
        %v8559 = vextract.high.u32 %v8557
        %v8560 = vmul.u32.u64.compose %v8556, %v8551
        %v8561 = vextract.low.u32 %v8560
        %v8562 = vextract.high.u32 %v8560
        %v8563 = vmul.u32 %v8556, %v8547
        %v8564 = vadd.s32 %v8559, %v8561
        %vm8565 = vc.u32 %v8559, %v8561
        %v8566 = vadd.s32 %v8562, 1
        %v8567 = vsel %vm8565, %v8566, %v8562
        %v8568 = vadd.s32 %v8563, %v8567
        %v8569 = vadd.s32 %v8568, 536870912
        %v8570 = vshrl.u32 %v8569, 30
        %v8571 = vshll.u32 %v8570, 30
        %v8572 = vsub.s32 %v8568, %v8571
        %vm8573 = vcmp.lt.s32.totalorder %v8572, 0
        %v8574 = vsub.s32 0, %v8572
        %v8575 = vsel %vm8573, %v8574, %v8572
        %v8576 = vclz %v8575
        %v8577 = vsub.s32 %v8576, 2
        %vm8578 = vcmp.gt.s32.totalorder 0, %v8577
        %v8579 = vsel %vm8578, 0, %v8577
        %v8580 = vsub.s32 32, %v8579
        %v8581 = vshll.u32 %v8572, %v8579
        %v8582 = vshrl.u32 %v8564, %v8580
        %v8583 = vor.u32 %v8581, %v8582
        %v8584 = vsub.s32 4294967266, %v8579
        %v8585 = vadd.s32 %v8584, 127
        %v8586 = vshll.u32 %v8585, 23
        %v8587 = vor.u32 4788187, %v8586
        %v8588 = vand.u32 2147483647, %v8587
        %v8590 = vcvt.s32.f32 %v8583
        %v8591 = vmul.f32 %v8590, %v8588
        %v8592 = vxor.u32 %v8591, 2147483648
        %v8593 = vsel %vm8510, %v8592, %v8591
        %v8594 = vsub.s32 4, %v8570
        %v8595 = vsel %vm8510, %v8594, %v8570
        %v8596 = vsel %vm8509, %v1473, %v8593
        %v8597 = vsel %vm8509, 0, %v8595
        %v8598 = vcosq.f32.pop %v8596
        %v8599 = vsinq.f32.pop %v8596
        %vm8600 = vweird.f32 %v1473
        %v8601 = vadd.s32 %v8597, 3
        %v8602 = vand.u32 %v8601, 3
        %vm8603 = vcmp.lt.s32.totalorder %v8602, 2
        %vm8604 = vcmp.eq.s32.totalorder %v8602, 0
        %v8605 = vxor.u32 %v8599, 2147483648
        %v8606 = vsel %vm8604, %v8598, %v8605
        %vm8607 = vcmp.eq.s32.totalorder %v8602, 2
        %v8608 = vxor.u32 %v8598, 2147483648
        %v8609 = vsel %vm8607, %v8608, %v8599
        %v8610 = vsel %vm8603, %v8606, %v8609
        %v8611 = vsel %vm8600, nan, %v8610
        %v8612 = vand.u32 2147483647, %v1475
        %vm8613 = vcmp.le.f32.partialorder %v8612, 0.7853982
        %vm8614 = vcmp.lt.s32.totalorder %v1475, 0
        %v8615 = vand.u32 %v1475, 2139095040
        %v8616 = vshrl.u32 %v8615, 23
        %v8617 = vsub.s32 %v8616, 127
        %v8618 = vand.u32 2147483647, %v1475
        %v8619 = vand.u32 %v8618, 8388607
        %v8620 = vor.u32 %v8619, 8388608
        %v8621 = vsub.s32 0, %v8620
        %v8622 = vadd.s32 %v8617, 1
        %vm8623 = vcmp.gt.s32.totalorder %v8622, 0
        %v8624 = vsel %vm8623, %v8622, 0
        %v8625 = vshrl.u32 %v8624, 5
        %v8626 = vand.u32 %v8624, 31
        %v8627 = vsub.s32 32, %v8626
        %v8628 = vshrl.u32 683565275, %v8627
        %v8629 = vshll.u32 683565275, %v8626
        %v8630 = vshrl.u32 2475754826, %v8627
        %v8631 = vor.u32 %v8629, %v8630
        %v8632 = vshll.u32 2475754826, %v8626
        %v8633 = vshrl.u32 2131351028, %v8627
        %v8634 = vor.u32 %v8632, %v8633
        %v8635 = vshll.u32 2131351028, %v8626
        %v8636 = vshrl.u32 2102212464, %v8627
        %v8637 = vor.u32 %v8635, %v8636
        %v8638 = vshll.u32 2102212464, %v8626
        %v8639 = vshrl.u32 920167782, %v8627
        %v8640 = vor.u32 %v8638, %v8639
        %v8641 = vshll.u32 920167782, %v8626
        %v8642 = vshrl.u32 1326507024, %v8627
        %v8643 = vor.u32 %v8641, %v8642
        %vm8644 = vcmp.lt.s32.totalorder %v8625, 1
        %vm8645 = vcmp.lt.s32.totalorder %v8625, 2
        %vm8646 = vcmp.lt.s32.totalorder %v8625, 3
        %vm8647 = vcmp.lt.s32.totalorder %v8625, 4
        %v8648 = vsel %vm8644, %v8628, %v8631
        %v8649 = vsel %vm8647, %v8637, 2102212464
        %v8650 = vsel %vm8646, %v8634, %v8649
        %v8651 = vsel %vm8645, %v8648, %v8650
        %v8652 = vsel %vm8644, %v8631, %v8634
        %v8653 = vsel %vm8647, %v8640, 920167782
        %v8654 = vsel %vm8646, %v8637, %v8653
        %v8655 = vsel %vm8645, %v8652, %v8654
        %v8656 = vsel %vm8644, %v8634, %v8637
        %v8657 = vsel %vm8647, %v8643, 1326507024
        %v8658 = vsel %vm8646, %v8640, %v8657
        %v8659 = vsel %vm8645, %v8656, %v8658
        %v8660 = vshll.u32 %v8620, 8
        %v8661 = vmul.u32.u64.compose %v8660, %v8659
        %v8662 = vextract.low.u32 %v8661
        %v8663 = vextract.high.u32 %v8661
        %v8664 = vmul.u32.u64.compose %v8660, %v8655
        %v8665 = vextract.low.u32 %v8664
        %v8666 = vextract.high.u32 %v8664
        %v8667 = vmul.u32 %v8660, %v8651
        %v8668 = vadd.s32 %v8663, %v8665
        %vm8669 = vc.u32 %v8663, %v8665
        %v8670 = vadd.s32 %v8666, 1
        %v8671 = vsel %vm8669, %v8670, %v8666
        %v8672 = vadd.s32 %v8667, %v8671
        %v8673 = vadd.s32 %v8672, 536870912
        %v8674 = vshrl.u32 %v8673, 30
        %v8675 = vshll.u32 %v8674, 30
        %v8676 = vsub.s32 %v8672, %v8675
        %vm8677 = vcmp.lt.s32.totalorder %v8676, 0
        %v8678 = vsub.s32 0, %v8676
        %v8679 = vsel %vm8677, %v8678, %v8676
        %v8680 = vclz %v8679
        %v8681 = vsub.s32 %v8680, 2
        %vm8682 = vcmp.gt.s32.totalorder 0, %v8681
        %v8683 = vsel %vm8682, 0, %v8681
        %v8684 = vsub.s32 32, %v8683
        %v8685 = vshll.u32 %v8676, %v8683
        %v8686 = vshrl.u32 %v8668, %v8684
        %v8687 = vor.u32 %v8685, %v8686
        %v8688 = vsub.s32 4294967266, %v8683
        %v8689 = vadd.s32 %v8688, 127
        %v8690 = vshll.u32 %v8689, 23
        %v8691 = vor.u32 4788187, %v8690
        %v8692 = vand.u32 2147483647, %v8691
        %v8694 = vcvt.s32.f32 %v8687
        %v8695 = vmul.f32 %v8694, %v8692
        %v8696 = vxor.u32 %v8695, 2147483648
        %v8697 = vsel %vm8614, %v8696, %v8695
        %v8698 = vsub.s32 4, %v8674
        %v8699 = vsel %vm8614, %v8698, %v8674
        %v8700 = vsel %vm8613, %v1475, %v8697
        %v8701 = vsel %vm8613, 0, %v8699
        %v8702 = vcosq.f32.pop %v8700
        %v8703 = vsinq.f32.pop %v8700
        %vm8704 = vweird.f32 %v1475
        %v8705 = vadd.s32 %v8701, 3
        %v8706 = vand.u32 %v8705, 3
        %vm8707 = vcmp.lt.s32.totalorder %v8706, 2
        %vm8708 = vcmp.eq.s32.totalorder %v8706, 0
        %v8709 = vxor.u32 %v8703, 2147483648
        %v8710 = vsel %vm8708, %v8702, %v8709
        %vm8711 = vcmp.eq.s32.totalorder %v8706, 2
        %v8712 = vxor.u32 %v8702, 2147483648
        %v8713 = vsel %vm8711, %v8712, %v8703
        %v8714 = vsel %vm8707, %v8710, %v8713
        %v8715 = vsel %vm8704, nan, %v8714
        %v8716 = vand.u32 2147483647, %v2673
        %vm8717 = vcmp.le.f32.partialorder %v8716, 0.7853982
        %vm8718 = vcmp.lt.s32.totalorder %v2673, 0
        %v8719 = vand.u32 %v2673, 2139095040
        %v8720 = vshrl.u32 %v8719, 23
        %v8721 = vsub.s32 %v8720, 127
        %v8722 = vand.u32 2147483647, %v2673
        %v8723 = vand.u32 %v8722, 8388607
        %v8724 = vor.u32 %v8723, 8388608
        %v8725 = vsub.s32 0, %v8724
        %v8726 = vadd.s32 %v8721, 1
        %vm8727 = vcmp.gt.s32.totalorder %v8726, 0
        %v8728 = vsel %vm8727, %v8726, 0
        %v8729 = vshrl.u32 %v8728, 5
        %v8730 = vand.u32 %v8728, 31
        %v8731 = vsub.s32 32, %v8730
        %v8732 = vshrl.u32 683565275, %v8731
        %v8733 = vshll.u32 683565275, %v8730
        %v8734 = vshrl.u32 2475754826, %v8731
        %v8735 = vor.u32 %v8733, %v8734
        %v8736 = vshll.u32 2475754826, %v8730
        %v8737 = vshrl.u32 2131351028, %v8731
        %v8738 = vor.u32 %v8736, %v8737
        %v8739 = vshll.u32 2131351028, %v8730
        %v8740 = vshrl.u32 2102212464, %v8731
        %v8741 = vor.u32 %v8739, %v8740
        %v8742 = vshll.u32 2102212464, %v8730
        %v8743 = vshrl.u32 920167782, %v8731
        %v8744 = vor.u32 %v8742, %v8743
        %v8745 = vshll.u32 920167782, %v8730
        %v8746 = vshrl.u32 1326507024, %v8731
        %v8747 = vor.u32 %v8745, %v8746
        %vm8748 = vcmp.lt.s32.totalorder %v8729, 1
        %vm8749 = vcmp.lt.s32.totalorder %v8729, 2
        %vm8750 = vcmp.lt.s32.totalorder %v8729, 3
        %vm8751 = vcmp.lt.s32.totalorder %v8729, 4
        %v8752 = vsel %vm8748, %v8732, %v8735
        %v8753 = vsel %vm8751, %v8741, 2102212464
        %v8754 = vsel %vm8750, %v8738, %v8753
        %v8755 = vsel %vm8749, %v8752, %v8754
        %v8756 = vsel %vm8748, %v8735, %v8738
        %v8757 = vsel %vm8751, %v8744, 920167782
        %v8758 = vsel %vm8750, %v8741, %v8757
        %v8759 = vsel %vm8749, %v8756, %v8758
        %v8760 = vsel %vm8748, %v8738, %v8741
        %v8761 = vsel %vm8751, %v8747, 1326507024
        %v8762 = vsel %vm8750, %v8744, %v8761
        %v8763 = vsel %vm8749, %v8760, %v8762
        %v8764 = vshll.u32 %v8724, 8
        %v8765 = vmul.u32.u64.compose %v8764, %v8763
        %v8766 = vextract.low.u32 %v8765
        %v8767 = vextract.high.u32 %v8765
        %v8768 = vmul.u32.u64.compose %v8764, %v8759
        %v8769 = vextract.low.u32 %v8768
        %v8770 = vextract.high.u32 %v8768
        %v8771 = vmul.u32 %v8764, %v8755
        %v8772 = vadd.s32 %v8767, %v8769
        %vm8773 = vc.u32 %v8767, %v8769
        %v8774 = vadd.s32 %v8770, 1
        %v8775 = vsel %vm8773, %v8774, %v8770
        %v8776 = vadd.s32 %v8771, %v8775
        %v8777 = vadd.s32 %v8776, 536870912
        %v8778 = vshrl.u32 %v8777, 30
        %v8779 = vshll.u32 %v8778, 30
        %v8780 = vsub.s32 %v8776, %v8779
        %vm8781 = vcmp.lt.s32.totalorder %v8780, 0
        %v8782 = vsub.s32 0, %v8780
        %v8783 = vsel %vm8781, %v8782, %v8780
        %v8784 = vclz %v8783
        %v8785 = vsub.s32 %v8784, 2
        %vm8786 = vcmp.gt.s32.totalorder 0, %v8785
        %v8787 = vsel %vm8786, 0, %v8785
        %v8788 = vsub.s32 32, %v8787
        %v8789 = vshll.u32 %v8780, %v8787
        %v8790 = vshrl.u32 %v8772, %v8788
        %v8791 = vor.u32 %v8789, %v8790
        %v8792 = vsub.s32 4294967266, %v8787
        %v8793 = vadd.s32 %v8792, 127
        %v8794 = vshll.u32 %v8793, 23
        %v8795 = vor.u32 4788187, %v8794
        %v8796 = vand.u32 2147483647, %v8795
        %v8798 = vcvt.s32.f32 %v8791
        %v8799 = vmul.f32 %v8798, %v8796
        %v8800 = vxor.u32 %v8799, 2147483648
        %v8801 = vsel %vm8718, %v8800, %v8799
        %v8802 = vsub.s32 4, %v8778
        %v8803 = vsel %vm8718, %v8802, %v8778
        %v8804 = vsel %vm8717, %v2673, %v8801
        %v8805 = vsel %vm8717, 0, %v8803
        %v8806 = vcosq.f32.pop %v8804
        %v8807 = vsinq.f32.pop %v8804
        %vm8808 = vweird.f32 %v2673
        %v8809 = vadd.s32 %v8805, 3
        %v8810 = vand.u32 %v8809, 3
        %vm8811 = vcmp.lt.s32.totalorder %v8810, 2
        %vm8812 = vcmp.eq.s32.totalorder %v8810, 0
        %v8813 = vxor.u32 %v8807, 2147483648
        %v8814 = vsel %vm8812, %v8806, %v8813
        %vm8815 = vcmp.eq.s32.totalorder %v8810, 2
        %v8816 = vxor.u32 %v8806, 2147483648
        %v8817 = vsel %vm8815, %v8816, %v8807
        %v8818 = vsel %vm8811, %v8814, %v8817
        %v8819 = vsel %vm8808, nan, %v8818
        %v8820 = vand.u32 2147483647, %v2675
        %vm8821 = vcmp.le.f32.partialorder %v8820, 0.7853982
        %vm8822 = vcmp.lt.s32.totalorder %v2675, 0
        %v8823 = vand.u32 %v2675, 2139095040
        %v8824 = vshrl.u32 %v8823, 23
        %v8825 = vsub.s32 %v8824, 127
        %v8826 = vand.u32 2147483647, %v2675
        %v8827 = vand.u32 %v8826, 8388607
        %v8828 = vor.u32 %v8827, 8388608
        %v8829 = vsub.s32 0, %v8828
        %v8830 = vadd.s32 %v8825, 1
        %vm8831 = vcmp.gt.s32.totalorder %v8830, 0
        %v8832 = vsel %vm8831, %v8830, 0
        %v8833 = vshrl.u32 %v8832, 5
        %v8834 = vand.u32 %v8832, 31
        %v8835 = vsub.s32 32, %v8834
        %v8836 = vshrl.u32 683565275, %v8835
        %v8837 = vshll.u32 683565275, %v8834
        %v8838 = vshrl.u32 2475754826, %v8835
        %v8839 = vor.u32 %v8837, %v8838
        %v8840 = vshll.u32 2475754826, %v8834
        %v8841 = vshrl.u32 2131351028, %v8835
        %v8842 = vor.u32 %v8840, %v8841
        %v8843 = vshll.u32 2131351028, %v8834
        %v8844 = vshrl.u32 2102212464, %v8835
        %v8845 = vor.u32 %v8843, %v8844
        %v8846 = vshll.u32 2102212464, %v8834
        %v8847 = vshrl.u32 920167782, %v8835
        %v8848 = vor.u32 %v8846, %v8847
        %v8849 = vshll.u32 920167782, %v8834
        %v8850 = vshrl.u32 1326507024, %v8835
        %v8851 = vor.u32 %v8849, %v8850
        %vm8852 = vcmp.lt.s32.totalorder %v8833, 1
        %vm8853 = vcmp.lt.s32.totalorder %v8833, 2
        %vm8854 = vcmp.lt.s32.totalorder %v8833, 3
        %vm8855 = vcmp.lt.s32.totalorder %v8833, 4
        %v8856 = vsel %vm8852, %v8836, %v8839
        %v8857 = vsel %vm8855, %v8845, 2102212464
        %v8858 = vsel %vm8854, %v8842, %v8857
        %v8859 = vsel %vm8853, %v8856, %v8858
        %v8860 = vsel %vm8852, %v8839, %v8842
        %v8861 = vsel %vm8855, %v8848, 920167782
        %v8862 = vsel %vm8854, %v8845, %v8861
        %v8863 = vsel %vm8853, %v8860, %v8862
        %v8864 = vsel %vm8852, %v8842, %v8845
        %v8865 = vsel %vm8855, %v8851, 1326507024
        %v8866 = vsel %vm8854, %v8848, %v8865
        %v8867 = vsel %vm8853, %v8864, %v8866
        %v8868 = vshll.u32 %v8828, 8
        %v8869 = vmul.u32.u64.compose %v8868, %v8867
        %v8870 = vextract.low.u32 %v8869
        %v8871 = vextract.high.u32 %v8869
        %v8872 = vmul.u32.u64.compose %v8868, %v8863
        %v8873 = vextract.low.u32 %v8872
        %v8874 = vextract.high.u32 %v8872
        %v8875 = vmul.u32 %v8868, %v8859
        %v8876 = vadd.s32 %v8871, %v8873
        %vm8877 = vc.u32 %v8871, %v8873
        %v8878 = vadd.s32 %v8874, 1
        %v8879 = vsel %vm8877, %v8878, %v8874
        %v8880 = vadd.s32 %v8875, %v8879
        %v8881 = vadd.s32 %v8880, 536870912
        %v8882 = vshrl.u32 %v8881, 30
        %v8883 = vshll.u32 %v8882, 30
        %v8884 = vsub.s32 %v8880, %v8883
        %vm8885 = vcmp.lt.s32.totalorder %v8884, 0
        %v8886 = vsub.s32 0, %v8884
        %v8887 = vsel %vm8885, %v8886, %v8884
        %v8888 = vclz %v8887
        %v8889 = vsub.s32 %v8888, 2
        %vm8890 = vcmp.gt.s32.totalorder 0, %v8889
        %v8891 = vsel %vm8890, 0, %v8889
        %v8892 = vsub.s32 32, %v8891
        %v8893 = vshll.u32 %v8884, %v8891
        %v8894 = vshrl.u32 %v8876, %v8892
        %v8895 = vor.u32 %v8893, %v8894
        %v8896 = vsub.s32 4294967266, %v8891
        %v8897 = vadd.s32 %v8896, 127
        %v8898 = vshll.u32 %v8897, 23
        %v8899 = vor.u32 4788187, %v8898
        %v8900 = vand.u32 2147483647, %v8899
        %v8902 = vcvt.s32.f32 %v8895
        %v8903 = vmul.f32 %v8902, %v8900
        %v8904 = vxor.u32 %v8903, 2147483648
        %v8905 = vsel %vm8822, %v8904, %v8903
        %v8906 = vsub.s32 4, %v8882
        %v8907 = vsel %vm8822, %v8906, %v8882
        %v8908 = vsel %vm8821, %v2675, %v8905
        %v8909 = vsel %vm8821, 0, %v8907
        %v8910 = vcosq.f32.pop %v8908
        %v8911 = vsinq.f32.pop %v8908
        %vm8912 = vweird.f32 %v2675
        %v8913 = vadd.s32 %v8909, 3
        %v8914 = vand.u32 %v8913, 3
        %vm8915 = vcmp.lt.s32.totalorder %v8914, 2
        %vm8916 = vcmp.eq.s32.totalorder %v8914, 0
        %v8917 = vxor.u32 %v8911, 2147483648
        %v8918 = vsel %vm8916, %v8910, %v8917
        %vm8919 = vcmp.eq.s32.totalorder %v8914, 2
        %v8920 = vxor.u32 %v8910, 2147483648
        %v8921 = vsel %vm8919, %v8920, %v8911
        %v8922 = vsel %vm8915, %v8918, %v8921
        %v8923 = vsel %vm8912, nan, %v8922
        %v8924 = vand.u32 2147483647, %v1480
        %vm8925 = vcmp.le.f32.partialorder %v8924, 0.7853982
        %vm8926 = vcmp.lt.s32.totalorder %v1480, 0
        %v8927 = vand.u32 %v1480, 2139095040
        %v8928 = vshrl.u32 %v8927, 23
        %v8929 = vsub.s32 %v8928, 127
        %v8930 = vand.u32 2147483647, %v1480
        %v8931 = vand.u32 %v8930, 8388607
        %v8932 = vor.u32 %v8931, 8388608
        %v8933 = vsub.s32 0, %v8932
        %v8934 = vadd.s32 %v8929, 1
        %vm8935 = vcmp.gt.s32.totalorder %v8934, 0
        %v8936 = vsel %vm8935, %v8934, 0
        %v8937 = vshrl.u32 %v8936, 5
        %v8938 = vand.u32 %v8936, 31
        %v8939 = vsub.s32 32, %v8938
        %v8940 = vshrl.u32 683565275, %v8939
        %v8941 = vshll.u32 683565275, %v8938
        %v8942 = vshrl.u32 2475754826, %v8939
        %v8943 = vor.u32 %v8941, %v8942
        %v8944 = vshll.u32 2475754826, %v8938
        %v8945 = vshrl.u32 2131351028, %v8939
        %v8946 = vor.u32 %v8944, %v8945
        %v8947 = vshll.u32 2131351028, %v8938
        %v8948 = vshrl.u32 2102212464, %v8939
        %v8949 = vor.u32 %v8947, %v8948
        %v8950 = vshll.u32 2102212464, %v8938
        %v8951 = vshrl.u32 920167782, %v8939
        %v8952 = vor.u32 %v8950, %v8951
        %v8953 = vshll.u32 920167782, %v8938
        %v8954 = vshrl.u32 1326507024, %v8939
        %v8955 = vor.u32 %v8953, %v8954
        %vm8956 = vcmp.lt.s32.totalorder %v8937, 1
        %vm8957 = vcmp.lt.s32.totalorder %v8937, 2
        %vm8958 = vcmp.lt.s32.totalorder %v8937, 3
        %vm8959 = vcmp.lt.s32.totalorder %v8937, 4
        %v8960 = vsel %vm8956, %v8940, %v8943
        %v8961 = vsel %vm8959, %v8949, 2102212464
        %v8962 = vsel %vm8958, %v8946, %v8961
        %v8963 = vsel %vm8957, %v8960, %v8962
        %v8964 = vsel %vm8956, %v8943, %v8946
        %v8965 = vsel %vm8959, %v8952, 920167782
        %v8966 = vsel %vm8958, %v8949, %v8965
        %v8967 = vsel %vm8957, %v8964, %v8966
        %v8968 = vsel %vm8956, %v8946, %v8949
        %v8969 = vsel %vm8959, %v8955, 1326507024
        %v8970 = vsel %vm8958, %v8952, %v8969
        %v8971 = vsel %vm8957, %v8968, %v8970
        %v8972 = vshll.u32 %v8932, 8
        %v8973 = vmul.u32.u64.compose %v8972, %v8971
        %v8974 = vextract.low.u32 %v8973
        %v8975 = vextract.high.u32 %v8973
        %v8976 = vmul.u32.u64.compose %v8972, %v8967
        %v8977 = vextract.low.u32 %v8976
        %v8978 = vextract.high.u32 %v8976
        %v8979 = vmul.u32 %v8972, %v8963
        %v8980 = vadd.s32 %v8975, %v8977
        %vm8981 = vc.u32 %v8975, %v8977
        %v8982 = vadd.s32 %v8978, 1
        %v8983 = vsel %vm8981, %v8982, %v8978
        %v8984 = vadd.s32 %v8979, %v8983
        %v8985 = vadd.s32 %v8984, 536870912
        %v8986 = vshrl.u32 %v8985, 30
        %v8987 = vshll.u32 %v8986, 30
        %v8988 = vsub.s32 %v8984, %v8987
        %vm8989 = vcmp.lt.s32.totalorder %v8988, 0
        %v8990 = vsub.s32 0, %v8988
        %v8991 = vsel %vm8989, %v8990, %v8988
        %v8992 = vclz %v8991
        %v8993 = vsub.s32 %v8992, 2
        %vm8994 = vcmp.gt.s32.totalorder 0, %v8993
        %v8995 = vsel %vm8994, 0, %v8993
        %v8996 = vsub.s32 32, %v8995
        %v8997 = vshll.u32 %v8988, %v8995
        %v8998 = vshrl.u32 %v8980, %v8996
        %v8999 = vor.u32 %v8997, %v8998
        %v9000 = vsub.s32 4294967266, %v8995
        %v9001 = vadd.s32 %v9000, 127
        %v9002 = vshll.u32 %v9001, 23
        %v9003 = vor.u32 4788187, %v9002
        %v9004 = vand.u32 2147483647, %v9003
        %v9006 = vcvt.s32.f32 %v8999
        %v9007 = vmul.f32 %v9006, %v9004
        %v9008 = vxor.u32 %v9007, 2147483648
        %v9009 = vsel %vm8926, %v9008, %v9007
        %v9010 = vsub.s32 4, %v8986
        %v9011 = vsel %vm8926, %v9010, %v8986
        %v9012 = vsel %vm8925, %v1480, %v9009
        %v9013 = vsel %vm8925, 0, %v9011
        %v9014 = vcosq.f32.pop %v9012
        %v9015 = vsinq.f32.pop %v9012
        %vm9016 = vweird.f32 %v1480
        %v9017 = vadd.s32 %v9013, 3
        %v9018 = vand.u32 %v9017, 3
        %vm9019 = vcmp.lt.s32.totalorder %v9018, 2
        %vm9020 = vcmp.eq.s32.totalorder %v9018, 0
        %v9021 = vxor.u32 %v9015, 2147483648
        %v9022 = vsel %vm9020, %v9014, %v9021
        %vm9023 = vcmp.eq.s32.totalorder %v9018, 2
        %v9024 = vxor.u32 %v9014, 2147483648
        %v9025 = vsel %vm9023, %v9024, %v9015
        %v9026 = vsel %vm9019, %v9022, %v9025
        %v9027 = vsel %vm9016, nan, %v9026
        %v9028 = vand.u32 2147483647, %v1482
        %vm9029 = vcmp.le.f32.partialorder %v9028, 0.7853982
        %vm9030 = vcmp.lt.s32.totalorder %v1482, 0
        %v9031 = vand.u32 %v1482, 2139095040
        %v9032 = vshrl.u32 %v9031, 23
        %v9033 = vsub.s32 %v9032, 127
        %v9034 = vand.u32 2147483647, %v1482
        %v9035 = vand.u32 %v9034, 8388607
        %v9036 = vor.u32 %v9035, 8388608
        %v9037 = vsub.s32 0, %v9036
        %v9038 = vadd.s32 %v9033, 1
        %vm9039 = vcmp.gt.s32.totalorder %v9038, 0
        %v9040 = vsel %vm9039, %v9038, 0
        %v9041 = vshrl.u32 %v9040, 5
        %v9042 = vand.u32 %v9040, 31
        %v9043 = vsub.s32 32, %v9042
        %v9044 = vshrl.u32 683565275, %v9043
        %v9045 = vshll.u32 683565275, %v9042
        %v9046 = vshrl.u32 2475754826, %v9043
        %v9047 = vor.u32 %v9045, %v9046
        %v9048 = vshll.u32 2475754826, %v9042
        %v9049 = vshrl.u32 2131351028, %v9043
        %v9050 = vor.u32 %v9048, %v9049
        %v9051 = vshll.u32 2131351028, %v9042
        %v9052 = vshrl.u32 2102212464, %v9043
        %v9053 = vor.u32 %v9051, %v9052
        %v9054 = vshll.u32 2102212464, %v9042
        %v9055 = vshrl.u32 920167782, %v9043
        %v9056 = vor.u32 %v9054, %v9055
        %v9057 = vshll.u32 920167782, %v9042
        %v9058 = vshrl.u32 1326507024, %v9043
        %v9059 = vor.u32 %v9057, %v9058
        %vm9060 = vcmp.lt.s32.totalorder %v9041, 1
        %vm9061 = vcmp.lt.s32.totalorder %v9041, 2
        %vm9062 = vcmp.lt.s32.totalorder %v9041, 3
        %vm9063 = vcmp.lt.s32.totalorder %v9041, 4
        %v9064 = vsel %vm9060, %v9044, %v9047
        %v9065 = vsel %vm9063, %v9053, 2102212464
        %v9066 = vsel %vm9062, %v9050, %v9065
        %v9067 = vsel %vm9061, %v9064, %v9066
        %v9068 = vsel %vm9060, %v9047, %v9050
        %v9069 = vsel %vm9063, %v9056, 920167782
        %v9070 = vsel %vm9062, %v9053, %v9069
        %v9071 = vsel %vm9061, %v9068, %v9070
        %v9072 = vsel %vm9060, %v9050, %v9053
        %v9073 = vsel %vm9063, %v9059, 1326507024
        %v9074 = vsel %vm9062, %v9056, %v9073
        %v9075 = vsel %vm9061, %v9072, %v9074
        %v9076 = vshll.u32 %v9036, 8
        %v9077 = vmul.u32.u64.compose %v9076, %v9075
        %v9078 = vextract.low.u32 %v9077
        %v9079 = vextract.high.u32 %v9077
        %v9080 = vmul.u32.u64.compose %v9076, %v9071
        %v9081 = vextract.low.u32 %v9080
        %v9082 = vextract.high.u32 %v9080
        %v9083 = vmul.u32 %v9076, %v9067
        %v9084 = vadd.s32 %v9079, %v9081
        %vm9085 = vc.u32 %v9079, %v9081
        %v9086 = vadd.s32 %v9082, 1
        %v9087 = vsel %vm9085, %v9086, %v9082
        %v9088 = vadd.s32 %v9083, %v9087
        %v9089 = vadd.s32 %v9088, 536870912
        %v9090 = vshrl.u32 %v9089, 30
        %v9091 = vshll.u32 %v9090, 30
        %v9092 = vsub.s32 %v9088, %v9091
        %vm9093 = vcmp.lt.s32.totalorder %v9092, 0
        %v9094 = vsub.s32 0, %v9092
        %v9095 = vsel %vm9093, %v9094, %v9092
        %v9096 = vclz %v9095
        %v9097 = vsub.s32 %v9096, 2
        %vm9098 = vcmp.gt.s32.totalorder 0, %v9097
        %v9099 = vsel %vm9098, 0, %v9097
        %v9100 = vsub.s32 32, %v9099
        %v9101 = vshll.u32 %v9092, %v9099
        %v9102 = vshrl.u32 %v9084, %v9100
        %v9103 = vor.u32 %v9101, %v9102
        %v9104 = vsub.s32 4294967266, %v9099
        %v9105 = vadd.s32 %v9104, 127
        %v9106 = vshll.u32 %v9105, 23
        %v9107 = vor.u32 4788187, %v9106
        %v9108 = vand.u32 2147483647, %v9107
        %v9110 = vcvt.s32.f32 %v9103
        %v9111 = vmul.f32 %v9110, %v9108
        %v9112 = vxor.u32 %v9111, 2147483648
        %v9113 = vsel %vm9030, %v9112, %v9111
        %v9114 = vsub.s32 4, %v9090
        %v9115 = vsel %vm9030, %v9114, %v9090
        %v9116 = vsel %vm9029, %v1482, %v9113
        %v9117 = vsel %vm9029, 0, %v9115
        %v9118 = vcosq.f32.pop %v9116
        %v9119 = vsinq.f32.pop %v9116
        %vm9120 = vweird.f32 %v1482
        %v9121 = vadd.s32 %v9117, 3
        %v9122 = vand.u32 %v9121, 3
        %vm9123 = vcmp.lt.s32.totalorder %v9122, 2
        %vm9124 = vcmp.eq.s32.totalorder %v9122, 0
        %v9125 = vxor.u32 %v9119, 2147483648
        %v9126 = vsel %vm9124, %v9118, %v9125
        %vm9127 = vcmp.eq.s32.totalorder %v9122, 2
        %v9128 = vxor.u32 %v9118, 2147483648
        %v9129 = vsel %vm9127, %v9128, %v9119
        %v9130 = vsel %vm9123, %v9126, %v9129
        %v9131 = vsel %vm9120, nan, %v9130
        %v9132 = vand.u32 2147483647, %v2680
        %vm9133 = vcmp.le.f32.partialorder %v9132, 0.7853982
        %vm9134 = vcmp.lt.s32.totalorder %v2680, 0
        %v9135 = vand.u32 %v2680, 2139095040
        %v9136 = vshrl.u32 %v9135, 23
        %v9137 = vsub.s32 %v9136, 127
        %v9138 = vand.u32 2147483647, %v2680
        %v9139 = vand.u32 %v9138, 8388607
        %v9140 = vor.u32 %v9139, 8388608
        %v9141 = vsub.s32 0, %v9140
        %v9142 = vadd.s32 %v9137, 1
        %vm9143 = vcmp.gt.s32.totalorder %v9142, 0
        %v9144 = vsel %vm9143, %v9142, 0
        %v9145 = vshrl.u32 %v9144, 5
        %v9146 = vand.u32 %v9144, 31
        %v9147 = vsub.s32 32, %v9146
        %v9148 = vshrl.u32 683565275, %v9147
        %v9149 = vshll.u32 683565275, %v9146
        %v9150 = vshrl.u32 2475754826, %v9147
        %v9151 = vor.u32 %v9149, %v9150
        %v9152 = vshll.u32 2475754826, %v9146
        %v9153 = vshrl.u32 2131351028, %v9147
        %v9154 = vor.u32 %v9152, %v9153
        %v9155 = vshll.u32 2131351028, %v9146
        %v9156 = vshrl.u32 2102212464, %v9147
        %v9157 = vor.u32 %v9155, %v9156
        %v9158 = vshll.u32 2102212464, %v9146
        %v9159 = vshrl.u32 920167782, %v9147
        %v9160 = vor.u32 %v9158, %v9159
        %v9161 = vshll.u32 920167782, %v9146
        %v9162 = vshrl.u32 1326507024, %v9147
        %v9163 = vor.u32 %v9161, %v9162
        %vm9164 = vcmp.lt.s32.totalorder %v9145, 1
        %vm9165 = vcmp.lt.s32.totalorder %v9145, 2
        %vm9166 = vcmp.lt.s32.totalorder %v9145, 3
        %vm9167 = vcmp.lt.s32.totalorder %v9145, 4
        %v9168 = vsel %vm9164, %v9148, %v9151
        %v9169 = vsel %vm9167, %v9157, 2102212464
        %v9170 = vsel %vm9166, %v9154, %v9169
        %v9171 = vsel %vm9165, %v9168, %v9170
        %v9172 = vsel %vm9164, %v9151, %v9154
        %v9173 = vsel %vm9167, %v9160, 920167782
        %v9174 = vsel %vm9166, %v9157, %v9173
        %v9175 = vsel %vm9165, %v9172, %v9174
        %v9176 = vsel %vm9164, %v9154, %v9157
        %v9177 = vsel %vm9167, %v9163, 1326507024
        %v9178 = vsel %vm9166, %v9160, %v9177
        %v9179 = vsel %vm9165, %v9176, %v9178
        %v9180 = vshll.u32 %v9140, 8
        %v9181 = vmul.u32.u64.compose %v9180, %v9179
        %v9182 = vextract.low.u32 %v9181
        %v9183 = vextract.high.u32 %v9181
        %v9184 = vmul.u32.u64.compose %v9180, %v9175
        %v9185 = vextract.low.u32 %v9184
        %v9186 = vextract.high.u32 %v9184
        %v9187 = vmul.u32 %v9180, %v9171
        %v9188 = vadd.s32 %v9183, %v9185
        %vm9189 = vc.u32 %v9183, %v9185
        %v9190 = vadd.s32 %v9186, 1
        %v9191 = vsel %vm9189, %v9190, %v9186
        %v9192 = vadd.s32 %v9187, %v9191
        %v9193 = vadd.s32 %v9192, 536870912
        %v9194 = vshrl.u32 %v9193, 30
        %v9195 = vshll.u32 %v9194, 30
        %v9196 = vsub.s32 %v9192, %v9195
        %vm9197 = vcmp.lt.s32.totalorder %v9196, 0
        %v9198 = vsub.s32 0, %v9196
        %v9199 = vsel %vm9197, %v9198, %v9196
        %v9200 = vclz %v9199
        %v9201 = vsub.s32 %v9200, 2
        %vm9202 = vcmp.gt.s32.totalorder 0, %v9201
        %v9203 = vsel %vm9202, 0, %v9201
        %v9204 = vsub.s32 32, %v9203
        %v9205 = vshll.u32 %v9196, %v9203
        %v9206 = vshrl.u32 %v9188, %v9204
        %v9207 = vor.u32 %v9205, %v9206
        %v9208 = vsub.s32 4294967266, %v9203
        %v9209 = vadd.s32 %v9208, 127
        %v9210 = vshll.u32 %v9209, 23
        %v9211 = vor.u32 4788187, %v9210
        %v9212 = vand.u32 2147483647, %v9211
        %v9214 = vcvt.s32.f32 %v9207
        %v9215 = vmul.f32 %v9214, %v9212
        %v9216 = vxor.u32 %v9215, 2147483648
        %v9217 = vsel %vm9134, %v9216, %v9215
        %v9218 = vsub.s32 4, %v9194
        %v9219 = vsel %vm9134, %v9218, %v9194
        %v9220 = vsel %vm9133, %v2680, %v9217
        %v9221 = vsel %vm9133, 0, %v9219
        %v9222 = vcosq.f32.pop %v9220
        %v9223 = vsinq.f32.pop %v9220
        %vm9224 = vweird.f32 %v2680
        %v9225 = vadd.s32 %v9221, 3
        %v9226 = vand.u32 %v9225, 3
        %vm9227 = vcmp.lt.s32.totalorder %v9226, 2
        %vm9228 = vcmp.eq.s32.totalorder %v9226, 0
        %v9229 = vxor.u32 %v9223, 2147483648
        %v9230 = vsel %vm9228, %v9222, %v9229
        %vm9231 = vcmp.eq.s32.totalorder %v9226, 2
        %v9232 = vxor.u32 %v9222, 2147483648
        %v9233 = vsel %vm9231, %v9232, %v9223
        %v9234 = vsel %vm9227, %v9230, %v9233
        %v9235 = vsel %vm9224, nan, %v9234
        %v9236 = vand.u32 2147483647, %v2682
        %vm9237 = vcmp.le.f32.partialorder %v9236, 0.7853982
        %vm9238 = vcmp.lt.s32.totalorder %v2682, 0
        %v9239 = vand.u32 %v2682, 2139095040
        %v9240 = vshrl.u32 %v9239, 23
        %v9241 = vsub.s32 %v9240, 127
        %v9242 = vand.u32 2147483647, %v2682
        %v9243 = vand.u32 %v9242, 8388607
        %v9244 = vor.u32 %v9243, 8388608
        %v9245 = vsub.s32 0, %v9244
        %v9246 = vadd.s32 %v9241, 1
        %vm9247 = vcmp.gt.s32.totalorder %v9246, 0
        %v9248 = vsel %vm9247, %v9246, 0
        %v9249 = vshrl.u32 %v9248, 5
        %v9250 = vand.u32 %v9248, 31
        %v9251 = vsub.s32 32, %v9250
        %v9252 = vshrl.u32 683565275, %v9251
        %v9253 = vshll.u32 683565275, %v9250
        %v9254 = vshrl.u32 2475754826, %v9251
        %v9255 = vor.u32 %v9253, %v9254
        %v9256 = vshll.u32 2475754826, %v9250
        %v9257 = vshrl.u32 2131351028, %v9251
        %v9258 = vor.u32 %v9256, %v9257
        %v9259 = vshll.u32 2131351028, %v9250
        %v9260 = vshrl.u32 2102212464, %v9251
        %v9261 = vor.u32 %v9259, %v9260
        %v9262 = vshll.u32 2102212464, %v9250
        %v9263 = vshrl.u32 920167782, %v9251
        %v9264 = vor.u32 %v9262, %v9263
        %v9265 = vshll.u32 920167782, %v9250
        %v9266 = vshrl.u32 1326507024, %v9251
        %v9267 = vor.u32 %v9265, %v9266
        %vm9268 = vcmp.lt.s32.totalorder %v9249, 1
        %vm9269 = vcmp.lt.s32.totalorder %v9249, 2
        %vm9270 = vcmp.lt.s32.totalorder %v9249, 3
        %vm9271 = vcmp.lt.s32.totalorder %v9249, 4
        %v9272 = vsel %vm9268, %v9252, %v9255
        %v9273 = vsel %vm9271, %v9261, 2102212464
        %v9274 = vsel %vm9270, %v9258, %v9273
        %v9275 = vsel %vm9269, %v9272, %v9274
        %v9276 = vsel %vm9268, %v9255, %v9258
        %v9277 = vsel %vm9271, %v9264, 920167782
        %v9278 = vsel %vm9270, %v9261, %v9277
        %v9279 = vsel %vm9269, %v9276, %v9278
        %v9280 = vsel %vm9268, %v9258, %v9261
        %v9281 = vsel %vm9271, %v9267, 1326507024
        %v9282 = vsel %vm9270, %v9264, %v9281
        %v9283 = vsel %vm9269, %v9280, %v9282
        %v9284 = vshll.u32 %v9244, 8
        %v9285 = vmul.u32.u64.compose %v9284, %v9283
        %v9286 = vextract.low.u32 %v9285
        %v9287 = vextract.high.u32 %v9285
        %v9288 = vmul.u32.u64.compose %v9284, %v9279
        %v9289 = vextract.low.u32 %v9288
        %v9290 = vextract.high.u32 %v9288
        %v9291 = vmul.u32 %v9284, %v9275
        %v9292 = vadd.s32 %v9287, %v9289
        %vm9293 = vc.u32 %v9287, %v9289
        %v9294 = vadd.s32 %v9290, 1
        %v9295 = vsel %vm9293, %v9294, %v9290
        %v9296 = vadd.s32 %v9291, %v9295
        %v9297 = vadd.s32 %v9296, 536870912
        %v9298 = vshrl.u32 %v9297, 30
        %v9299 = vshll.u32 %v9298, 30
        %v9300 = vsub.s32 %v9296, %v9299
        %vm9301 = vcmp.lt.s32.totalorder %v9300, 0
        %v9302 = vsub.s32 0, %v9300
        %v9303 = vsel %vm9301, %v9302, %v9300
        %v9304 = vclz %v9303
        %v9305 = vsub.s32 %v9304, 2
        %vm9306 = vcmp.gt.s32.totalorder 0, %v9305
        %v9307 = vsel %vm9306, 0, %v9305
        %v9308 = vsub.s32 32, %v9307
        %v9309 = vshll.u32 %v9300, %v9307
        %v9310 = vshrl.u32 %v9292, %v9308
        %v9311 = vor.u32 %v9309, %v9310
        %v9312 = vsub.s32 4294967266, %v9307
        %v9313 = vadd.s32 %v9312, 127
        %v9314 = vshll.u32 %v9313, 23
        %v9315 = vor.u32 4788187, %v9314
        %v9316 = vand.u32 2147483647, %v9315
        %v9318 = vcvt.s32.f32 %v9311
        %v9319 = vmul.f32 %v9318, %v9316
        %v9320 = vxor.u32 %v9319, 2147483648
        %v9321 = vsel %vm9238, %v9320, %v9319
        %v9322 = vsub.s32 4, %v9298
        %v9323 = vsel %vm9238, %v9322, %v9298
        %v9324 = vsel %vm9237, %v2682, %v9321
        %v9325 = vsel %vm9237, 0, %v9323
        %v9326 = vcosq.f32.pop %v9324
        %v9327 = vsinq.f32.pop %v9324
        %vm9328 = vweird.f32 %v2682
        %v9329 = vadd.s32 %v9325, 3
        %v9330 = vand.u32 %v9329, 3
        %vm9331 = vcmp.lt.s32.totalorder %v9330, 2
        %vm9332 = vcmp.eq.s32.totalorder %v9330, 0
        %v9333 = vxor.u32 %v9327, 2147483648
        %v9334 = vsel %vm9332, %v9326, %v9333
        %vm9335 = vcmp.eq.s32.totalorder %v9330, 2
        %v9336 = vxor.u32 %v9326, 2147483648
        %v9337 = vsel %vm9335, %v9336, %v9327
        %v9338 = vsel %vm9331, %v9334, %v9337
        %v9339 = vsel %vm9328, nan, %v9338
        %9340 = vst [vmem:[%s173] sm:$0xff] %v2787
        %9341 = vst [vmem:[%s173 + $0x8] sm:$0xff] %v2891
        %9342 = vst [vmem:[%s173 + $0x10] sm:$0xff] %v2995
        %9343 = vst [vmem:[%s173 + $0x18] sm:$0xff] %v3099
        %9344 = vst [vmem:[%s173 + $0x20] sm:$0xff] %v3203
        %9345 = vst [vmem:[%s173 + $0x28] sm:$0xff] %v3307
        %9346 = vst [vmem:[%s173 + $0x30] sm:$0xff] %v3411
        %9347 = vst [vmem:[%s173 + $0x38] sm:$0xff] %v3515
        %9348 = vst [vmem:[%s173 + $0x40] sm:$0xff] %v3619
        %9349 = vst [vmem:[%s173 + $0x48] sm:$0xff] %v3723
        %9350 = vst [vmem:[%s173 + $0x50] sm:$0xff] %v3827
        %9351 = vst [vmem:[%s173 + $0x58] sm:$0xff] %v3931
        %9352 = vst [vmem:[%s173 + $0x60] sm:$0xff] %v4035
        %9353 = vst [vmem:[%s173 + $0x68] sm:$0xff] %v4139
        %9354 = vst [vmem:[%s173 + $0x70] sm:$0xff] %v4243
        %9355 = vst [vmem:[%s173 + $0x78] sm:$0xff] %v4347
        %9356 = vst [vmem:[%s173 + $0x80] sm:$0xff] %v4451
        %9357 = vst [vmem:[%s173 + $0x88] sm:$0xff] %v4555
        %9358 = vst [vmem:[%s173 + $0x90] sm:$0xff] %v4659
        %9359 = vst [vmem:[%s173 + $0x98] sm:$0xff] %v4763
        %9360 = vst [vmem:[%s173 + $0xa0] sm:$0xff] %v4867
        %9361 = vst [vmem:[%s173 + $0xa8] sm:$0xff] %v4971
        %9362 = vst [vmem:[%s173 + $0xb0] sm:$0xff] %v5075
        %9363 = vst [vmem:[%s173 + $0xb8] sm:$0xff] %v5179
        %9364 = vst [vmem:[%s173 + $0xc0] sm:$0xff] %v5283
        %9365 = vst [vmem:[%s173 + $0xc8] sm:$0xff] %v5387
        %9366 = vst [vmem:[%s173 + $0xd0] sm:$0xff] %v5491
        %9367 = vst [vmem:[%s173 + $0xd8] sm:$0xff] %v5595
        %9368 = vst [vmem:[%s173 + $0xe0] sm:$0xff] %v5699
        %9369 = vst [vmem:[%s173 + $0xe8] sm:$0xff] %v5803
        %9370 = vst [vmem:[%s173 + $0xf0] sm:$0xff] %v5907
        %9371 = vst [vmem:[%s173 + $0xf8] sm:$0xff] %v6011
        %9372 = vst [vmem:[%s173 + $0x100] sm:$0xff] %v6115
        %9373 = vst [vmem:[%s173 + $0x108] sm:$0xff] %v6219
        %9374 = vst [vmem:[%s173 + $0x110] sm:$0xff] %v6323
        %9375 = vst [vmem:[%s173 + $0x118] sm:$0xff] %v6427
        %9376 = vst [vmem:[%s173 + $0x120] sm:$0xff] %v6531
        %9377 = vst [vmem:[%s173 + $0x128] sm:$0xff] %v6635
        %9378 = vst [vmem:[%s173 + $0x130] sm:$0xff] %v6739
        %9379 = vst [vmem:[%s173 + $0x138] sm:$0xff] %v6843
        %9380 = vst [vmem:[%s173 + $0x140] sm:$0xff] %v6947
        %9381 = vst [vmem:[%s173 + $0x148] sm:$0xff] %v7051
        %9382 = vst [vmem:[%s173 + $0x150] sm:$0xff] %v7155
        %9383 = vst [vmem:[%s173 + $0x158] sm:$0xff] %v7259
        %9384 = vst [vmem:[%s173 + $0x160] sm:$0xff] %v7363
        %9385 = vst [vmem:[%s173 + $0x168] sm:$0xff] %v7467
        %9386 = vst [vmem:[%s173 + $0x170] sm:$0xff] %v7571
        %9387 = vst [vmem:[%s173 + $0x178] sm:$0xff] %v7675
        %9388 = vst [vmem:[%s173 + $0x180] sm:$0xff] %v7779
        %9389 = vst [vmem:[%s173 + $0x188] sm:$0xff] %v7883
        %9390 = vst [vmem:[%s173 + $0x190] sm:$0xff] %v7987
        %9391 = vst [vmem:[%s173 + $0x198] sm:$0xff] %v8091
        %9392 = vst [vmem:[%s173 + $0x1a0] sm:$0xff] %v8195
        %9393 = vst [vmem:[%s173 + $0x1a8] sm:$0xff] %v8299
        %9394 = vst [vmem:[%s173 + $0x1b0] sm:$0xff] %v8403
        %9395 = vst [vmem:[%s173 + $0x1b8] sm:$0xff] %v8507
        %9396 = vst [vmem:[%s173 + $0x1c0] sm:$0xff] %v8611
        %9397 = vst [vmem:[%s173 + $0x1c8] sm:$0xff] %v8715
        %9398 = vst [vmem:[%s173 + $0x1d0] sm:$0xff] %v8819
        %9399 = vst [vmem:[%s173 + $0x1d8] sm:$0xff] %v8923
        %9400 = vst [vmem:[%s173 + $0x1e0] sm:$0xff] %v9027
        %9401 = vst [vmem:[%s173 + $0x1e8] sm:$0xff] %v9131
        %9402 = vst [vmem:[%s173 + $0x1f0] sm:$0xff] %v9235
        %9403 = vst [vmem:[%s173 + $0x1f8] sm:$0xff] %v9339
        %s9404 = sand.u32 %s75, 1
        %s9405 = scalar_lea.sflag [#allocation4], %s9404
        %s9406 = sand.u32 %s75, 1
        %s9407 = smul.addr %s9406, 512
        %s9408 = scalar_lea.vmem [#allocation7], %s9407
        // Predicated region
        $region37: #{tpu_custom_call.1} parent=27 // pred_check
          %p9409 = pneg %p85
        $region38: #{tpu_custom_call.1} parent=27 // pred_check_branch
          %9411 = sbr.rel (%p9409) target = $region40
        $region39: #{tpu_custom_call.1} parent=27 // pred_region
          %s9412 = smul.u32 16, %s20
          %s9414 = ssub.s32 8192, 8192
          %9415 = vsyncadd %s9405, %s9414
          %s9416 = smul.addr %s9412, 4
          %s9417 = smul.addr %s9416, 128
          %s9418 = scalar_lea.hbm %s2, %s9417
          %s9419 = sshll.u32 %s9408, 4
          %s9420 = int_to_ptr.vmem [resolvable:$true] %s9419
          %9425 = dma.vmem_to_hbm [thread:$0]  %s9420, 8192, %s9418, %s9405, 512, 512, 32
        $region40: #{tpu_custom_call.1} parent=27 // pred_fallthru
          _
      $region28: #{tpu_custom_call.1} parent=5 // pred_fallthru
        _
      %p9426 = scmp.le.s32.totalorder 2, %s15
      // Predicated region
      $region41: #{tpu_custom_call.1} parent=5 // pred_check
        %p9427 = pneg %p9426
      $region42: #{tpu_custom_call.1} parent=5 // pred_check_branch
        %9429 = sbr.rel (%p9427) target = $region44
      $region43: #{tpu_custom_call.1} parent=5 // pred_region
        %s9430 = ssub.s32 %s15, 2
        // Predicated region
        $region45: #{tpu_custom_call.1} parent=43 // pred_check
          %p9431 = pneg %p91
        $region46: #{tpu_custom_call.1} parent=43 // pred_check_branch
          %9433 = sbr.rel (%p9431) target = $region48
        $region47: #{tpu_custom_call.1} parent=43 // pred_region
          %s9434 = sand.u32 %s76, 1
          %s9435 = scalar_lea.sflag [#allocation4], %s9434
          %s9436 = sand.u32 %s76, 1
          %s9437 = smul.addr %s9436, 512
          %s9438 = scalar_lea.vmem [#allocation7], %s9437
          %9439 = dma.done %s9435, 8192
        $region48: #{tpu_custom_call.1} parent=43 // pred_fallthru
          _
      $region44: #{tpu_custom_call.1} parent=5 // pred_fallthru
        _
    $region6: #{tpu_custom_call.1} parent=1 // loop_footer
      %s19 = sadd.s32 1, %s15
    $region7: #{tpu_custom_call.1} parent=1 // loop_footer_branch
      %14 = sbr.rel target = $region3
    $region8: #{tpu_custom_call.1} parent=1 // loop_exit
      _
    %9440 = vsyncpa [#allocation3], 1
    %s9441 = scalar_lea.sflag [#allocation3], 1
    %9442 = vsyncpa %s9441, 1
    %9443 = vsyncpa [#allocation6], 1
    %9444 = vsyncpa [#allocation4], 1
    %s9445 = scalar_lea.sflag [#allocation4], 1
    %9446 = vsyncpa %s9445, 1

</llo_original>
